<compile_context>
chip_gen: v6e
topology: v6e:2x2x1
jax: 0.10.0
libtpu: 0.0.40
codegen_flags: <defaults>
</compile_context>

<pallas_src>
import functools
import math

import jax
import jax.numpy as jnp
from jax.experimental import pallas as pl
from jax.experimental.pallas import tpu as pltpu


C_MID = 64                 # hidden channel width
KH = KW = 3                # conv kernel size
K_RES = KH * KW * C_MID    # 576 = im2col contraction length for 64-ch convs
K_IN = KH * KW * 2         # 18  = im2col contraction length for the 2-ch input conv


# --------------------------- shared conv+relu pass ----------------------------
def _conv_relu_pass(buf_ref, patches_ref, halo_ref, weight_fn, *, W, BAND, NB, cin):
    """One 3x3 conv (+ReLU), band by band, updating buf in place.

    buf_ref     : (H+2, W+2, 64) bf16 zero-bordered activation buffer
    patches_ref : (BAND, W, 576) bf16 im2col scratch (first 9*cin lanes used)
    halo_ref    : (W+2, 64) bf16 pre-overwrite copy of the one buf row the next
                  band's dy=0 taps still need (in-place band-update correctness)
    weight_fn   : () -> (9*cin, 64) bf16 flattened conv weight
    cin         : 2 for the network-input conv (buf channels 0..1), 64 otherwise
    """
    ktot = 9 * cin

    def band_body(b, carry):
        r0 = pl.multiple_of(b * BAND, BAND)

        # im2col: one plain window copy per tap, no reshapes.
        for dy in range(KH):
            for dx in range(KW):
                k = dy * KW + dx
                patches_ref[:, :, k * cin:(k + 1) * cin] = (
                    buf_ref[pl.ds(r0 + dy, BAND), dx:dx + W, 0:cin])

        # Buf row r0 was overwritten by the previous band of this layer; only the
        # first patch row of the dy=0 taps needs its saved (halo) copy.
        @pl.when(b > 0)
        def _fix_first_row():
            for dx in range(KW):
                patches_ref[0:1, :, dx * cin:(dx + 1) * cin] = (
                    halo_ref[dx:dx + W, 0:cin][None])

        # One MXU matmul for the whole band, f32 accumulation.
        p = patches_ref[:, :, 0:ktot].reshape(BAND * W, ktot)
        acc = jnp.dot(p, weight_fn(), preferred_element_type=jnp.float32)
        act = jnp.maximum(acc, 0.0).astype(jnp.bfloat16).reshape(BAND, W, C_MID)

        # Save the halo row (old value), then write the band back in place.
        halo_ref[...] = buf_ref[r0 + BAND]
        buf_ref[pl.ds(r0 + 1, BAND), 1:W + 1, :] = act
        return carry

    jax.lax.fori_loop(0, NB, band_body, 0)


# ------------------------------- fused kernel ---------------------------------
def _vdsr_fused_kernel(ms_ref, x_ref, dem_ref, w_in_ref, w_res_ref, w_out_ref,
                       o_ref, buf_ref, patches_ref, halo_ref, *, H, W, BAND):
    # ms_ref    : SMEM (6,)  [w_sub_dem, b_sub_dem, w_sub_pr, b_sub_pr, w_add, b_add]
    # x_ref/dem_ref/o_ref : VMEM (1, H, W, 1) f32
    # w_in_ref  : VMEM (18, 64)       bf16 (im2col-flattened 2->64 conv)
    # w_res_ref : VMEM (18, 576, 64)  bf16 (im2col-flattened 64->64 convs)
    # w_out_ref : VMEM (3, 3, 64)     f32  (64->1 conv, VPU path)
    NB = H // BAND

    # --- re-zero ONLY the 1-pixel border: it is the convs' zero padding ---------
    zrow = jnp.zeros((1, W + 2, C_MID), jnp.bfloat16)
    zcol = jnp.zeros((H + 2, 1, C_MID), jnp.bfloat16)
    buf_ref[0:1, :, :] = zrow
    buf_ref[H + 1:H + 2, :, :] = zrow
    buf_ref[:, 0:1, :] = zcol
    buf_ref[:, W + 1:W + 2, :] = zcol

    # --- scatter the 2-channel network input into buf channels 0..1 -------------
    # channel 0 = raw x (matches torch.cat((x, dem), dim=1)),
    # channel 1 = sub_mean_dem(dem); the zero border stays exactly zero.
    def in_band(b, carry):
        r0 = pl.multiple_of(b * BAND, BAND)
        xb = x_ref[0, pl.ds(r0, BAND), :, :]
        db = dem_ref[0, pl.ds(r0, BAND), :, :]
        buf_ref[pl.ds(r0 + 1, BAND), 1:W + 1, 0:1] = xb.astype(jnp.bfloat16)
        buf_ref[pl.ds(r0 + 1, BAND), 1:W + 1, 1:2] = (
            db * ms_ref[0] + ms_ref[1]).astype(jnp.bfloat16)
        return carry
    jax.lax.fori_loop(0, NB, in_band, 0)

    # --- input conv 2->64 + ReLU: K=18 matmul on the shared band machinery ------
    _conv_relu_pass(buf_ref, patches_ref, halo_ref, lambda: w_in_ref[...],
                    W=W, BAND=BAND, NB=NB, cin=2)

    # --- 18 Conv_ReLU_Blocks; weights stay resident in VMEM ---------------------
    def layer_body(i, carry):
        _conv_relu_pass(buf_ref, patches_ref, halo_ref, lambda: w_res_ref[i],
                        W=W, BAND=BAND, NB=NB, cin=C_MID)
        return carry
    jax.lax.fori_loop(0, w_res_ref.shape[0], layer_body, 0)

    # --- output conv 64->1 on the VPU, + residual + add_mean, band by band ------
    def out_band(b, carry):
        r0 = pl.multiple_of(b * BAND, BAND)
        acc = jnp.zeros((BAND, W, C_MID), jnp.float32)
        for dy in range(KH):
            for dx in range(KW):
                tap = buf_ref[pl.ds(r0 + dy, BAND), dx:dx + W, :].astype(jnp.float32)
                acc = acc + tap * w_out_ref[dy, dx, :]
        conv1 = jnp.sum(acc, axis=-1, keepdims=True)                     # (BAND, W, 1)
        residual = x_ref[0, pl.ds(r0, BAND), :, :] * ms_ref[2] + ms_ref[3]
        final = (conv1 + residual) * ms_ref[4] + ms_ref[5]
        o_ref[0, pl.ds(r0, BAND), :, :] = final.astype(o_ref.dtype)
        return carry
    jax.lax.fori_loop(0, NB, out_band, 0)


# ------------------------------ parameter init --------------------------------
def init_params(key):
    ks = jax.random.split(key, 21)

    def conv_w(k, cin, cout):
        # matches m.weight.data.normal_(0, sqrt(2 / (k*k*out_channels)))
        std = math.sqrt(2.0 / (3 * 3 * cout))
        return (std * jax.random.normal(k, (3, 3, cin, cout))).astype(jnp.float32)

    params = {
        "w_in": conv_w(ks[0], 2, 64),
        "w_res": [conv_w(ks[1 + i], 64, 64) for i in range(18)],
        "w_out": conv_w(ks[19], 64, 1),
    }
    # MeanShift layers: 1x1 conv on 1 channel.  The reference init loop overwrites
    # the MeanShift *weights* with normal(0, sqrt(2/1)) while the *biases* keep the
    # mean-shift values; reproduce that.
    ms_std = math.sqrt(2.0)
    ms_keys = jax.random.split(ks[20], 3)
    params["w_sub_dem"] = (ms_std * jax.random.normal(ms_keys[0], (1,))).astype(jnp.float32)
    params["b_sub_dem"] = jnp.array([-1.0 * 2228.3303 * 0.05986051 / 1.0], jnp.float32)
    params["w_sub_pr"] = (ms_std * jax.random.normal(ms_keys[1], (1,))).astype(jnp.float32)
    params["b_sub_pr"] = jnp.array([-1.0 * 993.9646 * 0.00216697 / 1.0], jnp.float32)
    params["w_add"] = (ms_std * jax.random.normal(ms_keys[2], (1,))).astype(jnp.float32)
    params["b_add"] = jnp.array([1.0 * 993.9646 * 0.00216697 / 1.0], jnp.float32)
    return params


# --------------------------------- forward ------------------------------------
def _pick_band(h):
    for cand in (32, 16, 8):
        if h % cand == 0:
            return cand
    raise ValueError("H must be a multiple of 8")


def _pick_vmem_limit():
    # Size Mosaic's VMEM budget per TPU generation (~85% of physical) instead of a
    # hard 64 MiB cap.  Falls back to the compiler default if the query fails.
    try:
        cap = getattr(pltpu.get_tpu_info(), "vmem_capacity_bytes", None)
        if cap:
            return int(cap * 0.85)
    except Exception:
        pass
    return None


def vdsr_dem_forward(params, x_nchw, dem_nchw, band_rows=None):
    N, C, H, W = x_nchw.shape
    assert C == 1 and dem_nchw.shape == (N, 1, H, W)
    assert W % 16 == 0 and H % 8 == 0, "fused kernel expects W % 16 == 0, H % 8 == 0"
    band = band_rows or _pick_band(H)
    assert H % band == 0 and band % 8 == 0

    # NCHW (PyTorch) -> NHWC; C == 1 so these are cheap reshapes.
    x = jnp.transpose(x_nchw, (0, 2, 3, 1)).astype(jnp.float32)
    dem = jnp.transpose(dem_nchw, (0, 2, 3, 1)).astype(jnp.float32)

    ms = jnp.concatenate([params["w_sub_dem"], params["b_sub_dem"],
                          params["w_sub_pr"], params["b_sub_pr"],
                          params["w_add"], params["b_add"]]).astype(jnp.float32)

    # conv weights flattened to the kernel's im2col order (tap-major, cin-minor);
    # bf16 only feeds the MXU, the 64->1 output conv stays f32 on the VPU.
    w_in = params["w_in"].reshape(K_IN, C_MID).astype(jnp.bfloat16)              # (18, 64)
    w_res = jnp.stack([w.reshape(K_RES, C_MID) for w in params["w_res"]],
                      axis=0).astype(jnp.bfloat16)                                # (18, 576, 64)
    w_out = params["w_out"][:, :, :, 0].astype(jnp.float32)                       # (3, 3, 64)

    kernel = functools.partial(_vdsr_fused_kernel, H=H, W=W, BAND=band)
    out_nhwc = pl.pallas_call(
        kernel,
        out_shape=jax.ShapeDtypeStruct((N, H, W, 1), jnp.float32),
        grid=(N,),
        in_specs=[
            pl.BlockSpec(memory_space=pltpu.MemorySpace.SMEM),          # mean-shift scalars
            pl.BlockSpec((1, H, W, 1), lambda n: (n, 0, 0, 0)),         # x
            pl.BlockSpec((1, H, W, 1), lambda n: (n, 0, 0, 0)),         # dem
            pl.BlockSpec((K_IN, C_MID), lambda n: (0, 0)),              # w_in   (resident)
            pl.BlockSpec((18, K_RES, C_MID), lambda n: (0, 0, 0)),      # w_res  (resident)
            pl.BlockSpec((KH, KW, C_MID), lambda n: (0, 0, 0)),         # w_out  (resident)
        ],
        out_specs=pl.BlockSpec((1, H, W, 1), lambda n: (n, 0, 0, 0)),
        scratch_shapes=[
            pltpu.VMEM((H + 2, W + 2, C_MID), jnp.bfloat16),   # zero-bordered activations
            pltpu.VMEM((band, W, K_RES), jnp.bfloat16),        # band-sized im2col patches
            pltpu.VMEM((W + 2, C_MID), jnp.bfloat16),          # 1-row halo for in-place bands
        ],
        compiler_params=pltpu.CompilerParams(
            dimension_semantics=("parallel",),
            vmem_limit_bytes=_pick_vmem_limit(),
        ),
    )(ms, x, dem, w_in, w_res, w_out)

    return jnp.transpose(out_nhwc, (0, 3, 1, 2))   # back to NCHW


# ------------------------- pure-JAX numerics reference -------------------------
def vdsr_dem_reference(params, x_nchw, dem_nchw):
    """Mirrors the kernel's numerics: bf16 conv weights + bf16 inter-layer
    activations, f32 accumulation, f32 output conv / residual / mean-shifts."""
    f32 = jnp.float32
    bf = lambda a: a.astype(jnp.bfloat16).astype(f32)

    def conv(h, w):
        return jax.lax.conv_general_dilated(
            h, w.astype(f32), window_strides=(1, 1), padding=((1, 1), (1, 1)),
            dimension_numbers=("NCHW", "HWIO", "NCHW"),
            precision=jax.lax.Precision.HIGHEST)

    x = x_nchw.astype(f32)
    dem = dem_nchw.astype(f32)
    dem_s = dem * params["w_sub_dem"][0] + params["b_sub_dem"][0]
    h = bf(jnp.concatenate([x, dem_s], axis=1))
    h = bf(jax.nn.relu(conv(h, bf(params["w_in"]))))
    for w in params["w_res"]:
        h = bf(jax.nn.relu(conv(h, bf(w))))
    out = conv(h, params["w_out"])
    residual = x * params["w_sub_pr"][0] + params["b_sub_pr"][0]
    return (out + residual) * params["w_add"][0] + params["b_add"][0]


if __name__ == "__main__":
    key = jax.random.PRNGKey(0)
    k_in, k_dem, k_par = jax.random.split(key, 3)
    N, H, W = 2, 16, 16
    x = jax.random.normal(k_in, (N, 1, H, W), jnp.float32)
    dem = jax.random.normal(k_dem, (N, 1, H, W), jnp.float32)
    params = init_params(k_par)

    # band_rows=8 -> two bands per 16-row image, so the in-place band update and its
    # one-row halo path are exercised by the smoke test.
    fwd = jax.jit(functools.partial(vdsr_dem_forward, band_rows=8))
    out = jax.block_until_ready(fwd(params, x, dem))
    assert out.shape == (N, 1, H, W), out.shape
    assert bool(jnp.isfinite(out).all())

    ref = jax.block_until_ready(jax.jit(vdsr_dem_reference)(params, x, dem))
    err = float(jnp.max(jnp.abs(out - ref)) / (jnp.max(jnp.abs(ref)) + 1e-6))
    assert err < 3e-2, f"kernel/reference mismatch: normalized max err {err:.3e}"
    print("KERNEL_OK")
</pallas_src>

<mosaic_0001>
module attributes {stable_mosaic.version = 11 : i64} {
  func.func @_vdsr_fused_kernel(%arg0: i32, %arg1: memref<6xf32, #tpu.memory_space<smem>>, %arg2: memref<1x16x16x1xf32, #tpu.memory_space<vmem>>, %arg3: memref<1x16x16x1xf32, #tpu.memory_space<vmem>>, %arg4: memref<18x64xbf16, #tpu.memory_space<vmem>>, %arg5: memref<18x576x64xbf16, #tpu.memory_space<vmem>>, %arg6: memref<3x3x64xf32, #tpu.memory_space<vmem>>, %arg7: memref<1x16x16x1xf32, #tpu.memory_space<vmem>>, %arg8: memref<18x18x64xbf16, #tpu.memory_space<vmem>>, %arg9: memref<8x16x576xbf16, #tpu.memory_space<vmem>>, %arg10: memref<18x64xbf16, #tpu.memory_space<vmem>>) attributes {dimension_semantics = [#tpu.dimension_semantics<parallel>], iteration_bounds = array<i64: 2>, scalar_prefetch = 0 : i64, scratch_operands = 3 : i64, tpu.core_type = #tpu.core_type<tc>, window_params = [{transform_indices = @transform_0, window_bounds = array<i64: 6>}, {transform_indices = @transform_1, window_bounds = array<i64: 1, 16, 16, 1>}, {transform_indices = @transform_2, window_bounds = array<i64: 1, 16, 16, 1>}, {pipeline_mode = #tpu.pipeline_mode<synchronous>, transform_indices = @transform_3, window_bounds = array<i64: 18, 64>}, {pipeline_mode = #tpu.pipeline_mode<synchronous>, transform_indices = @transform_4, window_bounds = array<i64: 18, 576, 64>}, {pipeline_mode = #tpu.pipeline_mode<synchronous>, transform_indices = @transform_5, window_bounds = array<i64: 3, 3, 64>}, {transform_indices = @transform_6, window_bounds = array<i64: 1, 16, 16, 1>}]} {
    %cst = arith.constant 0.000000e+00 : bf16
    %0 = vector.broadcast %cst : bf16 to vector<1x18x64xbf16>
    %cst_0 = arith.constant 0.000000e+00 : bf16
    %1 = vector.broadcast %cst_0 : bf16 to vector<18x1x64xbf16>
    %c0 = arith.constant 0 : index
    %c0_1 = arith.constant 0 : index
    %c0_2 = arith.constant 0 : index
    %2 = vector.load %arg8[%c0, %c0_1, %c0_2] : memref<18x18x64xbf16, #tpu.memory_space<vmem>>, vector<1x18x64xbf16>
    tpu.vector_store %arg8[%c0, %c0_1, %c0_2], %0 {strides = array<i32>} : memref<18x18x64xbf16, #tpu.memory_space<vmem>>, vector<1x18x64xbf16>,
    %c17 = arith.constant 17 : index
    %c0_3 = arith.constant 0 : index
    %c0_4 = arith.constant 0 : index
    %3 = vector.load %arg8[%c17, %c0_3, %c0_4] : memref<18x18x64xbf16, #tpu.memory_space<vmem>>, vector<1x18x64xbf16>
    tpu.vector_store %arg8[%c17, %c0_3, %c0_4], %0 {strides = array<i32>} : memref<18x18x64xbf16, #tpu.memory_space<vmem>>, vector<1x18x64xbf16>,
    %c0_5 = arith.constant 0 : index
    %c0_6 = arith.constant 0 : index
    %c0_7 = arith.constant 0 : index
    %4 = vector.load %arg8[%c0_5, %c0_6, %c0_7] : memref<18x18x64xbf16, #tpu.memory_space<vmem>>, vector<18x1x64xbf16>
    tpu.vector_store %arg8[%c0_5, %c0_6, %c0_7], %1 {strides = array<i32>} : memref<18x18x64xbf16, #tpu.memory_space<vmem>>, vector<18x1x64xbf16>,
    %c0_8 = arith.constant 0 : index
    %c17_9 = arith.constant 17 : index
    %c0_10 = arith.constant 0 : index
    %5 = vector.load %arg8[%c0_8, %c17_9, %c0_10] : memref<18x18x64xbf16, #tpu.memory_space<vmem>>, vector<18x1x64xbf16>
    tpu.vector_store %arg8[%c0_8, %c17_9, %c0_10], %1 {strides = array<i32>} : memref<18x18x64xbf16, #tpu.memory_space<vmem>>, vector<18x1x64xbf16>,
    %c0_i32 = arith.constant 0 : i32
    %c2_i32 = arith.constant 2 : i32
    %6 = arith.addi %c0_i32, %c2_i32 : i32
    %c1_i32 = arith.constant 1 : i32
    scf.for %arg11 = %c0_i32 to %6 step %c1_i32  : i32 {
      %c8_i32 = arith.constant 8 : i32
      %10 = arith.muli %arg11, %c8_i32 : i32
      %11 = tpu.assume_multiple %10, 8 : i32
      %c0_23 = arith.constant 0 : index
      %12 = arith.index_cast %11 : i32 to index
      %c0_24 = arith.constant 0 : index
      %c0_25 = arith.constant 0 : index
      %13 = vector.load %arg2[%c0_23, %12, %c0_24, %c0_25] : memref<1x16x16x1xf32, #tpu.memory_space<vmem>>, vector<1x8x16x1xf32>
      %14 = vector.shape_cast %13 : vector<1x8x16x1xf32> to vector<8x16x1xf32>
      %c0_26 = arith.constant 0 : index
      %15 = arith.index_cast %11 : i32 to index
      %c0_27 = arith.constant 0 : index
      %c0_28 = arith.constant 0 : index
      %16 = vector.load %arg3[%c0_26, %15, %c0_27, %c0_28] : memref<1x16x16x1xf32, #tpu.memory_space<vmem>>, vector<1x8x16x1xf32>
      %17 = vector.shape_cast %16 : vector<1x8x16x1xf32> to vector<8x16x1xf32>
      %18 = arith.truncf %14 : vector<8x16x1xf32> to vector<8x16x1xbf16>
      %c1_i32_29 = arith.constant 1 : i32
      %19 = arith.addi %11, %c1_i32_29 : i32
      %20 = arith.index_cast %19 : i32 to index
      %c1 = arith.constant 1 : index
      %c0_30 = arith.constant 0 : index
      %21 = vector.load %arg8[%20, %c1, %c0_30] : memref<18x18x64xbf16, #tpu.memory_space<vmem>>, vector<8x16x1xbf16>
      tpu.vector_store %arg8[%20, %c1, %c0_30], %18 {strides = array<i32>} : memref<18x18x64xbf16, #tpu.memory_space<vmem>>, vector<8x16x1xbf16>,
      %c0_31 = arith.constant 0 : index
      %22 = memref.load %arg1[%c0_31] : memref<6xf32, #tpu.memory_space<smem>>
      %23 = vector.broadcast %22 : f32 to vector<8x16x1xf32>
      %24 = arith.mulf %17, %23 : vector<8x16x1xf32>
      %c1_32 = arith.constant 1 : index
      %25 = memref.load %arg1[%c1_32] : memref<6xf32, #tpu.memory_space<smem>>
      %26 = vector.broadcast %25 : f32 to vector<8x16x1xf32>
      %27 = arith.addf %24, %26 : vector<8x16x1xf32>
      %28 = arith.truncf %27 : vector<8x16x1xf32> to vector<8x16x1xbf16>
      %c1_i32_33 = arith.constant 1 : i32
      %29 = arith.addi %11, %c1_i32_33 : i32
      %30 = arith.index_cast %29 : i32 to index
      %c1_34 = arith.constant 1 : index
      %c1_35 = arith.constant 1 : index
      %31 = vector.load %arg8[%30, %c1_34, %c1_35] : memref<18x18x64xbf16, #tpu.memory_space<vmem>>, vector<8x16x1xbf16>
      tpu.vector_store %arg8[%30, %c1_34, %c1_35], %28 {strides = array<i32>} : memref<18x18x64xbf16, #tpu.memory_space<vmem>>, vector<8x16x1xbf16>,
    }
    %c2_i32_11 = arith.constant 2 : i32
    %c0_i32_12 = arith.constant 0 : i32
    %c2_i32_13 = arith.constant 2 : i32
    %7 = arith.addi %c0_i32_12, %c2_i32_13 : i32
    %c1_i32_14 = arith.constant 1 : i32
    scf.for %arg11 = %c0_i32_12 to %7 step %c1_i32_14  : i32 {
      %c8_i32 = arith.constant 8 : i32
      %10 = arith.muli %arg11, %c8_i32 : i32
      %11 = tpu.assume_multiple %10, 8 : i32
      %c0_i32_23 = arith.constant 0 : i32
      %12 = arith.addi %11, %c0_i32_23 : i32
      %13 = arith.index_cast %12 : i32 to index
      %c0_24 = arith.constant 0 : index
      %c0_25 = arith.constant 0 : index
      %14 = vector.load %arg8[%13, %c0_24, %c0_25] : memref<18x18x64xbf16, #tpu.memory_space<vmem>>, vector<8x16x2xbf16>
      %c0_26 = arith.constant 0 : index
      %c0_27 = arith.constant 0 : index
      %c0_28 = arith.constant 0 : index
      %15 = vector.load %arg9[%c0_26, %c0_27, %c0_28] : memref<8x16x576xbf16, #tpu.memory_space<vmem>>, vector<8x16x2xbf16>
      tpu.vector_store %arg9[%c0_26, %c0_27, %c0_28], %14 {strides = array<i32>} : memref<8x16x576xbf16, #tpu.memory_space<vmem>>, vector<8x16x2xbf16>,
      %c0_i32_29 = arith.constant 0 : i32
      %16 = arith.addi %11, %c0_i32_29 : i32
      %17 = arith.index_cast %16 : i32 to index
      %c1 = arith.constant 1 : index
      %c0_30 = arith.constant 0 : index
      %18 = vector.load %arg8[%17, %c1, %c0_30] : memref<18x18x64xbf16, #tpu.memory_space<vmem>>, vector<8x16x2xbf16>
      %c0_31 = arith.constant 0 : index
      %c0_32 = arith.constant 0 : index
      %c2 = arith.constant 2 : index
      %19 = vector.load %arg9[%c0_31, %c0_32, %c2] : memref<8x16x576xbf16, #tpu.memory_space<vmem>>, vector<8x16x2xbf16>
      tpu.vector_store %arg9[%c0_31, %c0_32, %c2], %18 {strides = array<i32>} : memref<8x16x576xbf16, #tpu.memory_space<vmem>>, vector<8x16x2xbf16>,
      %c0_i32_33 = arith.constant 0 : i32
      %20 = arith.addi %11, %c0_i32_33 : i32
      %21 = arith.index_cast %20 : i32 to index
      %c2_34 = arith.constant 2 : index
      %c0_35 = arith.constant 0 : index
      %22 = vector.load %arg8[%21, %c2_34, %c0_35] : memref<18x18x64xbf16, #tpu.memory_space<vmem>>, vector<8x16x2xbf16>
      %c0_36 = arith.constant 0 : index
      %c0_37 = arith.constant 0 : index
      %c4 = arith.constant 4 : index
      %23 = vector.load %arg9[%c0_36, %c0_37, %c4] : memref<8x16x576xbf16, #tpu.memory_space<vmem>>, vector<8x16x2xbf16>
      tpu.vector_store %arg9[%c0_36, %c0_37, %c4], %22 {strides = array<i32>} : memref<8x16x576xbf16, #tpu.memory_space<vmem>>, vector<8x16x2xbf16>,
      %c1_i32_38 = arith.constant 1 : i32
      %24 = arith.addi %11, %c1_i32_38 : i32
      %25 = arith.index_cast %24 : i32 to index
      %c0_39 = arith.constant 0 : index
      %c0_40 = arith.constant 0 : index
      %26 = vector.load %arg8[%25, %c0_39, %c0_40] : memref<18x18x64xbf16, #tpu.memory_space<vmem>>, vector<8x16x2xbf16>
      %c0_41 = arith.constant 0 : index
      %c0_42 = arith.constant 0 : index
      %c6 = arith.constant 6 : index
      %27 = vector.load %arg9[%c0_41, %c0_42, %c6] : memref<8x16x576xbf16, #tpu.memory_space<vmem>>, vector<8x16x2xbf16>
      tpu.vector_store %arg9[%c0_41, %c0_42, %c6], %26 {strides = array<i32>} : memref<8x16x576xbf16, #tpu.memory_space<vmem>>, vector<8x16x2xbf16>,
      %c1_i32_43 = arith.constant 1 : i32
      %28 = arith.addi %11, %c1_i32_43 : i32
      %29 = arith.index_cast %28 : i32 to index
      %c1_44 = arith.constant 1 : index
      %c0_45 = arith.constant 0 : index
      %30 = vector.load %arg8[%29, %c1_44, %c0_45] : memref<18x18x64xbf16, #tpu.memory_space<vmem>>, vector<8x16x2xbf16>
      %c0_46 = arith.constant 0 : index
      %c0_47 = arith.constant 0 : index
      %c8 = arith.constant 8 : index
      %31 = vector.load %arg9[%c0_46, %c0_47, %c8] : memref<8x16x576xbf16, #tpu.memory_space<vmem>>, vector<8x16x2xbf16>
      tpu.vector_store %arg9[%c0_46, %c0_47, %c8], %30 {strides = array<i32>} : memref<8x16x576xbf16, #tpu.memory_space<vmem>>, vector<8x16x2xbf16>,
      %c1_i32_48 = arith.constant 1 : i32
      %32 = arith.addi %11, %c1_i32_48 : i32
      %33 = arith.index_cast %32 : i32 to index
      %c2_49 = arith.constant 2 : index
      %c0_50 = arith.constant 0 : index
      %34 = vector.load %arg8[%33, %c2_49, %c0_50] : memref<18x18x64xbf16, #tpu.memory_space<vmem>>, vector<8x16x2xbf16>
      %c0_51 = arith.constant 0 : index
      %c0_52 = arith.constant 0 : index
      %c10 = arith.constant 10 : index
      %35 = vector.load %arg9[%c0_51, %c0_52, %c10] : memref<8x16x576xbf16, #tpu.memory_space<vmem>>, vector<8x16x2xbf16>
      tpu.vector_store %arg9[%c0_51, %c0_52, %c10], %34 {strides = array<i32>} : memref<8x16x576xbf16, #tpu.memory_space<vmem>>, vector<8x16x2xbf16>,
      %c2_i32_53 = arith.constant 2 : i32
      %36 = arith.addi %11, %c2_i32_53 : i32
      %37 = arith.index_cast %36 : i32 to index
      %c0_54 = arith.constant 0 : index
      %c0_55 = arith.constant 0 : index
      %38 = vector.load %arg8[%37, %c0_54, %c0_55] : memref<18x18x64xbf16, #tpu.memory_space<vmem>>, vector<8x16x2xbf16>
      %c0_56 = arith.constant 0 : index
      %c0_57 = arith.constant 0 : index
      %c12 = arith.constant 12 : index
      %39 = vector.load %arg9[%c0_56, %c0_57, %c12] : memref<8x16x576xbf16, #tpu.memory_space<vmem>>, vector<8x16x2xbf16>
      tpu.vector_store %arg9[%c0_56, %c0_57, %c12], %38 {strides = array<i32>} : memref<8x16x576xbf16, #tpu.memory_space<vmem>>, vector<8x16x2xbf16>,
      %c2_i32_58 = arith.constant 2 : i32
      %40 = arith.addi %11, %c2_i32_58 : i32
      %41 = arith.index_cast %40 : i32 to index
      %c1_59 = arith.constant 1 : index
      %c0_60 = arith.constant 0 : index
      %42 = vector.load %arg8[%41, %c1_59, %c0_60] : memref<18x18x64xbf16, #tpu.memory_space<vmem>>, vector<8x16x2xbf16>
      %c0_61 = arith.constant 0 : index
      %c0_62 = arith.constant 0 : index
      %c14 = arith.constant 14 : index
      %43 = vector.load %arg9[%c0_61, %c0_62, %c14] : memref<8x16x576xbf16, #tpu.memory_space<vmem>>, vector<8x16x2xbf16>
      tpu.vector_store %arg9[%c0_61, %c0_62, %c14], %42 {strides = array<i32>} : memref<8x16x576xbf16, #tpu.memory_space<vmem>>, vector<8x16x2xbf16>,
      %c2_i32_63 = arith.constant 2 : i32
      %44 = arith.addi %11, %c2_i32_63 : i32
      %45 = arith.index_cast %44 : i32 to index
      %c2_64 = arith.constant 2 : index
      %c0_65 = arith.constant 0 : index
      %46 = vector.load %arg8[%45, %c2_64, %c0_65] : memref<18x18x64xbf16, #tpu.memory_space<vmem>>, vector<8x16x2xbf16>
      %c0_66 = arith.constant 0 : index
      %c0_67 = arith.constant 0 : index
      %c16 = arith.constant 16 : index
      %47 = vector.load %arg9[%c0_66, %c0_67, %c16] : memref<8x16x576xbf16, #tpu.memory_space<vmem>>, vector<8x16x2xbf16>
      tpu.vector_store %arg9[%c0_66, %c0_67, %c16], %46 {strides = array<i32>} : memref<8x16x576xbf16, #tpu.memory_space<vmem>>, vector<8x16x2xbf16>,
      %c0_i32_68 = arith.constant 0 : i32
      %48 = arith.cmpi sgt, %arg11, %c0_i32_68 : i32
      %49 = arith.extui %48 : i1 to i32
      %c0_i32_69 = arith.constant 0 : i32
      %50 = arith.cmpi ne, %49, %c0_i32_69 : i32
      scf.if %50 {
        %c0_85 = arith.constant 0 : index
        %c0_86 = arith.constant 0 : index
        %67 = vector.load %arg10[%c0_85, %c0_86] : memref<18x64xbf16, #tpu.memory_space<vmem>>, vector<16x2xbf16>
        %68 = vector.shape_cast %67 : vector<16x2xbf16> to vector<1x16x2xbf16>
        %c0_87 = arith.constant 0 : index
        %c0_88 = arith.constant 0 : index
        %c0_89 = arith.constant 0 : index
        %69 = vector.load %arg9[%c0_87, %c0_88, %c0_89] : memref<8x16x576xbf16, #tpu.memory_space<vmem>>, vector<1x16x2xbf16>
        tpu.vector_store %arg9[%c0_87, %c0_88, %c0_89], %68 {strides = array<i32>} : memref<8x16x576xbf16, #tpu.memory_space<vmem>>, vector<1x16x2xbf16>,
        %c1_90 = arith.constant 1 : index
        %c0_91 = arith.constant 0 : index
        %70 = vector.load %arg10[%c1_90, %c0_91] : memref<18x64xbf16, #tpu.memory_space<vmem>>, vector<16x2xbf16>
        %71 = vector.shape_cast %70 : vector<16x2xbf16> to vector<1x16x2xbf16>
        %c0_92 = arith.constant 0 : index
        %c0_93 = arith.constant 0 : index
        %c2_94 = arith.constant 2 : index
        %72 = vector.load %arg9[%c0_92, %c0_93, %c2_94] : memref<8x16x576xbf16, #tpu.memory_space<vmem>>, vector<1x16x2xbf16>
        tpu.vector_store %arg9[%c0_92, %c0_93, %c2_94], %71 {strides = array<i32>} : memref<8x16x576xbf16, #tpu.memory_space<vmem>>, vector<1x16x2xbf16>,
        %c2_95 = arith.constant 2 : index
        %c0_96 = arith.constant 0 : index
        %73 = vector.load %arg10[%c2_95, %c0_96] : memref<18x64xbf16, #tpu.memory_space<vmem>>, vector<16x2xbf16>
        %74 = vector.shape_cast %73 : vector<16x2xbf16> to vector<1x16x2xbf16>
        %c0_97 = arith.constant 0 : index
        %c0_98 = arith.constant 0 : index
        %c4_99 = arith.constant 4 : index
        %75 = vector.load %arg9[%c0_97, %c0_98, %c4_99] : memref<8x16x576xbf16, #tpu.memory_space<vmem>>, vector<1x16x2xbf16>
        tpu.vector_store %arg9[%c0_97, %c0_98, %c4_99], %74 {strides = array<i32>} : memref<8x16x576xbf16, #tpu.memory_space<vmem>>, vector<1x16x2xbf16>,
      } else {
      }
      %c0_70 = arith.constant 0 : index
      %c0_71 = arith.constant 0 : index
      %c0_72 = arith.constant 0 : index
      %51 = vector.load %arg9[%c0_70, %c0_71, %c0_72] : memref<8x16x576xbf16, #tpu.memory_space<vmem>>, vector<8x16x18xbf16>
      %52 = vector.shape_cast %51 : vector<8x16x18xbf16> to vector<128x18xbf16>
      %c0_73 = arith.constant 0 : index
      %c0_74 = arith.constant 0 : index
      %53 = vector.load %arg4[%c0_73, %c0_74] : memref<18x64xbf16, #tpu.memory_space<vmem>>, vector<18x64xbf16>
      %cst_75 = arith.constant dense<0.000000e+00> : vector<128x64xf32>
      %54 = tpu.matmul %52, %53, %cst_75 {dimension_numbers = #tpu.dot_dimension_numbers<[1], [0], [0], [1], [0, 0, 1, 1], [], []>} : vector<128x18xbf16>, vector<18x64xbf16>, vector<128x64xf32> -> vector<128x64xf32>
      %cst_76 = arith.constant 0.000000e+00 : f32
      %55 = vector.broadcast %cst_76 : f32 to vector<128x64xf32>
      %56 = arith.maximumf %54, %55 : vector<128x64xf32>
      %57 = arith.truncf %56 : vector<128x64xf32> to vector<128x64xbf16>
      %58 = vector.shape_cast %57 : vector<128x64xbf16> to vector<8x16x64xbf16>
      %c8_i32_77 = arith.constant 8 : i32
      %59 = arith.addi %11, %c8_i32_77 : i32
      %60 = arith.index_cast %59 : i32 to index
      %c0_78 = arith.constant 0 : index
      %c0_79 = arith.constant 0 : index
      %61 = vector.load %arg8[%60, %c0_78, %c0_79] : memref<18x18x64xbf16, #tpu.memory_space<vmem>>, vector<1x18x64xbf16>
      %62 = vector.shape_cast %61 : vector<1x18x64xbf16> to vector<18x64xbf16>
      %c0_80 = arith.constant 0 : index
      %c0_81 = arith.constant 0 : index
      %63 = vector.load %arg10[%c0_80, %c0_81] : memref<18x64xbf16, #tpu.memory_space<vmem>>, vector<18x64xbf16>
      tpu.vector_store %arg10[%c0_80, %c0_81], %62 {strides = array<i32>} : memref<18x64xbf16, #tpu.memory_space<vmem>>, vector<18x64xbf16>,
      %c1_i32_82 = arith.constant 1 : i32
      %64 = arith.addi %11, %c1_i32_82 : i32
      %65 = arith.index_cast %64 : i32 to index
      %c1_83 = arith.constant 1 : index
      %c0_84 = arith.constant 0 : index
      %66 = vector.load %arg8[%65, %c1_83, %c0_84] : memref<18x18x64xbf16, #tpu.memory_space<vmem>>, vector<8x16x64xbf16>
      tpu.vector_store %arg8[%65, %c1_83, %c0_84], %58 {strides = array<i32>} : memref<18x18x64xbf16, #tpu.memory_space<vmem>>, vector<8x16x64xbf16>,
    }
    %c2_i32_15 = arith.constant 2 : i32
    %c0_i32_16 = arith.constant 0 : i32
    %c18_i32 = arith.constant 18 : i32
    %8 = arith.addi %c0_i32_16, %c18_i32 : i32
    %c1_i32_17 = arith.constant 1 : i32
    scf.for %arg11 = %c0_i32_16 to %8 step %c1_i32_17  : i32 {
      %c0_i32_23 = arith.constant 0 : i32
      %c2_i32_24 = arith.constant 2 : i32
      %10 = arith.addi %c0_i32_23, %c2_i32_24 : i32
      %c1_i32_25 = arith.constant 1 : i32
      scf.for %arg12 = %c0_i32_23 to %10 step %c1_i32_25  : i32 {
        %c8_i32 = arith.constant 8 : i32
        %11 = arith.muli %arg12, %c8_i32 : i32
        %12 = tpu.assume_multiple %11, 8 : i32
        %c0_i32_27 = arith.constant 0 : i32
        %13 = arith.addi %12, %c0_i32_27 : i32
        %14 = arith.index_cast %13 : i32 to index
        %c0_28 = arith.constant 0 : index
        %c0_29 = arith.constant 0 : index
        %15 = vector.load %arg8[%14, %c0_28, %c0_29] : memref<18x18x64xbf16, #tpu.memory_space<vmem>>, vector<8x16x64xbf16>
        %c0_30 = arith.constant 0 : index
        %c0_31 = arith.constant 0 : index
        %c0_32 = arith.constant 0 : index
        %16 = vector.load %arg9[%c0_30, %c0_31, %c0_32] : memref<8x16x576xbf16, #tpu.memory_space<vmem>>, vector<8x16x64xbf16>
        tpu.vector_store %arg9[%c0_30, %c0_31, %c0_32], %15 {strides = array<i32>} : memref<8x16x576xbf16, #tpu.memory_space<vmem>>, vector<8x16x64xbf16>,
        %c0_i32_33 = arith.constant 0 : i32
        %17 = arith.addi %12, %c0_i32_33 : i32
        %18 = arith.index_cast %17 : i32 to index
        %c1 = arith.constant 1 : index
        %c0_34 = arith.constant 0 : index
        %19 = vector.load %arg8[%18, %c1, %c0_34] : memref<18x18x64xbf16, #tpu.memory_space<vmem>>, vector<8x16x64xbf16>
        %c0_35 = arith.constant 0 : index
        %c0_36 = arith.constant 0 : index
        %c64 = arith.constant 64 : index
        %20 = vector.load %arg9[%c0_35, %c0_36, %c64] : memref<8x16x576xbf16, #tpu.memory_space<vmem>>, vector<8x16x64xbf16>
        tpu.vector_store %arg9[%c0_35, %c0_36, %c64], %19 {strides = array<i32>} : memref<8x16x576xbf16, #tpu.memory_space<vmem>>, vector<8x16x64xbf16>,
        %c0_i32_37 = arith.constant 0 : i32
        %21 = arith.addi %12, %c0_i32_37 : i32
        %22 = arith.index_cast %21 : i32 to index
        %c2 = arith.constant 2 : index
        %c0_38 = arith.constant 0 : index
        %23 = vector.load %arg8[%22, %c2, %c0_38] : memref<18x18x64xbf16, #tpu.memory_space<vmem>>, vector<8x16x64xbf16>
        %c0_39 = arith.constant 0 : index
        %c0_40 = arith.constant 0 : index
        %c128 = arith.constant 128 : index
        %24 = vector.load %arg9[%c0_39, %c0_40, %c128] : memref<8x16x576xbf16, #tpu.memory_space<vmem>>, vector<8x16x64xbf16>
        tpu.vector_store %arg9[%c0_39, %c0_40, %c128], %23 {strides = array<i32>} : memref<8x16x576xbf16, #tpu.memory_space<vmem>>, vector<8x16x64xbf16>,
        %c1_i32_41 = arith.constant 1 : i32
        %25 = arith.addi %12, %c1_i32_41 : i32
        %26 = arith.index_cast %25 : i32 to index
        %c0_42 = arith.constant 0 : index
        %c0_43 = arith.constant 0 : index
        %27 = vector.load %arg8[%26, %c0_42, %c0_43] : memref<18x18x64xbf16, #tpu.memory_space<vmem>>, vector<8x16x64xbf16>
        %c0_44 = arith.constant 0 : index
        %c0_45 = arith.constant 0 : index
        %c192 = arith.constant 192 : index
        %28 = vector.load %arg9[%c0_44, %c0_45, %c192] : memref<8x16x576xbf16, #tpu.memory_space<vmem>>, vector<8x16x64xbf16>
        tpu.vector_store %arg9[%c0_44, %c0_45, %c192], %27 {strides = array<i32>} : memref<8x16x576xbf16, #tpu.memory_space<vmem>>, vector<8x16x64xbf16>,
        %c1_i32_46 = arith.constant 1 : i32
        %29 = arith.addi %12, %c1_i32_46 : i32
        %30 = arith.index_cast %29 : i32 to index
        %c1_47 = arith.constant 1 : index
        %c0_48 = arith.constant 0 : index
        %31 = vector.load %arg8[%30, %c1_47, %c0_48] : memref<18x18x64xbf16, #tpu.memory_space<vmem>>, vector<8x16x64xbf16>
        %c0_49 = arith.constant 0 : index
        %c0_50 = arith.constant 0 : index
        %c256 = arith.constant 256 : index
        %32 = vector.load %arg9[%c0_49, %c0_50, %c256] : memref<8x16x576xbf16, #tpu.memory_space<vmem>>, vector<8x16x64xbf16>
        tpu.vector_store %arg9[%c0_49, %c0_50, %c256], %31 {strides = array<i32>} : memref<8x16x576xbf16, #tpu.memory_space<vmem>>, vector<8x16x64xbf16>,
        %c1_i32_51 = arith.constant 1 : i32
        %33 = arith.addi %12, %c1_i32_51 : i32
        %34 = arith.index_cast %33 : i32 to index
        %c2_52 = arith.constant 2 : index
        %c0_53 = arith.constant 0 : index
        %35 = vector.load %arg8[%34, %c2_52, %c0_53] : memref<18x18x64xbf16, #tpu.memory_space<vmem>>, vector<8x16x64xbf16>
        %c0_54 = arith.constant 0 : index
        %c0_55 = arith.constant 0 : index
        %c320 = arith.constant 320 : index
        %36 = vector.load %arg9[%c0_54, %c0_55, %c320] : memref<8x16x576xbf16, #tpu.memory_space<vmem>>, vector<8x16x64xbf16>
        tpu.vector_store %arg9[%c0_54, %c0_55, %c320], %35 {strides = array<i32>} : memref<8x16x576xbf16, #tpu.memory_space<vmem>>, vector<8x16x64xbf16>,
        %c2_i32_56 = arith.constant 2 : i32
        %37 = arith.addi %12, %c2_i32_56 : i32
        %38 = arith.index_cast %37 : i32 to index
        %c0_57 = arith.constant 0 : index
        %c0_58 = arith.constant 0 : index
        %39 = vector.load %arg8[%38, %c0_57, %c0_58] : memref<18x18x64xbf16, #tpu.memory_space<vmem>>, vector<8x16x64xbf16>
        %c0_59 = arith.constant 0 : index
        %c0_60 = arith.constant 0 : index
        %c384 = arith.constant 384 : index
        %40 = vector.load %arg9[%c0_59, %c0_60, %c384] : memref<8x16x576xbf16, #tpu.memory_space<vmem>>, vector<8x16x64xbf16>
        tpu.vector_store %arg9[%c0_59, %c0_60, %c384], %39 {strides = array<i32>} : memref<8x16x576xbf16, #tpu.memory_space<vmem>>, vector<8x16x64xbf16>,
        %c2_i32_61 = arith.constant 2 : i32
        %41 = arith.addi %12, %c2_i32_61 : i32
        %42 = arith.index_cast %41 : i32 to index
        %c1_62 = arith.constant 1 : index
        %c0_63 = arith.constant 0 : index
        %43 = vector.load %arg8[%42, %c1_62, %c0_63] : memref<18x18x64xbf16, #tpu.memory_space<vmem>>, vector<8x16x64xbf16>
        %c0_64 = arith.constant 0 : index
        %c0_65 = arith.constant 0 : index
        %c448 = arith.constant 448 : index
        %44 = vector.load %arg9[%c0_64, %c0_65, %c448] : memref<8x16x576xbf16, #tpu.memory_space<vmem>>, vector<8x16x64xbf16>
        tpu.vector_store %arg9[%c0_64, %c0_65, %c448], %43 {strides = array<i32>} : memref<8x16x576xbf16, #tpu.memory_space<vmem>>, vector<8x16x64xbf16>,
        %c2_i32_66 = arith.constant 2 : i32
        %45 = arith.addi %12, %c2_i32_66 : i32
        %46 = arith.index_cast %45 : i32 to index
        %c2_67 = arith.constant 2 : index
        %c0_68 = arith.constant 0 : index
        %47 = vector.load %arg8[%46, %c2_67, %c0_68] : memref<18x18x64xbf16, #tpu.memory_space<vmem>>, vector<8x16x64xbf16>
        %c0_69 = arith.constant 0 : index
        %c0_70 = arith.constant 0 : index
        %c512 = arith.constant 512 : index
        %48 = vector.load %arg9[%c0_69, %c0_70, %c512] : memref<8x16x576xbf16, #tpu.memory_space<vmem>>, vector<8x16x64xbf16>
        tpu.vector_store %arg9[%c0_69, %c0_70, %c512], %47 {strides = array<i32>} : memref<8x16x576xbf16, #tpu.memory_space<vmem>>, vector<8x16x64xbf16>,
        %c0_i32_71 = arith.constant 0 : i32
        %49 = arith.cmpi sgt, %arg12, %c0_i32_71 : i32
        %50 = arith.extui %49 : i1 to i32
        %c0_i32_72 = arith.constant 0 : i32
        %51 = arith.cmpi ne, %50, %c0_i32_72 : i32
        scf.if %51 {
          %c0_88 = arith.constant 0 : index
          %c0_89 = arith.constant 0 : index
          %70 = vector.load %arg10[%c0_88, %c0_89] : memref<18x64xbf16, #tpu.memory_space<vmem>>, vector<16x64xbf16>
          %71 = vector.shape_cast %70 : vector<16x64xbf16> to vector<1x16x64xbf16>
          %c0_90 = arith.constant 0 : index
          %c0_91 = arith.constant 0 : index
          %c0_92 = arith.constant 0 : index
          %72 = vector.load %arg9[%c0_90, %c0_91, %c0_92] : memref<8x16x576xbf16, #tpu.memory_space<vmem>>, vector<1x16x64xbf16>
          tpu.vector_store %arg9[%c0_90, %c0_91, %c0_92], %71 {strides = array<i32>} : memref<8x16x576xbf16, #tpu.memory_space<vmem>>, vector<1x16x64xbf16>,
          %c1_93 = arith.constant 1 : index
          %c0_94 = arith.constant 0 : index
          %73 = vector.load %arg10[%c1_93, %c0_94] : memref<18x64xbf16, #tpu.memory_space<vmem>>, vector<16x64xbf16>
          %74 = vector.shape_cast %73 : vector<16x64xbf16> to vector<1x16x64xbf16>
          %c0_95 = arith.constant 0 : index
          %c0_96 = arith.constant 0 : index
          %c64_97 = arith.constant 64 : index
          %75 = vector.load %arg9[%c0_95, %c0_96, %c64_97] : memref<8x16x576xbf16, #tpu.memory_space<vmem>>, vector<1x16x64xbf16>
          tpu.vector_store %arg9[%c0_95, %c0_96, %c64_97], %74 {strides = array<i32>} : memref<8x16x576xbf16, #tpu.memory_space<vmem>>, vector<1x16x64xbf16>,
          %c2_98 = arith.constant 2 : index
          %c0_99 = arith.constant 0 : index
          %76 = vector.load %arg10[%c2_98, %c0_99] : memref<18x64xbf16, #tpu.memory_space<vmem>>, vector<16x64xbf16>
          %77 = vector.shape_cast %76 : vector<16x64xbf16> to vector<1x16x64xbf16>
          %c0_100 = arith.constant 0 : index
          %c0_101 = arith.constant 0 : index
          %c128_102 = arith.constant 128 : index
          %78 = vector.load %arg9[%c0_100, %c0_101, %c128_102] : memref<8x16x576xbf16, #tpu.memory_space<vmem>>, vector<1x16x64xbf16>
          tpu.vector_store %arg9[%c0_100, %c0_101, %c128_102], %77 {strides = array<i32>} : memref<8x16x576xbf16, #tpu.memory_space<vmem>>, vector<1x16x64xbf16>,
        } else {
        }
        %c0_73 = arith.constant 0 : index
        %c0_74 = arith.constant 0 : index
        %c0_75 = arith.constant 0 : index
        %52 = vector.load %arg9[%c0_73, %c0_74, %c0_75] : memref<8x16x576xbf16, #tpu.memory_space<vmem>>, vector<8x16x576xbf16>
        %53 = vector.shape_cast %52 : vector<8x16x576xbf16> to vector<128x576xbf16>
        %54 = arith.index_cast %arg11 : i32 to index
        %c0_76 = arith.constant 0 : index
        %c0_77 = arith.constant 0 : index
        %55 = vector.load %arg5[%54, %c0_76, %c0_77] : memref<18x576x64xbf16, #tpu.memory_space<vmem>>, vector<1x576x64xbf16>
        %56 = vector.shape_cast %55 : vector<1x576x64xbf16> to vector<576x64xbf16>
        %cst_78 = arith.constant dense<0.000000e+00> : vector<128x64xf32>
        %57 = tpu.matmul %53, %56, %cst_78 {dimension_numbers = #tpu.dot_dimension_numbers<[1], [0], [0], [1], [0, 0, 1, 1], [], []>} : vector<128x576xbf16>, vector<576x64xbf16>, vector<128x64xf32> -> vector<128x64xf32>
        %cst_79 = arith.constant 0.000000e+00 : f32
        %58 = vector.broadcast %cst_79 : f32 to vector<128x64xf32>
        %59 = arith.maximumf %57, %58 : vector<128x64xf32>
        %60 = arith.truncf %59 : vector<128x64xf32> to vector<128x64xbf16>
        %61 = vector.shape_cast %60 : vector<128x64xbf16> to vector<8x16x64xbf16>
        %c8_i32_80 = arith.constant 8 : i32
        %62 = arith.addi %12, %c8_i32_80 : i32
        %63 = arith.index_cast %62 : i32 to index
        %c0_81 = arith.constant 0 : index
        %c0_82 = arith.constant 0 : index
        %64 = vector.load %arg8[%63, %c0_81, %c0_82] : memref<18x18x64xbf16, #tpu.memory_space<vmem>>, vector<1x18x64xbf16>
        %65 = vector.shape_cast %64 : vector<1x18x64xbf16> to vector<18x64xbf16>
        %c0_83 = arith.constant 0 : index
        %c0_84 = arith.constant 0 : index
        %66 = vector.load %arg10[%c0_83, %c0_84] : memref<18x64xbf16, #tpu.memory_space<vmem>>, vector<18x64xbf16>
        tpu.vector_store %arg10[%c0_83, %c0_84], %65 {strides = array<i32>} : memref<18x64xbf16, #tpu.memory_space<vmem>>, vector<18x64xbf16>,
        %c1_i32_85 = arith.constant 1 : i32
        %67 = arith.addi %12, %c1_i32_85 : i32
        %68 = arith.index_cast %67 : i32 to index
        %c1_86 = arith.constant 1 : index
        %c0_87 = arith.constant 0 : index
        %69 = vector.load %arg8[%68, %c1_86, %c0_87] : memref<18x18x64xbf16, #tpu.memory_space<vmem>>, vector<8x16x64xbf16>
        tpu.vector_store %arg8[%68, %c1_86, %c0_87], %61 {strides = array<i32>} : memref<18x18x64xbf16, #tpu.memory_space<vmem>>, vector<8x16x64xbf16>,
      }
      %c2_i32_26 = arith.constant 2 : i32
    }
    %c18_i32_18 = arith.constant 18 : i32
    %c0_i32_19 = arith.constant 0 : i32
    %c2_i32_20 = arith.constant 2 : i32
    %9 = arith.addi %c0_i32_19, %c2_i32_20 : i32
    %c1_i32_21 = arith.constant 1 : i32
    scf.for %arg11 = %c0_i32_19 to %9 step %c1_i32_21  : i32 {
      %c8_i32 = arith.constant 8 : i32
      %10 = arith.muli %arg11, %c8_i32 : i32
      %11 = tpu.assume_multiple %10, 8 : i32
      %cst_23 = arith.constant 0.000000e+00 : f32
      %12 = vector.broadcast %cst_23 : f32 to vector<8x16x64xf32>
      %c0_i32_24 = arith.constant 0 : i32
      %13 = arith.addi %11, %c0_i32_24 : i32
      %14 = arith.index_cast %13 : i32 to index
      %c0_25 = arith.constant 0 : index
      %c0_26 = arith.constant 0 : index
      %15 = vector.load %arg8[%14, %c0_25, %c0_26] : memref<18x18x64xbf16, #tpu.memory_space<vmem>>, vector<8x16x64xbf16>
      %16 = arith.extf %15 : vector<8x16x64xbf16> to vector<8x16x64xf32>
      %c0_27 = arith.constant 0 : index
      %c0_28 = arith.constant 0 : index
      %c0_29 = arith.constant 0 : index
      %17 = vector.load %arg6[%c0_27, %c0_28, %c0_29] : memref<3x3x64xf32, #tpu.memory_space<vmem>>, vector<1x1x64xf32>
      %18 = vector.shape_cast %17 : vector<1x1x64xf32> to vector<64xf32>
      %19 = vector.shape_cast %18 : vector<64xf32> to vector<1x1x64xf32>
      %20 = vector.broadcast %19 : vector<1x1x64xf32> to vector<8x16x64xf32>
      %21 = arith.mulf %16, %20 : vector<8x16x64xf32>
      %22 = arith.addf %12, %21 : vector<8x16x64xf32>
      %c0_i32_30 = arith.constant 0 : i32
      %23 = arith.addi %11, %c0_i32_30 : i32
      %24 = arith.index_cast %23 : i32 to index
      %c1 = arith.constant 1 : index
      %c0_31 = arith.constant 0 : index
      %25 = vector.load %arg8[%24, %c1, %c0_31] : memref<18x18x64xbf16, #tpu.memory_space<vmem>>, vector<8x16x64xbf16>
      %26 = arith.extf %25 : vector<8x16x64xbf16> to vector<8x16x64xf32>
      %c0_32 = arith.constant 0 : index
      %c1_33 = arith.constant 1 : index
      %c0_34 = arith.constant 0 : index
      %27 = vector.load %arg6[%c0_32, %c1_33, %c0_34] : memref<3x3x64xf32, #tpu.memory_space<vmem>>, vector<1x1x64xf32>
      %28 = vector.shape_cast %27 : vector<1x1x64xf32> to vector<64xf32>
      %29 = vector.shape_cast %28 : vector<64xf32> to vector<1x1x64xf32>
      %30 = vector.broadcast %29 : vector<1x1x64xf32> to vector<8x16x64xf32>
      %31 = arith.mulf %26, %30 : vector<8x16x64xf32>
      %32 = arith.addf %22, %31 : vector<8x16x64xf32>
      %c0_i32_35 = arith.constant 0 : i32
      %33 = arith.addi %11, %c0_i32_35 : i32
      %34 = arith.index_cast %33 : i32 to index
      %c2 = arith.constant 2 : index
      %c0_36 = arith.constant 0 : index
      %35 = vector.load %arg8[%34, %c2, %c0_36] : memref<18x18x64xbf16, #tpu.memory_space<vmem>>, vector<8x16x64xbf16>
      %36 = arith.extf %35 : vector<8x16x64xbf16> to vector<8x16x64xf32>
      %c0_37 = arith.constant 0 : index
      %c2_38 = arith.constant 2 : index
      %c0_39 = arith.constant 0 : index
      %37 = vector.load %arg6[%c0_37, %c2_38, %c0_39] : memref<3x3x64xf32, #tpu.memory_space<vmem>>, vector<1x1x64xf32>
      %38 = vector.shape_cast %37 : vector<1x1x64xf32> to vector<64xf32>
      %39 = vector.shape_cast %38 : vector<64xf32> to vector<1x1x64xf32>
      %40 = vector.broadcast %39 : vector<1x1x64xf32> to vector<8x16x64xf32>
      %41 = arith.mulf %36, %40 : vector<8x16x64xf32>
      %42 = arith.addf %32, %41 : vector<8x16x64xf32>
      %c1_i32_40 = arith.constant 1 : i32
      %43 = arith.addi %11, %c1_i32_40 : i32
      %44 = arith.index_cast %43 : i32 to index
      %c0_41 = arith.constant 0 : index
      %c0_42 = arith.constant 0 : index
      %45 = vector.load %arg8[%44, %c0_41, %c0_42] : memref<18x18x64xbf16, #tpu.memory_space<vmem>>, vector<8x16x64xbf16>
      %46 = arith.extf %45 : vector<8x16x64xbf16> to vector<8x16x64xf32>
      %c1_43 = arith.constant 1 : index
      %c0_44 = arith.constant 0 : index
      %c0_45 = arith.constant 0 : index
      %47 = vector.load %arg6[%c1_43, %c0_44, %c0_45] : memref<3x3x64xf32, #tpu.memory_space<vmem>>, vector<1x1x64xf32>
      %48 = vector.shape_cast %47 : vector<1x1x64xf32> to vector<64xf32>
      %49 = vector.shape_cast %48 : vector<64xf32> to vector<1x1x64xf32>
      %50 = vector.broadcast %49 : vector<1x1x64xf32> to vector<8x16x64xf32>
      %51 = arith.mulf %46, %50 : vector<8x16x64xf32>
      %52 = arith.addf %42, %51 : vector<8x16x64xf32>
      %c1_i32_46 = arith.constant 1 : i32
      %53 = arith.addi %11, %c1_i32_46 : i32
      %54 = arith.index_cast %53 : i32 to index
      %c1_47 = arith.constant 1 : index
      %c0_48 = arith.constant 0 : index
      %55 = vector.load %arg8[%54, %c1_47, %c0_48] : memref<18x18x64xbf16, #tpu.memory_space<vmem>>, vector<8x16x64xbf16>
      %56 = arith.extf %55 : vector<8x16x64xbf16> to vector<8x16x64xf32>
      %c1_49 = arith.constant 1 : index
      %c1_50 = arith.constant 1 : index
      %c0_51 = arith.constant 0 : index
      %57 = vector.load %arg6[%c1_49, %c1_50, %c0_51] : memref<3x3x64xf32, #tpu.memory_space<vmem>>, vector<1x1x64xf32>
      %58 = vector.shape_cast %57 : vector<1x1x64xf32> to vector<64xf32>
      %59 = vector.shape_cast %58 : vector<64xf32> to vector<1x1x64xf32>
      %60 = vector.broadcast %59 : vector<1x1x64xf32> to vector<8x16x64xf32>
      %61 = arith.mulf %56, %60 : vector<8x16x64xf32>
      %62 = arith.addf %52, %61 : vector<8x16x64xf32>
      %c1_i32_52 = arith.constant 1 : i32
      %63 = arith.addi %11, %c1_i32_52 : i32
      %64 = arith.index_cast %63 : i32 to index
      %c2_53 = arith.constant 2 : index
      %c0_54 = arith.constant 0 : index
      %65 = vector.load %arg8[%64, %c2_53, %c0_54] : memref<18x18x64xbf16, #tpu.memory_space<vmem>>, vector<8x16x64xbf16>
      %66 = arith.extf %65 : vector<8x16x64xbf16> to vector<8x16x64xf32>
      %c1_55 = arith.constant 1 : index
      %c2_56 = arith.constant 2 : index
      %c0_57 = arith.constant 0 : index
      %67 = vector.load %arg6[%c1_55, %c2_56, %c0_57] : memref<3x3x64xf32, #tpu.memory_space<vmem>>, vector<1x1x64xf32>
      %68 = vector.shape_cast %67 : vector<1x1x64xf32> to vector<64xf32>
      %69 = vector.shape_cast %68 : vector<64xf32> to vector<1x1x64xf32>
      %70 = vector.broadcast %69 : vector<1x1x64xf32> to vector<8x16x64xf32>
      %71 = arith.mulf %66, %70 : vector<8x16x64xf32>
      %72 = arith.addf %62, %71 : vector<8x16x64xf32>
      %c2_i32_58 = arith.constant 2 : i32
      %73 = arith.addi %11, %c2_i32_58 : i32
      %74 = arith.index_cast %73 : i32 to index
      %c0_59 = arith.constant 0 : index
      %c0_60 = arith.constant 0 : index
      %75 = vector.load %arg8[%74, %c0_59, %c0_60] : memref<18x18x64xbf16, #tpu.memory_space<vmem>>, vector<8x16x64xbf16>
      %76 = arith.extf %75 : vector<8x16x64xbf16> to vector<8x16x64xf32>
      %c2_61 = arith.constant 2 : index
      %c0_62 = arith.constant 0 : index
      %c0_63 = arith.constant 0 : index
      %77 = vector.load %arg6[%c2_61, %c0_62, %c0_63] : memref<3x3x64xf32, #tpu.memory_space<vmem>>, vector<1x1x64xf32>
      %78 = vector.shape_cast %77 : vector<1x1x64xf32> to vector<64xf32>
      %79 = vector.shape_cast %78 : vector<64xf32> to vector<1x1x64xf32>
      %80 = vector.broadcast %79 : vector<1x1x64xf32> to vector<8x16x64xf32>
      %81 = arith.mulf %76, %80 : vector<8x16x64xf32>
      %82 = arith.addf %72, %81 : vector<8x16x64xf32>
      %c2_i32_64 = arith.constant 2 : i32
      %83 = arith.addi %11, %c2_i32_64 : i32
      %84 = arith.index_cast %83 : i32 to index
      %c1_65 = arith.constant 1 : index
      %c0_66 = arith.constant 0 : index
      %85 = vector.load %arg8[%84, %c1_65, %c0_66] : memref<18x18x64xbf16, #tpu.memory_space<vmem>>, vector<8x16x64xbf16>
      %86 = arith.extf %85 : vector<8x16x64xbf16> to vector<8x16x64xf32>
      %c2_67 = arith.constant 2 : index
      %c1_68 = arith.constant 1 : index
      %c0_69 = arith.constant 0 : index
      %87 = vector.load %arg6[%c2_67, %c1_68, %c0_69] : memref<3x3x64xf32, #tpu.memory_space<vmem>>, vector<1x1x64xf32>
      %88 = vector.shape_cast %87 : vector<1x1x64xf32> to vector<64xf32>
      %89 = vector.shape_cast %88 : vector<64xf32> to vector<1x1x64xf32>
      %90 = vector.broadcast %89 : vector<1x1x64xf32> to vector<8x16x64xf32>
      %91 = arith.mulf %86, %90 : vector<8x16x64xf32>
      %92 = arith.addf %82, %91 : vector<8x16x64xf32>
      %c2_i32_70 = arith.constant 2 : i32
      %93 = arith.addi %11, %c2_i32_70 : i32
      %94 = arith.index_cast %93 : i32 to index
      %c2_71 = arith.constant 2 : index
      %c0_72 = arith.constant 0 : index
      %95 = vector.load %arg8[%94, %c2_71, %c0_72] : memref<18x18x64xbf16, #tpu.memory_space<vmem>>, vector<8x16x64xbf16>
      %96 = arith.extf %95 : vector<8x16x64xbf16> to vector<8x16x64xf32>
      %c2_73 = arith.constant 2 : index
      %c2_74 = arith.constant 2 : index
      %c0_75 = arith.constant 0 : index
      %97 = vector.load %arg6[%c2_73, %c2_74, %c0_75] : memref<3x3x64xf32, #tpu.memory_space<vmem>>, vector<1x1x64xf32>
      %98 = vector.shape_cast %97 : vector<1x1x64xf32> to vector<64xf32>
      %99 = vector.shape_cast %98 : vector<64xf32> to vector<1x1x64xf32>
      %100 = vector.broadcast %99 : vector<1x1x64xf32> to vector<8x16x64xf32>
      %101 = arith.mulf %96, %100 : vector<8x16x64xf32>
      %102 = arith.addf %92, %101 : vector<8x16x64xf32>
      %cst_76 = arith.constant dense<0.000000e+00> : vector<8x16xf32>
      %103 = vector.multi_reduction <add>, %102, %cst_76 [2] : vector<8x16x64xf32> to vector<8x16xf32>
      %104 = vector.shape_cast %103 : vector<8x16xf32> to vector<8x16x1xf32>
      %c0_77 = arith.constant 0 : index
      %105 = arith.index_cast %11 : i32 to index
      %c0_78 = arith.constant 0 : index
      %c0_79 = arith.constant 0 : index
      %106 = vector.load %arg2[%c0_77, %105, %c0_78, %c0_79] : memref<1x16x16x1xf32, #tpu.memory_space<vmem>>, vector<1x8x16x1xf32>
      %107 = vector.shape_cast %106 : vector<1x8x16x1xf32> to vector<8x16x1xf32>
      %c2_80 = arith.constant 2 : index
      %108 = memref.load %arg1[%c2_80] : memref<6xf32, #tpu.memory_space<smem>>
      %109 = vector.broadcast %108 : f32 to vector<8x16x1xf32>
      %110 = arith.mulf %107, %109 : vector<8x16x1xf32>
      %c3 = arith.constant 3 : index
      %111 = memref.load %arg1[%c3] : memref<6xf32, #tpu.memory_space<smem>>
      %112 = vector.broadcast %111 : f32 to vector<8x16x1xf32>
      %113 = arith.addf %110, %112 : vector<8x16x1xf32>
      %114 = arith.addf %104, %113 : vector<8x16x1xf32>
      %c4 = arith.constant 4 : index
      %115 = memref.load %arg1[%c4] : memref<6xf32, #tpu.memory_space<smem>>
      %116 = vector.broadcast %115 : f32 to vector<8x16x1xf32>
      %117 = arith.mulf %114, %116 : vector<8x16x1xf32>
      %c5 = arith.constant 5 : index
      %118 = memref.load %arg1[%c5] : memref<6xf32, #tpu.memory_space<smem>>
      %119 = vector.broadcast %118 : f32 to vector<8x16x1xf32>
      %120 = arith.addf %117, %119 : vector<8x16x1xf32>
      %c0_81 = arith.constant 0 : index
      %121 = arith.index_cast %11 : i32 to index
      %c0_82 = arith.constant 0 : index
      %c0_83 = arith.constant 0 : index
      %122 = vector.load %arg7[%c0_81, %121, %c0_82, %c0_83] : memref<1x16x16x1xf32, #tpu.memory_space<vmem>>, vector<1x8x16x1xf32>
      %123 = vector.shape_cast %122 : vector<1x8x16x1xf32> to vector<8x16x1xf32>
      %124 = vector.shape_cast %120 : vector<8x16x1xf32> to vector<1x8x16x1xf32>
      tpu.vector_store %arg7[%c0_81, %121, %c0_82, %c0_83], %124 {strides = array<i32>} : memref<1x16x16x1xf32, #tpu.memory_space<vmem>>, vector<1x8x16x1xf32>,
    }
    %c2_i32_22 = arith.constant 2 : i32
    return
  }
  func.func @transform_0(%arg0: i32) -> i32 {
    %c0_i32 = arith.constant 0 : i32
    %c0_i32_0 = arith.constant 0 : i32
    return %c0_i32 : i32
  }
  func.func @transform_1(%arg0: i32) -> (i32, i32, i32, i32) {
    %c0_i32 = arith.constant 0 : i32
    %c0_i32_0 = arith.constant 0 : i32
    %c0_i32_1 = arith.constant 0 : i32
    %c0_i32_2 = arith.constant 0 : i32
    return %arg0, %c0_i32, %c0_i32_0, %c0_i32_1 : i32, i32, i32, i32
  }
  func.func @transform_2(%arg0: i32) -> (i32, i32, i32, i32) {
    %c0_i32 = arith.constant 0 : i32
    %c0_i32_0 = arith.constant 0 : i32
    %c0_i32_1 = arith.constant 0 : i32
    %c0_i32_2 = arith.constant 0 : i32
    return %arg0, %c0_i32, %c0_i32_0, %c0_i32_1 : i32, i32, i32, i32
  }
  func.func @transform_3(%arg0: i32) -> (i32, i32) {
    %c0_i32 = arith.constant 0 : i32
    %c0_i32_0 = arith.constant 0 : i32
    %c0_i32_1 = arith.constant 0 : i32
    return %c0_i32, %c0_i32_0 : i32, i32
  }
  func.func @transform_4(%arg0: i32) -> (i32, i32, i32) {
    %c0_i32 = arith.constant 0 : i32
    %c0_i32_0 = arith.constant 0 : i32
    %c0_i32_1 = arith.constant 0 : i32
    %c0_i32_2 = arith.constant 0 : i32
    return %c0_i32, %c0_i32_0, %c0_i32_1 : i32, i32, i32
  }
  func.func @transform_5(%arg0: i32) -> (i32, i32, i32) {
    %c0_i32 = arith.constant 0 : i32
    %c0_i32_0 = arith.constant 0 : i32
    %c0_i32_1 = arith.constant 0 : i32
    %c0_i32_2 = arith.constant 0 : i32
    return %c0_i32, %c0_i32_0, %c0_i32_1 : i32, i32, i32
  }
  func.func @transform_6(%arg0: i32) -> (i32, i32, i32, i32) {
    %c0_i32 = arith.constant 0 : i32
    %c0_i32_0 = arith.constant 0 : i32
    %c0_i32_1 = arith.constant 0 : i32
    %c0_i32_2 = arith.constant 0 : i32
    return %arg0, %c0_i32, %c0_i32_0, %c0_i32_1 : i32, i32, i32, i32
  }
}

</mosaic_0001>

<llo_original>
// kernel: vdsr_dem_forward.1
$region0: #{vdsr_dem_forward.1}
  #allocation0 [shape = 'u32[]', space=smem, size = 0x4, offset = 0x4, fixed_abs, tag = 'smem constant byte address 0x4 - core index']
  #allocation1 [shape = 'u32[144,128]{1,0:T(1,128)}', space=vmem, size = 0x12000, scoped, tag = 'internal scratch']
  #allocation2 [shape = 'bf16[18,18,64]{2,1,0:T(8,128)(2,1)}', space=vmem, size = 0x1b000, scoped, tag = 'scratch operand']
  #allocation3 [shape = 'bf16[8,16,576]{2,1,0:T(8,128)(2,1)}', space=vmem, size = 0x28000, scoped, tag = 'scratch operand']
  #allocation4 [shape = 'bf16[18,64]{1,0:T(8,128)(2,1)}', space=vmem, size = 0x1800, scoped, tag = 'scratch operand']
  %s0 = inlined_call_operand.vmem [shape: f32[6], index: 0, kind: input, shape index: {}]
  %s1 = inlined_call_operand.vmem [shape: f32[2,16,16,1], index: 1, kind: input, shape index: {}]
  %s2 = inlined_call_operand.vmem [shape: f32[2,16,16,1], index: 2, kind: input, shape index: {}]
  %s3 = inlined_call_operand.vmem [shape: bf16[18,64], index: 3, kind: input, shape index: {}]
  %s4 = inlined_call_operand.vmem [shape: bf16[18,576,64], index: 4, kind: input, shape index: {}]
  %s5 = inlined_call_operand.vmem [shape: f32[3,3,64], index: 5, kind: input, shape index: {}]
  %s6 = inlined_call_operand.vmem [shape: f32[2,16,16,1], index: 6, kind: output, shape index: {}]
  %s7 = sld [smem:[#allocation0]]
  $region104: #{vdsr_dem_forward.1} parent=0
    _
  %s9 = ssub.s32 1, %s7
  %s10 = scalar_select 0, %s9, %s7
  $region1: #{vdsr_dem_forward.1} parent=0
    #allocation5 [shape = 'u8[512]{0}', space=smem, size = 0x200, scoped, tag = 'input window, operand 0, single buffered']
    #allocation6 [shape = 's32[2]{0}', space=sflag, size = 0x8, scoped, tag = 'scoped memory for vdsr_dem_forward.1']
    %11 = vsyncpa [#allocation6], 0
    loop: start=0, step=1, limit=4
    $region2: #{vdsr_dem_forward.1} parent=1 // loop_pre_header
      _
    $region3: #{vdsr_dem_forward.1} parent=1 // loop_header
      %s13 = sphi 0, %s17
      %p14 = scmp.ge.s32.totalorder %s13, 4
      %s21 = sphi 0, %s21
      %s23 = sphi 0, %s21
      %s24 = sphi 0, %s23
      %s38 = sphi 0, %s24
      %s44 = sphi 0, %s46
      %s47 = sphi 0, %s44
      %s48 = sphi 0, %s47
      %s64 = sphi 0, %s48
      %s70 = sphi 0, %s72
      %s73 = sphi 0, %s70
      %s74 = sphi 0, %s73
      %s90 = sphi 0, %s74
      %s94 = sphi 0, %s94
      %s96 = sphi 0, %s94
      %s97 = sphi 0, %s96
      %s111 = sphi 0, %s97
      %s115 = sphi 0, %s115
      %s117 = sphi 0, %s115
      %s118 = sphi 0, %s117
      %s132 = sphi 0, %s118
      %s136 = sphi 0, %s136
      %s138 = sphi 0, %s136
      %s139 = sphi 0, %s138
      %s153 = sphi 0, %s139
      %s159 = sphi 0, %s161
      %s162 = sphi 0, %s159
      %s163 = sphi 0, %s162
      %s179 = sphi 0, %s163
    $region4: #{vdsr_dem_forward.1} parent=1 // loop_header_branch
      %16 = sbr.rel (%p14) target = $region8
    $region5: #{vdsr_dem_forward.1} parent=1 // loop_body
      %s18 = ssub.s32 %s13, 1
      %s19 = ssub.s32 %s13, 2
      %s20 = sadd.s32 %s13, 1
      %s22 = sadd.s32 %s21, 1
      %p25 = scmp.eq.s32.totalorder %s13, 1
      %p26 = scmp.ne.s32.totalorder %s21, %s23
      %p27 = scmp.eq.s32.totalorder %s13, 0
      %p28 = por %p26, %p27
      %p29 = scmp.ne.s32.totalorder %s21, %s23
      %p30 = scmp.eq.s32.totalorder %s18, 1
      %p31 = por %p29, %p30
      %p32 = scmp.ne.s32.totalorder %s23, %s24
      %p33 = scmp.eq.s32.totalorder %s18, 0
      %p34 = por %p32, %p33
      %p35 = scmp.ne.s32.totalorder %s23, %s24
      %p36 = scmp.eq.s32.totalorder %s19, 1
      %p37 = por %p35, %p36
      %p39 = scmp.ne.s32.totalorder %s24, %s38
      %p40 = scmp.eq.s32.totalorder %s19, 0
      %p41 = por %p39, %p40
      %s42 = ssub.s32 %s13, %s20
      %p43 = scmp.eq.s32.totalorder %s42, 0
      %s45 = sadd.s32 %s44, 1
      %s46 = scalar_select %p43, %s44, %s45
      %p49 = pneg %p43
      %p50 = scmp.eq.s32.totalorder %s13, 1
      %p51 = por %p49, %p50
      %p52 = scmp.ne.s32.totalorder %s44, %s47
      %p53 = scmp.eq.s32.totalorder %s13, 0
      %p54 = por %p52, %p53
      %p55 = scmp.ne.s32.totalorder %s44, %s47
      %p56 = scmp.eq.s32.totalorder %s18, 1
      %p57 = por %p55, %p56
      %p58 = scmp.ne.s32.totalorder %s47, %s48
      %p59 = scmp.eq.s32.totalorder %s18, 0
      %p60 = por %p58, %p59
      %p61 = scmp.ne.s32.totalorder %s47, %s48
      %p62 = scmp.eq.s32.totalorder %s19, 1
      %p63 = por %p61, %p62
      %p65 = scmp.ne.s32.totalorder %s48, %s64
      %p66 = scmp.eq.s32.totalorder %s19, 0
      %p67 = por %p65, %p66
      %s68 = ssub.s32 %s13, %s20
      %p69 = scmp.eq.s32.totalorder %s68, 0
      %s71 = sadd.s32 %s70, 1
      %s72 = scalar_select %p69, %s70, %s71
      %p75 = pneg %p69
      %p76 = scmp.eq.s32.totalorder %s13, 1
      %p77 = por %p75, %p76
      %p78 = scmp.ne.s32.totalorder %s70, %s73
      %p79 = scmp.eq.s32.totalorder %s13, 0
      %p80 = por %p78, %p79
      %p81 = scmp.ne.s32.totalorder %s70, %s73
      %p82 = scmp.eq.s32.totalorder %s18, 1
      %p83 = por %p81, %p82
      %p84 = scmp.ne.s32.totalorder %s73, %s74
      %p85 = scmp.eq.s32.totalorder %s18, 0
      %p86 = por %p84, %p85
      %p87 = scmp.ne.s32.totalorder %s73, %s74
      %p88 = scmp.eq.s32.totalorder %s19, 1
      %p89 = por %p87, %p88
      %p91 = scmp.ne.s32.totalorder %s74, %s90
      %p92 = scmp.eq.s32.totalorder %s19, 0
      %p93 = por %p91, %p92
      %s95 = sadd.s32 %s94, 1
      %p98 = scmp.eq.s32.totalorder %s13, 1
      %p99 = scmp.ne.s32.totalorder %s94, %s96
      %p100 = scmp.eq.s32.totalorder %s13, 0
      %p101 = por %p99, %p100
      %p102 = scmp.ne.s32.totalorder %s94, %s96
      %p103 = scmp.eq.s32.totalorder %s18, 1
      %p104 = por %p102, %p103
      %p105 = scmp.ne.s32.totalorder %s96, %s97
      %p106 = scmp.eq.s32.totalorder %s18, 0
      %p107 = por %p105, %p106
      %p108 = scmp.ne.s32.totalorder %s96, %s97
      %p109 = scmp.eq.s32.totalorder %s19, 1
      %p110 = por %p108, %p109
      %p112 = scmp.ne.s32.totalorder %s97, %s111
      %p113 = scmp.eq.s32.totalorder %s19, 0
      %p114 = por %p112, %p113
      %s116 = sadd.s32 %s115, 1
      %p119 = scmp.eq.s32.totalorder %s13, 1
      %p120 = scmp.ne.s32.totalorder %s115, %s117
      %p121 = scmp.eq.s32.totalorder %s13, 0
      %p122 = por %p120, %p121
      %p123 = scmp.ne.s32.totalorder %s115, %s117
      %p124 = scmp.eq.s32.totalorder %s18, 1
      %p125 = por %p123, %p124
      %p126 = scmp.ne.s32.totalorder %s117, %s118
      %p127 = scmp.eq.s32.totalorder %s18, 0
      %p128 = por %p126, %p127
      %p129 = scmp.ne.s32.totalorder %s117, %s118
      %p130 = scmp.eq.s32.totalorder %s19, 1
      %p131 = por %p129, %p130
      %p133 = scmp.ne.s32.totalorder %s118, %s132
      %p134 = scmp.eq.s32.totalorder %s19, 0
      %p135 = por %p133, %p134
      %s137 = sadd.s32 %s136, 1
      %p140 = scmp.eq.s32.totalorder %s13, 1
      %p141 = scmp.ne.s32.totalorder %s136, %s138
      %p142 = scmp.eq.s32.totalorder %s13, 0
      %p143 = por %p141, %p142
      %p144 = scmp.ne.s32.totalorder %s136, %s138
      %p145 = scmp.eq.s32.totalorder %s18, 1
      %p146 = por %p144, %p145
      %p147 = scmp.ne.s32.totalorder %s138, %s139
      %p148 = scmp.eq.s32.totalorder %s18, 0
      %p149 = por %p147, %p148
      %p150 = scmp.ne.s32.totalorder %s138, %s139
      %p151 = scmp.eq.s32.totalorder %s19, 1
      %p152 = por %p150, %p151
      %p154 = scmp.ne.s32.totalorder %s139, %s153
      %p155 = scmp.eq.s32.totalorder %s19, 0
      %p156 = por %p154, %p155
      %s157 = ssub.s32 %s13, %s20
      %p158 = scmp.eq.s32.totalorder %s157, 0
      %s160 = sadd.s32 %s159, 1
      %s161 = scalar_select %p158, %s159, %s160
      %p164 = pneg %p158
      %p165 = scmp.eq.s32.totalorder %s13, 1
      %p166 = por %p164, %p165
      %p167 = scmp.ne.s32.totalorder %s159, %s162
      %p168 = scmp.eq.s32.totalorder %s13, 0
      %p169 = por %p167, %p168
      %p170 = scmp.ne.s32.totalorder %s159, %s162
      %p171 = scmp.eq.s32.totalorder %s18, 1
      %p172 = por %p170, %p171
      %p173 = scmp.ne.s32.totalorder %s162, %s163
      %p174 = scmp.eq.s32.totalorder %s18, 0
      %p175 = por %p173, %p174
      %p176 = scmp.ne.s32.totalorder %s162, %s163
      %p177 = scmp.eq.s32.totalorder %s19, 1
      %p178 = por %p176, %p177
      %p180 = scmp.ne.s32.totalorder %s163, %s179
      %p181 = scmp.eq.s32.totalorder %s19, 0
      %p182 = por %p180, %p181
      %p183 = scmp.le.s32.totalorder 1, %s13
      %p184 = scmp.lt.s32.totalorder %s13, 3
      %p185 = pnand %p183, %p184
      %p186 = pneg %p185
      // Predicated region
      $region9: #{vdsr_dem_forward.1} parent=5 // pred_check
        _
      $region10: #{vdsr_dem_forward.1} parent=5 // pred_check_branch
        %188 = sbr.rel (%p185) target = $region12
      $region11: #{vdsr_dem_forward.1} parent=5 // pred_region
        %s189 = ssub.s32 %s13, 1
        // Predicated region
        $region13: #{vdsr_dem_forward.1} parent=11 // pred_check
          %p190 = pneg %p34
        $region14: #{vdsr_dem_forward.1} parent=11 // pred_check_branch
          %192 = sbr.rel (%p190) target = $region16
        $region15: #{vdsr_dem_forward.1} parent=11 // pred_region
          %s194 = ssub.s32 16, 16
          %195 = vsyncadd [#allocation6], %s194
          %s197 = sshll.u32 %s0, 4
          %s198 = int_to_ptr.vmem [resolvable:$true] %s197
          %200 = dma.vmem_to_smem %s198, 16, [#allocation5], [#allocation6]
        $region16: #{vdsr_dem_forward.1} parent=11 // pred_fallthru
          _
        // Predicated region
        $region17: #{vdsr_dem_forward.1} parent=11 // pred_check
          %p201 = pneg %p107
        $region18: #{vdsr_dem_forward.1} parent=11 // pred_check_branch
          %203 = sbr.rel (%p201) target = $region20
        $region19: #{vdsr_dem_forward.1} parent=11 // pred_region
          _
        $region20: #{vdsr_dem_forward.1} parent=11 // pred_fallthru
          _
        // Predicated region
        $region21: #{vdsr_dem_forward.1} parent=11 // pred_check
          %p204 = pneg %p128
        $region22: #{vdsr_dem_forward.1} parent=11 // pred_check_branch
          %206 = sbr.rel (%p204) target = $region24
        $region23: #{vdsr_dem_forward.1} parent=11 // pred_region
          _
        $region24: #{vdsr_dem_forward.1} parent=11 // pred_fallthru
          _
        // Predicated region
        $region25: #{vdsr_dem_forward.1} parent=11 // pred_check
          %p207 = pneg %p149
        $region26: #{vdsr_dem_forward.1} parent=11 // pred_check_branch
          %209 = sbr.rel (%p207) target = $region28
        $region27: #{vdsr_dem_forward.1} parent=11 // pred_region
          _
        $region28: #{vdsr_dem_forward.1} parent=11 // pred_fallthru
          _
      $region12: #{vdsr_dem_forward.1} parent=5 // pred_fallthru
        _
      %p210 = scmp.lt.s32.totalorder %s13, 2
      // Predicated region
      $region29: #{vdsr_dem_forward.1} parent=5 // pred_check
        %p211 = pneg %p210
      $region30: #{vdsr_dem_forward.1} parent=5 // pred_check_branch
        %213 = sbr.rel (%p211) target = $region32
      $region31: #{vdsr_dem_forward.1} parent=5 // pred_region
        // Predicated region
        $region33: #{vdsr_dem_forward.1} parent=31 // pred_check
          %p214 = pneg %p54
        $region34: #{vdsr_dem_forward.1} parent=31 // pred_check_branch
          %216 = sbr.rel (%p214) target = $region36
        $region35: #{vdsr_dem_forward.1} parent=31 // pred_region
          %p217 = scmp.lt.s32.totalorder %s13, 1
          %s218 = scalar_select %p217, %s13, 1
          %s219 = smul.addr %s218, 32
          %s220 = smul.addr %s219, 8
          %s221 = scalar_lea.vmem %s1, %s220
        $region36: #{vdsr_dem_forward.1} parent=31 // pred_fallthru
          _
        // Predicated region
        $region37: #{vdsr_dem_forward.1} parent=31 // pred_check
          %p222 = pneg %p80
        $region38: #{vdsr_dem_forward.1} parent=31 // pred_check_branch
          %224 = sbr.rel (%p222) target = $region40
        $region39: #{vdsr_dem_forward.1} parent=31 // pred_region
          %p225 = scmp.lt.s32.totalorder %s13, 1
          %s226 = scalar_select %p225, %s13, 1
          %s227 = smul.addr %s226, 32
          %s228 = smul.addr %s227, 8
          %s229 = scalar_lea.vmem %s2, %s228
        $region40: #{vdsr_dem_forward.1} parent=31 // pred_fallthru
          _
      $region32: #{vdsr_dem_forward.1} parent=5 // pred_fallthru
        _
      %p230 = scmp.le.s32.totalorder 1, %s13
      %p231 = scmp.lt.s32.totalorder %s13, 3
      %p232 = pnand %p230, %p231
      %p233 = pneg %p232
      // Predicated region
      $region41: #{vdsr_dem_forward.1} parent=5 // pred_check
        _
      $region42: #{vdsr_dem_forward.1} parent=5 // pred_check_branch
        %235 = sbr.rel (%p232) target = $region44
      $region43: #{vdsr_dem_forward.1} parent=5 // pred_region
        %s236 = ssub.s32 %s13, 1
        // Predicated region
        $region45: #{vdsr_dem_forward.1} parent=43 // pred_check
          %p237 = pneg %p34
        $region46: #{vdsr_dem_forward.1} parent=43 // pred_check_branch
          %239 = sbr.rel (%p237) target = $region48
        $region47: #{vdsr_dem_forward.1} parent=43 // pred_region
          %240 = dma.done [#allocation6], 16
        $region48: #{vdsr_dem_forward.1} parent=43 // pred_fallthru
          _
        %241 = sfence
        %p242 = pneg %p34
        %p243 = pneg %p31
        %p244 = scmp.lt.s32.totalorder %s18, 1
        %s245 = scalar_select %p244, %s18, 1
        %s246 = smul.addr %s245, 32
        %s247 = smul.addr %s246, 8
        %s248 = scalar_lea.vmem %s1, %s247
        %p249 = pneg %p60
        %p250 = pneg %p57
        %p251 = scmp.lt.s32.totalorder %s18, 1
        %s252 = scalar_select %p251, %s18, 1
        %s253 = smul.addr %s252, 32
        %s254 = smul.addr %s253, 8
        %s255 = scalar_lea.vmem %s2, %s254
        %p256 = pneg %p86
        %p257 = pneg %p83
        %p258 = pneg %p107
        %p259 = pneg %p104
        %p260 = pneg %p128
        %p261 = pneg %p125
        %p262 = pneg %p149
        %p263 = pneg %p146
        %p264 = pneg %p175
        %p265 = pneg %p172
        %p266 = scmp.lt.s32.totalorder %s18, 1
        %s267 = scalar_select %p266, %s18, 1
        %s268 = smul.addr %s267, 32
        %s269 = smul.addr %s268, 8
        %s270 = scalar_lea.vmem %s6, %s269
        %p271 = scmp.lt.s32.totalorder %s18, 1
        %s272 = scalar_select %p271, %s18, 1
        %s273 = smul.addr %s272, 32
        %s274 = smul.addr %s273, 8
        %s275 = scalar_lea.vmem %s1, %s274
        %p276 = scmp.lt.s32.totalorder %s18, 1
        %s277 = scalar_select %p276, %s18, 1
        %s278 = smul.addr %s277, 32
        %s279 = smul.addr %s278, 8
        %s280 = scalar_lea.vmem %s2, %s279
        %p281 = scmp.lt.s32.totalorder %s18, 1
        %s282 = scalar_select %p281, %s18, 1
        %s283 = smul.addr %s282, 32
        %s284 = smul.addr %s283, 8
        %s285 = scalar_lea.vmem %s6, %s284
        %vm287 = vcmask 519168
        %288 = vst.msk [vmem:[#allocation2] sm:$0xf] %vm287, 0
        %289 = vst.msk [vmem:[#allocation2 + $0x4] sm:$0xf] %vm287, 0
        %vm290 = vcmask 516096
        %291 = vst.msk [vmem:[#allocation2 + $0x8] sm:$0x1] %vm290, 0
        %s292 = scalar_lea.vmem [#allocation2], 204
        %293 = vst.msk [vmem:[%s292] sm:$0xf] %vm287, 0
        %294 = vst.msk [vmem:[%s292 + $0x4] sm:$0xf] %vm287, 0
        %295 = vst.msk [vmem:[%s292 + $0x8] sm:$0x1] %vm290, 0
        %vm296 = vcmask 516096
        %vm297 = vsmask.f32 256
        %vm298 = vmand %vm296, %vm297
        %v299 = vld [vmem:[#allocation2] sm:$0x1]
        %v300 = vsel %vm298, 0, %v299
        %301 = vst [vmem:[#allocation2] sm:$0x1] %v300
        %v302 = vld [vmem:[#allocation2 + $0xc] sm:$0x1]
        %v303 = vsel %vm298, 0, %v302
        %304 = vst [vmem:[#allocation2 + $0xc] sm:$0x1] %v303
        %v305 = vld [vmem:[#allocation2 + $0x18] sm:$0x1]
        %v306 = vsel %vm298, 0, %v305
        %307 = vst [vmem:[#allocation2 + $0x18] sm:$0x1] %v306
        %v308 = vld [vmem:[#allocation2 + $0x24] sm:$0x1]
        %v309 = vsel %vm298, 0, %v308
        %310 = vst [vmem:[#allocation2 + $0x24] sm:$0x1] %v309
        %v311 = vld [vmem:[#allocation2 + $0x30] sm:$0x1]
        %v312 = vsel %vm298, 0, %v311
        %313 = vst [vmem:[#allocation2 + $0x30] sm:$0x1] %v312
        %v314 = vld [vmem:[#allocation2 + $0x3c] sm:$0x1]
        %v315 = vsel %vm298, 0, %v314
        %316 = vst [vmem:[#allocation2 + $0x3c] sm:$0x1] %v315
        %v317 = vld [vmem:[#allocation2 + $0x48] sm:$0x1]
        %v318 = vsel %vm298, 0, %v317
        %319 = vst [vmem:[#allocation2 + $0x48] sm:$0x1] %v318
        %v320 = vld [vmem:[#allocation2 + $0x54] sm:$0x1]
        %v321 = vsel %vm298, 0, %v320
        %322 = vst [vmem:[#allocation2 + $0x54] sm:$0x1] %v321
        %v323 = vld [vmem:[#allocation2 + $0x60] sm:$0x1]
        %v324 = vsel %vm298, 0, %v323
        %325 = vst [vmem:[#allocation2 + $0x60] sm:$0x1] %v324
        %v326 = vld [vmem:[#allocation2 + $0x6c] sm:$0x1]
        %v327 = vsel %vm298, 0, %v326
        %328 = vst [vmem:[#allocation2 + $0x6c] sm:$0x1] %v327
        %v329 = vld [vmem:[#allocation2 + $0x78] sm:$0x1]
        %v330 = vsel %vm298, 0, %v329
        %331 = vst [vmem:[#allocation2 + $0x78] sm:$0x1] %v330
        %v332 = vld [vmem:[#allocation2 + $0x84] sm:$0x1]
        %v333 = vsel %vm298, 0, %v332
        %334 = vst [vmem:[#allocation2 + $0x84] sm:$0x1] %v333
        %v335 = vld [vmem:[#allocation2 + $0x90] sm:$0x1]
        %v336 = vsel %vm298, 0, %v335
        %337 = vst [vmem:[#allocation2 + $0x90] sm:$0x1] %v336
        %v338 = vld [vmem:[#allocation2 + $0x9c] sm:$0x1]
        %v339 = vsel %vm298, 0, %v338
        %340 = vst [vmem:[#allocation2 + $0x9c] sm:$0x1] %v339
        %v341 = vld [vmem:[#allocation2 + $0xa8] sm:$0x1]
        %v342 = vsel %vm298, 0, %v341
        %343 = vst [vmem:[#allocation2 + $0xa8] sm:$0x1] %v342
        %v344 = vld [vmem:[#allocation2 + $0xb4] sm:$0x1]
        %v345 = vsel %vm298, 0, %v344
        %346 = vst [vmem:[#allocation2 + $0xb4] sm:$0x1] %v345
        %v347 = vld [vmem:[#allocation2 + $0xc0] sm:$0x1]
        %v348 = vsel %vm298, 0, %v347
        %349 = vst [vmem:[#allocation2 + $0xc0] sm:$0x1] %v348
        %v350 = vld [vmem:[#allocation2 + $0xcc] sm:$0x1]
        %v351 = vsel %vm298, 0, %v350
        %352 = vst [vmem:[#allocation2 + $0xcc] sm:$0x1] %v351
        %vm353 = vsmask.f32 7938
        %vm354 = vmand %vm296, %vm353
        %v355 = vld [vmem:[#allocation2 + $0x8] sm:$0x1]
        %v356 = vsel %vm354, 0, %v355
        %357 = vst [vmem:[#allocation2 + $0x8] sm:$0x1] %v356
        %v358 = vld [vmem:[#allocation2 + $0x14] sm:$0x1]
        %v359 = vsel %vm354, 0, %v358
        %360 = vst [vmem:[#allocation2 + $0x14] sm:$0x1] %v359
        %v361 = vld [vmem:[#allocation2 + $0x20] sm:$0x1]
        %v362 = vsel %vm354, 0, %v361
        %363 = vst [vmem:[#allocation2 + $0x20] sm:$0x1] %v362
        %v364 = vld [vmem:[#allocation2 + $0x2c] sm:$0x1]
        %v365 = vsel %vm354, 0, %v364
        %366 = vst [vmem:[#allocation2 + $0x2c] sm:$0x1] %v365
        %v367 = vld [vmem:[#allocation2 + $0x38] sm:$0x1]
        %v368 = vsel %vm354, 0, %v367
        %369 = vst [vmem:[#allocation2 + $0x38] sm:$0x1] %v368
        %v370 = vld [vmem:[#allocation2 + $0x44] sm:$0x1]
        %v371 = vsel %vm354, 0, %v370
        %372 = vst [vmem:[#allocation2 + $0x44] sm:$0x1] %v371
        %v373 = vld [vmem:[#allocation2 + $0x50] sm:$0x1]
        %v374 = vsel %vm354, 0, %v373
        %375 = vst [vmem:[#allocation2 + $0x50] sm:$0x1] %v374
        %v376 = vld [vmem:[#allocation2 + $0x5c] sm:$0x1]
        %v377 = vsel %vm354, 0, %v376
        %378 = vst [vmem:[#allocation2 + $0x5c] sm:$0x1] %v377
        %v379 = vld [vmem:[#allocation2 + $0x68] sm:$0x1]
        %v380 = vsel %vm354, 0, %v379
        %381 = vst [vmem:[#allocation2 + $0x68] sm:$0x1] %v380
        %v382 = vld [vmem:[#allocation2 + $0x74] sm:$0x1]
        %v383 = vsel %vm354, 0, %v382
        %384 = vst [vmem:[#allocation2 + $0x74] sm:$0x1] %v383
        %v385 = vld [vmem:[#allocation2 + $0x80] sm:$0x1]
        %v386 = vsel %vm354, 0, %v385
        %387 = vst [vmem:[#allocation2 + $0x80] sm:$0x1] %v386
        %v388 = vld [vmem:[#allocation2 + $0x8c] sm:$0x1]
        %v389 = vsel %vm354, 0, %v388
        %390 = vst [vmem:[#allocation2 + $0x8c] sm:$0x1] %v389
        %v391 = vld [vmem:[#allocation2 + $0x98] sm:$0x1]
        %v392 = vsel %vm354, 0, %v391
        %393 = vst [vmem:[#allocation2 + $0x98] sm:$0x1] %v392
        %v394 = vld [vmem:[#allocation2 + $0xa4] sm:$0x1]
        %v395 = vsel %vm354, 0, %v394
        %396 = vst [vmem:[#allocation2 + $0xa4] sm:$0x1] %v395
        %v397 = vld [vmem:[#allocation2 + $0xb0] sm:$0x1]
        %v398 = vsel %vm354, 0, %v397
        %399 = vst [vmem:[#allocation2 + $0xb0] sm:$0x1] %v398
        %v400 = vld [vmem:[#allocation2 + $0xbc] sm:$0x1]
        %v401 = vsel %vm354, 0, %v400
        %402 = vst [vmem:[#allocation2 + $0xbc] sm:$0x1] %v401
        %v403 = vld [vmem:[#allocation2 + $0xc8] sm:$0x1]
        %v404 = vsel %vm354, 0, %v403
        %405 = vst [vmem:[#allocation2 + $0xc8] sm:$0x1] %v404
        %v406 = vld [vmem:[#allocation2 + $0xd4] sm:$0x1]
        %v407 = vsel %vm354, 0, %v406
        %408 = vst [vmem:[#allocation2 + $0xd4] sm:$0x1] %v407
        loop: start=0, step=1, limit=2
        $region49: #{vdsr_dem_forward.1} parent=43 // loop_pre_header
          _
        $region50: #{vdsr_dem_forward.1} parent=43 // loop_header
          %s410 = sphi 0, %s414
          %p411 = scmp.ge.s32.totalorder %s410, 2
        $region51: #{vdsr_dem_forward.1} parent=43 // loop_header_branch
          %413 = sbr.rel (%p411) target = $region55
        $region52: #{vdsr_dem_forward.1} parent=43 // loop_body
          %s415 = smul.u32 %s410, 8
          %s416 = smul.u32 %s415, 16
          %s417 = scalar_lea.vmem %s275, %s416
          %v418 = vld [vmem:[%s417] sm:$0xff]
          %v419 = vld [vmem:[%s417 + $0x8] sm:$0xff]
          %v420 = vld [vmem:[%s417 + $0x10] sm:$0xff]
          %v421 = vld [vmem:[%s417 + $0x18] sm:$0xff]
          %v422 = vld [vmem:[%s417 + $0x20] sm:$0xff]
          %v423 = vld [vmem:[%s417 + $0x28] sm:$0xff]
          %v424 = vld [vmem:[%s417 + $0x30] sm:$0xff]
          %v425 = vld [vmem:[%s417 + $0x38] sm:$0xff]
          %v426 = vld [vmem:[%s417 + $0x40] sm:$0xff]
          %v427 = vld [vmem:[%s417 + $0x48] sm:$0xff]
          %v428 = vld [vmem:[%s417 + $0x50] sm:$0xff]
          %v429 = vld [vmem:[%s417 + $0x58] sm:$0xff]
          %v430 = vld [vmem:[%s417 + $0x60] sm:$0xff]
          %v431 = vld [vmem:[%s417 + $0x68] sm:$0xff]
          %v432 = vld [vmem:[%s417 + $0x70] sm:$0xff]
          %v433 = vld [vmem:[%s417 + $0x78] sm:$0xff]
          %s434 = scalar_lea.vmem %s280, %s416
          %v435 = vld [vmem:[%s434] sm:$0xff]
          %v436 = vld [vmem:[%s434 + $0x8] sm:$0xff]
          %v437 = vld [vmem:[%s434 + $0x10] sm:$0xff]
          %v438 = vld [vmem:[%s434 + $0x18] sm:$0xff]
          %v439 = vld [vmem:[%s434 + $0x20] sm:$0xff]
          %v440 = vld [vmem:[%s434 + $0x28] sm:$0xff]
          %v441 = vld [vmem:[%s434 + $0x30] sm:$0xff]
          %v442 = vld [vmem:[%s434 + $0x38] sm:$0xff]
          %v443 = vld [vmem:[%s434 + $0x40] sm:$0xff]
          %v444 = vld [vmem:[%s434 + $0x48] sm:$0xff]
          %v445 = vld [vmem:[%s434 + $0x50] sm:$0xff]
          %v446 = vld [vmem:[%s434 + $0x58] sm:$0xff]
          %v447 = vld [vmem:[%s434 + $0x60] sm:$0xff]
          %v448 = vld [vmem:[%s434 + $0x68] sm:$0xff]
          %v449 = vld [vmem:[%s434 + $0x70] sm:$0xff]
          %v450 = vld [vmem:[%s434 + $0x78] sm:$0xff]
          %v451 = vpack.c.bf16 %v419, %v418
          %v452 = vpack.c.bf16 %v421, %v420
          %v453 = vpack.c.bf16 %v423, %v422
          %v454 = vpack.c.bf16 %v425, %v424
          %v455 = vpack.c.bf16 %v427, %v426
          %v456 = vpack.c.bf16 %v429, %v428
          %v457 = vpack.c.bf16 %v431, %v430
          %v458 = vpack.c.bf16 %v433, %v432
          %s459 = sadd.s32 %s415, 1
          %v468 = vunpack.c.l.b16 %v451
          %v469 = vunpack.c.h.b16 %v451
          %v470 = vunpack.c.l.b16 %v452
          %v471 = vunpack.c.h.b16 %v452
          %v472 = vunpack.c.l.b16 %v453
          %v473 = vunpack.c.h.b16 %v453
          %v474 = vunpack.c.l.b16 %v454
          %v475 = vunpack.c.h.b16 %v454
          %v476 = vunpack.c.l.b16 %v455
          %v477 = vunpack.c.h.b16 %v455
          %v478 = vunpack.c.l.b16 %v456
          %v479 = vunpack.c.h.b16 %v456
          %v480 = vunpack.c.l.b16 %v457
          %v481 = vunpack.c.h.b16 %v457
          %v482 = vunpack.c.l.b16 %v458
          %v483 = vunpack.c.h.b16 %v458
          %v484 = vpack.c.b16 %v468, %v468
          %v485 = vpack.c.b16 %v469, %v469
          %v486 = vpack.c.b16 %v470, %v470
          %v487 = vpack.c.b16 %v471, %v471
          %v488 = vpack.c.b16 %v472, %v472
          %v489 = vpack.c.b16 %v473, %v473
          %v490 = vpack.c.b16 %v474, %v474
          %v491 = vpack.c.b16 %v475, %v475
          %v492 = vpack.c.b16 %v476, %v476
          %v493 = vpack.c.b16 %v477, %v477
          %v494 = vpack.c.b16 %v478, %v478
          %v495 = vpack.c.b16 %v479, %v479
          %v496 = vpack.c.b16 %v480, %v480
          %v497 = vpack.c.b16 %v481, %v481
          %v498 = vpack.c.b16 %v482, %v482
          %v499 = vpack.c.b16 %v483, %v483
          %vm500 = vsmask.f32 4368
          %vm501 = vmor %vm297, %vm500
          %v503 = vshrl.u32 %v484, 16
          %v505 = vrot.slane %v503, 7
          %v506 = vshll.u32 %v484, 16
          %v508 = vor.u32 %v505, %v506
          %v509 = vrot.slane %v505, 4
          %v511 = vshrl.u32 %v485, 16
          %v513 = vrot.slane %v511, 7
          %v514 = vshll.u32 %v485, 16
          %v516 = vor.u32 %v513, %v514
          %v517 = vsel %vm501, %v509, %v516
          %v518 = vrot.slane %v513, 4
          %v520 = vshrl.u32 %v486, 16
          %v522 = vrot.slane %v520, 7
          %v523 = vshll.u32 %v486, 16
          %v525 = vor.u32 %v522, %v523
          %v526 = vrot.slane %v522, 4
          %v528 = vshrl.u32 %v487, 16
          %v530 = vrot.slane %v528, 7
          %v531 = vshll.u32 %v487, 16
          %v533 = vor.u32 %v530, %v531
          %v534 = vsel %vm501, %v526, %v533
          %v535 = vrot.slane %v530, 4
          %v537 = vshrl.u32 %v488, 16
          %v539 = vrot.slane %v537, 7
          %v540 = vshll.u32 %v488, 16
          %v542 = vor.u32 %v539, %v540
          %v543 = vrot.slane %v539, 4
          %v545 = vshrl.u32 %v489, 16
          %v547 = vrot.slane %v545, 7
          %v548 = vshll.u32 %v489, 16
          %v550 = vor.u32 %v547, %v548
          %v551 = vsel %vm501, %v543, %v550
          %v552 = vrot.slane %v547, 4
          %v554 = vshrl.u32 %v490, 16
          %v556 = vrot.slane %v554, 7
          %v557 = vshll.u32 %v490, 16
          %v559 = vor.u32 %v556, %v557
          %v560 = vrot.slane %v556, 4
          %v562 = vshrl.u32 %v491, 16
          %v564 = vrot.slane %v562, 7
          %v565 = vshll.u32 %v491, 16
          %v567 = vor.u32 %v564, %v565
          %v568 = vsel %vm501, %v560, %v567
          %v569 = vrot.slane %v564, 4
          %v571 = vshrl.u32 %v492, 16
          %v573 = vrot.slane %v571, 7
          %v574 = vshll.u32 %v492, 16
          %v576 = vor.u32 %v573, %v574
          %v577 = vrot.slane %v573, 4
          %v579 = vshrl.u32 %v493, 16
          %v581 = vrot.slane %v579, 7
          %v582 = vshll.u32 %v493, 16
          %v584 = vor.u32 %v581, %v582
          %v585 = vsel %vm501, %v577, %v584
          %v586 = vrot.slane %v581, 4
          %v588 = vshrl.u32 %v494, 16
          %v590 = vrot.slane %v588, 7
          %v591 = vshll.u32 %v494, 16
          %v593 = vor.u32 %v590, %v591
          %v594 = vrot.slane %v590, 4
          %v596 = vshrl.u32 %v495, 16
          %v598 = vrot.slane %v596, 7
          %v599 = vshll.u32 %v495, 16
          %v601 = vor.u32 %v598, %v599
          %v602 = vsel %vm501, %v594, %v601
          %v603 = vrot.slane %v598, 4
          %v605 = vshrl.u32 %v496, 16
          %v607 = vrot.slane %v605, 7
          %v608 = vshll.u32 %v496, 16
          %v610 = vor.u32 %v607, %v608
          %v611 = vrot.slane %v607, 4
          %v613 = vshrl.u32 %v497, 16
          %v615 = vrot.slane %v613, 7
          %v616 = vshll.u32 %v497, 16
          %v618 = vor.u32 %v615, %v616
          %v619 = vsel %vm501, %v611, %v618
          %v620 = vrot.slane %v615, 4
          %v622 = vshrl.u32 %v498, 16
          %v624 = vrot.slane %v622, 7
          %v625 = vshll.u32 %v498, 16
          %v627 = vor.u32 %v624, %v625
          %v628 = vrot.slane %v624, 4
          %v630 = vshrl.u32 %v499, 16
          %v632 = vrot.slane %v630, 7
          %v633 = vshll.u32 %v499, 16
          %v635 = vor.u32 %v632, %v633
          %v636 = vsel %vm501, %v628, %v635
          %v637 = vrot.slane %v632, 4
          %s662 = smul.u32 %s459, 3
          %s663 = smul.addr %s662, 4
          %s664 = scalar_lea.vmem [#allocation2], %s663
          %vm665 = vcmask 3072
          %vm666 = vmand %vm665, %vm353
          %v667 = vld [vmem:[%s664] sm:$0xf]
          %v668 = vsel %vm666, %v508, %v667
          %669 = vst [vmem:[%s664] sm:$0xf] %v668
          %vm670 = vcmask 3072
          %671 = vst.msk [vmem:[%s664 + $0x4] sm:$0xf] %vm670, %v517
          %vm672 = vcmask 0
          %vm673 = vmand %vm672, %vm297
          %v674 = vld [vmem:[%s664 + $0x8] sm:$0x1]
          %v675 = vsel %vm673, %v518, %v674
          %676 = vst [vmem:[%s664 + $0x8] sm:$0x1] %v675
          %v677 = vld [vmem:[%s664 + $0xc] sm:$0xf]
          %v678 = vsel %vm666, %v525, %v677
          %679 = vst [vmem:[%s664 + $0xc] sm:$0xf] %v678
          %680 = vst.msk [vmem:[%s664 + $0x10] sm:$0xf] %vm670, %v534
          %v681 = vld [vmem:[%s664 + $0x14] sm:$0x1]
          %v682 = vsel %vm673, %v535, %v681
          %683 = vst [vmem:[%s664 + $0x14] sm:$0x1] %v682
          %v684 = vld [vmem:[%s664 + $0x18] sm:$0xf]
          %v685 = vsel %vm666, %v542, %v684
          %686 = vst [vmem:[%s664 + $0x18] sm:$0xf] %v685
          %687 = vst.msk [vmem:[%s664 + $0x1c] sm:$0xf] %vm670, %v551
          %v688 = vld [vmem:[%s664 + $0x20] sm:$0x1]
          %v689 = vsel %vm673, %v552, %v688
          %690 = vst [vmem:[%s664 + $0x20] sm:$0x1] %v689
          %v691 = vld [vmem:[%s664 + $0x24] sm:$0xf]
          %v692 = vsel %vm666, %v559, %v691
          %693 = vst [vmem:[%s664 + $0x24] sm:$0xf] %v692
          %694 = vst.msk [vmem:[%s664 + $0x28] sm:$0xf] %vm670, %v568
          %v695 = vld [vmem:[%s664 + $0x2c] sm:$0x1]
          %v696 = vsel %vm673, %v569, %v695
          %697 = vst [vmem:[%s664 + $0x2c] sm:$0x1] %v696
          %v698 = vld [vmem:[%s664 + $0x30] sm:$0xf]
          %v699 = vsel %vm666, %v576, %v698
          %700 = vst [vmem:[%s664 + $0x30] sm:$0xf] %v699
          %701 = vst.msk [vmem:[%s664 + $0x34] sm:$0xf] %vm670, %v585
          %v702 = vld [vmem:[%s664 + $0x38] sm:$0x1]
          %v703 = vsel %vm673, %v586, %v702
          %704 = vst [vmem:[%s664 + $0x38] sm:$0x1] %v703
          %v705 = vld [vmem:[%s664 + $0x3c] sm:$0xf]
          %v706 = vsel %vm666, %v593, %v705
          %707 = vst [vmem:[%s664 + $0x3c] sm:$0xf] %v706
          %708 = vst.msk [vmem:[%s664 + $0x40] sm:$0xf] %vm670, %v602
          %v709 = vld [vmem:[%s664 + $0x44] sm:$0x1]
          %v710 = vsel %vm673, %v603, %v709
          %711 = vst [vmem:[%s664 + $0x44] sm:$0x1] %v710
          %v712 = vld [vmem:[%s664 + $0x48] sm:$0xf]
          %v713 = vsel %vm666, %v610, %v712
          %714 = vst [vmem:[%s664 + $0x48] sm:$0xf] %v713
          %715 = vst.msk [vmem:[%s664 + $0x4c] sm:$0xf] %vm670, %v619
          %v716 = vld [vmem:[%s664 + $0x50] sm:$0x1]
          %v717 = vsel %vm673, %v620, %v716
          %718 = vst [vmem:[%s664 + $0x50] sm:$0x1] %v717
          %v719 = vld [vmem:[%s664 + $0x54] sm:$0xf]
          %v720 = vsel %vm666, %v627, %v719
          %721 = vst [vmem:[%s664 + $0x54] sm:$0xf] %v720
          %722 = vst.msk [vmem:[%s664 + $0x58] sm:$0xf] %vm670, %v636
          %v723 = vld [vmem:[%s664 + $0x5c] sm:$0x1]
          %v724 = vsel %vm673, %v637, %v723
          %725 = vst [vmem:[%s664 + $0x5c] sm:$0x1] %v724
          %s726 = sld [smem:[#allocation5]]
          %v727 = vstv %s726
          %v728 = vmul.f32 %v435, %v727
          %v729 = vmul.f32 %v436, %v727
          %v730 = vmul.f32 %v437, %v727
          %v731 = vmul.f32 %v438, %v727
          %v732 = vmul.f32 %v439, %v727
          %v733 = vmul.f32 %v440, %v727
          %v734 = vmul.f32 %v441, %v727
          %v735 = vmul.f32 %v442, %v727
          %v736 = vmul.f32 %v443, %v727
          %v737 = vmul.f32 %v444, %v727
          %v738 = vmul.f32 %v445, %v727
          %v739 = vmul.f32 %v446, %v727
          %v740 = vmul.f32 %v447, %v727
          %v741 = vmul.f32 %v448, %v727
          %v742 = vmul.f32 %v449, %v727
          %v743 = vmul.f32 %v450, %v727
          %s744 = sld [smem:[#allocation5 + $0x1]]
          %v745 = vstv %s744
          %v746 = vadd.f32 %v728, %v745
          %v747 = vadd.f32 %v729, %v745
          %v748 = vadd.f32 %v730, %v745
          %v749 = vadd.f32 %v731, %v745
          %v750 = vadd.f32 %v732, %v745
          %v751 = vadd.f32 %v733, %v745
          %v752 = vadd.f32 %v734, %v745
          %v753 = vadd.f32 %v735, %v745
          %v754 = vadd.f32 %v736, %v745
          %v755 = vadd.f32 %v737, %v745
          %v756 = vadd.f32 %v738, %v745
          %v757 = vadd.f32 %v739, %v745
          %v758 = vadd.f32 %v740, %v745
          %v759 = vadd.f32 %v741, %v745
          %v760 = vadd.f32 %v742, %v745
          %v761 = vadd.f32 %v743, %v745
          %v762 = vpack.c.bf16 %v747, %v746
          %v763 = vpack.c.bf16 %v749, %v748
          %v764 = vpack.c.bf16 %v751, %v750
          %v765 = vpack.c.bf16 %v753, %v752
          %v766 = vpack.c.bf16 %v755, %v754
          %v767 = vpack.c.bf16 %v757, %v756
          %v768 = vpack.c.bf16 %v759, %v758
          %v769 = vpack.c.bf16 %v761, %v760
          %v778 = vunpack.c.l.b16 %v762
          %v779 = vunpack.c.h.b16 %v762
          %v780 = vunpack.c.l.b16 %v763
          %v781 = vunpack.c.h.b16 %v763
          %v782 = vunpack.c.l.b16 %v764
          %v783 = vunpack.c.h.b16 %v764
          %v784 = vunpack.c.l.b16 %v765
          %v785 = vunpack.c.h.b16 %v765
          %v786 = vunpack.c.l.b16 %v766
          %v787 = vunpack.c.h.b16 %v766
          %v788 = vunpack.c.l.b16 %v767
          %v789 = vunpack.c.h.b16 %v767
          %v790 = vunpack.c.l.b16 %v768
          %v791 = vunpack.c.h.b16 %v768
          %v792 = vunpack.c.l.b16 %v769
          %v793 = vunpack.c.h.b16 %v769
          %v794 = vpack.c.b16 %v778, %v778
          %v795 = vpack.c.b16 %v779, %v779
          %v796 = vpack.c.b16 %v780, %v780
          %v797 = vpack.c.b16 %v781, %v781
          %v798 = vpack.c.b16 %v782, %v782
          %v799 = vpack.c.b16 %v783, %v783
          %v800 = vpack.c.b16 %v784, %v784
          %v801 = vpack.c.b16 %v785, %v785
          %v802 = vpack.c.b16 %v786, %v786
          %v803 = vpack.c.b16 %v787, %v787
          %v804 = vpack.c.b16 %v788, %v788
          %v805 = vpack.c.b16 %v789, %v789
          %v806 = vpack.c.b16 %v790, %v790
          %v807 = vpack.c.b16 %v791, %v791
          %v808 = vpack.c.b16 %v792, %v792
          %v809 = vpack.c.b16 %v793, %v793
          %v811 = vshrl.u32 %v794, 16
          %v813 = vrot.slane %v811, 7
          %v814 = vshll.u32 %v794, 16
          %v816 = vor.u32 %v813, %v814
          %v817 = vrot.slane %v813, 4
          %v819 = vshrl.u32 %v795, 16
          %v821 = vrot.slane %v819, 7
          %v822 = vshll.u32 %v795, 16
          %v824 = vor.u32 %v821, %v822
          %v825 = vsel %vm501, %v817, %v824
          %v826 = vrot.slane %v821, 4
          %v828 = vshrl.u32 %v796, 16
          %v830 = vrot.slane %v828, 7
          %v831 = vshll.u32 %v796, 16
          %v833 = vor.u32 %v830, %v831
          %v834 = vrot.slane %v830, 4
          %v836 = vshrl.u32 %v797, 16
          %v838 = vrot.slane %v836, 7
          %v839 = vshll.u32 %v797, 16
          %v841 = vor.u32 %v838, %v839
          %v842 = vsel %vm501, %v834, %v841
          %v843 = vrot.slane %v838, 4
          %v845 = vshrl.u32 %v798, 16
          %v847 = vrot.slane %v845, 7
          %v848 = vshll.u32 %v798, 16
          %v850 = vor.u32 %v847, %v848
          %v851 = vrot.slane %v847, 4
          %v853 = vshrl.u32 %v799, 16
          %v855 = vrot.slane %v853, 7
          %v856 = vshll.u32 %v799, 16
          %v858 = vor.u32 %v855, %v856
          %v859 = vsel %vm501, %v851, %v858
          %v860 = vrot.slane %v855, 4
          %v862 = vshrl.u32 %v800, 16
          %v864 = vrot.slane %v862, 7
          %v865 = vshll.u32 %v800, 16
          %v867 = vor.u32 %v864, %v865
          %v868 = vrot.slane %v864, 4
          %v870 = vshrl.u32 %v801, 16
          %v872 = vrot.slane %v870, 7
          %v873 = vshll.u32 %v801, 16
          %v875 = vor.u32 %v872, %v873
          %v876 = vsel %vm501, %v868, %v875
          %v877 = vrot.slane %v872, 4
          %v879 = vshrl.u32 %v802, 16
          %v881 = vrot.slane %v879, 7
          %v882 = vshll.u32 %v802, 16
          %v884 = vor.u32 %v881, %v882
          %v885 = vrot.slane %v881, 4
          %v887 = vshrl.u32 %v803, 16
          %v889 = vrot.slane %v887, 7
          %v890 = vshll.u32 %v803, 16
          %v892 = vor.u32 %v889, %v890
          %v893 = vsel %vm501, %v885, %v892
          %v894 = vrot.slane %v889, 4
          %v896 = vshrl.u32 %v804, 16
          %v898 = vrot.slane %v896, 7
          %v899 = vshll.u32 %v804, 16
          %v901 = vor.u32 %v898, %v899
          %v902 = vrot.slane %v898, 4
          %v904 = vshrl.u32 %v805, 16
          %v906 = vrot.slane %v904, 7
          %v907 = vshll.u32 %v805, 16
          %v909 = vor.u32 %v906, %v907
          %v910 = vsel %vm501, %v902, %v909
          %v911 = vrot.slane %v906, 4
          %v913 = vshrl.u32 %v806, 16
          %v915 = vrot.slane %v913, 7
          %v916 = vshll.u32 %v806, 16
          %v918 = vor.u32 %v915, %v916
          %v919 = vrot.slane %v915, 4
          %v921 = vshrl.u32 %v807, 16
          %v923 = vrot.slane %v921, 7
          %v924 = vshll.u32 %v807, 16
          %v926 = vor.u32 %v923, %v924
          %v927 = vsel %vm501, %v919, %v926
          %v928 = vrot.slane %v923, 4
          %v930 = vshrl.u32 %v808, 16
          %v932 = vrot.slane %v930, 7
          %v933 = vshll.u32 %v808, 16
          %v935 = vor.u32 %v932, %v933
          %v936 = vrot.slane %v932, 4
          %v938 = vshrl.u32 %v809, 16
          %v940 = vrot.slane %v938, 7
          %v941 = vshll.u32 %v809, 16
          %v943 = vor.u32 %v940, %v941
          %v944 = vsel %vm501, %v936, %v943
          %v945 = vrot.slane %v940, 4
          %946 = vrot.lane.b32.xlu0 %v816, 1
          %v947 = vpop.permute.xlu0 %946
          %948 = vrot.lane.b32.xlu0 %v825, 1
          %v949 = vpop.permute.xlu0 %948
          %950 = vrot.lane.b32.xlu0 %v826, 1
          %v951 = vpop.permute.xlu0 %950
          %952 = vrot.lane.b32.xlu0 %v833, 1
          %v953 = vpop.permute.xlu0 %952
          %954 = vrot.lane.b32.xlu0 %v842, 1
          %v955 = vpop.permute.xlu0 %954
          %956 = vrot.lane.b32.xlu0 %v843, 1
          %v957 = vpop.permute.xlu0 %956
          %958 = vrot.lane.b32.xlu0 %v850, 1
          %v959 = vpop.permute.xlu0 %958
          %960 = vrot.lane.b32.xlu0 %v859, 1
          %v961 = vpop.permute.xlu0 %960
          %962 = vrot.lane.b32.xlu0 %v860, 1
          %v963 = vpop.permute.xlu0 %962
          %964 = vrot.lane.b32.xlu0 %v867, 1
          %v965 = vpop.permute.xlu0 %964
          %966 = vrot.lane.b32.xlu0 %v876, 1
          %v967 = vpop.permute.xlu0 %966
          %968 = vrot.lane.b32.xlu0 %v877, 1
          %v969 = vpop.permute.xlu0 %968
          %970 = vrot.lane.b32.xlu0 %v884, 1
          %v971 = vpop.permute.xlu0 %970
          %972 = vrot.lane.b32.xlu0 %v893, 1
          %v973 = vpop.permute.xlu0 %972
          %974 = vrot.lane.b32.xlu0 %v894, 1
          %v975 = vpop.permute.xlu0 %974
          %976 = vrot.lane.b32.xlu0 %v901, 1
          %v977 = vpop.permute.xlu0 %976
          %978 = vrot.lane.b32.xlu0 %v910, 1
          %v979 = vpop.permute.xlu0 %978
          %980 = vrot.lane.b32.xlu0 %v911, 1
          %v981 = vpop.permute.xlu0 %980
          %982 = vrot.lane.b32.xlu0 %v918, 1
          %v983 = vpop.permute.xlu0 %982
          %984 = vrot.lane.b32.xlu0 %v927, 1
          %v985 = vpop.permute.xlu0 %984
          %986 = vrot.lane.b32.xlu0 %v928, 1
          %v987 = vpop.permute.xlu0 %986
          %988 = vrot.lane.b32.xlu0 %v935, 1
          %v989 = vpop.permute.xlu0 %988
          %990 = vrot.lane.b32.xlu0 %v944, 1
          %v991 = vpop.permute.xlu0 %990
          %992 = vrot.lane.b32.xlu0 %v945, 1
          %v993 = vpop.permute.xlu0 %992
          %vm1018 = vcmask 11272
          %vm1019 = vmand %vm1018, %vm353
          %v1020 = vld [vmem:[%s664] sm:$0xf]
          %v1021 = vsel %vm1019, %v947, %v1020
          %1022 = vst [vmem:[%s664] sm:$0xf] %v1021
          %vm1023 = vcmask 11272
          %1024 = vst.msk [vmem:[%s664 + $0x4] sm:$0xf] %vm1023, %v949
          %vm1025 = vcmask 8200
          %vm1026 = vmand %vm1025, %vm297
          %v1027 = vld [vmem:[%s664 + $0x8] sm:$0x1]
          %v1028 = vsel %vm1026, %v951, %v1027
          %1029 = vst [vmem:[%s664 + $0x8] sm:$0x1] %v1028
          %v1030 = vld [vmem:[%s664 + $0xc] sm:$0xf]
          %v1031 = vsel %vm1019, %v953, %v1030
          %1032 = vst [vmem:[%s664 + $0xc] sm:$0xf] %v1031
          %1033 = vst.msk [vmem:[%s664 + $0x10] sm:$0xf] %vm1023, %v955
          %v1034 = vld [vmem:[%s664 + $0x14] sm:$0x1]
          %v1035 = vsel %vm1026, %v957, %v1034
          %1036 = vst [vmem:[%s664 + $0x14] sm:$0x1] %v1035
          %v1037 = vld [vmem:[%s664 + $0x18] sm:$0xf]
          %v1038 = vsel %vm1019, %v959, %v1037
          %1039 = vst [vmem:[%s664 + $0x18] sm:$0xf] %v1038
          %1040 = vst.msk [vmem:[%s664 + $0x1c] sm:$0xf] %vm1023, %v961
          %v1041 = vld [vmem:[%s664 + $0x20] sm:$0x1]
          %v1042 = vsel %vm1026, %v963, %v1041
          %1043 = vst [vmem:[%s664 + $0x20] sm:$0x1] %v1042
          %v1044 = vld [vmem:[%s664 + $0x24] sm:$0xf]
          %v1045 = vsel %vm1019, %v965, %v1044
          %1046 = vst [vmem:[%s664 + $0x24] sm:$0xf] %v1045
          %1047 = vst.msk [vmem:[%s664 + $0x28] sm:$0xf] %vm1023, %v967
          %v1048 = vld [vmem:[%s664 + $0x2c] sm:$0x1]
          %v1049 = vsel %vm1026, %v969, %v1048
          %1050 = vst [vmem:[%s664 + $0x2c] sm:$0x1] %v1049
          %v1051 = vld [vmem:[%s664 + $0x30] sm:$0xf]
          %v1052 = vsel %vm1019, %v971, %v1051
          %1053 = vst [vmem:[%s664 + $0x30] sm:$0xf] %v1052
          %1054 = vst.msk [vmem:[%s664 + $0x34] sm:$0xf] %vm1023, %v973
          %v1055 = vld [vmem:[%s664 + $0x38] sm:$0x1]
          %v1056 = vsel %vm1026, %v975, %v1055
          %1057 = vst [vmem:[%s664 + $0x38] sm:$0x1] %v1056
          %v1058 = vld [vmem:[%s664 + $0x3c] sm:$0xf]
          %v1059 = vsel %vm1019, %v977, %v1058
          %1060 = vst [vmem:[%s664 + $0x3c] sm:$0xf] %v1059
          %1061 = vst.msk [vmem:[%s664 + $0x40] sm:$0xf] %vm1023, %v979
          %v1062 = vld [vmem:[%s664 + $0x44] sm:$0x1]
          %v1063 = vsel %vm1026, %v981, %v1062
          %1064 = vst [vmem:[%s664 + $0x44] sm:$0x1] %v1063
          %v1065 = vld [vmem:[%s664 + $0x48] sm:$0xf]
          %v1066 = vsel %vm1019, %v983, %v1065
          %1067 = vst [vmem:[%s664 + $0x48] sm:$0xf] %v1066
          %1068 = vst.msk [vmem:[%s664 + $0x4c] sm:$0xf] %vm1023, %v985
          %v1069 = vld [vmem:[%s664 + $0x50] sm:$0x1]
          %v1070 = vsel %vm1026, %v987, %v1069
          %1071 = vst [vmem:[%s664 + $0x50] sm:$0x1] %v1070
          %v1072 = vld [vmem:[%s664 + $0x54] sm:$0xf]
          %v1073 = vsel %vm1019, %v989, %v1072
          %1074 = vst [vmem:[%s664 + $0x54] sm:$0xf] %v1073
          %1075 = vst.msk [vmem:[%s664 + $0x58] sm:$0xf] %vm1023, %v991
          %v1076 = vld [vmem:[%s664 + $0x5c] sm:$0x1]
          %v1077 = vsel %vm1026, %v993, %v1076
          %1078 = vst [vmem:[%s664 + $0x5c] sm:$0x1] %v1077
        $region53: #{vdsr_dem_forward.1} parent=43 // loop_footer
          %s414 = sadd.s32 1, %s410
        $region54: #{vdsr_dem_forward.1} parent=43 // loop_footer_branch
          %409 = sbr.rel target = $region50
        $region55: #{vdsr_dem_forward.1} parent=43 // loop_exit
          _
        loop: start=0, step=1, limit=2
        $region56: #{vdsr_dem_forward.1} parent=43 // loop_pre_header
          _
        $region57: #{vdsr_dem_forward.1} parent=43 // loop_header
          %s1080 = sphi 0, %s1084
          %p1081 = scmp.ge.s32.totalorder %s1080, 2
        $region58: #{vdsr_dem_forward.1} parent=43 // loop_header_branch
          %1083 = sbr.rel (%p1081) target = $region62
        $region59: #{vdsr_dem_forward.1} parent=43 // loop_body
          %s1085 = smul.u32 %s1080, 8
          %s1086 = smul.u32 %s1085, 3
          %s1087 = smul.addr %s1086, 4
          %s1088 = scalar_lea.vmem [#allocation2], %s1087
          %v1089 = vld [vmem:[%s1088] sm:$0xf]
          %v1090 = vld [vmem:[%s1088 + $0x4] sm:$0xf]
          %v1091 = vld [vmem:[%s1088 + $0xc] sm:$0xf]
          %v1092 = vld [vmem:[%s1088 + $0x10] sm:$0xf]
          %v1093 = vld [vmem:[%s1088 + $0x18] sm:$0xf]
          %v1094 = vld [vmem:[%s1088 + $0x1c] sm:$0xf]
          %v1095 = vld [vmem:[%s1088 + $0x24] sm:$0xf]
          %v1096 = vld [vmem:[%s1088 + $0x28] sm:$0xf]
          %v1097 = vld [vmem:[%s1088 + $0x30] sm:$0xf]
          %v1098 = vld [vmem:[%s1088 + $0x34] sm:$0xf]
          %v1099 = vld [vmem:[%s1088 + $0x3c] sm:$0xf]
          %v1100 = vld [vmem:[%s1088 + $0x40] sm:$0xf]
          %v1101 = vld [vmem:[%s1088 + $0x48] sm:$0xf]
          %v1102 = vld [vmem:[%s1088 + $0x4c] sm:$0xf]
          %v1103 = vld [vmem:[%s1088 + $0x54] sm:$0xf]
          %v1104 = vld [vmem:[%s1088 + $0x58] sm:$0xf]
          %vm1105 = vcmask 11264
          %1106 = vst.msk [vmem:[#allocation3] sm:$0xf] %vm1105, %v1089
          %1107 = vst.msk [vmem:[#allocation3 + $0x14] sm:$0xf] %vm1105, %v1090
          %1108 = vst.msk [vmem:[#allocation3 + $0x28] sm:$0xf] %vm1105, %v1091
          %1109 = vst.msk [vmem:[#allocation3 + $0x3c] sm:$0xf] %vm1105, %v1092
          %1110 = vst.msk [vmem:[#allocation3 + $0x50] sm:$0xf] %vm1105, %v1093
          %1111 = vst.msk [vmem:[#allocation3 + $0x64] sm:$0xf] %vm1105, %v1094
          %1112 = vst.msk [vmem:[#allocation3 + $0x78] sm:$0xf] %vm1105, %v1095
          %1113 = vst.msk [vmem:[#allocation3 + $0x8c] sm:$0xf] %vm1105, %v1096
          %1114 = vst.msk [vmem:[#allocation3 + $0xa0] sm:$0xf] %vm1105, %v1097
          %1115 = vst.msk [vmem:[#allocation3 + $0xb4] sm:$0xf] %vm1105, %v1098
          %1116 = vst.msk [vmem:[#allocation3 + $0xc8] sm:$0xf] %vm1105, %v1099
          %1117 = vst.msk [vmem:[#allocation3 + $0xdc] sm:$0xf] %vm1105, %v1100
          %1118 = vst.msk [vmem:[#allocation3 + $0xf0] sm:$0xf] %vm1105, %v1101
          %1119 = vst.msk [vmem:[#allocation3 + $0x104] sm:$0xf] %vm1105, %v1102
          %1120 = vst.msk [vmem:[#allocation3 + $0x118] sm:$0xf] %vm1105, %v1103
          %1121 = vst.msk [vmem:[#allocation3 + $0x12c] sm:$0xf] %vm1105, %v1104
          %v1122 = vld [vmem:[%s1088] sm:$0xf]
          %v1123 = vld [vmem:[%s1088 + $0x4] sm:$0xf]
          %v1124 = vld [vmem:[%s1088 + $0x8] sm:$0x1]
          %v1125 = vld [vmem:[%s1088 + $0xc] sm:$0xf]
          %v1126 = vld [vmem:[%s1088 + $0x10] sm:$0xf]
          %v1127 = vld [vmem:[%s1088 + $0x14] sm:$0x1]
          %v1128 = vld [vmem:[%s1088 + $0x18] sm:$0xf]
          %v1129 = vld [vmem:[%s1088 + $0x1c] sm:$0xf]
          %v1130 = vld [vmem:[%s1088 + $0x20] sm:$0x1]
          %v1131 = vld [vmem:[%s1088 + $0x24] sm:$0xf]
          %v1132 = vld [vmem:[%s1088 + $0x28] sm:$0xf]
          %v1133 = vld [vmem:[%s1088 + $0x2c] sm:$0x1]
          %v1134 = vld [vmem:[%s1088 + $0x30] sm:$0xf]
          %v1135 = vld [vmem:[%s1088 + $0x34] sm:$0xf]
          %v1136 = vld [vmem:[%s1088 + $0x38] sm:$0x1]
          %v1137 = vld [vmem:[%s1088 + $0x3c] sm:$0xf]
          %v1138 = vld [vmem:[%s1088 + $0x40] sm:$0xf]
          %v1139 = vld [vmem:[%s1088 + $0x44] sm:$0x1]
          %v1140 = vld [vmem:[%s1088 + $0x48] sm:$0xf]
          %v1141 = vld [vmem:[%s1088 + $0x4c] sm:$0xf]
          %v1142 = vld [vmem:[%s1088 + $0x50] sm:$0x1]
          %v1143 = vld [vmem:[%s1088 + $0x54] sm:$0xf]
          %v1144 = vld [vmem:[%s1088 + $0x58] sm:$0xf]
          %v1145 = vld [vmem:[%s1088 + $0x5c] sm:$0x1]
          %vm1146 = vsmask.f32 3328
          %vm1147 = vsmask.f32 7440
          %vm1148 = vmor %vm1146, %vm1147
          %v1150 = vshrl.u32 %v1122, 16
          %v1152 = vrot.slane %v1150, 4
          %v1153 = vshll.u32 %v1122, 16
          %v1155 = vrot.slane %v1153, 5
          %v1156 = vor.u32 %v1152, %v1155
          %v1157 = vrot.slane %v1156, 4
          %v1159 = vshll.u32 %v1123, 16
          %v1161 = vrot.slane %v1159, 5
          %v1162 = vsel %vm1148, %v1157, %v1161
          %v1163 = vshrl.u32 %v1123, 16
          %v1165 = vrot.slane %v1163, 4
          %v1166 = vor.u32 %v1165, %v1161
          %v1167 = vrot.slane %v1166, 4
          %v1169 = vshll.u32 %v1124, 16
          %v1171 = vrot.slane %v1169, 5
          %v1172 = vsel %vm1148, %v1167, %v1171
          %v1174 = vshrl.u32 %v1125, 16
          %v1176 = vrot.slane %v1174, 4
          %v1177 = vshll.u32 %v1125, 16
          %v1179 = vrot.slane %v1177, 5
          %v1180 = vor.u32 %v1176, %v1179
          %v1181 = vrot.slane %v1180, 4
          %v1183 = vshll.u32 %v1126, 16
          %v1185 = vrot.slane %v1183, 5
          %v1186 = vsel %vm1148, %v1181, %v1185
          %v1187 = vshrl.u32 %v1126, 16
          %v1189 = vrot.slane %v1187, 4
          %v1190 = vor.u32 %v1189, %v1185
          %v1191 = vrot.slane %v1190, 4
          %v1193 = vshll.u32 %v1127, 16
          %v1195 = vrot.slane %v1193, 5
          %v1196 = vsel %vm1148, %v1191, %v1195
          %v1198 = vshrl.u32 %v1128, 16
          %v1200 = vrot.slane %v1198, 4
          %v1201 = vshll.u32 %v1128, 16
          %v1203 = vrot.slane %v1201, 5
          %v1204 = vor.u32 %v1200, %v1203
          %v1205 = vrot.slane %v1204, 4
          %v1207 = vshll.u32 %v1129, 16
          %v1209 = vrot.slane %v1207, 5
          %v1210 = vsel %vm1148, %v1205, %v1209
          %v1211 = vshrl.u32 %v1129, 16
          %v1213 = vrot.slane %v1211, 4
          %v1214 = vor.u32 %v1213, %v1209
          %v1215 = vrot.slane %v1214, 4
          %v1217 = vshll.u32 %v1130, 16
          %v1219 = vrot.slane %v1217, 5
          %v1220 = vsel %vm1148, %v1215, %v1219
          %v1222 = vshrl.u32 %v1131, 16
          %v1224 = vrot.slane %v1222, 4
          %v1225 = vshll.u32 %v1131, 16
          %v1227 = vrot.slane %v1225, 5
          %v1228 = vor.u32 %v1224, %v1227
          %v1229 = vrot.slane %v1228, 4
          %v1231 = vshll.u32 %v1132, 16
          %v1233 = vrot.slane %v1231, 5
          %v1234 = vsel %vm1148, %v1229, %v1233
          %v1235 = vshrl.u32 %v1132, 16
          %v1237 = vrot.slane %v1235, 4
          %v1238 = vor.u32 %v1237, %v1233
          %v1239 = vrot.slane %v1238, 4
          %v1241 = vshll.u32 %v1133, 16
          %v1243 = vrot.slane %v1241, 5
          %v1244 = vsel %vm1148, %v1239, %v1243
          %v1246 = vshrl.u32 %v1134, 16
          %v1248 = vrot.slane %v1246, 4
          %v1249 = vshll.u32 %v1134, 16
          %v1251 = vrot.slane %v1249, 5
          %v1252 = vor.u32 %v1248, %v1251
          %v1253 = vrot.slane %v1252, 4
          %v1255 = vshll.u32 %v1135, 16
          %v1257 = vrot.slane %v1255, 5
          %v1258 = vsel %vm1148, %v1253, %v1257
          %v1259 = vshrl.u32 %v1135, 16
          %v1261 = vrot.slane %v1259, 4
          %v1262 = vor.u32 %v1261, %v1257
          %v1263 = vrot.slane %v1262, 4
          %v1265 = vshll.u32 %v1136, 16
          %v1267 = vrot.slane %v1265, 5
          %v1268 = vsel %vm1148, %v1263, %v1267
          %v1270 = vshrl.u32 %v1137, 16
          %v1272 = vrot.slane %v1270, 4
          %v1273 = vshll.u32 %v1137, 16
          %v1275 = vrot.slane %v1273, 5
          %v1276 = vor.u32 %v1272, %v1275
          %v1277 = vrot.slane %v1276, 4
          %v1279 = vshll.u32 %v1138, 16
          %v1281 = vrot.slane %v1279, 5
          %v1282 = vsel %vm1148, %v1277, %v1281
          %v1283 = vshrl.u32 %v1138, 16
          %v1285 = vrot.slane %v1283, 4
          %v1286 = vor.u32 %v1285, %v1281
          %v1287 = vrot.slane %v1286, 4
          %v1289 = vshll.u32 %v1139, 16
          %v1291 = vrot.slane %v1289, 5
          %v1292 = vsel %vm1148, %v1287, %v1291
          %v1294 = vshrl.u32 %v1140, 16
          %v1296 = vrot.slane %v1294, 4
          %v1297 = vshll.u32 %v1140, 16
          %v1299 = vrot.slane %v1297, 5
          %v1300 = vor.u32 %v1296, %v1299
          %v1301 = vrot.slane %v1300, 4
          %v1303 = vshll.u32 %v1141, 16
          %v1305 = vrot.slane %v1303, 5
          %v1306 = vsel %vm1148, %v1301, %v1305
          %v1307 = vshrl.u32 %v1141, 16
          %v1309 = vrot.slane %v1307, 4
          %v1310 = vor.u32 %v1309, %v1305
          %v1311 = vrot.slane %v1310, 4
          %v1313 = vshll.u32 %v1142, 16
          %v1315 = vrot.slane %v1313, 5
          %v1316 = vsel %vm1148, %v1311, %v1315
          %v1318 = vshrl.u32 %v1143, 16
          %v1320 = vrot.slane %v1318, 4
          %v1321 = vshll.u32 %v1143, 16
          %v1323 = vrot.slane %v1321, 5
          %v1324 = vor.u32 %v1320, %v1323
          %v1325 = vrot.slane %v1324, 4
          %v1327 = vshll.u32 %v1144, 16
          %v1329 = vrot.slane %v1327, 5
          %v1330 = vsel %vm1148, %v1325, %v1329
          %v1331 = vshrl.u32 %v1144, 16
          %v1333 = vrot.slane %v1331, 4
          %v1334 = vor.u32 %v1333, %v1329
          %v1335 = vrot.slane %v1334, 4
          %v1337 = vshll.u32 %v1145, 16
          %v1339 = vrot.slane %v1337, 5
          %v1340 = vsel %vm1148, %v1335, %v1339
          %1341 = vrot.lane.b32.xlu0 %v1162, 2
          %v1342 = vpop.permute.xlu0 %1341
          %1343 = vrot.lane.b32.xlu0 %v1172, 2
          %v1344 = vpop.permute.xlu0 %1343
          %1345 = vrot.lane.b32.xlu0 %v1186, 2
          %v1346 = vpop.permute.xlu0 %1345
          %1347 = vrot.lane.b32.xlu0 %v1196, 2
          %v1348 = vpop.permute.xlu0 %1347
          %1349 = vrot.lane.b32.xlu0 %v1210, 2
          %v1350 = vpop.permute.xlu0 %1349
          %1351 = vrot.lane.b32.xlu0 %v1220, 2
          %v1352 = vpop.permute.xlu0 %1351
          %1353 = vrot.lane.b32.xlu0 %v1234, 2
          %v1354 = vpop.permute.xlu0 %1353
          %1355 = vrot.lane.b32.xlu0 %v1244, 2
          %v1356 = vpop.permute.xlu0 %1355
          %1357 = vrot.lane.b32.xlu0 %v1258, 2
          %v1358 = vpop.permute.xlu0 %1357
          %1359 = vrot.lane.b32.xlu0 %v1268, 2
          %v1360 = vpop.permute.xlu0 %1359
          %1361 = vrot.lane.b32.xlu0 %v1282, 2
          %v1362 = vpop.permute.xlu0 %1361
          %1363 = vrot.lane.b32.xlu0 %v1292, 2
          %v1364 = vpop.permute.xlu0 %1363
          %1365 = vrot.lane.b32.xlu0 %v1306, 2
          %v1366 = vpop.permute.xlu0 %1365
          %1367 = vrot.lane.b32.xlu0 %v1316, 2
          %v1368 = vpop.permute.xlu0 %1367
          %1369 = vrot.lane.b32.xlu0 %v1330, 2
          %v1370 = vpop.permute.xlu0 %1369
          %1371 = vrot.lane.b32.xlu0 %v1340, 2
          %v1372 = vpop.permute.xlu0 %1371
          %vm1389 = vcmask 27664
          %1390 = vst.msk [vmem:[#allocation3] sm:$0xf] %vm1389, %v1342
          %1391 = vst.msk [vmem:[#allocation3 + $0x14] sm:$0xf] %vm1389, %v1344
          %1392 = vst.msk [vmem:[#allocation3 + $0x28] sm:$0xf] %vm1389, %v1346
          %1393 = vst.msk [vmem:[#allocation3 + $0x3c] sm:$0xf] %vm1389, %v1348
          %1394 = vst.msk [vmem:[#allocation3 + $0x50] sm:$0xf] %vm1389, %v1350
          %1395 = vst.msk [vmem:[#allocation3 + $0x64] sm:$0xf] %vm1389, %v1352
          %1396 = vst.msk [vmem:[#allocation3 + $0x78] sm:$0xf] %vm1389, %v1354
          %1397 = vst.msk [vmem:[#allocation3 + $0x8c] sm:$0xf] %vm1389, %v1356
          %1398 = vst.msk [vmem:[#allocation3 + $0xa0] sm:$0xf] %vm1389, %v1358
          %1399 = vst.msk [vmem:[#allocation3 + $0xb4] sm:$0xf] %vm1389, %v1360
          %1400 = vst.msk [vmem:[#allocation3 + $0xc8] sm:$0xf] %vm1389, %v1362
          %1401 = vst.msk [vmem:[#allocation3 + $0xdc] sm:$0xf] %vm1389, %v1364
          %1402 = vst.msk [vmem:[#allocation3 + $0xf0] sm:$0xf] %vm1389, %v1366
          %1403 = vst.msk [vmem:[#allocation3 + $0x104] sm:$0xf] %vm1389, %v1368
          %1404 = vst.msk [vmem:[#allocation3 + $0x118] sm:$0xf] %vm1389, %v1370
          %1405 = vst.msk [vmem:[#allocation3 + $0x12c] sm:$0xf] %vm1389, %v1372
          %v1406 = vld [vmem:[%s1088] sm:$0xe]
          %v1407 = vld [vmem:[%s1088 + $0x4] sm:$0xf]
          %v1408 = vld [vmem:[%s1088 + $0x8] sm:$0x1]
          %v1409 = vld [vmem:[%s1088 + $0xc] sm:$0xe]
          %v1410 = vld [vmem:[%s1088 + $0x10] sm:$0xf]
          %v1411 = vld [vmem:[%s1088 + $0x14] sm:$0x1]
          %v1412 = vld [vmem:[%s1088 + $0x18] sm:$0xe]
          %v1413 = vld [vmem:[%s1088 + $0x1c] sm:$0xf]
          %v1414 = vld [vmem:[%s1088 + $0x20] sm:$0x1]
          %v1415 = vld [vmem:[%s1088 + $0x24] sm:$0xe]
          %v1416 = vld [vmem:[%s1088 + $0x28] sm:$0xf]
          %v1417 = vld [vmem:[%s1088 + $0x2c] sm:$0x1]
          %v1418 = vld [vmem:[%s1088 + $0x30] sm:$0xe]
          %v1419 = vld [vmem:[%s1088 + $0x34] sm:$0xf]
          %v1420 = vld [vmem:[%s1088 + $0x38] sm:$0x1]
          %v1421 = vld [vmem:[%s1088 + $0x3c] sm:$0xe]
          %v1422 = vld [vmem:[%s1088 + $0x40] sm:$0xf]
          %v1423 = vld [vmem:[%s1088 + $0x44] sm:$0x1]
          %v1424 = vld [vmem:[%s1088 + $0x48] sm:$0xe]
          %v1425 = vld [vmem:[%s1088 + $0x4c] sm:$0xf]
          %v1426 = vld [vmem:[%s1088 + $0x50] sm:$0x1]
          %v1427 = vld [vmem:[%s1088 + $0x54] sm:$0xe]
          %v1428 = vld [vmem:[%s1088 + $0x58] sm:$0xf]
          %v1429 = vld [vmem:[%s1088 + $0x5c] sm:$0x1]
          %vm1454 = vcmask 1042432
          %vm1455 = vcmask 1046532
          %vm1456 = vmor %vm1454, %vm1455
          %v1457 = vrot.slane %v1406, 5
          %v1458 = vrot.slane %v1457, 4
          %v1459 = vrot.slane %v1407, 5
          %v1460 = vsel %vm1456, %v1458, %v1459
          %v1461 = vrot.slane %v1459, 4
          %v1462 = vrot.slane %v1408, 5
          %v1463 = vsel %vm1456, %v1461, %v1462
          %v1464 = vrot.slane %v1409, 5
          %v1465 = vrot.slane %v1464, 4
          %v1466 = vrot.slane %v1410, 5
          %v1467 = vsel %vm1456, %v1465, %v1466
          %v1468 = vrot.slane %v1466, 4
          %v1469 = vrot.slane %v1411, 5
          %v1470 = vsel %vm1456, %v1468, %v1469
          %v1471 = vrot.slane %v1412, 5
          %v1472 = vrot.slane %v1471, 4
          %v1473 = vrot.slane %v1413, 5
          %v1474 = vsel %vm1456, %v1472, %v1473
          %v1475 = vrot.slane %v1473, 4
          %v1476 = vrot.slane %v1414, 5
          %v1477 = vsel %vm1456, %v1475, %v1476
          %v1478 = vrot.slane %v1415, 5
          %v1479 = vrot.slane %v1478, 4
          %v1480 = vrot.slane %v1416, 5
          %v1481 = vsel %vm1456, %v1479, %v1480
          %v1482 = vrot.slane %v1480, 4
          %v1483 = vrot.slane %v1417, 5
          %v1484 = vsel %vm1456, %v1482, %v1483
          %v1485 = vrot.slane %v1418, 5
          %v1486 = vrot.slane %v1485, 4
          %v1487 = vrot.slane %v1419, 5
          %v1488 = vsel %vm1456, %v1486, %v1487
          %v1489 = vrot.slane %v1487, 4
          %v1490 = vrot.slane %v1420, 5
          %v1491 = vsel %vm1456, %v1489, %v1490
          %v1492 = vrot.slane %v1421, 5
          %v1493 = vrot.slane %v1492, 4
          %v1494 = vrot.slane %v1422, 5
          %v1495 = vsel %vm1456, %v1493, %v1494
          %v1496 = vrot.slane %v1494, 4
          %v1497 = vrot.slane %v1423, 5
          %v1498 = vsel %vm1456, %v1496, %v1497
          %v1499 = vrot.slane %v1424, 5
          %v1500 = vrot.slane %v1499, 4
          %v1501 = vrot.slane %v1425, 5
          %v1502 = vsel %vm1456, %v1500, %v1501
          %v1503 = vrot.slane %v1501, 4
          %v1504 = vrot.slane %v1426, 5
          %v1505 = vsel %vm1456, %v1503, %v1504
          %v1506 = vrot.slane %v1427, 5
          %v1507 = vrot.slane %v1506, 4
          %v1508 = vrot.slane %v1428, 5
          %v1509 = vsel %vm1456, %v1507, %v1508
          %v1510 = vrot.slane %v1508, 4
          %v1511 = vrot.slane %v1429, 5
          %v1512 = vsel %vm1456, %v1510, %v1511
          %1513 = vrot.lane.b32.xlu0 %v1460, 4
          %v1514 = vpop.permute.xlu0 %1513
          %1515 = vrot.lane.b32.xlu0 %v1463, 4
          %v1516 = vpop.permute.xlu0 %1515
          %1517 = vrot.lane.b32.xlu0 %v1467, 4
          %v1518 = vpop.permute.xlu0 %1517
          %1519 = vrot.lane.b32.xlu0 %v1470, 4
          %v1520 = vpop.permute.xlu0 %1519
          %1521 = vrot.lane.b32.xlu0 %v1474, 4
          %v1522 = vpop.permute.xlu0 %1521
          %1523 = vrot.lane.b32.xlu0 %v1477, 4
          %v1524 = vpop.permute.xlu0 %1523
          %1525 = vrot.lane.b32.xlu0 %v1481, 4
          %v1526 = vpop.permute.xlu0 %1525
          %1527 = vrot.lane.b32.xlu0 %v1484, 4
          %v1528 = vpop.permute.xlu0 %1527
          %1529 = vrot.lane.b32.xlu0 %v1488, 4
          %v1530 = vpop.permute.xlu0 %1529
          %1531 = vrot.lane.b32.xlu0 %v1491, 4
          %v1532 = vpop.permute.xlu0 %1531
          %1533 = vrot.lane.b32.xlu0 %v1495, 4
          %v1534 = vpop.permute.xlu0 %1533
          %1535 = vrot.lane.b32.xlu0 %v1498, 4
          %v1536 = vpop.permute.xlu0 %1535
          %1537 = vrot.lane.b32.xlu0 %v1502, 4
          %v1538 = vpop.permute.xlu0 %1537
          %1539 = vrot.lane.b32.xlu0 %v1505, 4
          %v1540 = vpop.permute.xlu0 %1539
          %1541 = vrot.lane.b32.xlu0 %v1509, 4
          %v1542 = vpop.permute.xlu0 %1541
          %1543 = vrot.lane.b32.xlu0 %v1512, 4
          %v1544 = vpop.permute.xlu0 %1543
          %vm1561 = vcmask 44064
          %1562 = vst.msk [vmem:[#allocation3] sm:$0xf] %vm1561, %v1514
          %1563 = vst.msk [vmem:[#allocation3 + $0x14] sm:$0xf] %vm1561, %v1516
          %1564 = vst.msk [vmem:[#allocation3 + $0x28] sm:$0xf] %vm1561, %v1518
          %1565 = vst.msk [vmem:[#allocation3 + $0x3c] sm:$0xf] %vm1561, %v1520
          %1566 = vst.msk [vmem:[#allocation3 + $0x50] sm:$0xf] %vm1561, %v1522
          %1567 = vst.msk [vmem:[#allocation3 + $0x64] sm:$0xf] %vm1561, %v1524
          %1568 = vst.msk [vmem:[#allocation3 + $0x78] sm:$0xf] %vm1561, %v1526
          %1569 = vst.msk [vmem:[#allocation3 + $0x8c] sm:$0xf] %vm1561, %v1528
          %1570 = vst.msk [vmem:[#allocation3 + $0xa0] sm:$0xf] %vm1561, %v1530
          %1571 = vst.msk [vmem:[#allocation3 + $0xb4] sm:$0xf] %vm1561, %v1532
          %1572 = vst.msk [vmem:[#allocation3 + $0xc8] sm:$0xf] %vm1561, %v1534
          %1573 = vst.msk [vmem:[#allocation3 + $0xdc] sm:$0xf] %vm1561, %v1536
          %1574 = vst.msk [vmem:[#allocation3 + $0xf0] sm:$0xf] %vm1561, %v1538
          %1575 = vst.msk [vmem:[#allocation3 + $0x104] sm:$0xf] %vm1561, %v1540
          %1576 = vst.msk [vmem:[#allocation3 + $0x118] sm:$0xf] %vm1561, %v1542
          %1577 = vst.msk [vmem:[#allocation3 + $0x12c] sm:$0xf] %vm1561, %v1544
          %s1578 = sadd.s32 %s1085, 1
          %s1579 = smul.u32 %s1578, 3
          %s1580 = smul.addr %s1579, 4
          %s1581 = scalar_lea.vmem [#allocation2], %s1580
          %v1582 = vld [vmem:[%s1581] sm:$0xf]
          %v1583 = vld [vmem:[%s1581 + $0x4] sm:$0xf]
          %v1584 = vld [vmem:[%s1581 + $0xc] sm:$0xf]
          %v1585 = vld [vmem:[%s1581 + $0x10] sm:$0xf]
          %v1586 = vld [vmem:[%s1581 + $0x18] sm:$0xf]
          %v1587 = vld [vmem:[%s1581 + $0x1c] sm:$0xf]
          %v1588 = vld [vmem:[%s1581 + $0x24] sm:$0xf]
          %v1589 = vld [vmem:[%s1581 + $0x28] sm:$0xf]
          %v1590 = vld [vmem:[%s1581 + $0x30] sm:$0xf]
          %v1591 = vld [vmem:[%s1581 + $0x34] sm:$0xf]
          %v1592 = vld [vmem:[%s1581 + $0x3c] sm:$0xf]
          %v1593 = vld [vmem:[%s1581 + $0x40] sm:$0xf]
          %v1594 = vld [vmem:[%s1581 + $0x48] sm:$0xf]
          %v1595 = vld [vmem:[%s1581 + $0x4c] sm:$0xf]
          %v1596 = vld [vmem:[%s1581 + $0x54] sm:$0xf]
          %v1597 = vld [vmem:[%s1581 + $0x58] sm:$0xf]
          %1614 = vrot.lane.b32.xlu0 %v1582, 6
          %v1615 = vpop.permute.xlu0 %1614
          %1616 = vrot.lane.b32.xlu0 %v1583, 6
          %v1617 = vpop.permute.xlu0 %1616
          %1618 = vrot.lane.b32.xlu0 %v1584, 6
          %v1619 = vpop.permute.xlu0 %1618
          %1620 = vrot.lane.b32.xlu0 %v1585, 6
          %v1621 = vpop.permute.xlu0 %1620
          %1622 = vrot.lane.b32.xlu0 %v1586, 6
          %v1623 = vpop.permute.xlu0 %1622
          %1624 = vrot.lane.b32.xlu0 %v1587, 6
          %v1625 = vpop.permute.xlu0 %1624
          %1626 = vrot.lane.b32.xlu0 %v1588, 6
          %v1627 = vpop.permute.xlu0 %1626
          %1628 = vrot.lane.b32.xlu0 %v1589, 6
          %v1629 = vpop.permute.xlu0 %1628
          %1630 = vrot.lane.b32.xlu0 %v1590, 6
          %v1631 = vpop.permute.xlu0 %1630
          %1632 = vrot.lane.b32.xlu0 %v1591, 6
          %v1633 = vpop.permute.xlu0 %1632
          %1634 = vrot.lane.b32.xlu0 %v1592, 6
          %v1635 = vpop.permute.xlu0 %1634
          %1636 = vrot.lane.b32.xlu0 %v1593, 6
          %v1637 = vpop.permute.xlu0 %1636
          %1638 = vrot.lane.b32.xlu0 %v1594, 6
          %v1639 = vpop.permute.xlu0 %1638
          %1640 = vrot.lane.b32.xlu0 %v1595, 6
          %v1641 = vpop.permute.xlu0 %1640
          %1642 = vrot.lane.b32.xlu0 %v1596, 6
          %v1643 = vpop.permute.xlu0 %1642
          %1644 = vrot.lane.b32.xlu0 %v1597, 6
          %v1645 = vpop.permute.xlu0 %1644
          %vm1662 = vcmask 60464
          %1663 = vst.msk [vmem:[#allocation3] sm:$0xf] %vm1662, %v1615
          %1664 = vst.msk [vmem:[#allocation3 + $0x14] sm:$0xf] %vm1662, %v1617
          %1665 = vst.msk [vmem:[#allocation3 + $0x28] sm:$0xf] %vm1662, %v1619
          %1666 = vst.msk [vmem:[#allocation3 + $0x3c] sm:$0xf] %vm1662, %v1621
          %1667 = vst.msk [vmem:[#allocation3 + $0x50] sm:$0xf] %vm1662, %v1623
          %1668 = vst.msk [vmem:[#allocation3 + $0x64] sm:$0xf] %vm1662, %v1625
          %1669 = vst.msk [vmem:[#allocation3 + $0x78] sm:$0xf] %vm1662, %v1627
          %1670 = vst.msk [vmem:[#allocation3 + $0x8c] sm:$0xf] %vm1662, %v1629
          %1671 = vst.msk [vmem:[#allocation3 + $0xa0] sm:$0xf] %vm1662, %v1631
          %1672 = vst.msk [vmem:[#allocation3 + $0xb4] sm:$0xf] %vm1662, %v1633
          %1673 = vst.msk [vmem:[#allocation3 + $0xc8] sm:$0xf] %vm1662, %v1635
          %1674 = vst.msk [vmem:[#allocation3 + $0xdc] sm:$0xf] %vm1662, %v1637
          %1675 = vst.msk [vmem:[#allocation3 + $0xf0] sm:$0xf] %vm1662, %v1639
          %1676 = vst.msk [vmem:[#allocation3 + $0x104] sm:$0xf] %vm1662, %v1641
          %1677 = vst.msk [vmem:[#allocation3 + $0x118] sm:$0xf] %vm1662, %v1643
          %1678 = vst.msk [vmem:[#allocation3 + $0x12c] sm:$0xf] %vm1662, %v1645
          %v1679 = vld [vmem:[%s1581] sm:$0xf]
          %v1680 = vld [vmem:[%s1581 + $0x4] sm:$0xf]
          %v1681 = vld [vmem:[%s1581 + $0x8] sm:$0x1]
          %v1682 = vld [vmem:[%s1581 + $0xc] sm:$0xf]
          %v1683 = vld [vmem:[%s1581 + $0x10] sm:$0xf]
          %v1684 = vld [vmem:[%s1581 + $0x14] sm:$0x1]
          %v1685 = vld [vmem:[%s1581 + $0x18] sm:$0xf]
          %v1686 = vld [vmem:[%s1581 + $0x1c] sm:$0xf]
          %v1687 = vld [vmem:[%s1581 + $0x20] sm:$0x1]
          %v1688 = vld [vmem:[%s1581 + $0x24] sm:$0xf]
          %v1689 = vld [vmem:[%s1581 + $0x28] sm:$0xf]
          %v1690 = vld [vmem:[%s1581 + $0x2c] sm:$0x1]
          %v1691 = vld [vmem:[%s1581 + $0x30] sm:$0xf]
          %v1692 = vld [vmem:[%s1581 + $0x34] sm:$0xf]
          %v1693 = vld [vmem:[%s1581 + $0x38] sm:$0x1]
          %v1694 = vld [vmem:[%s1581 + $0x3c] sm:$0xf]
          %v1695 = vld [vmem:[%s1581 + $0x40] sm:$0xf]
          %v1696 = vld [vmem:[%s1581 + $0x44] sm:$0x1]
          %v1697 = vld [vmem:[%s1581 + $0x48] sm:$0xf]
          %v1698 = vld [vmem:[%s1581 + $0x4c] sm:$0xf]
          %v1699 = vld [vmem:[%s1581 + $0x50] sm:$0x1]
          %v1700 = vld [vmem:[%s1581 + $0x54] sm:$0xf]
          %v1701 = vld [vmem:[%s1581 + $0x58] sm:$0xf]
          %v1702 = vld [vmem:[%s1581 + $0x5c] sm:$0x1]
          %v1704 = vshrl.u32 %v1679, 16
          %v1706 = vrot.slane %v1704, 4
          %v1707 = vshll.u32 %v1679, 16
          %v1709 = vrot.slane %v1707, 5
          %v1710 = vor.u32 %v1706, %v1709
          %v1711 = vrot.slane %v1710, 4
          %v1713 = vshll.u32 %v1680, 16
          %v1715 = vrot.slane %v1713, 5
          %v1716 = vsel %vm1148, %v1711, %v1715
          %v1717 = vshrl.u32 %v1680, 16
          %v1719 = vrot.slane %v1717, 4
          %v1720 = vor.u32 %v1719, %v1715
          %v1721 = vrot.slane %v1720, 4
          %v1723 = vshll.u32 %v1681, 16
          %v1725 = vrot.slane %v1723, 5
          %v1726 = vsel %vm1148, %v1721, %v1725
          %v1728 = vshrl.u32 %v1682, 16
          %v1730 = vrot.slane %v1728, 4
          %v1731 = vshll.u32 %v1682, 16
          %v1733 = vrot.slane %v1731, 5
          %v1734 = vor.u32 %v1730, %v1733
          %v1735 = vrot.slane %v1734, 4
          %v1737 = vshll.u32 %v1683, 16
          %v1739 = vrot.slane %v1737, 5
          %v1740 = vsel %vm1148, %v1735, %v1739
          %v1741 = vshrl.u32 %v1683, 16
          %v1743 = vrot.slane %v1741, 4
          %v1744 = vor.u32 %v1743, %v1739
          %v1745 = vrot.slane %v1744, 4
          %v1747 = vshll.u32 %v1684, 16
          %v1749 = vrot.slane %v1747, 5
          %v1750 = vsel %vm1148, %v1745, %v1749
          %v1752 = vshrl.u32 %v1685, 16
          %v1754 = vrot.slane %v1752, 4
          %v1755 = vshll.u32 %v1685, 16
          %v1757 = vrot.slane %v1755, 5
          %v1758 = vor.u32 %v1754, %v1757
          %v1759 = vrot.slane %v1758, 4
          %v1761 = vshll.u32 %v1686, 16
          %v1763 = vrot.slane %v1761, 5
          %v1764 = vsel %vm1148, %v1759, %v1763
          %v1765 = vshrl.u32 %v1686, 16
          %v1767 = vrot.slane %v1765, 4
          %v1768 = vor.u32 %v1767, %v1763
          %v1769 = vrot.slane %v1768, 4
          %v1771 = vshll.u32 %v1687, 16
          %v1773 = vrot.slane %v1771, 5
          %v1774 = vsel %vm1148, %v1769, %v1773
          %v1776 = vshrl.u32 %v1688, 16
          %v1778 = vrot.slane %v1776, 4
          %v1779 = vshll.u32 %v1688, 16
          %v1781 = vrot.slane %v1779, 5
          %v1782 = vor.u32 %v1778, %v1781
          %v1783 = vrot.slane %v1782, 4
          %v1785 = vshll.u32 %v1689, 16
          %v1787 = vrot.slane %v1785, 5
          %v1788 = vsel %vm1148, %v1783, %v1787
          %v1789 = vshrl.u32 %v1689, 16
          %v1791 = vrot.slane %v1789, 4
          %v1792 = vor.u32 %v1791, %v1787
          %v1793 = vrot.slane %v1792, 4
          %v1795 = vshll.u32 %v1690, 16
          %v1797 = vrot.slane %v1795, 5
          %v1798 = vsel %vm1148, %v1793, %v1797
          %v1800 = vshrl.u32 %v1691, 16
          %v1802 = vrot.slane %v1800, 4
          %v1803 = vshll.u32 %v1691, 16
          %v1805 = vrot.slane %v1803, 5
          %v1806 = vor.u32 %v1802, %v1805
          %v1807 = vrot.slane %v1806, 4
          %v1809 = vshll.u32 %v1692, 16
          %v1811 = vrot.slane %v1809, 5
          %v1812 = vsel %vm1148, %v1807, %v1811
          %v1813 = vshrl.u32 %v1692, 16
          %v1815 = vrot.slane %v1813, 4
          %v1816 = vor.u32 %v1815, %v1811
          %v1817 = vrot.slane %v1816, 4
          %v1819 = vshll.u32 %v1693, 16
          %v1821 = vrot.slane %v1819, 5
          %v1822 = vsel %vm1148, %v1817, %v1821
          %v1824 = vshrl.u32 %v1694, 16
          %v1826 = vrot.slane %v1824, 4
          %v1827 = vshll.u32 %v1694, 16
          %v1829 = vrot.slane %v1827, 5
          %v1830 = vor.u32 %v1826, %v1829
          %v1831 = vrot.slane %v1830, 4
          %v1833 = vshll.u32 %v1695, 16
          %v1835 = vrot.slane %v1833, 5
          %v1836 = vsel %vm1148, %v1831, %v1835
          %v1837 = vshrl.u32 %v1695, 16
          %v1839 = vrot.slane %v1837, 4
          %v1840 = vor.u32 %v1839, %v1835
          %v1841 = vrot.slane %v1840, 4
          %v1843 = vshll.u32 %v1696, 16
          %v1845 = vrot.slane %v1843, 5
          %v1846 = vsel %vm1148, %v1841, %v1845
          %v1848 = vshrl.u32 %v1697, 16
          %v1850 = vrot.slane %v1848, 4
          %v1851 = vshll.u32 %v1697, 16
          %v1853 = vrot.slane %v1851, 5
          %v1854 = vor.u32 %v1850, %v1853
          %v1855 = vrot.slane %v1854, 4
          %v1857 = vshll.u32 %v1698, 16
          %v1859 = vrot.slane %v1857, 5
          %v1860 = vsel %vm1148, %v1855, %v1859
          %v1861 = vshrl.u32 %v1698, 16
          %v1863 = vrot.slane %v1861, 4
          %v1864 = vor.u32 %v1863, %v1859
          %v1865 = vrot.slane %v1864, 4
          %v1867 = vshll.u32 %v1699, 16
          %v1869 = vrot.slane %v1867, 5
          %v1870 = vsel %vm1148, %v1865, %v1869
          %v1872 = vshrl.u32 %v1700, 16
          %v1874 = vrot.slane %v1872, 4
          %v1875 = vshll.u32 %v1700, 16
          %v1877 = vrot.slane %v1875, 5
          %v1878 = vor.u32 %v1874, %v1877
          %v1879 = vrot.slane %v1878, 4
          %v1881 = vshll.u32 %v1701, 16
          %v1883 = vrot.slane %v1881, 5
          %v1884 = vsel %vm1148, %v1879, %v1883
          %v1885 = vshrl.u32 %v1701, 16
          %v1887 = vrot.slane %v1885, 4
          %v1888 = vor.u32 %v1887, %v1883
          %v1889 = vrot.slane %v1888, 4
          %v1891 = vshll.u32 %v1702, 16
          %v1893 = vrot.slane %v1891, 5
          %v1894 = vsel %vm1148, %v1889, %v1893
          %1895 = vrot.lane.b32.xlu0 %v1716, 8
          %v1896 = vpop.permute.xlu0 %1895
          %1897 = vrot.lane.b32.xlu0 %v1726, 8
          %v1898 = vpop.permute.xlu0 %1897
          %1899 = vrot.lane.b32.xlu0 %v1740, 8
          %v1900 = vpop.permute.xlu0 %1899
          %1901 = vrot.lane.b32.xlu0 %v1750, 8
          %v1902 = vpop.permute.xlu0 %1901
          %1903 = vrot.lane.b32.xlu0 %v1764, 8
          %v1904 = vpop.permute.xlu0 %1903
          %1905 = vrot.lane.b32.xlu0 %v1774, 8
          %v1906 = vpop.permute.xlu0 %1905
          %1907 = vrot.lane.b32.xlu0 %v1788, 8
          %v1908 = vpop.permute.xlu0 %1907
          %1909 = vrot.lane.b32.xlu0 %v1798, 8
          %v1910 = vpop.permute.xlu0 %1909
          %1911 = vrot.lane.b32.xlu0 %v1812, 8
          %v1912 = vpop.permute.xlu0 %1911
          %1913 = vrot.lane.b32.xlu0 %v1822, 8
          %v1914 = vpop.permute.xlu0 %1913
          %1915 = vrot.lane.b32.xlu0 %v1836, 8
          %v1916 = vpop.permute.xlu0 %1915
          %1917 = vrot.lane.b32.xlu0 %v1846, 8
          %v1918 = vpop.permute.xlu0 %1917
          %1919 = vrot.lane.b32.xlu0 %v1860, 8
          %v1920 = vpop.permute.xlu0 %1919
          %1921 = vrot.lane.b32.xlu0 %v1870, 8
          %v1922 = vpop.permute.xlu0 %1921
          %1923 = vrot.lane.b32.xlu0 %v1884, 8
          %v1924 = vpop.permute.xlu0 %1923
          %1925 = vrot.lane.b32.xlu0 %v1894, 8
          %v1926 = vpop.permute.xlu0 %1925
          %vm1943 = vcmask 76864
          %1944 = vst.msk [vmem:[#allocation3] sm:$0xf] %vm1943, %v1896
          %1945 = vst.msk [vmem:[#allocation3 + $0x14] sm:$0xf] %vm1943, %v1898
          %1946 = vst.msk [vmem:[#allocation3 + $0x28] sm:$0xf] %vm1943, %v1900
          %1947 = vst.msk [vmem:[#allocation3 + $0x3c] sm:$0xf] %vm1943, %v1902
          %1948 = vst.msk [vmem:[#allocation3 + $0x50] sm:$0xf] %vm1943, %v1904
          %1949 = vst.msk [vmem:[#allocation3 + $0x64] sm:$0xf] %vm1943, %v1906
          %1950 = vst.msk [vmem:[#allocation3 + $0x78] sm:$0xf] %vm1943, %v1908
          %1951 = vst.msk [vmem:[#allocation3 + $0x8c] sm:$0xf] %vm1943, %v1910
          %1952 = vst.msk [vmem:[#allocation3 + $0xa0] sm:$0xf] %vm1943, %v1912
          %1953 = vst.msk [vmem:[#allocation3 + $0xb4] sm:$0xf] %vm1943, %v1914
          %1954 = vst.msk [vmem:[#allocation3 + $0xc8] sm:$0xf] %vm1943, %v1916
          %1955 = vst.msk [vmem:[#allocation3 + $0xdc] sm:$0xf] %vm1943, %v1918
          %1956 = vst.msk [vmem:[#allocation3 + $0xf0] sm:$0xf] %vm1943, %v1920
          %1957 = vst.msk [vmem:[#allocation3 + $0x104] sm:$0xf] %vm1943, %v1922
          %1958 = vst.msk [vmem:[#allocation3 + $0x118] sm:$0xf] %vm1943, %v1924
          %1959 = vst.msk [vmem:[#allocation3 + $0x12c] sm:$0xf] %vm1943, %v1926
          %v1960 = vld [vmem:[%s1581] sm:$0xe]
          %v1961 = vld [vmem:[%s1581 + $0x4] sm:$0xf]
          %v1962 = vld [vmem:[%s1581 + $0x8] sm:$0x1]
          %v1963 = vld [vmem:[%s1581 + $0xc] sm:$0xe]
          %v1964 = vld [vmem:[%s1581 + $0x10] sm:$0xf]
          %v1965 = vld [vmem:[%s1581 + $0x14] sm:$0x1]
          %v1966 = vld [vmem:[%s1581 + $0x18] sm:$0xe]
          %v1967 = vld [vmem:[%s1581 + $0x1c] sm:$0xf]
          %v1968 = vld [vmem:[%s1581 + $0x20] sm:$0x1]
          %v1969 = vld [vmem:[%s1581 + $0x24] sm:$0xe]
          %v1970 = vld [vmem:[%s1581 + $0x28] sm:$0xf]
          %v1971 = vld [vmem:[%s1581 + $0x2c] sm:$0x1]
          %v1972 = vld [vmem:[%s1581 + $0x30] sm:$0xe]
          %v1973 = vld [vmem:[%s1581 + $0x34] sm:$0xf]
          %v1974 = vld [vmem:[%s1581 + $0x38] sm:$0x1]
          %v1975 = vld [vmem:[%s1581 + $0x3c] sm:$0xe]
          %v1976 = vld [vmem:[%s1581 + $0x40] sm:$0xf]
          %v1977 = vld [vmem:[%s1581 + $0x44] sm:$0x1]
          %v1978 = vld [vmem:[%s1581 + $0x48] sm:$0xe]
          %v1979 = vld [vmem:[%s1581 + $0x4c] sm:$0xf]
          %v1980 = vld [vmem:[%s1581 + $0x50] sm:$0x1]
          %v1981 = vld [vmem:[%s1581 + $0x54] sm:$0xe]
          %v1982 = vld [vmem:[%s1581 + $0x58] sm:$0xf]
          %v1983 = vld [vmem:[%s1581 + $0x5c] sm:$0x1]
          %v2008 = vrot.slane %v1960, 5
          %v2009 = vrot.slane %v2008, 4
          %v2010 = vrot.slane %v1961, 5
          %v2011 = vsel %vm1456, %v2009, %v2010
          %v2012 = vrot.slane %v2010, 4
          %v2013 = vrot.slane %v1962, 5
          %v2014 = vsel %vm1456, %v2012, %v2013
          %v2015 = vrot.slane %v1963, 5
          %v2016 = vrot.slane %v2015, 4
          %v2017 = vrot.slane %v1964, 5
          %v2018 = vsel %vm1456, %v2016, %v2017
          %v2019 = vrot.slane %v2017, 4
          %v2020 = vrot.slane %v1965, 5
          %v2021 = vsel %vm1456, %v2019, %v2020
          %v2022 = vrot.slane %v1966, 5
          %v2023 = vrot.slane %v2022, 4
          %v2024 = vrot.slane %v1967, 5
          %v2025 = vsel %vm1456, %v2023, %v2024
          %v2026 = vrot.slane %v2024, 4
          %v2027 = vrot.slane %v1968, 5
          %v2028 = vsel %vm1456, %v2026, %v2027
          %v2029 = vrot.slane %v1969, 5
          %v2030 = vrot.slane %v2029, 4
          %v2031 = vrot.slane %v1970, 5
          %v2032 = vsel %vm1456, %v2030, %v2031
          %v2033 = vrot.slane %v2031, 4
          %v2034 = vrot.slane %v1971, 5
          %v2035 = vsel %vm1456, %v2033, %v2034
          %v2036 = vrot.slane %v1972, 5
          %v2037 = vrot.slane %v2036, 4
          %v2038 = vrot.slane %v1973, 5
          %v2039 = vsel %vm1456, %v2037, %v2038
          %v2040 = vrot.slane %v2038, 4
          %v2041 = vrot.slane %v1974, 5
          %v2042 = vsel %vm1456, %v2040, %v2041
          %v2043 = vrot.slane %v1975, 5
          %v2044 = vrot.slane %v2043, 4
          %v2045 = vrot.slane %v1976, 5
          %v2046 = vsel %vm1456, %v2044, %v2045
          %v2047 = vrot.slane %v2045, 4
          %v2048 = vrot.slane %v1977, 5
          %v2049 = vsel %vm1456, %v2047, %v2048
          %v2050 = vrot.slane %v1978, 5
          %v2051 = vrot.slane %v2050, 4
          %v2052 = vrot.slane %v1979, 5
          %v2053 = vsel %vm1456, %v2051, %v2052
          %v2054 = vrot.slane %v2052, 4
          %v2055 = vrot.slane %v1980, 5
          %v2056 = vsel %vm1456, %v2054, %v2055
          %v2057 = vrot.slane %v1981, 5
          %v2058 = vrot.slane %v2057, 4
          %v2059 = vrot.slane %v1982, 5
          %v2060 = vsel %vm1456, %v2058, %v2059
          %v2061 = vrot.slane %v2059, 4
          %v2062 = vrot.slane %v1983, 5
          %v2063 = vsel %vm1456, %v2061, %v2062
          %2064 = vrot.lane.b32.xlu0 %v2011, 10
          %v2065 = vpop.permute.xlu0 %2064
          %2066 = vrot.lane.b32.xlu0 %v2014, 10
          %v2067 = vpop.permute.xlu0 %2066
          %2068 = vrot.lane.b32.xlu0 %v2018, 10
          %v2069 = vpop.permute.xlu0 %2068
          %2070 = vrot.lane.b32.xlu0 %v2021, 10
          %v2071 = vpop.permute.xlu0 %2070
          %2072 = vrot.lane.b32.xlu0 %v2025, 10
          %v2073 = vpop.permute.xlu0 %2072
          %2074 = vrot.lane.b32.xlu0 %v2028, 10
          %v2075 = vpop.permute.xlu0 %2074
          %2076 = vrot.lane.b32.xlu0 %v2032, 10
          %v2077 = vpop.permute.xlu0 %2076
          %2078 = vrot.lane.b32.xlu0 %v2035, 10
          %v2079 = vpop.permute.xlu0 %2078
          %2080 = vrot.lane.b32.xlu0 %v2039, 10
          %v2081 = vpop.permute.xlu0 %2080
          %2082 = vrot.lane.b32.xlu0 %v2042, 10
          %v2083 = vpop.permute.xlu0 %2082
          %2084 = vrot.lane.b32.xlu0 %v2046, 10
          %v2085 = vpop.permute.xlu0 %2084
          %2086 = vrot.lane.b32.xlu0 %v2049, 10
          %v2087 = vpop.permute.xlu0 %2086
          %2088 = vrot.lane.b32.xlu0 %v2053, 10
          %v2089 = vpop.permute.xlu0 %2088
          %2090 = vrot.lane.b32.xlu0 %v2056, 10
          %v2091 = vpop.permute.xlu0 %2090
          %2092 = vrot.lane.b32.xlu0 %v2060, 10
          %v2093 = vpop.permute.xlu0 %2092
          %2094 = vrot.lane.b32.xlu0 %v2063, 10
          %v2095 = vpop.permute.xlu0 %2094
          %vm2112 = vcmask 93264
          %2113 = vst.msk [vmem:[#allocation3] sm:$0xf] %vm2112, %v2065
          %2114 = vst.msk [vmem:[#allocation3 + $0x14] sm:$0xf] %vm2112, %v2067
          %2115 = vst.msk [vmem:[#allocation3 + $0x28] sm:$0xf] %vm2112, %v2069
          %2116 = vst.msk [vmem:[#allocation3 + $0x3c] sm:$0xf] %vm2112, %v2071
          %2117 = vst.msk [vmem:[#allocation3 + $0x50] sm:$0xf] %vm2112, %v2073
          %2118 = vst.msk [vmem:[#allocation3 + $0x64] sm:$0xf] %vm2112, %v2075
          %2119 = vst.msk [vmem:[#allocation3 + $0x78] sm:$0xf] %vm2112, %v2077
          %2120 = vst.msk [vmem:[#allocation3 + $0x8c] sm:$0xf] %vm2112, %v2079
          %2121 = vst.msk [vmem:[#allocation3 + $0xa0] sm:$0xf] %vm2112, %v2081
          %2122 = vst.msk [vmem:[#allocation3 + $0xb4] sm:$0xf] %vm2112, %v2083
          %2123 = vst.msk [vmem:[#allocation3 + $0xc8] sm:$0xf] %vm2112, %v2085
          %2124 = vst.msk [vmem:[#allocation3 + $0xdc] sm:$0xf] %vm2112, %v2087
          %2125 = vst.msk [vmem:[#allocation3 + $0xf0] sm:$0xf] %vm2112, %v2089
          %2126 = vst.msk [vmem:[#allocation3 + $0x104] sm:$0xf] %vm2112, %v2091
          %2127 = vst.msk [vmem:[#allocation3 + $0x118] sm:$0xf] %vm2112, %v2093
          %2128 = vst.msk [vmem:[#allocation3 + $0x12c] sm:$0xf] %vm2112, %v2095
          %s2129 = sadd.s32 %s1085, 2
          %s2130 = smul.u32 %s2129, 3
          %s2131 = smul.addr %s2130, 4
          %s2132 = scalar_lea.vmem [#allocation2], %s2131
          %v2133 = vld [vmem:[%s2132] sm:$0xf]
          %v2134 = vld [vmem:[%s2132 + $0x4] sm:$0xf]
          %v2135 = vld [vmem:[%s2132 + $0xc] sm:$0xf]
          %v2136 = vld [vmem:[%s2132 + $0x10] sm:$0xf]
          %v2137 = vld [vmem:[%s2132 + $0x18] sm:$0xf]
          %v2138 = vld [vmem:[%s2132 + $0x1c] sm:$0xf]
          %v2139 = vld [vmem:[%s2132 + $0x24] sm:$0xf]
          %v2140 = vld [vmem:[%s2132 + $0x28] sm:$0xf]
          %v2141 = vld [vmem:[%s2132 + $0x30] sm:$0xf]
          %v2142 = vld [vmem:[%s2132 + $0x34] sm:$0xf]
          %v2143 = vld [vmem:[%s2132 + $0x3c] sm:$0xf]
          %v2144 = vld [vmem:[%s2132 + $0x40] sm:$0xf]
          %v2145 = vld [vmem:[%s2132 + $0x48] sm:$0xf]
          %v2146 = vld [vmem:[%s2132 + $0x4c] sm:$0xf]
          %v2147 = vld [vmem:[%s2132 + $0x54] sm:$0xf]
          %v2148 = vld [vmem:[%s2132 + $0x58] sm:$0xf]
          %2165 = vrot.lane.b32.xlu0 %v2133, 12
          %v2166 = vpop.permute.xlu0 %2165
          %2167 = vrot.lane.b32.xlu0 %v2134, 12
          %v2168 = vpop.permute.xlu0 %2167
          %2169 = vrot.lane.b32.xlu0 %v2135, 12
          %v2170 = vpop.permute.xlu0 %2169
          %2171 = vrot.lane.b32.xlu0 %v2136, 12
          %v2172 = vpop.permute.xlu0 %2171
          %2173 = vrot.lane.b32.xlu0 %v2137, 12
          %v2174 = vpop.permute.xlu0 %2173
          %2175 = vrot.lane.b32.xlu0 %v2138, 12
          %v2176 = vpop.permute.xlu0 %2175
          %2177 = vrot.lane.b32.xlu0 %v2139, 12
          %v2178 = vpop.permute.xlu0 %2177
          %2179 = vrot.lane.b32.xlu0 %v2140, 12
          %v2180 = vpop.permute.xlu0 %2179
          %2181 = vrot.lane.b32.xlu0 %v2141, 12
          %v2182 = vpop.permute.xlu0 %2181
          %2183 = vrot.lane.b32.xlu0 %v2142, 12
          %v2184 = vpop.permute.xlu0 %2183
          %2185 = vrot.lane.b32.xlu0 %v2143, 12
          %v2186 = vpop.permute.xlu0 %2185
          %2187 = vrot.lane.b32.xlu0 %v2144, 12
          %v2188 = vpop.permute.xlu0 %2187
          %2189 = vrot.lane.b32.xlu0 %v2145, 12
          %v2190 = vpop.permute.xlu0 %2189
          %2191 = vrot.lane.b32.xlu0 %v2146, 12
          %v2192 = vpop.permute.xlu0 %2191
          %2193 = vrot.lane.b32.xlu0 %v2147, 12
          %v2194 = vpop.permute.xlu0 %2193
          %2195 = vrot.lane.b32.xlu0 %v2148, 12
          %v2196 = vpop.permute.xlu0 %2195
          %vm2213 = vcmask 109664
          %2214 = vst.msk [vmem:[#allocation3] sm:$0xf] %vm2213, %v2166
          %2215 = vst.msk [vmem:[#allocation3 + $0x14] sm:$0xf] %vm2213, %v2168
          %2216 = vst.msk [vmem:[#allocation3 + $0x28] sm:$0xf] %vm2213, %v2170
          %2217 = vst.msk [vmem:[#allocation3 + $0x3c] sm:$0xf] %vm2213, %v2172
          %2218 = vst.msk [vmem:[#allocation3 + $0x50] sm:$0xf] %vm2213, %v2174
          %2219 = vst.msk [vmem:[#allocation3 + $0x64] sm:$0xf] %vm2213, %v2176
          %2220 = vst.msk [vmem:[#allocation3 + $0x78] sm:$0xf] %vm2213, %v2178
          %2221 = vst.msk [vmem:[#allocation3 + $0x8c] sm:$0xf] %vm2213, %v2180
          %2222 = vst.msk [vmem:[#allocation3 + $0xa0] sm:$0xf] %vm2213, %v2182
          %2223 = vst.msk [vmem:[#allocation3 + $0xb4] sm:$0xf] %vm2213, %v2184
          %2224 = vst.msk [vmem:[#allocation3 + $0xc8] sm:$0xf] %vm2213, %v2186
          %2225 = vst.msk [vmem:[#allocation3 + $0xdc] sm:$0xf] %vm2213, %v2188
          %2226 = vst.msk [vmem:[#allocation3 + $0xf0] sm:$0xf] %vm2213, %v2190
          %2227 = vst.msk [vmem:[#allocation3 + $0x104] sm:$0xf] %vm2213, %v2192
          %2228 = vst.msk [vmem:[#allocation3 + $0x118] sm:$0xf] %vm2213, %v2194
          %2229 = vst.msk [vmem:[#allocation3 + $0x12c] sm:$0xf] %vm2213, %v2196
          %v2230 = vld [vmem:[%s2132] sm:$0xf]
          %v2231 = vld [vmem:[%s2132 + $0x4] sm:$0xf]
          %v2232 = vld [vmem:[%s2132 + $0x8] sm:$0x1]
          %v2233 = vld [vmem:[%s2132 + $0xc] sm:$0xf]
          %v2234 = vld [vmem:[%s2132 + $0x10] sm:$0xf]
          %v2235 = vld [vmem:[%s2132 + $0x14] sm:$0x1]
          %v2236 = vld [vmem:[%s2132 + $0x18] sm:$0xf]
          %v2237 = vld [vmem:[%s2132 + $0x1c] sm:$0xf]
          %v2238 = vld [vmem:[%s2132 + $0x20] sm:$0x1]
          %v2239 = vld [vmem:[%s2132 + $0x24] sm:$0xf]
          %v2240 = vld [vmem:[%s2132 + $0x28] sm:$0xf]
          %v2241 = vld [vmem:[%s2132 + $0x2c] sm:$0x1]
          %v2242 = vld [vmem:[%s2132 + $0x30] sm:$0xf]
          %v2243 = vld [vmem:[%s2132 + $0x34] sm:$0xf]
          %v2244 = vld [vmem:[%s2132 + $0x38] sm:$0x1]
          %v2245 = vld [vmem:[%s2132 + $0x3c] sm:$0xf]
          %v2246 = vld [vmem:[%s2132 + $0x40] sm:$0xf]
          %v2247 = vld [vmem:[%s2132 + $0x44] sm:$0x1]
          %v2248 = vld [vmem:[%s2132 + $0x48] sm:$0xf]
          %v2249 = vld [vmem:[%s2132 + $0x4c] sm:$0xf]
          %v2250 = vld [vmem:[%s2132 + $0x50] sm:$0x1]
          %v2251 = vld [vmem:[%s2132 + $0x54] sm:$0xf]
          %v2252 = vld [vmem:[%s2132 + $0x58] sm:$0xf]
          %v2253 = vld [vmem:[%s2132 + $0x5c] sm:$0x1]
          %v2255 = vshrl.u32 %v2230, 16
          %v2257 = vrot.slane %v2255, 4
          %v2258 = vshll.u32 %v2230, 16
          %v2260 = vrot.slane %v2258, 5
          %v2261 = vor.u32 %v2257, %v2260
          %v2262 = vrot.slane %v2261, 4
          %v2264 = vshll.u32 %v2231, 16
          %v2266 = vrot.slane %v2264, 5
          %v2267 = vsel %vm1148, %v2262, %v2266
          %v2268 = vshrl.u32 %v2231, 16
          %v2270 = vrot.slane %v2268, 4
          %v2271 = vor.u32 %v2270, %v2266
          %v2272 = vrot.slane %v2271, 4
          %v2274 = vshll.u32 %v2232, 16
          %v2276 = vrot.slane %v2274, 5
          %v2277 = vsel %vm1148, %v2272, %v2276
          %v2279 = vshrl.u32 %v2233, 16
          %v2281 = vrot.slane %v2279, 4
          %v2282 = vshll.u32 %v2233, 16
          %v2284 = vrot.slane %v2282, 5
          %v2285 = vor.u32 %v2281, %v2284
          %v2286 = vrot.slane %v2285, 4
          %v2288 = vshll.u32 %v2234, 16
          %v2290 = vrot.slane %v2288, 5
          %v2291 = vsel %vm1148, %v2286, %v2290
          %v2292 = vshrl.u32 %v2234, 16
          %v2294 = vrot.slane %v2292, 4
          %v2295 = vor.u32 %v2294, %v2290
          %v2296 = vrot.slane %v2295, 4
          %v2298 = vshll.u32 %v2235, 16
          %v2300 = vrot.slane %v2298, 5
          %v2301 = vsel %vm1148, %v2296, %v2300
          %v2303 = vshrl.u32 %v2236, 16
          %v2305 = vrot.slane %v2303, 4
          %v2306 = vshll.u32 %v2236, 16
          %v2308 = vrot.slane %v2306, 5
          %v2309 = vor.u32 %v2305, %v2308
          %v2310 = vrot.slane %v2309, 4
          %v2312 = vshll.u32 %v2237, 16
          %v2314 = vrot.slane %v2312, 5
          %v2315 = vsel %vm1148, %v2310, %v2314
          %v2316 = vshrl.u32 %v2237, 16
          %v2318 = vrot.slane %v2316, 4
          %v2319 = vor.u32 %v2318, %v2314
          %v2320 = vrot.slane %v2319, 4
          %v2322 = vshll.u32 %v2238, 16
          %v2324 = vrot.slane %v2322, 5
          %v2325 = vsel %vm1148, %v2320, %v2324
          %v2327 = vshrl.u32 %v2239, 16
          %v2329 = vrot.slane %v2327, 4
          %v2330 = vshll.u32 %v2239, 16
          %v2332 = vrot.slane %v2330, 5
          %v2333 = vor.u32 %v2329, %v2332
          %v2334 = vrot.slane %v2333, 4
          %v2336 = vshll.u32 %v2240, 16
          %v2338 = vrot.slane %v2336, 5
          %v2339 = vsel %vm1148, %v2334, %v2338
          %v2340 = vshrl.u32 %v2240, 16
          %v2342 = vrot.slane %v2340, 4
          %v2343 = vor.u32 %v2342, %v2338
          %v2344 = vrot.slane %v2343, 4
          %v2346 = vshll.u32 %v2241, 16
          %v2348 = vrot.slane %v2346, 5
          %v2349 = vsel %vm1148, %v2344, %v2348
          %v2351 = vshrl.u32 %v2242, 16
          %v2353 = vrot.slane %v2351, 4
          %v2354 = vshll.u32 %v2242, 16
          %v2356 = vrot.slane %v2354, 5
          %v2357 = vor.u32 %v2353, %v2356
          %v2358 = vrot.slane %v2357, 4
          %v2360 = vshll.u32 %v2243, 16
          %v2362 = vrot.slane %v2360, 5
          %v2363 = vsel %vm1148, %v2358, %v2362
          %v2364 = vshrl.u32 %v2243, 16
          %v2366 = vrot.slane %v2364, 4
          %v2367 = vor.u32 %v2366, %v2362
          %v2368 = vrot.slane %v2367, 4
          %v2370 = vshll.u32 %v2244, 16
          %v2372 = vrot.slane %v2370, 5
          %v2373 = vsel %vm1148, %v2368, %v2372
          %v2375 = vshrl.u32 %v2245, 16
          %v2377 = vrot.slane %v2375, 4
          %v2378 = vshll.u32 %v2245, 16
          %v2380 = vrot.slane %v2378, 5
          %v2381 = vor.u32 %v2377, %v2380
          %v2382 = vrot.slane %v2381, 4
          %v2384 = vshll.u32 %v2246, 16
          %v2386 = vrot.slane %v2384, 5
          %v2387 = vsel %vm1148, %v2382, %v2386
          %v2388 = vshrl.u32 %v2246, 16
          %v2390 = vrot.slane %v2388, 4
          %v2391 = vor.u32 %v2390, %v2386
          %v2392 = vrot.slane %v2391, 4
          %v2394 = vshll.u32 %v2247, 16
          %v2396 = vrot.slane %v2394, 5
          %v2397 = vsel %vm1148, %v2392, %v2396
          %v2399 = vshrl.u32 %v2248, 16
          %v2401 = vrot.slane %v2399, 4
          %v2402 = vshll.u32 %v2248, 16
          %v2404 = vrot.slane %v2402, 5
          %v2405 = vor.u32 %v2401, %v2404
          %v2406 = vrot.slane %v2405, 4
          %v2408 = vshll.u32 %v2249, 16
          %v2410 = vrot.slane %v2408, 5
          %v2411 = vsel %vm1148, %v2406, %v2410
          %v2412 = vshrl.u32 %v2249, 16
          %v2414 = vrot.slane %v2412, 4
          %v2415 = vor.u32 %v2414, %v2410
          %v2416 = vrot.slane %v2415, 4
          %v2418 = vshll.u32 %v2250, 16
          %v2420 = vrot.slane %v2418, 5
          %v2421 = vsel %vm1148, %v2416, %v2420
          %v2423 = vshrl.u32 %v2251, 16
          %v2425 = vrot.slane %v2423, 4
          %v2426 = vshll.u32 %v2251, 16
          %v2428 = vrot.slane %v2426, 5
          %v2429 = vor.u32 %v2425, %v2428
          %v2430 = vrot.slane %v2429, 4
          %v2432 = vshll.u32 %v2252, 16
          %v2434 = vrot.slane %v2432, 5
          %v2435 = vsel %vm1148, %v2430, %v2434
          %v2436 = vshrl.u32 %v2252, 16
          %v2438 = vrot.slane %v2436, 4
          %v2439 = vor.u32 %v2438, %v2434
          %v2440 = vrot.slane %v2439, 4
          %v2442 = vshll.u32 %v2253, 16
          %v2444 = vrot.slane %v2442, 5
          %v2445 = vsel %vm1148, %v2440, %v2444
          %2446 = vrot.lane.b32.xlu0 %v2267, 14
          %v2447 = vpop.permute.xlu0 %2446
          %2448 = vrot.lane.b32.xlu0 %v2277, 14
          %v2449 = vpop.permute.xlu0 %2448
          %2450 = vrot.lane.b32.xlu0 %v2291, 14
          %v2451 = vpop.permute.xlu0 %2450
          %2452 = vrot.lane.b32.xlu0 %v2301, 14
          %v2453 = vpop.permute.xlu0 %2452
          %2454 = vrot.lane.b32.xlu0 %v2315, 14
          %v2455 = vpop.permute.xlu0 %2454
          %2456 = vrot.lane.b32.xlu0 %v2325, 14
          %v2457 = vpop.permute.xlu0 %2456
          %2458 = vrot.lane.b32.xlu0 %v2339, 14
          %v2459 = vpop.permute.xlu0 %2458
          %2460 = vrot.lane.b32.xlu0 %v2349, 14
          %v2461 = vpop.permute.xlu0 %2460
          %2462 = vrot.lane.b32.xlu0 %v2363, 14
          %v2463 = vpop.permute.xlu0 %2462
          %2464 = vrot.lane.b32.xlu0 %v2373, 14
          %v2465 = vpop.permute.xlu0 %2464
          %2466 = vrot.lane.b32.xlu0 %v2387, 14
          %v2467 = vpop.permute.xlu0 %2466
          %2468 = vrot.lane.b32.xlu0 %v2397, 14
          %v2469 = vpop.permute.xlu0 %2468
          %2470 = vrot.lane.b32.xlu0 %v2411, 14
          %v2471 = vpop.permute.xlu0 %2470
          %2472 = vrot.lane.b32.xlu0 %v2421, 14
          %v2473 = vpop.permute.xlu0 %2472
          %2474 = vrot.lane.b32.xlu0 %v2435, 14
          %v2475 = vpop.permute.xlu0 %2474
          %2476 = vrot.lane.b32.xlu0 %v2445, 14
          %v2477 = vpop.permute.xlu0 %2476
          %vm2494 = vcmask 126064
          %2495 = vst.msk [vmem:[#allocation3] sm:$0xf] %vm2494, %v2447
          %2496 = vst.msk [vmem:[#allocation3 + $0x14] sm:$0xf] %vm2494, %v2449
          %2497 = vst.msk [vmem:[#allocation3 + $0x28] sm:$0xf] %vm2494, %v2451
          %2498 = vst.msk [vmem:[#allocation3 + $0x3c] sm:$0xf] %vm2494, %v2453
          %2499 = vst.msk [vmem:[#allocation3 + $0x50] sm:$0xf] %vm2494, %v2455
          %2500 = vst.msk [vmem:[#allocation3 + $0x64] sm:$0xf] %vm2494, %v2457
          %2501 = vst.msk [vmem:[#allocation3 + $0x78] sm:$0xf] %vm2494, %v2459
          %2502 = vst.msk [vmem:[#allocation3 + $0x8c] sm:$0xf] %vm2494, %v2461
          %2503 = vst.msk [vmem:[#allocation3 + $0xa0] sm:$0xf] %vm2494, %v2463
          %2504 = vst.msk [vmem:[#allocation3 + $0xb4] sm:$0xf] %vm2494, %v2465
          %2505 = vst.msk [vmem:[#allocation3 + $0xc8] sm:$0xf] %vm2494, %v2467
          %2506 = vst.msk [vmem:[#allocation3 + $0xdc] sm:$0xf] %vm2494, %v2469
          %2507 = vst.msk [vmem:[#allocation3 + $0xf0] sm:$0xf] %vm2494, %v2471
          %2508 = vst.msk [vmem:[#allocation3 + $0x104] sm:$0xf] %vm2494, %v2473
          %2509 = vst.msk [vmem:[#allocation3 + $0x118] sm:$0xf] %vm2494, %v2475
          %2510 = vst.msk [vmem:[#allocation3 + $0x12c] sm:$0xf] %vm2494, %v2477
          %v2511 = vld [vmem:[%s2132] sm:$0xe]
          %v2512 = vld [vmem:[%s2132 + $0x4] sm:$0xf]
          %v2513 = vld [vmem:[%s2132 + $0x8] sm:$0x1]
          %v2514 = vld [vmem:[%s2132 + $0xc] sm:$0xe]
          %v2515 = vld [vmem:[%s2132 + $0x10] sm:$0xf]
          %v2516 = vld [vmem:[%s2132 + $0x14] sm:$0x1]
          %v2517 = vld [vmem:[%s2132 + $0x18] sm:$0xe]
          %v2518 = vld [vmem:[%s2132 + $0x1c] sm:$0xf]
          %v2519 = vld [vmem:[%s2132 + $0x20] sm:$0x1]
          %v2520 = vld [vmem:[%s2132 + $0x24] sm:$0xe]
          %v2521 = vld [vmem:[%s2132 + $0x28] sm:$0xf]
          %v2522 = vld [vmem:[%s2132 + $0x2c] sm:$0x1]
          %v2523 = vld [vmem:[%s2132 + $0x30] sm:$0xe]
          %v2524 = vld [vmem:[%s2132 + $0x34] sm:$0xf]
          %v2525 = vld [vmem:[%s2132 + $0x38] sm:$0x1]
          %v2526 = vld [vmem:[%s2132 + $0x3c] sm:$0xe]
          %v2527 = vld [vmem:[%s2132 + $0x40] sm:$0xf]
          %v2528 = vld [vmem:[%s2132 + $0x44] sm:$0x1]
          %v2529 = vld [vmem:[%s2132 + $0x48] sm:$0xe]
          %v2530 = vld [vmem:[%s2132 + $0x4c] sm:$0xf]
          %v2531 = vld [vmem:[%s2132 + $0x50] sm:$0x1]
          %v2532 = vld [vmem:[%s2132 + $0x54] sm:$0xe]
          %v2533 = vld [vmem:[%s2132 + $0x58] sm:$0xf]
          %v2534 = vld [vmem:[%s2132 + $0x5c] sm:$0x1]
          %v2559 = vrot.slane %v2511, 5
          %v2560 = vrot.slane %v2559, 4
          %v2561 = vrot.slane %v2512, 5
          %v2562 = vsel %vm1456, %v2560, %v2561
          %v2563 = vrot.slane %v2561, 4
          %v2564 = vrot.slane %v2513, 5
          %v2565 = vsel %vm1456, %v2563, %v2564
          %v2566 = vrot.slane %v2514, 5
          %v2567 = vrot.slane %v2566, 4
          %v2568 = vrot.slane %v2515, 5
          %v2569 = vsel %vm1456, %v2567, %v2568
          %v2570 = vrot.slane %v2568, 4
          %v2571 = vrot.slane %v2516, 5
          %v2572 = vsel %vm1456, %v2570, %v2571
          %v2573 = vrot.slane %v2517, 5
          %v2574 = vrot.slane %v2573, 4
          %v2575 = vrot.slane %v2518, 5
          %v2576 = vsel %vm1456, %v2574, %v2575
          %v2577 = vrot.slane %v2575, 4
          %v2578 = vrot.slane %v2519, 5
          %v2579 = vsel %vm1456, %v2577, %v2578
          %v2580 = vrot.slane %v2520, 5
          %v2581 = vrot.slane %v2580, 4
          %v2582 = vrot.slane %v2521, 5
          %v2583 = vsel %vm1456, %v2581, %v2582
          %v2584 = vrot.slane %v2582, 4
          %v2585 = vrot.slane %v2522, 5
          %v2586 = vsel %vm1456, %v2584, %v2585
          %v2587 = vrot.slane %v2523, 5
          %v2588 = vrot.slane %v2587, 4
          %v2589 = vrot.slane %v2524, 5
          %v2590 = vsel %vm1456, %v2588, %v2589
          %v2591 = vrot.slane %v2589, 4
          %v2592 = vrot.slane %v2525, 5
          %v2593 = vsel %vm1456, %v2591, %v2592
          %v2594 = vrot.slane %v2526, 5
          %v2595 = vrot.slane %v2594, 4
          %v2596 = vrot.slane %v2527, 5
          %v2597 = vsel %vm1456, %v2595, %v2596
          %v2598 = vrot.slane %v2596, 4
          %v2599 = vrot.slane %v2528, 5
          %v2600 = vsel %vm1456, %v2598, %v2599
          %v2601 = vrot.slane %v2529, 5
          %v2602 = vrot.slane %v2601, 4
          %v2603 = vrot.slane %v2530, 5
          %v2604 = vsel %vm1456, %v2602, %v2603
          %v2605 = vrot.slane %v2603, 4
          %v2606 = vrot.slane %v2531, 5
          %v2607 = vsel %vm1456, %v2605, %v2606
          %v2608 = vrot.slane %v2532, 5
          %v2609 = vrot.slane %v2608, 4
          %v2610 = vrot.slane %v2533, 5
          %v2611 = vsel %vm1456, %v2609, %v2610
          %v2612 = vrot.slane %v2610, 4
          %v2613 = vrot.slane %v2534, 5
          %v2614 = vsel %vm1456, %v2612, %v2613
          %2615 = vrot.lane.b32.xlu0 %v2562, 16
          %v2616 = vpop.permute.xlu0 %2615
          %2617 = vrot.lane.b32.xlu0 %v2565, 16
          %v2618 = vpop.permute.xlu0 %2617
          %2619 = vrot.lane.b32.xlu0 %v2569, 16
          %v2620 = vpop.permute.xlu0 %2619
          %2621 = vrot.lane.b32.xlu0 %v2572, 16
          %v2622 = vpop.permute.xlu0 %2621
          %2623 = vrot.lane.b32.xlu0 %v2576, 16
          %v2624 = vpop.permute.xlu0 %2623
          %2625 = vrot.lane.b32.xlu0 %v2579, 16
          %v2626 = vpop.permute.xlu0 %2625
          %2627 = vrot.lane.b32.xlu0 %v2583, 16
          %v2628 = vpop.permute.xlu0 %2627
          %2629 = vrot.lane.b32.xlu0 %v2586, 16
          %v2630 = vpop.permute.xlu0 %2629
          %2631 = vrot.lane.b32.xlu0 %v2590, 16
          %v2632 = vpop.permute.xlu0 %2631
          %2633 = vrot.lane.b32.xlu0 %v2593, 16
          %v2634 = vpop.permute.xlu0 %2633
          %2635 = vrot.lane.b32.xlu0 %v2597, 16
          %v2636 = vpop.permute.xlu0 %2635
          %2637 = vrot.lane.b32.xlu0 %v2600, 16
          %v2638 = vpop.permute.xlu0 %2637
          %2639 = vrot.lane.b32.xlu0 %v2604, 16
          %v2640 = vpop.permute.xlu0 %2639
          %2641 = vrot.lane.b32.xlu0 %v2607, 16
          %v2642 = vpop.permute.xlu0 %2641
          %2643 = vrot.lane.b32.xlu0 %v2611, 16
          %v2644 = vpop.permute.xlu0 %2643
          %2645 = vrot.lane.b32.xlu0 %v2614, 16
          %v2646 = vpop.permute.xlu0 %2645
          %vm2663 = vcmask 142464
          %2664 = vst.msk [vmem:[#allocation3] sm:$0xf] %vm2663, %v2616
          %2665 = vst.msk [vmem:[#allocation3 + $0x14] sm:$0xf] %vm2663, %v2618
          %2666 = vst.msk [vmem:[#allocation3 + $0x28] sm:$0xf] %vm2663, %v2620
          %2667 = vst.msk [vmem:[#allocation3 + $0x3c] sm:$0xf] %vm2663, %v2622
          %2668 = vst.msk [vmem:[#allocation3 + $0x50] sm:$0xf] %vm2663, %v2624
          %2669 = vst.msk [vmem:[#allocation3 + $0x64] sm:$0xf] %vm2663, %v2626
          %2670 = vst.msk [vmem:[#allocation3 + $0x78] sm:$0xf] %vm2663, %v2628
          %2671 = vst.msk [vmem:[#allocation3 + $0x8c] sm:$0xf] %vm2663, %v2630
          %2672 = vst.msk [vmem:[#allocation3 + $0xa0] sm:$0xf] %vm2663, %v2632
          %2673 = vst.msk [vmem:[#allocation3 + $0xb4] sm:$0xf] %vm2663, %v2634
          %2674 = vst.msk [vmem:[#allocation3 + $0xc8] sm:$0xf] %vm2663, %v2636
          %2675 = vst.msk [vmem:[#allocation3 + $0xdc] sm:$0xf] %vm2663, %v2638
          %2676 = vst.msk [vmem:[#allocation3 + $0xf0] sm:$0xf] %vm2663, %v2640
          %2677 = vst.msk [vmem:[#allocation3 + $0x104] sm:$0xf] %vm2663, %v2642
          %2678 = vst.msk [vmem:[#allocation3 + $0x118] sm:$0xf] %vm2663, %v2644
          %2679 = vst.msk [vmem:[#allocation3 + $0x12c] sm:$0xf] %vm2663, %v2646
          %p2680 = scmp.gt.s32.totalorder %s1080, 0
          // Predicated region
          $region63: #{vdsr_dem_forward.1} parent=59 // pred_check
            %p2681 = pneg %p2680
          $region64: #{vdsr_dem_forward.1} parent=59 // pred_check_branch
            %2683 = sbr.rel (%p2681) target = $region66
          $region65: #{vdsr_dem_forward.1} parent=59 // pred_region
            %v2684 = vld [vmem:[#allocation4] sm:$0xf]
            %v2685 = vld [vmem:[#allocation4 + $0x4] sm:$0xf]
            %2686 = vst.msk [vmem:[#allocation3] sm:$0xf] %vm1105, %v2684
            %2687 = vst.msk [vmem:[#allocation3 + $0x14] sm:$0xf] %vm1105, %v2685
            %v2688 = vld [vmem:[#allocation4] sm:$0xf]
            %v2689 = vld [vmem:[#allocation4 + $0x4] sm:$0xf]
            %v2690 = vld [vmem:[#allocation4 + $0x8] sm:$0x1]
            %v2692 = vshrl.u32 %v2688, 16
            %v2694 = vrot.slane %v2692, 4
            %v2695 = vshll.u32 %v2688, 16
            %v2697 = vrot.slane %v2695, 5
            %v2698 = vor.u32 %v2694, %v2697
            %v2699 = vrot.slane %v2698, 4
            %v2701 = vshll.u32 %v2689, 16
            %v2703 = vrot.slane %v2701, 5
            %v2704 = vsel %vm1148, %v2699, %v2703
            %v2705 = vshrl.u32 %v2689, 16
            %v2707 = vrot.slane %v2705, 4
            %v2708 = vor.u32 %v2707, %v2703
            %v2709 = vrot.slane %v2708, 4
            %v2711 = vshll.u32 %v2690, 16
            %v2713 = vrot.slane %v2711, 5
            %v2714 = vsel %vm1148, %v2709, %v2713
            %2715 = vrot.lane.b32.xlu0 %v2704, 2
            %v2716 = vpop.permute.xlu0 %2715
            %2717 = vrot.lane.b32.xlu0 %v2714, 2
            %v2718 = vpop.permute.xlu0 %2717
            %2721 = vst.msk [vmem:[#allocation3] sm:$0xf] %vm1389, %v2716
            %2722 = vst.msk [vmem:[#allocation3 + $0x14] sm:$0xf] %vm1389, %v2718
            %v2723 = vld [vmem:[#allocation4] sm:$0xe]
            %v2724 = vld [vmem:[#allocation4 + $0x4] sm:$0xf]
            %v2725 = vld [vmem:[#allocation4 + $0x8] sm:$0x1]
            %v2729 = vrot.slane %v2723, 5
            %v2730 = vrot.slane %v2729, 4
            %v2731 = vrot.slane %v2724, 5
            %v2732 = vsel %vm1456, %v2730, %v2731
            %v2733 = vrot.slane %v2731, 4
            %v2734 = vrot.slane %v2725, 5
            %v2735 = vsel %vm1456, %v2733, %v2734
            %2736 = vrot.lane.b32.xlu0 %v2732, 4
            %v2737 = vpop.permute.xlu0 %2736
            %2738 = vrot.lane.b32.xlu0 %v2735, 4
            %v2739 = vpop.permute.xlu0 %2738
            %2742 = vst.msk [vmem:[#allocation3] sm:$0xf] %vm1561, %v2737
            %2743 = vst.msk [vmem:[#allocation3 + $0x14] sm:$0xf] %vm1561, %v2739
          $region66: #{vdsr_dem_forward.1} parent=59 // pred_fallthru
            _
          %v2744 = vld [vmem:[#allocation3] sm:$0xf]
          %v2745 = vld [vmem:[#allocation3 + $0x14] sm:$0xf]
          %v2746 = vld [vmem:[#allocation3 + $0x28] sm:$0xf]
          %v2747 = vld [vmem:[#allocation3 + $0x3c] sm:$0xf]
          %v2748 = vld [vmem:[#allocation3 + $0x50] sm:$0xf]
          %v2749 = vld [vmem:[#allocation3 + $0x64] sm:$0xf]
          %v2750 = vld [vmem:[#allocation3 + $0x78] sm:$0xf]
          %v2751 = vld [vmem:[#allocation3 + $0x8c] sm:$0xf]
          %v2752 = vld [vmem:[#allocation3 + $0xa0] sm:$0xf]
          %v2753 = vld [vmem:[#allocation3 + $0xb4] sm:$0xf]
          %v2754 = vld [vmem:[#allocation3 + $0xc8] sm:$0xf]
          %v2755 = vld [vmem:[#allocation3 + $0xdc] sm:$0xf]
          %v2756 = vld [vmem:[#allocation3 + $0xf0] sm:$0xf]
          %v2757 = vld [vmem:[#allocation3 + $0x104] sm:$0xf]
          %v2758 = vld [vmem:[#allocation3 + $0x118] sm:$0xf]
          %v2759 = vld [vmem:[#allocation3 + $0x12c] sm:$0xf]
          %v2760 = vld [vmem:[%s3] sm:$0xf]
          %v2761 = vld [vmem:[%s3 + $0x4] sm:$0xf]
          %v2762 = vld [vmem:[%s3 + $0x8] sm:$0x1]
          %v2779 = vunpack.c.l.b16 %v2744
          %v2780 = vunpack.c.l.b16 %v2745
          %v2781 = vunpack.c.l.b16 %v2746
          %v2782 = vunpack.c.l.b16 %v2747
          %v2783 = vunpack.c.l.b16 %v2748
          %v2784 = vunpack.c.l.b16 %v2749
          %v2785 = vunpack.c.l.b16 %v2750
          %v2786 = vunpack.c.l.b16 %v2751
          %v2787 = vunpack.c.l.b16 %v2752
          %v2788 = vunpack.c.l.b16 %v2753
          %v2789 = vunpack.c.l.b16 %v2754
          %v2790 = vunpack.c.l.b16 %v2755
          %v2791 = vunpack.c.l.b16 %v2756
          %v2792 = vunpack.c.l.b16 %v2757
          %v2793 = vunpack.c.l.b16 %v2758
          %v2794 = vunpack.c.l.b16 %v2759
          %v2795 = vpack.c.b16 %v2780, %v2779
          %v2796 = vpack.c.b16 %v2782, %v2781
          %v2797 = vpack.c.b16 %v2784, %v2783
          %v2798 = vpack.c.b16 %v2786, %v2785
          %v2799 = vpack.c.b16 %v2788, %v2787
          %v2800 = vpack.c.b16 %v2790, %v2789
          %v2801 = vpack.c.b16 %v2792, %v2791
          %v2802 = vpack.c.b16 %v2794, %v2793
          %v2806 = vunpack.c.l.b16 %v2760
          %v2807 = vunpack.c.l.b16 %v2761
          %v2808 = vunpack.c.l.b16 %v2762
          %v2809 = vpack.c.b16 %v2807, %v2806
          %v2810 = vpack.c.b16 %v2808, %v2808
          %vm2812 = vcmask 146432
          %v2814 = vsel %vm2812, %v2795, 0
          %v2817 = vsel %vm2812, %v2796, 0
          %v2820 = vsel %vm2812, %v2797, 0
          %v2823 = vsel %vm2812, %v2798, 0
          %v2826 = vsel %vm2812, %v2799, 0
          %v2829 = vsel %vm2812, %v2800, 0
          %v2832 = vsel %vm2812, %v2801, 0
          %v2835 = vsel %vm2812, %v2802, 0
          %vm2837 = vcmask 1040384
          %v2839 = vsel %vm2837, %v2810, 0
          %2841 = vmatprep.subr.bf16.mxu0 0
          %2842 = vmatpush1.bf16.msra.mxu0 0
          %2843 = vmatprep.subr.bf16.mxu0 0
          %2844 = vmatpush1.bf16.msra.mxu0 0
          %2845 = vmatprep.subr.bf16.mxu0 0
          %2846 = vmatpush1.bf16.msra.mxu0 0
          %2847 = vmatprep.subr.bf16.mxu0 0
          %2848 = vmatpush1.bf16.msra.mxu0 0
          %2849 = vmatprep.subr.bf16.mxu0 0
          %2850 = vmatpush1.bf16.msra.mxu0 0
          %2851 = vmatprep.subr.bf16.mxu0 0
          %2852 = vmatpush1.bf16.msra.mxu0 0
          %2853 = vmatprep.subr.bf16.mxu0 0
          %2854 = vmatpush1.bf16.msra.mxu0 %v2839
          %2855 = vmatprep.subr.bf16.mxu0 0
          %2856 = vmatpush1.bf16.msra.mxu0 %v2809
          %2857 = vmatprep.subr.bf16.mxu0 0
          %2858 = vmatpush2.bf16.msra.mxu0 0
          %2859 = vmatprep.subr.bf16.mxu0 0
          %2860 = vmatpush2.bf16.msra.mxu0 0
          %2861 = vmatprep.subr.bf16.mxu0 0
          %2862 = vmatpush2.bf16.msra.mxu0 0
          %2863 = vmatprep.subr.bf16.mxu0 0
          %2864 = vmatpush2.bf16.msra.mxu0 0
          %2865 = vmatprep.subr.bf16.mxu0 0
          %2866 = vmatpush2.bf16.msra.mxu0 0
          %2867 = vmatprep.subr.bf16.mxu0 0
          %2868 = vmatpush2.bf16.msra.mxu0 0
          %2869 = vmatprep.subr.bf16.mxu0 0
          %2870 = vmatpush2.bf16.msra.mxu0 0
          %2871 = vmatprep.subr.bf16.mxu0 0
          %2872 = vmatpush2.bf16.msra.mxu0 0
          %2873 = vmatprep.mubr.bf16.mxu0 0
          %2874 = vmatmul.mubr.bf16.gmra.mxu0 %v2814
          %v2875 = vpop.f32.mrf.mxu0
          %v2876 = vadd.f32 0.0, %v2875
          %v2877 = vpop.f32.mrf.mxu0
          %v2878 = vpop.f32.mrf.mxu0
          %v2879 = vadd.f32 0.0, %v2878
          %v2880 = vpop.f32.mrf.mxu0
          %2881 = vmatprep.mubr.bf16.mxu0 0
          %2882 = vmatmul.mubr.bf16.gmra.mxu0 %v2817
          %v2883 = vpop.f32.mrf.mxu0
          %v2884 = vadd.f32 0.0, %v2883
          %v2885 = vpop.f32.mrf.mxu0
          %v2886 = vpop.f32.mrf.mxu0
          %v2887 = vadd.f32 0.0, %v2886
          %v2888 = vpop.f32.mrf.mxu0
          %2889 = vmatprep.mubr.bf16.mxu0 0
          %2890 = vmatmul.mubr.bf16.gmra.mxu0 %v2820
          %v2891 = vpop.f32.mrf.mxu0
          %v2892 = vadd.f32 0.0, %v2891
          %v2893 = vpop.f32.mrf.mxu0
          %v2894 = vpop.f32.mrf.mxu0
          %v2895 = vadd.f32 0.0, %v2894
          %v2896 = vpop.f32.mrf.mxu0
          %2897 = vmatprep.mubr.bf16.mxu0 0
          %2898 = vmatmul.mubr.bf16.gmra.mxu0 %v2823
          %v2899 = vpop.f32.mrf.mxu0
          %v2900 = vadd.f32 0.0, %v2899
          %v2901 = vpop.f32.mrf.mxu0
          %v2902 = vpop.f32.mrf.mxu0
          %v2903 = vadd.f32 0.0, %v2902
          %v2904 = vpop.f32.mrf.mxu0
          %2905 = vmatprep.mubr.bf16.mxu0 0
          %2906 = vmatmul.mubr.bf16.gmra.mxu0 %v2826
          %v2907 = vpop.f32.mrf.mxu0
          %v2908 = vadd.f32 0.0, %v2907
          %v2909 = vpop.f32.mrf.mxu0
          %v2910 = vpop.f32.mrf.mxu0
          %v2911 = vadd.f32 0.0, %v2910
          %v2912 = vpop.f32.mrf.mxu0
          %2913 = vmatprep.mubr.bf16.mxu0 0
          %2914 = vmatmul.mubr.bf16.gmra.mxu0 %v2829
          %v2915 = vpop.f32.mrf.mxu0
          %v2916 = vadd.f32 0.0, %v2915
          %v2917 = vpop.f32.mrf.mxu0
          %v2918 = vpop.f32.mrf.mxu0
          %v2919 = vadd.f32 0.0, %v2918
          %v2920 = vpop.f32.mrf.mxu0
          %2921 = vmatprep.mubr.bf16.mxu0 0
          %2922 = vmatmul.mubr.bf16.gmra.mxu0 %v2832
          %v2923 = vpop.f32.mrf.mxu0
          %v2924 = vadd.f32 0.0, %v2923
          %v2925 = vpop.f32.mrf.mxu0
          %v2926 = vpop.f32.mrf.mxu0
          %v2927 = vadd.f32 0.0, %v2926
          %v2928 = vpop.f32.mrf.mxu0
          %2929 = vmatprep.mubr.bf16.mxu0 0
          %2930 = vmatmul.mubr.bf16.gmra.mxu0 %v2835
          %v2931 = vpop.f32.mrf.mxu0
          %v2932 = vadd.f32 0.0, %v2931
          %v2933 = vpop.f32.mrf.mxu0
          %v2934 = vpop.f32.mrf.mxu0
          %v2935 = vadd.f32 0.0, %v2934
          %v2936 = vpop.f32.mrf.mxu0
          %2937 = vdwg.mxu0
          %v2938 = vmax.f32 %v2876, 0.0
          %v2939 = vmax.f32 %v2879, 0.0
          %v2940 = vmax.f32 %v2884, 0.0
          %v2941 = vmax.f32 %v2887, 0.0
          %v2942 = vmax.f32 %v2892, 0.0
          %v2943 = vmax.f32 %v2895, 0.0
          %v2944 = vmax.f32 %v2900, 0.0
          %v2945 = vmax.f32 %v2903, 0.0
          %v2946 = vmax.f32 %v2908, 0.0
          %v2947 = vmax.f32 %v2911, 0.0
          %v2948 = vmax.f32 %v2916, 0.0
          %v2949 = vmax.f32 %v2919, 0.0
          %v2950 = vmax.f32 %v2924, 0.0
          %v2951 = vmax.f32 %v2927, 0.0
          %v2952 = vmax.f32 %v2932, 0.0
          %v2953 = vmax.f32 %v2935, 0.0
          %v2954 = vpack.c.bf16 %v2939, %v2938
          %v2955 = vpack.c.bf16 %v2941, %v2940
          %v2956 = vpack.c.bf16 %v2943, %v2942
          %v2957 = vpack.c.bf16 %v2945, %v2944
          %v2958 = vpack.c.bf16 %v2947, %v2946
          %v2959 = vpack.c.bf16 %v2949, %v2948
          %v2960 = vpack.c.bf16 %v2951, %v2950
          %v2961 = vpack.c.bf16 %v2953, %v2952
          %s2962 = sadd.s32 %s1085, 8
          %s2963 = smul.u32 %s2962, 3
          %s2964 = smul.addr %s2963, 4
          %s2965 = scalar_lea.vmem [#allocation2], %s2964
          %v2966 = vld [vmem:[%s2965] sm:$0xf]
          %v2967 = vld [vmem:[%s2965 + $0x4] sm:$0xf]
          %v2968 = vld [vmem:[%s2965 + $0x8] sm:$0x1]
          %2969 = vst.msk [vmem:[#allocation4] sm:$0xf] %vm287, %v2966
          %2970 = vst.msk [vmem:[#allocation4 + $0x4] sm:$0xf] %vm287, %v2967
          %2971 = vst.msk [vmem:[#allocation4 + $0x8] sm:$0x1] %vm290, %v2968
          %v2980 = vunpack.c.l.b16 %v2954
          %v2981 = vunpack.c.h.b16 %v2954
          %v2982 = vunpack.c.l.b16 %v2955
          %v2983 = vunpack.c.h.b16 %v2955
          %v2984 = vunpack.c.l.b16 %v2956
          %v2985 = vunpack.c.h.b16 %v2956
          %v2986 = vunpack.c.l.b16 %v2957
          %v2987 = vunpack.c.h.b16 %v2957
          %v2988 = vunpack.c.l.b16 %v2958
          %v2989 = vunpack.c.h.b16 %v2958
          %v2990 = vunpack.c.l.b16 %v2959
          %v2991 = vunpack.c.h.b16 %v2959
          %v2992 = vunpack.c.l.b16 %v2960
          %v2993 = vunpack.c.h.b16 %v2960
          %v2994 = vunpack.c.l.b16 %v2961
          %v2995 = vunpack.c.h.b16 %v2961
          %v2996 = vpack.c.b16 %v2980, %v2980
          %v2997 = vpack.c.b16 %v2981, %v2981
          %v2998 = vpack.c.b16 %v2982, %v2982
          %v2999 = vpack.c.b16 %v2983, %v2983
          %v3000 = vpack.c.b16 %v2984, %v2984
          %v3001 = vpack.c.b16 %v2985, %v2985
          %v3002 = vpack.c.b16 %v2986, %v2986
          %v3003 = vpack.c.b16 %v2987, %v2987
          %v3004 = vpack.c.b16 %v2988, %v2988
          %v3005 = vpack.c.b16 %v2989, %v2989
          %v3006 = vpack.c.b16 %v2990, %v2990
          %v3007 = vpack.c.b16 %v2991, %v2991
          %v3008 = vpack.c.b16 %v2992, %v2992
          %v3009 = vpack.c.b16 %v2993, %v2993
          %v3010 = vpack.c.b16 %v2994, %v2994
          %v3011 = vpack.c.b16 %v2995, %v2995
          %vm3012 = vsmask.f32 4368
          %vm3013 = vmor %vm297, %vm3012
          %v3015 = vshrl.u32 %v2996, 16
          %v3017 = vrot.slane %v3015, 7
          %v3018 = vshll.u32 %v2996, 16
          %v3020 = vor.u32 %v3017, %v3018
          %v3021 = vrot.slane %v3017, 4
          %v3023 = vshrl.u32 %v2997, 16
          %v3025 = vrot.slane %v3023, 7
          %v3026 = vshll.u32 %v2997, 16
          %v3028 = vor.u32 %v3025, %v3026
          %v3029 = vsel %vm3013, %v3021, %v3028
          %v3030 = vrot.slane %v3025, 4
          %v3032 = vshrl.u32 %v2998, 16
          %v3034 = vrot.slane %v3032, 7
          %v3035 = vshll.u32 %v2998, 16
          %v3037 = vor.u32 %v3034, %v3035
          %v3038 = vrot.slane %v3034, 4
          %v3040 = vshrl.u32 %v2999, 16
          %v3042 = vrot.slane %v3040, 7
          %v3043 = vshll.u32 %v2999, 16
          %v3045 = vor.u32 %v3042, %v3043
          %v3046 = vsel %vm3013, %v3038, %v3045
          %v3047 = vrot.slane %v3042, 4
          %v3049 = vshrl.u32 %v3000, 16
          %v3051 = vrot.slane %v3049, 7
          %v3052 = vshll.u32 %v3000, 16
          %v3054 = vor.u32 %v3051, %v3052
          %v3055 = vrot.slane %v3051, 4
          %v3057 = vshrl.u32 %v3001, 16
          %v3059 = vrot.slane %v3057, 7
          %v3060 = vshll.u32 %v3001, 16
          %v3062 = vor.u32 %v3059, %v3060
          %v3063 = vsel %vm3013, %v3055, %v3062
          %v3064 = vrot.slane %v3059, 4
          %v3066 = vshrl.u32 %v3002, 16
          %v3068 = vrot.slane %v3066, 7
          %v3069 = vshll.u32 %v3002, 16
          %v3071 = vor.u32 %v3068, %v3069
          %v3072 = vrot.slane %v3068, 4
          %v3074 = vshrl.u32 %v3003, 16
          %v3076 = vrot.slane %v3074, 7
          %v3077 = vshll.u32 %v3003, 16
          %v3079 = vor.u32 %v3076, %v3077
          %v3080 = vsel %vm3013, %v3072, %v3079
          %v3081 = vrot.slane %v3076, 4
          %v3083 = vshrl.u32 %v3004, 16
          %v3085 = vrot.slane %v3083, 7
          %v3086 = vshll.u32 %v3004, 16
          %v3088 = vor.u32 %v3085, %v3086
          %v3089 = vrot.slane %v3085, 4
          %v3091 = vshrl.u32 %v3005, 16
          %v3093 = vrot.slane %v3091, 7
          %v3094 = vshll.u32 %v3005, 16
          %v3096 = vor.u32 %v3093, %v3094
          %v3097 = vsel %vm3013, %v3089, %v3096
          %v3098 = vrot.slane %v3093, 4
          %v3100 = vshrl.u32 %v3006, 16
          %v3102 = vrot.slane %v3100, 7
          %v3103 = vshll.u32 %v3006, 16
          %v3105 = vor.u32 %v3102, %v3103
          %v3106 = vrot.slane %v3102, 4
          %v3108 = vshrl.u32 %v3007, 16
          %v3110 = vrot.slane %v3108, 7
          %v3111 = vshll.u32 %v3007, 16
          %v3113 = vor.u32 %v3110, %v3111
          %v3114 = vsel %vm3013, %v3106, %v3113
          %v3115 = vrot.slane %v3110, 4
          %v3117 = vshrl.u32 %v3008, 16
          %v3119 = vrot.slane %v3117, 7
          %v3120 = vshll.u32 %v3008, 16
          %v3122 = vor.u32 %v3119, %v3120
          %v3123 = vrot.slane %v3119, 4
          %v3125 = vshrl.u32 %v3009, 16
          %v3127 = vrot.slane %v3125, 7
          %v3128 = vshll.u32 %v3009, 16
          %v3130 = vor.u32 %v3127, %v3128
          %v3131 = vsel %vm3013, %v3123, %v3130
          %v3132 = vrot.slane %v3127, 4
          %v3134 = vshrl.u32 %v3010, 16
          %v3136 = vrot.slane %v3134, 7
          %v3137 = vshll.u32 %v3010, 16
          %v3139 = vor.u32 %v3136, %v3137
          %v3140 = vrot.slane %v3136, 4
          %v3142 = vshrl.u32 %v3011, 16
          %v3144 = vrot.slane %v3142, 7
          %v3145 = vshll.u32 %v3011, 16
          %v3147 = vor.u32 %v3144, %v3145
          %v3148 = vsel %vm3013, %v3140, %v3147
          %v3149 = vrot.slane %v3144, 4
          %vm3174 = vcmask 519168
          %vm3175 = vmand %vm3174, %vm353
          %v3176 = vld [vmem:[%s1581] sm:$0xf]
          %v3177 = vsel %vm3175, %v3020, %v3176
          %3178 = vst [vmem:[%s1581] sm:$0xf] %v3177
          %3179 = vst.msk [vmem:[%s1581 + $0x4] sm:$0xf] %vm287, %v3029
          %v3180 = vld [vmem:[%s1581 + $0x8] sm:$0x1]
          %v3181 = vsel %vm298, %v3030, %v3180
          %3182 = vst [vmem:[%s1581 + $0x8] sm:$0x1] %v3181
          %v3183 = vld [vmem:[%s1581 + $0xc] sm:$0xf]
          %v3184 = vsel %vm3175, %v3037, %v3183
          %3185 = vst [vmem:[%s1581 + $0xc] sm:$0xf] %v3184
          %3186 = vst.msk [vmem:[%s1581 + $0x10] sm:$0xf] %vm287, %v3046
          %v3187 = vld [vmem:[%s1581 + $0x14] sm:$0x1]
          %v3188 = vsel %vm298, %v3047, %v3187
          %3189 = vst [vmem:[%s1581 + $0x14] sm:$0x1] %v3188
          %v3190 = vld [vmem:[%s1581 + $0x18] sm:$0xf]
          %v3191 = vsel %vm3175, %v3054, %v3190
          %3192 = vst [vmem:[%s1581 + $0x18] sm:$0xf] %v3191
          %3193 = vst.msk [vmem:[%s1581 + $0x1c] sm:$0xf] %vm287, %v3063
          %v3194 = vld [vmem:[%s1581 + $0x20] sm:$0x1]
          %v3195 = vsel %vm298, %v3064, %v3194
          %3196 = vst [vmem:[%s1581 + $0x20] sm:$0x1] %v3195
          %v3197 = vld [vmem:[%s1581 + $0x24] sm:$0xf]
          %v3198 = vsel %vm3175, %v3071, %v3197
          %3199 = vst [vmem:[%s1581 + $0x24] sm:$0xf] %v3198
          %3200 = vst.msk [vmem:[%s1581 + $0x28] sm:$0xf] %vm287, %v3080
          %v3201 = vld [vmem:[%s1581 + $0x2c] sm:$0x1]
          %v3202 = vsel %vm298, %v3081, %v3201
          %3203 = vst [vmem:[%s1581 + $0x2c] sm:$0x1] %v3202
          %v3204 = vld [vmem:[%s1581 + $0x30] sm:$0xf]
          %v3205 = vsel %vm3175, %v3088, %v3204
          %3206 = vst [vmem:[%s1581 + $0x30] sm:$0xf] %v3205
          %3207 = vst.msk [vmem:[%s1581 + $0x34] sm:$0xf] %vm287, %v3097
          %v3208 = vld [vmem:[%s1581 + $0x38] sm:$0x1]
          %v3209 = vsel %vm298, %v3098, %v3208
          %3210 = vst [vmem:[%s1581 + $0x38] sm:$0x1] %v3209
          %v3211 = vld [vmem:[%s1581 + $0x3c] sm:$0xf]
          %v3212 = vsel %vm3175, %v3105, %v3211
          %3213 = vst [vmem:[%s1581 + $0x3c] sm:$0xf] %v3212
          %3214 = vst.msk [vmem:[%s1581 + $0x40] sm:$0xf] %vm287, %v3114
          %v3215 = vld [vmem:[%s1581 + $0x44] sm:$0x1]
          %v3216 = vsel %vm298, %v3115, %v3215
          %3217 = vst [vmem:[%s1581 + $0x44] sm:$0x1] %v3216
          %v3218 = vld [vmem:[%s1581 + $0x48] sm:$0xf]
          %v3219 = vsel %vm3175, %v3122, %v3218
          %3220 = vst [vmem:[%s1581 + $0x48] sm:$0xf] %v3219
          %3221 = vst.msk [vmem:[%s1581 + $0x4c] sm:$0xf] %vm287, %v3131
          %v3222 = vld [vmem:[%s1581 + $0x50] sm:$0x1]
          %v3223 = vsel %vm298, %v3132, %v3222
          %3224 = vst [vmem:[%s1581 + $0x50] sm:$0x1] %v3223
          %v3225 = vld [vmem:[%s1581 + $0x54] sm:$0xf]
          %v3226 = vsel %vm3175, %v3139, %v3225
          %3227 = vst [vmem:[%s1581 + $0x54] sm:$0xf] %v3226
          %3228 = vst.msk [vmem:[%s1581 + $0x58] sm:$0xf] %vm287, %v3148
          %v3229 = vld [vmem:[%s1581 + $0x5c] sm:$0x1]
          %v3230 = vsel %vm298, %v3149, %v3229
          %3231 = vst [vmem:[%s1581 + $0x5c] sm:$0x1] %v3230
        $region60: #{vdsr_dem_forward.1} parent=43 // loop_footer
          %s1084 = sadd.s32 1, %s1080
        $region61: #{vdsr_dem_forward.1} parent=43 // loop_footer_branch
          %1079 = sbr.rel target = $region57
        $region62: #{vdsr_dem_forward.1} parent=43 // loop_exit
          _
        loop: start=0, step=1, limit=18
        $region67: #{vdsr_dem_forward.1} parent=43 // loop_pre_header
          _
        $region68: #{vdsr_dem_forward.1} parent=43 // loop_header
          %s3233 = sphi 0, %s3237
          %p3234 = scmp.ge.s32.totalorder %s3233, 18
        $region69: #{vdsr_dem_forward.1} parent=43 // loop_header_branch
          %3236 = sbr.rel (%p3234) target = $region73
        $region70: #{vdsr_dem_forward.1} parent=43 // loop_body
          loop: start=0, step=1, limit=2
          $region74: #{vdsr_dem_forward.1} parent=70 // loop_pre_header
            _
          $region75: #{vdsr_dem_forward.1} parent=70 // loop_header
            %s3239 = sphi 0, %s3243
            %p3240 = scmp.ge.s32.totalorder %s3239, 2
          $region76: #{vdsr_dem_forward.1} parent=70 // loop_header_branch
            %3242 = sbr.rel (%p3240) target = $region80
          $region77: #{vdsr_dem_forward.1} parent=70 // loop_body
            %s3244 = smul.u32 %s3239, 8
            %s3245 = smul.u32 %s3244, 3
            %s3246 = smul.addr %s3245, 4
            %s3247 = scalar_lea.vmem [#allocation2], %s3246
            %v3248 = vld [vmem:[%s3247] sm:$0xf]
            %v3249 = vld [vmem:[%s3247 + $0x4] sm:$0xf]
            %v3250 = vld [vmem:[%s3247 + $0xc] sm:$0xf]
            %v3251 = vld [vmem:[%s3247 + $0x10] sm:$0xf]
            %v3252 = vld [vmem:[%s3247 + $0x18] sm:$0xf]
            %v3253 = vld [vmem:[%s3247 + $0x1c] sm:$0xf]
            %v3254 = vld [vmem:[%s3247 + $0x24] sm:$0xf]
            %v3255 = vld [vmem:[%s3247 + $0x28] sm:$0xf]
            %v3256 = vld [vmem:[%s3247 + $0x30] sm:$0xf]
            %v3257 = vld [vmem:[%s3247 + $0x34] sm:$0xf]
            %v3258 = vld [vmem:[%s3247 + $0x3c] sm:$0xf]
            %v3259 = vld [vmem:[%s3247 + $0x40] sm:$0xf]
            %v3260 = vld [vmem:[%s3247 + $0x48] sm:$0xf]
            %v3261 = vld [vmem:[%s3247 + $0x4c] sm:$0xf]
            %v3262 = vld [vmem:[%s3247 + $0x54] sm:$0xf]
            %v3263 = vld [vmem:[%s3247 + $0x58] sm:$0xf]
            %3264 = vst.msk [vmem:[#allocation3] sm:$0xf] %vm287, %v3248
            %3265 = vst.msk [vmem:[#allocation3 + $0x14] sm:$0xf] %vm287, %v3249
            %3266 = vst.msk [vmem:[#allocation3 + $0x28] sm:$0xf] %vm287, %v3250
            %3267 = vst.msk [vmem:[#allocation3 + $0x3c] sm:$0xf] %vm287, %v3251
            %3268 = vst.msk [vmem:[#allocation3 + $0x50] sm:$0xf] %vm287, %v3252
            %3269 = vst.msk [vmem:[#allocation3 + $0x64] sm:$0xf] %vm287, %v3253
            %3270 = vst.msk [vmem:[#allocation3 + $0x78] sm:$0xf] %vm287, %v3254
            %3271 = vst.msk [vmem:[#allocation3 + $0x8c] sm:$0xf] %vm287, %v3255
            %3272 = vst.msk [vmem:[#allocation3 + $0xa0] sm:$0xf] %vm287, %v3256
            %3273 = vst.msk [vmem:[#allocation3 + $0xb4] sm:$0xf] %vm287, %v3257
            %3274 = vst.msk [vmem:[#allocation3 + $0xc8] sm:$0xf] %vm287, %v3258
            %3275 = vst.msk [vmem:[#allocation3 + $0xdc] sm:$0xf] %vm287, %v3259
            %3276 = vst.msk [vmem:[#allocation3 + $0xf0] sm:$0xf] %vm287, %v3260
            %3277 = vst.msk [vmem:[#allocation3 + $0x104] sm:$0xf] %vm287, %v3261
            %3278 = vst.msk [vmem:[#allocation3 + $0x118] sm:$0xf] %vm287, %v3262
            %3279 = vst.msk [vmem:[#allocation3 + $0x12c] sm:$0xf] %vm287, %v3263
            %v3280 = vld [vmem:[%s3247] sm:$0xf]
            %v3281 = vld [vmem:[%s3247 + $0x4] sm:$0xf]
            %v3282 = vld [vmem:[%s3247 + $0x8] sm:$0x1]
            %v3283 = vld [vmem:[%s3247 + $0xc] sm:$0xf]
            %v3284 = vld [vmem:[%s3247 + $0x10] sm:$0xf]
            %v3285 = vld [vmem:[%s3247 + $0x14] sm:$0x1]
            %v3286 = vld [vmem:[%s3247 + $0x18] sm:$0xf]
            %v3287 = vld [vmem:[%s3247 + $0x1c] sm:$0xf]
            %v3288 = vld [vmem:[%s3247 + $0x20] sm:$0x1]
            %v3289 = vld [vmem:[%s3247 + $0x24] sm:$0xf]
            %v3290 = vld [vmem:[%s3247 + $0x28] sm:$0xf]
            %v3291 = vld [vmem:[%s3247 + $0x2c] sm:$0x1]
            %v3292 = vld [vmem:[%s3247 + $0x30] sm:$0xf]
            %v3293 = vld [vmem:[%s3247 + $0x34] sm:$0xf]
            %v3294 = vld [vmem:[%s3247 + $0x38] sm:$0x1]
            %v3295 = vld [vmem:[%s3247 + $0x3c] sm:$0xf]
            %v3296 = vld [vmem:[%s3247 + $0x40] sm:$0xf]
            %v3297 = vld [vmem:[%s3247 + $0x44] sm:$0x1]
            %v3298 = vld [vmem:[%s3247 + $0x48] sm:$0xf]
            %v3299 = vld [vmem:[%s3247 + $0x4c] sm:$0xf]
            %v3300 = vld [vmem:[%s3247 + $0x50] sm:$0x1]
            %v3301 = vld [vmem:[%s3247 + $0x54] sm:$0xf]
            %v3302 = vld [vmem:[%s3247 + $0x58] sm:$0xf]
            %v3303 = vld [vmem:[%s3247 + $0x5c] sm:$0x1]
            %vm3304 = vsmask.f32 3328
            %vm3305 = vsmask.f32 7440
            %vm3306 = vmor %vm3304, %vm3305
            %v3308 = vshrl.u32 %v3280, 16
            %v3310 = vrot.slane %v3308, 4
            %v3311 = vshll.u32 %v3280, 16
            %v3313 = vrot.slane %v3311, 5
            %v3314 = vor.u32 %v3310, %v3313
            %v3315 = vrot.slane %v3314, 4
            %v3317 = vshll.u32 %v3281, 16
            %v3319 = vrot.slane %v3317, 5
            %v3320 = vsel %vm3306, %v3315, %v3319
            %v3321 = vshrl.u32 %v3281, 16
            %v3323 = vrot.slane %v3321, 4
            %v3324 = vor.u32 %v3323, %v3319
            %v3325 = vrot.slane %v3324, 4
            %v3327 = vshll.u32 %v3282, 16
            %v3329 = vrot.slane %v3327, 5
            %v3330 = vsel %vm3306, %v3325, %v3329
            %v3332 = vshrl.u32 %v3283, 16
            %v3334 = vrot.slane %v3332, 4
            %v3335 = vshll.u32 %v3283, 16
            %v3337 = vrot.slane %v3335, 5
            %v3338 = vor.u32 %v3334, %v3337
            %v3339 = vrot.slane %v3338, 4
            %v3341 = vshll.u32 %v3284, 16
            %v3343 = vrot.slane %v3341, 5
            %v3344 = vsel %vm3306, %v3339, %v3343
            %v3345 = vshrl.u32 %v3284, 16
            %v3347 = vrot.slane %v3345, 4
            %v3348 = vor.u32 %v3347, %v3343
            %v3349 = vrot.slane %v3348, 4
            %v3351 = vshll.u32 %v3285, 16
            %v3353 = vrot.slane %v3351, 5
            %v3354 = vsel %vm3306, %v3349, %v3353
            %v3356 = vshrl.u32 %v3286, 16
            %v3358 = vrot.slane %v3356, 4
            %v3359 = vshll.u32 %v3286, 16
            %v3361 = vrot.slane %v3359, 5
            %v3362 = vor.u32 %v3358, %v3361
            %v3363 = vrot.slane %v3362, 4
            %v3365 = vshll.u32 %v3287, 16
            %v3367 = vrot.slane %v3365, 5
            %v3368 = vsel %vm3306, %v3363, %v3367
            %v3369 = vshrl.u32 %v3287, 16
            %v3371 = vrot.slane %v3369, 4
            %v3372 = vor.u32 %v3371, %v3367
            %v3373 = vrot.slane %v3372, 4
            %v3375 = vshll.u32 %v3288, 16
            %v3377 = vrot.slane %v3375, 5
            %v3378 = vsel %vm3306, %v3373, %v3377
            %v3380 = vshrl.u32 %v3289, 16
            %v3382 = vrot.slane %v3380, 4
            %v3383 = vshll.u32 %v3289, 16
            %v3385 = vrot.slane %v3383, 5
            %v3386 = vor.u32 %v3382, %v3385
            %v3387 = vrot.slane %v3386, 4
            %v3389 = vshll.u32 %v3290, 16
            %v3391 = vrot.slane %v3389, 5
            %v3392 = vsel %vm3306, %v3387, %v3391
            %v3393 = vshrl.u32 %v3290, 16
            %v3395 = vrot.slane %v3393, 4
            %v3396 = vor.u32 %v3395, %v3391
            %v3397 = vrot.slane %v3396, 4
            %v3399 = vshll.u32 %v3291, 16
            %v3401 = vrot.slane %v3399, 5
            %v3402 = vsel %vm3306, %v3397, %v3401
            %v3404 = vshrl.u32 %v3292, 16
            %v3406 = vrot.slane %v3404, 4
            %v3407 = vshll.u32 %v3292, 16
            %v3409 = vrot.slane %v3407, 5
            %v3410 = vor.u32 %v3406, %v3409
            %v3411 = vrot.slane %v3410, 4
            %v3413 = vshll.u32 %v3293, 16
            %v3415 = vrot.slane %v3413, 5
            %v3416 = vsel %vm3306, %v3411, %v3415
            %v3417 = vshrl.u32 %v3293, 16
            %v3419 = vrot.slane %v3417, 4
            %v3420 = vor.u32 %v3419, %v3415
            %v3421 = vrot.slane %v3420, 4
            %v3423 = vshll.u32 %v3294, 16
            %v3425 = vrot.slane %v3423, 5
            %v3426 = vsel %vm3306, %v3421, %v3425
            %v3428 = vshrl.u32 %v3295, 16
            %v3430 = vrot.slane %v3428, 4
            %v3431 = vshll.u32 %v3295, 16
            %v3433 = vrot.slane %v3431, 5
            %v3434 = vor.u32 %v3430, %v3433
            %v3435 = vrot.slane %v3434, 4
            %v3437 = vshll.u32 %v3296, 16
            %v3439 = vrot.slane %v3437, 5
            %v3440 = vsel %vm3306, %v3435, %v3439
            %v3441 = vshrl.u32 %v3296, 16
            %v3443 = vrot.slane %v3441, 4
            %v3444 = vor.u32 %v3443, %v3439
            %v3445 = vrot.slane %v3444, 4
            %v3447 = vshll.u32 %v3297, 16
            %v3449 = vrot.slane %v3447, 5
            %v3450 = vsel %vm3306, %v3445, %v3449
            %v3452 = vshrl.u32 %v3298, 16
            %v3454 = vrot.slane %v3452, 4
            %v3455 = vshll.u32 %v3298, 16
            %v3457 = vrot.slane %v3455, 5
            %v3458 = vor.u32 %v3454, %v3457
            %v3459 = vrot.slane %v3458, 4
            %v3461 = vshll.u32 %v3299, 16
            %v3463 = vrot.slane %v3461, 5
            %v3464 = vsel %vm3306, %v3459, %v3463
            %v3465 = vshrl.u32 %v3299, 16
            %v3467 = vrot.slane %v3465, 4
            %v3468 = vor.u32 %v3467, %v3463
            %v3469 = vrot.slane %v3468, 4
            %v3471 = vshll.u32 %v3300, 16
            %v3473 = vrot.slane %v3471, 5
            %v3474 = vsel %vm3306, %v3469, %v3473
            %v3476 = vshrl.u32 %v3301, 16
            %v3478 = vrot.slane %v3476, 4
            %v3479 = vshll.u32 %v3301, 16
            %v3481 = vrot.slane %v3479, 5
            %v3482 = vor.u32 %v3478, %v3481
            %v3483 = vrot.slane %v3482, 4
            %v3485 = vshll.u32 %v3302, 16
            %v3487 = vrot.slane %v3485, 5
            %v3488 = vsel %vm3306, %v3483, %v3487
            %v3489 = vshrl.u32 %v3302, 16
            %v3491 = vrot.slane %v3489, 4
            %v3492 = vor.u32 %v3491, %v3487
            %v3493 = vrot.slane %v3492, 4
            %v3495 = vshll.u32 %v3303, 16
            %v3497 = vrot.slane %v3495, 5
            %v3498 = vsel %vm3306, %v3493, %v3497
            %3499 = vrot.lane.b32.xlu0 %v3320, 64
            %v3500 = vpop.permute.xlu0 %3499
            %3501 = vrot.lane.b32.xlu0 %v3330, 64
            %v3502 = vpop.permute.xlu0 %3501
            %3503 = vrot.lane.b32.xlu0 %v3344, 64
            %v3504 = vpop.permute.xlu0 %3503
            %3505 = vrot.lane.b32.xlu0 %v3354, 64
            %v3506 = vpop.permute.xlu0 %3505
            %3507 = vrot.lane.b32.xlu0 %v3368, 64
            %v3508 = vpop.permute.xlu0 %3507
            %3509 = vrot.lane.b32.xlu0 %v3378, 64
            %v3510 = vpop.permute.xlu0 %3509
            %3511 = vrot.lane.b32.xlu0 %v3392, 64
            %v3512 = vpop.permute.xlu0 %3511
            %3513 = vrot.lane.b32.xlu0 %v3402, 64
            %v3514 = vpop.permute.xlu0 %3513
            %3515 = vrot.lane.b32.xlu0 %v3416, 64
            %v3516 = vpop.permute.xlu0 %3515
            %3517 = vrot.lane.b32.xlu0 %v3426, 64
            %v3518 = vpop.permute.xlu0 %3517
            %3519 = vrot.lane.b32.xlu0 %v3440, 64
            %v3520 = vpop.permute.xlu0 %3519
            %3521 = vrot.lane.b32.xlu0 %v3450, 64
            %v3522 = vpop.permute.xlu0 %3521
            %3523 = vrot.lane.b32.xlu0 %v3464, 64
            %v3524 = vpop.permute.xlu0 %3523
            %3525 = vrot.lane.b32.xlu0 %v3474, 64
            %v3526 = vpop.permute.xlu0 %3525
            %3527 = vrot.lane.b32.xlu0 %v3488, 64
            %v3528 = vpop.permute.xlu0 %3527
            %3529 = vrot.lane.b32.xlu0 %v3498, 64
            %v3530 = vpop.permute.xlu0 %3529
            %vm3547 = vcmask 1043968
            %3548 = vst.msk [vmem:[#allocation3] sm:$0xf] %vm3547, %v3500
            %3549 = vst.msk [vmem:[#allocation3 + $0x14] sm:$0xf] %vm3547, %v3502
            %3550 = vst.msk [vmem:[#allocation3 + $0x28] sm:$0xf] %vm3547, %v3504
            %3551 = vst.msk [vmem:[#allocation3 + $0x3c] sm:$0xf] %vm3547, %v3506
            %3552 = vst.msk [vmem:[#allocation3 + $0x50] sm:$0xf] %vm3547, %v3508
            %3553 = vst.msk [vmem:[#allocation3 + $0x64] sm:$0xf] %vm3547, %v3510
            %3554 = vst.msk [vmem:[#allocation3 + $0x78] sm:$0xf] %vm3547, %v3512
            %3555 = vst.msk [vmem:[#allocation3 + $0x8c] sm:$0xf] %vm3547, %v3514
            %3556 = vst.msk [vmem:[#allocation3 + $0xa0] sm:$0xf] %vm3547, %v3516
            %3557 = vst.msk [vmem:[#allocation3 + $0xb4] sm:$0xf] %vm3547, %v3518
            %3558 = vst.msk [vmem:[#allocation3 + $0xc8] sm:$0xf] %vm3547, %v3520
            %3559 = vst.msk [vmem:[#allocation3 + $0xdc] sm:$0xf] %vm3547, %v3522
            %3560 = vst.msk [vmem:[#allocation3 + $0xf0] sm:$0xf] %vm3547, %v3524
            %3561 = vst.msk [vmem:[#allocation3 + $0x104] sm:$0xf] %vm3547, %v3526
            %3562 = vst.msk [vmem:[#allocation3 + $0x118] sm:$0xf] %vm3547, %v3528
            %3563 = vst.msk [vmem:[#allocation3 + $0x12c] sm:$0xf] %vm3547, %v3530
            %v3564 = vld [vmem:[%s3247] sm:$0xe]
            %v3565 = vld [vmem:[%s3247 + $0x4] sm:$0xf]
            %v3566 = vld [vmem:[%s3247 + $0x8] sm:$0x1]
            %v3567 = vld [vmem:[%s3247 + $0xc] sm:$0xe]
            %v3568 = vld [vmem:[%s3247 + $0x10] sm:$0xf]
            %v3569 = vld [vmem:[%s3247 + $0x14] sm:$0x1]
            %v3570 = vld [vmem:[%s3247 + $0x18] sm:$0xe]
            %v3571 = vld [vmem:[%s3247 + $0x1c] sm:$0xf]
            %v3572 = vld [vmem:[%s3247 + $0x20] sm:$0x1]
            %v3573 = vld [vmem:[%s3247 + $0x24] sm:$0xe]
            %v3574 = vld [vmem:[%s3247 + $0x28] sm:$0xf]
            %v3575 = vld [vmem:[%s3247 + $0x2c] sm:$0x1]
            %v3576 = vld [vmem:[%s3247 + $0x30] sm:$0xe]
            %v3577 = vld [vmem:[%s3247 + $0x34] sm:$0xf]
            %v3578 = vld [vmem:[%s3247 + $0x38] sm:$0x1]
            %v3579 = vld [vmem:[%s3247 + $0x3c] sm:$0xe]
            %v3580 = vld [vmem:[%s3247 + $0x40] sm:$0xf]
            %v3581 = vld [vmem:[%s3247 + $0x44] sm:$0x1]
            %v3582 = vld [vmem:[%s3247 + $0x48] sm:$0xe]
            %v3583 = vld [vmem:[%s3247 + $0x4c] sm:$0xf]
            %v3584 = vld [vmem:[%s3247 + $0x50] sm:$0x1]
            %v3585 = vld [vmem:[%s3247 + $0x54] sm:$0xe]
            %v3586 = vld [vmem:[%s3247 + $0x58] sm:$0xf]
            %v3587 = vld [vmem:[%s3247 + $0x5c] sm:$0x1]
            %vm3612 = vcmask 1042432
            %vm3613 = vcmask 1046532
            %vm3614 = vmor %vm3612, %vm3613
            %v3615 = vrot.slane %v3564, 5
            %v3616 = vrot.slane %v3615, 4
            %v3617 = vrot.slane %v3565, 5
            %v3618 = vsel %vm3614, %v3616, %v3617
            %v3619 = vrot.slane %v3617, 4
            %v3620 = vrot.slane %v3566, 5
            %v3621 = vsel %vm3614, %v3619, %v3620
            %v3622 = vrot.slane %v3567, 5
            %v3623 = vrot.slane %v3622, 4
            %v3624 = vrot.slane %v3568, 5
            %v3625 = vsel %vm3614, %v3623, %v3624
            %v3626 = vrot.slane %v3624, 4
            %v3627 = vrot.slane %v3569, 5
            %v3628 = vsel %vm3614, %v3626, %v3627
            %v3629 = vrot.slane %v3570, 5
            %v3630 = vrot.slane %v3629, 4
            %v3631 = vrot.slane %v3571, 5
            %v3632 = vsel %vm3614, %v3630, %v3631
            %v3633 = vrot.slane %v3631, 4
            %v3634 = vrot.slane %v3572, 5
            %v3635 = vsel %vm3614, %v3633, %v3634
            %v3636 = vrot.slane %v3573, 5
            %v3637 = vrot.slane %v3636, 4
            %v3638 = vrot.slane %v3574, 5
            %v3639 = vsel %vm3614, %v3637, %v3638
            %v3640 = vrot.slane %v3638, 4
            %v3641 = vrot.slane %v3575, 5
            %v3642 = vsel %vm3614, %v3640, %v3641
            %v3643 = vrot.slane %v3576, 5
            %v3644 = vrot.slane %v3643, 4
            %v3645 = vrot.slane %v3577, 5
            %v3646 = vsel %vm3614, %v3644, %v3645
            %v3647 = vrot.slane %v3645, 4
            %v3648 = vrot.slane %v3578, 5
            %v3649 = vsel %vm3614, %v3647, %v3648
            %v3650 = vrot.slane %v3579, 5
            %v3651 = vrot.slane %v3650, 4
            %v3652 = vrot.slane %v3580, 5
            %v3653 = vsel %vm3614, %v3651, %v3652
            %v3654 = vrot.slane %v3652, 4
            %v3655 = vrot.slane %v3581, 5
            %v3656 = vsel %vm3614, %v3654, %v3655
            %v3657 = vrot.slane %v3582, 5
            %v3658 = vrot.slane %v3657, 4
            %v3659 = vrot.slane %v3583, 5
            %v3660 = vsel %vm3614, %v3658, %v3659
            %v3661 = vrot.slane %v3659, 4
            %v3662 = vrot.slane %v3584, 5
            %v3663 = vsel %vm3614, %v3661, %v3662
            %v3664 = vrot.slane %v3585, 5
            %v3665 = vrot.slane %v3664, 4
            %v3666 = vrot.slane %v3586, 5
            %v3667 = vsel %vm3614, %v3665, %v3666
            %v3668 = vrot.slane %v3666, 4
            %v3669 = vrot.slane %v3587, 5
            %v3670 = vsel %vm3614, %v3668, %v3669
            %3687 = vst.msk [vmem:[#allocation3 + $0x4] sm:$0xf] %vm287, %v3618
            %3688 = vst.msk [vmem:[#allocation3 + $0x18] sm:$0xf] %vm287, %v3621
            %3689 = vst.msk [vmem:[#allocation3 + $0x2c] sm:$0xf] %vm287, %v3625
            %3690 = vst.msk [vmem:[#allocation3 + $0x40] sm:$0xf] %vm287, %v3628
            %3691 = vst.msk [vmem:[#allocation3 + $0x54] sm:$0xf] %vm287, %v3632
            %3692 = vst.msk [vmem:[#allocation3 + $0x68] sm:$0xf] %vm287, %v3635
            %3693 = vst.msk [vmem:[#allocation3 + $0x7c] sm:$0xf] %vm287, %v3639
            %3694 = vst.msk [vmem:[#allocation3 + $0x90] sm:$0xf] %vm287, %v3642
            %3695 = vst.msk [vmem:[#allocation3 + $0xa4] sm:$0xf] %vm287, %v3646
            %3696 = vst.msk [vmem:[#allocation3 + $0xb8] sm:$0xf] %vm287, %v3649
            %3697 = vst.msk [vmem:[#allocation3 + $0xcc] sm:$0xf] %vm287, %v3653
            %3698 = vst.msk [vmem:[#allocation3 + $0xe0] sm:$0xf] %vm287, %v3656
            %3699 = vst.msk [vmem:[#allocation3 + $0xf4] sm:$0xf] %vm287, %v3660
            %3700 = vst.msk [vmem:[#allocation3 + $0x108] sm:$0xf] %vm287, %v3663
            %3701 = vst.msk [vmem:[#allocation3 + $0x11c] sm:$0xf] %vm287, %v3667
            %3702 = vst.msk [vmem:[#allocation3 + $0x130] sm:$0xf] %vm287, %v3670
            %s3703 = sadd.s32 %s3244, 1
            %s3704 = smul.u32 %s3703, 3
            %s3705 = smul.addr %s3704, 4
            %s3706 = scalar_lea.vmem [#allocation2], %s3705
            %v3707 = vld [vmem:[%s3706] sm:$0xf]
            %v3708 = vld [vmem:[%s3706 + $0x4] sm:$0xf]
            %v3709 = vld [vmem:[%s3706 + $0xc] sm:$0xf]
            %v3710 = vld [vmem:[%s3706 + $0x10] sm:$0xf]
            %v3711 = vld [vmem:[%s3706 + $0x18] sm:$0xf]
            %v3712 = vld [vmem:[%s3706 + $0x1c] sm:$0xf]
            %v3713 = vld [vmem:[%s3706 + $0x24] sm:$0xf]
            %v3714 = vld [vmem:[%s3706 + $0x28] sm:$0xf]
            %v3715 = vld [vmem:[%s3706 + $0x30] sm:$0xf]
            %v3716 = vld [vmem:[%s3706 + $0x34] sm:$0xf]
            %v3717 = vld [vmem:[%s3706 + $0x3c] sm:$0xf]
            %v3718 = vld [vmem:[%s3706 + $0x40] sm:$0xf]
            %v3719 = vld [vmem:[%s3706 + $0x48] sm:$0xf]
            %v3720 = vld [vmem:[%s3706 + $0x4c] sm:$0xf]
            %v3721 = vld [vmem:[%s3706 + $0x54] sm:$0xf]
            %v3722 = vld [vmem:[%s3706 + $0x58] sm:$0xf]
            %3739 = vrot.lane.b32.xlu0 %v3707, 64
            %v3740 = vpop.permute.xlu0 %3739
            %3741 = vrot.lane.b32.xlu0 %v3708, 64
            %v3742 = vpop.permute.xlu0 %3741
            %3743 = vrot.lane.b32.xlu0 %v3709, 64
            %v3744 = vpop.permute.xlu0 %3743
            %3745 = vrot.lane.b32.xlu0 %v3710, 64
            %v3746 = vpop.permute.xlu0 %3745
            %3747 = vrot.lane.b32.xlu0 %v3711, 64
            %v3748 = vpop.permute.xlu0 %3747
            %3749 = vrot.lane.b32.xlu0 %v3712, 64
            %v3750 = vpop.permute.xlu0 %3749
            %3751 = vrot.lane.b32.xlu0 %v3713, 64
            %v3752 = vpop.permute.xlu0 %3751
            %3753 = vrot.lane.b32.xlu0 %v3714, 64
            %v3754 = vpop.permute.xlu0 %3753
            %3755 = vrot.lane.b32.xlu0 %v3715, 64
            %v3756 = vpop.permute.xlu0 %3755
            %3757 = vrot.lane.b32.xlu0 %v3716, 64
            %v3758 = vpop.permute.xlu0 %3757
            %3759 = vrot.lane.b32.xlu0 %v3717, 64
            %v3760 = vpop.permute.xlu0 %3759
            %3761 = vrot.lane.b32.xlu0 %v3718, 64
            %v3762 = vpop.permute.xlu0 %3761
            %3763 = vrot.lane.b32.xlu0 %v3719, 64
            %v3764 = vpop.permute.xlu0 %3763
            %3765 = vrot.lane.b32.xlu0 %v3720, 64
            %v3766 = vpop.permute.xlu0 %3765
            %3767 = vrot.lane.b32.xlu0 %v3721, 64
            %v3768 = vpop.permute.xlu0 %3767
            %3769 = vrot.lane.b32.xlu0 %v3722, 64
            %v3770 = vpop.permute.xlu0 %3769
            %3787 = vst.msk [vmem:[#allocation3 + $0x4] sm:$0xf] %vm3547, %v3740
            %3788 = vst.msk [vmem:[#allocation3 + $0x18] sm:$0xf] %vm3547, %v3742
            %3789 = vst.msk [vmem:[#allocation3 + $0x2c] sm:$0xf] %vm3547, %v3744
            %3790 = vst.msk [vmem:[#allocation3 + $0x40] sm:$0xf] %vm3547, %v3746
            %3791 = vst.msk [vmem:[#allocation3 + $0x54] sm:$0xf] %vm3547, %v3748
            %3792 = vst.msk [vmem:[#allocation3 + $0x68] sm:$0xf] %vm3547, %v3750
            %3793 = vst.msk [vmem:[#allocation3 + $0x7c] sm:$0xf] %vm3547, %v3752
            %3794 = vst.msk [vmem:[#allocation3 + $0x90] sm:$0xf] %vm3547, %v3754
            %3795 = vst.msk [vmem:[#allocation3 + $0xa4] sm:$0xf] %vm3547, %v3756
            %3796 = vst.msk [vmem:[#allocation3 + $0xb8] sm:$0xf] %vm3547, %v3758
            %3797 = vst.msk [vmem:[#allocation3 + $0xcc] sm:$0xf] %vm3547, %v3760
            %3798 = vst.msk [vmem:[#allocation3 + $0xe0] sm:$0xf] %vm3547, %v3762
            %3799 = vst.msk [vmem:[#allocation3 + $0xf4] sm:$0xf] %vm3547, %v3764
            %3800 = vst.msk [vmem:[#allocation3 + $0x108] sm:$0xf] %vm3547, %v3766
            %3801 = vst.msk [vmem:[#allocation3 + $0x11c] sm:$0xf] %vm3547, %v3768
            %3802 = vst.msk [vmem:[#allocation3 + $0x130] sm:$0xf] %vm3547, %v3770
            %v3803 = vld [vmem:[%s3706] sm:$0xf]
            %v3804 = vld [vmem:[%s3706 + $0x4] sm:$0xf]
            %v3805 = vld [vmem:[%s3706 + $0x8] sm:$0x1]
            %v3806 = vld [vmem:[%s3706 + $0xc] sm:$0xf]
            %v3807 = vld [vmem:[%s3706 + $0x10] sm:$0xf]
            %v3808 = vld [vmem:[%s3706 + $0x14] sm:$0x1]
            %v3809 = vld [vmem:[%s3706 + $0x18] sm:$0xf]
            %v3810 = vld [vmem:[%s3706 + $0x1c] sm:$0xf]
            %v3811 = vld [vmem:[%s3706 + $0x20] sm:$0x1]
            %v3812 = vld [vmem:[%s3706 + $0x24] sm:$0xf]
            %v3813 = vld [vmem:[%s3706 + $0x28] sm:$0xf]
            %v3814 = vld [vmem:[%s3706 + $0x2c] sm:$0x1]
            %v3815 = vld [vmem:[%s3706 + $0x30] sm:$0xf]
            %v3816 = vld [vmem:[%s3706 + $0x34] sm:$0xf]
            %v3817 = vld [vmem:[%s3706 + $0x38] sm:$0x1]
            %v3818 = vld [vmem:[%s3706 + $0x3c] sm:$0xf]
            %v3819 = vld [vmem:[%s3706 + $0x40] sm:$0xf]
            %v3820 = vld [vmem:[%s3706 + $0x44] sm:$0x1]
            %v3821 = vld [vmem:[%s3706 + $0x48] sm:$0xf]
            %v3822 = vld [vmem:[%s3706 + $0x4c] sm:$0xf]
            %v3823 = vld [vmem:[%s3706 + $0x50] sm:$0x1]
            %v3824 = vld [vmem:[%s3706 + $0x54] sm:$0xf]
            %v3825 = vld [vmem:[%s3706 + $0x58] sm:$0xf]
            %v3826 = vld [vmem:[%s3706 + $0x5c] sm:$0x1]
            %v3828 = vshrl.u32 %v3803, 16
            %v3830 = vrot.slane %v3828, 4
            %v3831 = vshll.u32 %v3803, 16
            %v3833 = vrot.slane %v3831, 5
            %v3834 = vor.u32 %v3830, %v3833
            %v3835 = vrot.slane %v3834, 4
            %v3837 = vshll.u32 %v3804, 16
            %v3839 = vrot.slane %v3837, 5
            %v3840 = vsel %vm3306, %v3835, %v3839
            %v3841 = vshrl.u32 %v3804, 16
            %v3843 = vrot.slane %v3841, 4
            %v3844 = vor.u32 %v3843, %v3839
            %v3845 = vrot.slane %v3844, 4
            %v3847 = vshll.u32 %v3805, 16
            %v3849 = vrot.slane %v3847, 5
            %v3850 = vsel %vm3306, %v3845, %v3849
            %v3852 = vshrl.u32 %v3806, 16
            %v3854 = vrot.slane %v3852, 4
            %v3855 = vshll.u32 %v3806, 16
            %v3857 = vrot.slane %v3855, 5
            %v3858 = vor.u32 %v3854, %v3857
            %v3859 = vrot.slane %v3858, 4
            %v3861 = vshll.u32 %v3807, 16
            %v3863 = vrot.slane %v3861, 5
            %v3864 = vsel %vm3306, %v3859, %v3863
            %v3865 = vshrl.u32 %v3807, 16
            %v3867 = vrot.slane %v3865, 4
            %v3868 = vor.u32 %v3867, %v3863
            %v3869 = vrot.slane %v3868, 4
            %v3871 = vshll.u32 %v3808, 16
            %v3873 = vrot.slane %v3871, 5
            %v3874 = vsel %vm3306, %v3869, %v3873
            %v3876 = vshrl.u32 %v3809, 16
            %v3878 = vrot.slane %v3876, 4
            %v3879 = vshll.u32 %v3809, 16
            %v3881 = vrot.slane %v3879, 5
            %v3882 = vor.u32 %v3878, %v3881
            %v3883 = vrot.slane %v3882, 4
            %v3885 = vshll.u32 %v3810, 16
            %v3887 = vrot.slane %v3885, 5
            %v3888 = vsel %vm3306, %v3883, %v3887
            %v3889 = vshrl.u32 %v3810, 16
            %v3891 = vrot.slane %v3889, 4
            %v3892 = vor.u32 %v3891, %v3887
            %v3893 = vrot.slane %v3892, 4
            %v3895 = vshll.u32 %v3811, 16
            %v3897 = vrot.slane %v3895, 5
            %v3898 = vsel %vm3306, %v3893, %v3897
            %v3900 = vshrl.u32 %v3812, 16
            %v3902 = vrot.slane %v3900, 4
            %v3903 = vshll.u32 %v3812, 16
            %v3905 = vrot.slane %v3903, 5
            %v3906 = vor.u32 %v3902, %v3905
            %v3907 = vrot.slane %v3906, 4
            %v3909 = vshll.u32 %v3813, 16
            %v3911 = vrot.slane %v3909, 5
            %v3912 = vsel %vm3306, %v3907, %v3911
            %v3913 = vshrl.u32 %v3813, 16
            %v3915 = vrot.slane %v3913, 4
            %v3916 = vor.u32 %v3915, %v3911
            %v3917 = vrot.slane %v3916, 4
            %v3919 = vshll.u32 %v3814, 16
            %v3921 = vrot.slane %v3919, 5
            %v3922 = vsel %vm3306, %v3917, %v3921
            %v3924 = vshrl.u32 %v3815, 16
            %v3926 = vrot.slane %v3924, 4
            %v3927 = vshll.u32 %v3815, 16
            %v3929 = vrot.slane %v3927, 5
            %v3930 = vor.u32 %v3926, %v3929
            %v3931 = vrot.slane %v3930, 4
            %v3933 = vshll.u32 %v3816, 16
            %v3935 = vrot.slane %v3933, 5
            %v3936 = vsel %vm3306, %v3931, %v3935
            %v3937 = vshrl.u32 %v3816, 16
            %v3939 = vrot.slane %v3937, 4
            %v3940 = vor.u32 %v3939, %v3935
            %v3941 = vrot.slane %v3940, 4
            %v3943 = vshll.u32 %v3817, 16
            %v3945 = vrot.slane %v3943, 5
            %v3946 = vsel %vm3306, %v3941, %v3945
            %v3948 = vshrl.u32 %v3818, 16
            %v3950 = vrot.slane %v3948, 4
            %v3951 = vshll.u32 %v3818, 16
            %v3953 = vrot.slane %v3951, 5
            %v3954 = vor.u32 %v3950, %v3953
            %v3955 = vrot.slane %v3954, 4
            %v3957 = vshll.u32 %v3819, 16
            %v3959 = vrot.slane %v3957, 5
            %v3960 = vsel %vm3306, %v3955, %v3959
            %v3961 = vshrl.u32 %v3819, 16
            %v3963 = vrot.slane %v3961, 4
            %v3964 = vor.u32 %v3963, %v3959
            %v3965 = vrot.slane %v3964, 4
            %v3967 = vshll.u32 %v3820, 16
            %v3969 = vrot.slane %v3967, 5
            %v3970 = vsel %vm3306, %v3965, %v3969
            %v3972 = vshrl.u32 %v3821, 16
            %v3974 = vrot.slane %v3972, 4
            %v3975 = vshll.u32 %v3821, 16
            %v3977 = vrot.slane %v3975, 5
            %v3978 = vor.u32 %v3974, %v3977
            %v3979 = vrot.slane %v3978, 4
            %v3981 = vshll.u32 %v3822, 16
            %v3983 = vrot.slane %v3981, 5
            %v3984 = vsel %vm3306, %v3979, %v3983
            %v3985 = vshrl.u32 %v3822, 16
            %v3987 = vrot.slane %v3985, 4
            %v3988 = vor.u32 %v3987, %v3983
            %v3989 = vrot.slane %v3988, 4
            %v3991 = vshll.u32 %v3823, 16
            %v3993 = vrot.slane %v3991, 5
            %v3994 = vsel %vm3306, %v3989, %v3993
            %v3996 = vshrl.u32 %v3824, 16
            %v3998 = vrot.slane %v3996, 4
            %v3999 = vshll.u32 %v3824, 16
            %v4001 = vrot.slane %v3999, 5
            %v4002 = vor.u32 %v3998, %v4001
            %v4003 = vrot.slane %v4002, 4
            %v4005 = vshll.u32 %v3825, 16
            %v4007 = vrot.slane %v4005, 5
            %v4008 = vsel %vm3306, %v4003, %v4007
            %v4009 = vshrl.u32 %v3825, 16
            %v4011 = vrot.slane %v4009, 4
            %v4012 = vor.u32 %v4011, %v4007
            %v4013 = vrot.slane %v4012, 4
            %v4015 = vshll.u32 %v3826, 16
            %v4017 = vrot.slane %v4015, 5
            %v4018 = vsel %vm3306, %v4013, %v4017
            %4035 = vst.msk [vmem:[#allocation3 + $0x8] sm:$0xf] %vm287, %v3840
            %4036 = vst.msk [vmem:[#allocation3 + $0x1c] sm:$0xf] %vm287, %v3850
            %4037 = vst.msk [vmem:[#allocation3 + $0x30] sm:$0xf] %vm287, %v3864
            %4038 = vst.msk [vmem:[#allocation3 + $0x44] sm:$0xf] %vm287, %v3874
            %4039 = vst.msk [vmem:[#allocation3 + $0x58] sm:$0xf] %vm287, %v3888
            %4040 = vst.msk [vmem:[#allocation3 + $0x6c] sm:$0xf] %vm287, %v3898
            %4041 = vst.msk [vmem:[#allocation3 + $0x80] sm:$0xf] %vm287, %v3912
            %4042 = vst.msk [vmem:[#allocation3 + $0x94] sm:$0xf] %vm287, %v3922
            %4043 = vst.msk [vmem:[#allocation3 + $0xa8] sm:$0xf] %vm287, %v3936
            %4044 = vst.msk [vmem:[#allocation3 + $0xbc] sm:$0xf] %vm287, %v3946
            %4045 = vst.msk [vmem:[#allocation3 + $0xd0] sm:$0xf] %vm287, %v3960
            %4046 = vst.msk [vmem:[#allocation3 + $0xe4] sm:$0xf] %vm287, %v3970
            %4047 = vst.msk [vmem:[#allocation3 + $0xf8] sm:$0xf] %vm287, %v3984
            %4048 = vst.msk [vmem:[#allocation3 + $0x10c] sm:$0xf] %vm287, %v3994
            %4049 = vst.msk [vmem:[#allocation3 + $0x120] sm:$0xf] %vm287, %v4008
            %4050 = vst.msk [vmem:[#allocation3 + $0x134] sm:$0xf] %vm287, %v4018
            %v4051 = vld [vmem:[%s3706] sm:$0xe]
            %v4052 = vld [vmem:[%s3706 + $0x4] sm:$0xf]
            %v4053 = vld [vmem:[%s3706 + $0x8] sm:$0x1]
            %v4054 = vld [vmem:[%s3706 + $0xc] sm:$0xe]
            %v4055 = vld [vmem:[%s3706 + $0x10] sm:$0xf]
            %v4056 = vld [vmem:[%s3706 + $0x14] sm:$0x1]
            %v4057 = vld [vmem:[%s3706 + $0x18] sm:$0xe]
            %v4058 = vld [vmem:[%s3706 + $0x1c] sm:$0xf]
            %v4059 = vld [vmem:[%s3706 + $0x20] sm:$0x1]
            %v4060 = vld [vmem:[%s3706 + $0x24] sm:$0xe]
            %v4061 = vld [vmem:[%s3706 + $0x28] sm:$0xf]
            %v4062 = vld [vmem:[%s3706 + $0x2c] sm:$0x1]
            %v4063 = vld [vmem:[%s3706 + $0x30] sm:$0xe]
            %v4064 = vld [vmem:[%s3706 + $0x34] sm:$0xf]
            %v4065 = vld [vmem:[%s3706 + $0x38] sm:$0x1]
            %v4066 = vld [vmem:[%s3706 + $0x3c] sm:$0xe]
            %v4067 = vld [vmem:[%s3706 + $0x40] sm:$0xf]
            %v4068 = vld [vmem:[%s3706 + $0x44] sm:$0x1]
            %v4069 = vld [vmem:[%s3706 + $0x48] sm:$0xe]
            %v4070 = vld [vmem:[%s3706 + $0x4c] sm:$0xf]
            %v4071 = vld [vmem:[%s3706 + $0x50] sm:$0x1]
            %v4072 = vld [vmem:[%s3706 + $0x54] sm:$0xe]
            %v4073 = vld [vmem:[%s3706 + $0x58] sm:$0xf]
            %v4074 = vld [vmem:[%s3706 + $0x5c] sm:$0x1]
            %v4099 = vrot.slane %v4051, 5
            %v4100 = vrot.slane %v4099, 4
            %v4101 = vrot.slane %v4052, 5
            %v4102 = vsel %vm3614, %v4100, %v4101
            %v4103 = vrot.slane %v4101, 4
            %v4104 = vrot.slane %v4053, 5
            %v4105 = vsel %vm3614, %v4103, %v4104
            %v4106 = vrot.slane %v4054, 5
            %v4107 = vrot.slane %v4106, 4
            %v4108 = vrot.slane %v4055, 5
            %v4109 = vsel %vm3614, %v4107, %v4108
            %v4110 = vrot.slane %v4108, 4
            %v4111 = vrot.slane %v4056, 5
            %v4112 = vsel %vm3614, %v4110, %v4111
            %v4113 = vrot.slane %v4057, 5
            %v4114 = vrot.slane %v4113, 4
            %v4115 = vrot.slane %v4058, 5
            %v4116 = vsel %vm3614, %v4114, %v4115
            %v4117 = vrot.slane %v4115, 4
            %v4118 = vrot.slane %v4059, 5
            %v4119 = vsel %vm3614, %v4117, %v4118
            %v4120 = vrot.slane %v4060, 5
            %v4121 = vrot.slane %v4120, 4
            %v4122 = vrot.slane %v4061, 5
            %v4123 = vsel %vm3614, %v4121, %v4122
            %v4124 = vrot.slane %v4122, 4
            %v4125 = vrot.slane %v4062, 5
            %v4126 = vsel %vm3614, %v4124, %v4125
            %v4127 = vrot.slane %v4063, 5
            %v4128 = vrot.slane %v4127, 4
            %v4129 = vrot.slane %v4064, 5
            %v4130 = vsel %vm3614, %v4128, %v4129
            %v4131 = vrot.slane %v4129, 4
            %v4132 = vrot.slane %v4065, 5
            %v4133 = vsel %vm3614, %v4131, %v4132
            %v4134 = vrot.slane %v4066, 5
            %v4135 = vrot.slane %v4134, 4
            %v4136 = vrot.slane %v4067, 5
            %v4137 = vsel %vm3614, %v4135, %v4136
            %v4138 = vrot.slane %v4136, 4
            %v4139 = vrot.slane %v4068, 5
            %v4140 = vsel %vm3614, %v4138, %v4139
            %v4141 = vrot.slane %v4069, 5
            %v4142 = vrot.slane %v4141, 4
            %v4143 = vrot.slane %v4070, 5
            %v4144 = vsel %vm3614, %v4142, %v4143
            %v4145 = vrot.slane %v4143, 4
            %v4146 = vrot.slane %v4071, 5
            %v4147 = vsel %vm3614, %v4145, %v4146
            %v4148 = vrot.slane %v4072, 5
            %v4149 = vrot.slane %v4148, 4
            %v4150 = vrot.slane %v4073, 5
            %v4151 = vsel %vm3614, %v4149, %v4150
            %v4152 = vrot.slane %v4150, 4
            %v4153 = vrot.slane %v4074, 5
            %v4154 = vsel %vm3614, %v4152, %v4153
            %4155 = vrot.lane.b32.xlu0 %v4102, 64
            %v4156 = vpop.permute.xlu0 %4155
            %4157 = vrot.lane.b32.xlu0 %v4105, 64
            %v4158 = vpop.permute.xlu0 %4157
            %4159 = vrot.lane.b32.xlu0 %v4109, 64
            %v4160 = vpop.permute.xlu0 %4159
            %4161 = vrot.lane.b32.xlu0 %v4112, 64
            %v4162 = vpop.permute.xlu0 %4161
            %4163 = vrot.lane.b32.xlu0 %v4116, 64
            %v4164 = vpop.permute.xlu0 %4163
            %4165 = vrot.lane.b32.xlu0 %v4119, 64
            %v4166 = vpop.permute.xlu0 %4165
            %4167 = vrot.lane.b32.xlu0 %v4123, 64
            %v4168 = vpop.permute.xlu0 %4167
            %4169 = vrot.lane.b32.xlu0 %v4126, 64
            %v4170 = vpop.permute.xlu0 %4169
            %4171 = vrot.lane.b32.xlu0 %v4130, 64
            %v4172 = vpop.permute.xlu0 %4171
            %4173 = vrot.lane.b32.xlu0 %v4133, 64
            %v4174 = vpop.permute.xlu0 %4173
            %4175 = vrot.lane.b32.xlu0 %v4137, 64
            %v4176 = vpop.permute.xlu0 %4175
            %4177 = vrot.lane.b32.xlu0 %v4140, 64
            %v4178 = vpop.permute.xlu0 %4177
            %4179 = vrot.lane.b32.xlu0 %v4144, 64
            %v4180 = vpop.permute.xlu0 %4179
            %4181 = vrot.lane.b32.xlu0 %v4147, 64
            %v4182 = vpop.permute.xlu0 %4181
            %4183 = vrot.lane.b32.xlu0 %v4151, 64
            %v4184 = vpop.permute.xlu0 %4183
            %4185 = vrot.lane.b32.xlu0 %v4154, 64
            %v4186 = vpop.permute.xlu0 %4185
            %4203 = vst.msk [vmem:[#allocation3 + $0x8] sm:$0xf] %vm3547, %v4156
            %4204 = vst.msk [vmem:[#allocation3 + $0x1c] sm:$0xf] %vm3547, %v4158
            %4205 = vst.msk [vmem:[#allocation3 + $0x30] sm:$0xf] %vm3547, %v4160
            %4206 = vst.msk [vmem:[#allocation3 + $0x44] sm:$0xf] %vm3547, %v4162
            %4207 = vst.msk [vmem:[#allocation3 + $0x58] sm:$0xf] %vm3547, %v4164
            %4208 = vst.msk [vmem:[#allocation3 + $0x6c] sm:$0xf] %vm3547, %v4166
            %4209 = vst.msk [vmem:[#allocation3 + $0x80] sm:$0xf] %vm3547, %v4168
            %4210 = vst.msk [vmem:[#allocation3 + $0x94] sm:$0xf] %vm3547, %v4170
            %4211 = vst.msk [vmem:[#allocation3 + $0xa8] sm:$0xf] %vm3547, %v4172
            %4212 = vst.msk [vmem:[#allocation3 + $0xbc] sm:$0xf] %vm3547, %v4174
            %4213 = vst.msk [vmem:[#allocation3 + $0xd0] sm:$0xf] %vm3547, %v4176
            %4214 = vst.msk [vmem:[#allocation3 + $0xe4] sm:$0xf] %vm3547, %v4178
            %4215 = vst.msk [vmem:[#allocation3 + $0xf8] sm:$0xf] %vm3547, %v4180
            %4216 = vst.msk [vmem:[#allocation3 + $0x10c] sm:$0xf] %vm3547, %v4182
            %4217 = vst.msk [vmem:[#allocation3 + $0x120] sm:$0xf] %vm3547, %v4184
            %4218 = vst.msk [vmem:[#allocation3 + $0x134] sm:$0xf] %vm3547, %v4186
            %s4219 = sadd.s32 %s3244, 2
            %s4220 = smul.u32 %s4219, 3
            %s4221 = smul.addr %s4220, 4
            %s4222 = scalar_lea.vmem [#allocation2], %s4221
            %v4223 = vld [vmem:[%s4222] sm:$0xf]
            %v4224 = vld [vmem:[%s4222 + $0x4] sm:$0xf]
            %v4225 = vld [vmem:[%s4222 + $0xc] sm:$0xf]
            %v4226 = vld [vmem:[%s4222 + $0x10] sm:$0xf]
            %v4227 = vld [vmem:[%s4222 + $0x18] sm:$0xf]
            %v4228 = vld [vmem:[%s4222 + $0x1c] sm:$0xf]
            %v4229 = vld [vmem:[%s4222 + $0x24] sm:$0xf]
            %v4230 = vld [vmem:[%s4222 + $0x28] sm:$0xf]
            %v4231 = vld [vmem:[%s4222 + $0x30] sm:$0xf]
            %v4232 = vld [vmem:[%s4222 + $0x34] sm:$0xf]
            %v4233 = vld [vmem:[%s4222 + $0x3c] sm:$0xf]
            %v4234 = vld [vmem:[%s4222 + $0x40] sm:$0xf]
            %v4235 = vld [vmem:[%s4222 + $0x48] sm:$0xf]
            %v4236 = vld [vmem:[%s4222 + $0x4c] sm:$0xf]
            %v4237 = vld [vmem:[%s4222 + $0x54] sm:$0xf]
            %v4238 = vld [vmem:[%s4222 + $0x58] sm:$0xf]
            %4239 = vst.msk [vmem:[#allocation3 + $0xc] sm:$0xf] %vm287, %v4223
            %4240 = vst.msk [vmem:[#allocation3 + $0x20] sm:$0xf] %vm287, %v4224
            %4241 = vst.msk [vmem:[#allocation3 + $0x34] sm:$0xf] %vm287, %v4225
            %4242 = vst.msk [vmem:[#allocation3 + $0x48] sm:$0xf] %vm287, %v4226
            %4243 = vst.msk [vmem:[#allocation3 + $0x5c] sm:$0xf] %vm287, %v4227
            %4244 = vst.msk [vmem:[#allocation3 + $0x70] sm:$0xf] %vm287, %v4228
            %4245 = vst.msk [vmem:[#allocation3 + $0x84] sm:$0xf] %vm287, %v4229
            %4246 = vst.msk [vmem:[#allocation3 + $0x98] sm:$0xf] %vm287, %v4230
            %4247 = vst.msk [vmem:[#allocation3 + $0xac] sm:$0xf] %vm287, %v4231
            %4248 = vst.msk [vmem:[#allocation3 + $0xc0] sm:$0xf] %vm287, %v4232
            %4249 = vst.msk [vmem:[#allocation3 + $0xd4] sm:$0xf] %vm287, %v4233
            %4250 = vst.msk [vmem:[#allocation3 + $0xe8] sm:$0xf] %vm287, %v4234
            %4251 = vst.msk [vmem:[#allocation3 + $0xfc] sm:$0xf] %vm287, %v4235
            %4252 = vst.msk [vmem:[#allocation3 + $0x110] sm:$0xf] %vm287, %v4236
            %4253 = vst.msk [vmem:[#allocation3 + $0x124] sm:$0xf] %vm287, %v4237
            %4254 = vst.msk [vmem:[#allocation3 + $0x138] sm:$0xf] %vm287, %v4238
            %v4255 = vld [vmem:[%s4222] sm:$0xf]
            %v4256 = vld [vmem:[%s4222 + $0x4] sm:$0xf]
            %v4257 = vld [vmem:[%s4222 + $0x8] sm:$0x1]
            %v4258 = vld [vmem:[%s4222 + $0xc] sm:$0xf]
            %v4259 = vld [vmem:[%s4222 + $0x10] sm:$0xf]
            %v4260 = vld [vmem:[%s4222 + $0x14] sm:$0x1]
            %v4261 = vld [vmem:[%s4222 + $0x18] sm:$0xf]
            %v4262 = vld [vmem:[%s4222 + $0x1c] sm:$0xf]
            %v4263 = vld [vmem:[%s4222 + $0x20] sm:$0x1]
            %v4264 = vld [vmem:[%s4222 + $0x24] sm:$0xf]
            %v4265 = vld [vmem:[%s4222 + $0x28] sm:$0xf]
            %v4266 = vld [vmem:[%s4222 + $0x2c] sm:$0x1]
            %v4267 = vld [vmem:[%s4222 + $0x30] sm:$0xf]
            %v4268 = vld [vmem:[%s4222 + $0x34] sm:$0xf]
            %v4269 = vld [vmem:[%s4222 + $0x38] sm:$0x1]
            %v4270 = vld [vmem:[%s4222 + $0x3c] sm:$0xf]
            %v4271 = vld [vmem:[%s4222 + $0x40] sm:$0xf]
            %v4272 = vld [vmem:[%s4222 + $0x44] sm:$0x1]
            %v4273 = vld [vmem:[%s4222 + $0x48] sm:$0xf]
            %v4274 = vld [vmem:[%s4222 + $0x4c] sm:$0xf]
            %v4275 = vld [vmem:[%s4222 + $0x50] sm:$0x1]
            %v4276 = vld [vmem:[%s4222 + $0x54] sm:$0xf]
            %v4277 = vld [vmem:[%s4222 + $0x58] sm:$0xf]
            %v4278 = vld [vmem:[%s4222 + $0x5c] sm:$0x1]
            %v4280 = vshrl.u32 %v4255, 16
            %v4282 = vrot.slane %v4280, 4
            %v4283 = vshll.u32 %v4255, 16
            %v4285 = vrot.slane %v4283, 5
            %v4286 = vor.u32 %v4282, %v4285
            %v4287 = vrot.slane %v4286, 4
            %v4289 = vshll.u32 %v4256, 16
            %v4291 = vrot.slane %v4289, 5
            %v4292 = vsel %vm3306, %v4287, %v4291
            %v4293 = vshrl.u32 %v4256, 16
            %v4295 = vrot.slane %v4293, 4
            %v4296 = vor.u32 %v4295, %v4291
            %v4297 = vrot.slane %v4296, 4
            %v4299 = vshll.u32 %v4257, 16
            %v4301 = vrot.slane %v4299, 5
            %v4302 = vsel %vm3306, %v4297, %v4301
            %v4304 = vshrl.u32 %v4258, 16
            %v4306 = vrot.slane %v4304, 4
            %v4307 = vshll.u32 %v4258, 16
            %v4309 = vrot.slane %v4307, 5
            %v4310 = vor.u32 %v4306, %v4309
            %v4311 = vrot.slane %v4310, 4
            %v4313 = vshll.u32 %v4259, 16
            %v4315 = vrot.slane %v4313, 5
            %v4316 = vsel %vm3306, %v4311, %v4315
            %v4317 = vshrl.u32 %v4259, 16
            %v4319 = vrot.slane %v4317, 4
            %v4320 = vor.u32 %v4319, %v4315
            %v4321 = vrot.slane %v4320, 4
            %v4323 = vshll.u32 %v4260, 16
            %v4325 = vrot.slane %v4323, 5
            %v4326 = vsel %vm3306, %v4321, %v4325
            %v4328 = vshrl.u32 %v4261, 16
            %v4330 = vrot.slane %v4328, 4
            %v4331 = vshll.u32 %v4261, 16
            %v4333 = vrot.slane %v4331, 5
            %v4334 = vor.u32 %v4330, %v4333
            %v4335 = vrot.slane %v4334, 4
            %v4337 = vshll.u32 %v4262, 16
            %v4339 = vrot.slane %v4337, 5
            %v4340 = vsel %vm3306, %v4335, %v4339
            %v4341 = vshrl.u32 %v4262, 16
            %v4343 = vrot.slane %v4341, 4
            %v4344 = vor.u32 %v4343, %v4339
            %v4345 = vrot.slane %v4344, 4
            %v4347 = vshll.u32 %v4263, 16
            %v4349 = vrot.slane %v4347, 5
            %v4350 = vsel %vm3306, %v4345, %v4349
            %v4352 = vshrl.u32 %v4264, 16
            %v4354 = vrot.slane %v4352, 4
            %v4355 = vshll.u32 %v4264, 16
            %v4357 = vrot.slane %v4355, 5
            %v4358 = vor.u32 %v4354, %v4357
            %v4359 = vrot.slane %v4358, 4
            %v4361 = vshll.u32 %v4265, 16
            %v4363 = vrot.slane %v4361, 5
            %v4364 = vsel %vm3306, %v4359, %v4363
            %v4365 = vshrl.u32 %v4265, 16
            %v4367 = vrot.slane %v4365, 4
            %v4368 = vor.u32 %v4367, %v4363
            %v4369 = vrot.slane %v4368, 4
            %v4371 = vshll.u32 %v4266, 16
            %v4373 = vrot.slane %v4371, 5
            %v4374 = vsel %vm3306, %v4369, %v4373
            %v4376 = vshrl.u32 %v4267, 16
            %v4378 = vrot.slane %v4376, 4
            %v4379 = vshll.u32 %v4267, 16
            %v4381 = vrot.slane %v4379, 5
            %v4382 = vor.u32 %v4378, %v4381
            %v4383 = vrot.slane %v4382, 4
            %v4385 = vshll.u32 %v4268, 16
            %v4387 = vrot.slane %v4385, 5
            %v4388 = vsel %vm3306, %v4383, %v4387
            %v4389 = vshrl.u32 %v4268, 16
            %v4391 = vrot.slane %v4389, 4
            %v4392 = vor.u32 %v4391, %v4387
            %v4393 = vrot.slane %v4392, 4
            %v4395 = vshll.u32 %v4269, 16
            %v4397 = vrot.slane %v4395, 5
            %v4398 = vsel %vm3306, %v4393, %v4397
            %v4400 = vshrl.u32 %v4270, 16
            %v4402 = vrot.slane %v4400, 4
            %v4403 = vshll.u32 %v4270, 16
            %v4405 = vrot.slane %v4403, 5
            %v4406 = vor.u32 %v4402, %v4405
            %v4407 = vrot.slane %v4406, 4
            %v4409 = vshll.u32 %v4271, 16
            %v4411 = vrot.slane %v4409, 5
            %v4412 = vsel %vm3306, %v4407, %v4411
            %v4413 = vshrl.u32 %v4271, 16
            %v4415 = vrot.slane %v4413, 4
            %v4416 = vor.u32 %v4415, %v4411
            %v4417 = vrot.slane %v4416, 4
            %v4419 = vshll.u32 %v4272, 16
            %v4421 = vrot.slane %v4419, 5
            %v4422 = vsel %vm3306, %v4417, %v4421
            %v4424 = vshrl.u32 %v4273, 16
            %v4426 = vrot.slane %v4424, 4
            %v4427 = vshll.u32 %v4273, 16
            %v4429 = vrot.slane %v4427, 5
            %v4430 = vor.u32 %v4426, %v4429
            %v4431 = vrot.slane %v4430, 4
            %v4433 = vshll.u32 %v4274, 16
            %v4435 = vrot.slane %v4433, 5
            %v4436 = vsel %vm3306, %v4431, %v4435
            %v4437 = vshrl.u32 %v4274, 16
            %v4439 = vrot.slane %v4437, 4
            %v4440 = vor.u32 %v4439, %v4435
            %v4441 = vrot.slane %v4440, 4
            %v4443 = vshll.u32 %v4275, 16
            %v4445 = vrot.slane %v4443, 5
            %v4446 = vsel %vm3306, %v4441, %v4445
            %v4448 = vshrl.u32 %v4276, 16
            %v4450 = vrot.slane %v4448, 4
            %v4451 = vshll.u32 %v4276, 16
            %v4453 = vrot.slane %v4451, 5
            %v4454 = vor.u32 %v4450, %v4453
            %v4455 = vrot.slane %v4454, 4
            %v4457 = vshll.u32 %v4277, 16
            %v4459 = vrot.slane %v4457, 5
            %v4460 = vsel %vm3306, %v4455, %v4459
            %v4461 = vshrl.u32 %v4277, 16
            %v4463 = vrot.slane %v4461, 4
            %v4464 = vor.u32 %v4463, %v4459
            %v4465 = vrot.slane %v4464, 4
            %v4467 = vshll.u32 %v4278, 16
            %v4469 = vrot.slane %v4467, 5
            %v4470 = vsel %vm3306, %v4465, %v4469
            %4471 = vrot.lane.b32.xlu0 %v4292, 64
            %v4472 = vpop.permute.xlu0 %4471
            %4473 = vrot.lane.b32.xlu0 %v4302, 64
            %v4474 = vpop.permute.xlu0 %4473
            %4475 = vrot.lane.b32.xlu0 %v4316, 64
            %v4476 = vpop.permute.xlu0 %4475
            %4477 = vrot.lane.b32.xlu0 %v4326, 64
            %v4478 = vpop.permute.xlu0 %4477
            %4479 = vrot.lane.b32.xlu0 %v4340, 64
            %v4480 = vpop.permute.xlu0 %4479
            %4481 = vrot.lane.b32.xlu0 %v4350, 64
            %v4482 = vpop.permute.xlu0 %4481
            %4483 = vrot.lane.b32.xlu0 %v4364, 64
            %v4484 = vpop.permute.xlu0 %4483
            %4485 = vrot.lane.b32.xlu0 %v4374, 64
            %v4486 = vpop.permute.xlu0 %4485
            %4487 = vrot.lane.b32.xlu0 %v4388, 64
            %v4488 = vpop.permute.xlu0 %4487
            %4489 = vrot.lane.b32.xlu0 %v4398, 64
            %v4490 = vpop.permute.xlu0 %4489
            %4491 = vrot.lane.b32.xlu0 %v4412, 64
            %v4492 = vpop.permute.xlu0 %4491
            %4493 = vrot.lane.b32.xlu0 %v4422, 64
            %v4494 = vpop.permute.xlu0 %4493
            %4495 = vrot.lane.b32.xlu0 %v4436, 64
            %v4496 = vpop.permute.xlu0 %4495
            %4497 = vrot.lane.b32.xlu0 %v4446, 64
            %v4498 = vpop.permute.xlu0 %4497
            %4499 = vrot.lane.b32.xlu0 %v4460, 64
            %v4500 = vpop.permute.xlu0 %4499
            %4501 = vrot.lane.b32.xlu0 %v4470, 64
            %v4502 = vpop.permute.xlu0 %4501
            %4519 = vst.msk [vmem:[#allocation3 + $0xc] sm:$0xf] %vm3547, %v4472
            %4520 = vst.msk [vmem:[#allocation3 + $0x20] sm:$0xf] %vm3547, %v4474
            %4521 = vst.msk [vmem:[#allocation3 + $0x34] sm:$0xf] %vm3547, %v4476
            %4522 = vst.msk [vmem:[#allocation3 + $0x48] sm:$0xf] %vm3547, %v4478
            %4523 = vst.msk [vmem:[#allocation3 + $0x5c] sm:$0xf] %vm3547, %v4480
            %4524 = vst.msk [vmem:[#allocation3 + $0x70] sm:$0xf] %vm3547, %v4482
            %4525 = vst.msk [vmem:[#allocation3 + $0x84] sm:$0xf] %vm3547, %v4484
            %4526 = vst.msk [vmem:[#allocation3 + $0x98] sm:$0xf] %vm3547, %v4486
            %4527 = vst.msk [vmem:[#allocation3 + $0xac] sm:$0xf] %vm3547, %v4488
            %4528 = vst.msk [vmem:[#allocation3 + $0xc0] sm:$0xf] %vm3547, %v4490
            %4529 = vst.msk [vmem:[#allocation3 + $0xd4] sm:$0xf] %vm3547, %v4492
            %4530 = vst.msk [vmem:[#allocation3 + $0xe8] sm:$0xf] %vm3547, %v4494
            %4531 = vst.msk [vmem:[#allocation3 + $0xfc] sm:$0xf] %vm3547, %v4496
            %4532 = vst.msk [vmem:[#allocation3 + $0x110] sm:$0xf] %vm3547, %v4498
            %4533 = vst.msk [vmem:[#allocation3 + $0x124] sm:$0xf] %vm3547, %v4500
            %4534 = vst.msk [vmem:[#allocation3 + $0x138] sm:$0xf] %vm3547, %v4502
            %v4535 = vld [vmem:[%s4222] sm:$0xe]
            %v4536 = vld [vmem:[%s4222 + $0x4] sm:$0xf]
            %v4537 = vld [vmem:[%s4222 + $0x8] sm:$0x1]
            %v4538 = vld [vmem:[%s4222 + $0xc] sm:$0xe]
            %v4539 = vld [vmem:[%s4222 + $0x10] sm:$0xf]
            %v4540 = vld [vmem:[%s4222 + $0x14] sm:$0x1]
            %v4541 = vld [vmem:[%s4222 + $0x18] sm:$0xe]
            %v4542 = vld [vmem:[%s4222 + $0x1c] sm:$0xf]
            %v4543 = vld [vmem:[%s4222 + $0x20] sm:$0x1]
            %v4544 = vld [vmem:[%s4222 + $0x24] sm:$0xe]
            %v4545 = vld [vmem:[%s4222 + $0x28] sm:$0xf]
            %v4546 = vld [vmem:[%s4222 + $0x2c] sm:$0x1]
            %v4547 = vld [vmem:[%s4222 + $0x30] sm:$0xe]
            %v4548 = vld [vmem:[%s4222 + $0x34] sm:$0xf]
            %v4549 = vld [vmem:[%s4222 + $0x38] sm:$0x1]
            %v4550 = vld [vmem:[%s4222 + $0x3c] sm:$0xe]
            %v4551 = vld [vmem:[%s4222 + $0x40] sm:$0xf]
            %v4552 = vld [vmem:[%s4222 + $0x44] sm:$0x1]
            %v4553 = vld [vmem:[%s4222 + $0x48] sm:$0xe]
            %v4554 = vld [vmem:[%s4222 + $0x4c] sm:$0xf]
            %v4555 = vld [vmem:[%s4222 + $0x50] sm:$0x1]
            %v4556 = vld [vmem:[%s4222 + $0x54] sm:$0xe]
            %v4557 = vld [vmem:[%s4222 + $0x58] sm:$0xf]
            %v4558 = vld [vmem:[%s4222 + $0x5c] sm:$0x1]
            %v4583 = vrot.slane %v4535, 5
            %v4584 = vrot.slane %v4583, 4
            %v4585 = vrot.slane %v4536, 5
            %v4586 = vsel %vm3614, %v4584, %v4585
            %v4587 = vrot.slane %v4585, 4
            %v4588 = vrot.slane %v4537, 5
            %v4589 = vsel %vm3614, %v4587, %v4588
            %v4590 = vrot.slane %v4538, 5
            %v4591 = vrot.slane %v4590, 4
            %v4592 = vrot.slane %v4539, 5
            %v4593 = vsel %vm3614, %v4591, %v4592
            %v4594 = vrot.slane %v4592, 4
            %v4595 = vrot.slane %v4540, 5
            %v4596 = vsel %vm3614, %v4594, %v4595
            %v4597 = vrot.slane %v4541, 5
            %v4598 = vrot.slane %v4597, 4
            %v4599 = vrot.slane %v4542, 5
            %v4600 = vsel %vm3614, %v4598, %v4599
            %v4601 = vrot.slane %v4599, 4
            %v4602 = vrot.slane %v4543, 5
            %v4603 = vsel %vm3614, %v4601, %v4602
            %v4604 = vrot.slane %v4544, 5
            %v4605 = vrot.slane %v4604, 4
            %v4606 = vrot.slane %v4545, 5
            %v4607 = vsel %vm3614, %v4605, %v4606
            %v4608 = vrot.slane %v4606, 4
            %v4609 = vrot.slane %v4546, 5
            %v4610 = vsel %vm3614, %v4608, %v4609
            %v4611 = vrot.slane %v4547, 5
            %v4612 = vrot.slane %v4611, 4
            %v4613 = vrot.slane %v4548, 5
            %v4614 = vsel %vm3614, %v4612, %v4613
            %v4615 = vrot.slane %v4613, 4
            %v4616 = vrot.slane %v4549, 5
            %v4617 = vsel %vm3614, %v4615, %v4616
            %v4618 = vrot.slane %v4550, 5
            %v4619 = vrot.slane %v4618, 4
            %v4620 = vrot.slane %v4551, 5
            %v4621 = vsel %vm3614, %v4619, %v4620
            %v4622 = vrot.slane %v4620, 4
            %v4623 = vrot.slane %v4552, 5
            %v4624 = vsel %vm3614, %v4622, %v4623
            %v4625 = vrot.slane %v4553, 5
            %v4626 = vrot.slane %v4625, 4
            %v4627 = vrot.slane %v4554, 5
            %v4628 = vsel %vm3614, %v4626, %v4627
            %v4629 = vrot.slane %v4627, 4
            %v4630 = vrot.slane %v4555, 5
            %v4631 = vsel %vm3614, %v4629, %v4630
            %v4632 = vrot.slane %v4556, 5
            %v4633 = vrot.slane %v4632, 4
            %v4634 = vrot.slane %v4557, 5
            %v4635 = vsel %vm3614, %v4633, %v4634
            %v4636 = vrot.slane %v4634, 4
            %v4637 = vrot.slane %v4558, 5
            %v4638 = vsel %vm3614, %v4636, %v4637
            %4655 = vst.msk [vmem:[#allocation3 + $0x10] sm:$0xf] %vm287, %v4586
            %4656 = vst.msk [vmem:[#allocation3 + $0x24] sm:$0xf] %vm287, %v4589
            %4657 = vst.msk [vmem:[#allocation3 + $0x38] sm:$0xf] %vm287, %v4593
            %4658 = vst.msk [vmem:[#allocation3 + $0x4c] sm:$0xf] %vm287, %v4596
            %4659 = vst.msk [vmem:[#allocation3 + $0x60] sm:$0xf] %vm287, %v4600
            %4660 = vst.msk [vmem:[#allocation3 + $0x74] sm:$0xf] %vm287, %v4603
            %4661 = vst.msk [vmem:[#allocation3 + $0x88] sm:$0xf] %vm287, %v4607
            %4662 = vst.msk [vmem:[#allocation3 + $0x9c] sm:$0xf] %vm287, %v4610
            %4663 = vst.msk [vmem:[#allocation3 + $0xb0] sm:$0xf] %vm287, %v4614
            %4664 = vst.msk [vmem:[#allocation3 + $0xc4] sm:$0xf] %vm287, %v4617
            %4665 = vst.msk [vmem:[#allocation3 + $0xd8] sm:$0xf] %vm287, %v4621
            %4666 = vst.msk [vmem:[#allocation3 + $0xec] sm:$0xf] %vm287, %v4624
            %4667 = vst.msk [vmem:[#allocation3 + $0x100] sm:$0xf] %vm287, %v4628
            %4668 = vst.msk [vmem:[#allocation3 + $0x114] sm:$0xf] %vm287, %v4631
            %4669 = vst.msk [vmem:[#allocation3 + $0x128] sm:$0xf] %vm287, %v4635
            %4670 = vst.msk [vmem:[#allocation3 + $0x13c] sm:$0xf] %vm287, %v4638
            %p4671 = scmp.gt.s32.totalorder %s3239, 0
            // Predicated region
            $region81: #{vdsr_dem_forward.1} parent=77 // pred_check
              %p4672 = pneg %p4671
            $region82: #{vdsr_dem_forward.1} parent=77 // pred_check_branch
              %4674 = sbr.rel (%p4672) target = $region84
            $region83: #{vdsr_dem_forward.1} parent=77 // pred_region
              %v4675 = vld [vmem:[#allocation4] sm:$0xf]
              %v4676 = vld [vmem:[#allocation4 + $0x4] sm:$0xf]
              %4677 = vst.msk [vmem:[#allocation3] sm:$0xf] %vm287, %v4675
              %4678 = vst.msk [vmem:[#allocation3 + $0x14] sm:$0xf] %vm287, %v4676
              %v4679 = vld [vmem:[#allocation4] sm:$0xf]
              %v4680 = vld [vmem:[#allocation4 + $0x4] sm:$0xf]
              %v4681 = vld [vmem:[#allocation4 + $0x8] sm:$0x1]
              %v4683 = vshrl.u32 %v4679, 16
              %v4685 = vrot.slane %v4683, 4
              %v4686 = vshll.u32 %v4679, 16
              %v4688 = vrot.slane %v4686, 5
              %v4689 = vor.u32 %v4685, %v4688
              %v4690 = vrot.slane %v4689, 4
              %v4692 = vshll.u32 %v4680, 16
              %v4694 = vrot.slane %v4692, 5
              %v4695 = vsel %vm3306, %v4690, %v4694
              %v4696 = vshrl.u32 %v4680, 16
              %v4698 = vrot.slane %v4696, 4
              %v4699 = vor.u32 %v4698, %v4694
              %v4700 = vrot.slane %v4699, 4
              %v4702 = vshll.u32 %v4681, 16
              %v4704 = vrot.slane %v4702, 5
              %v4705 = vsel %vm3306, %v4700, %v4704
              %4706 = vrot.lane.b32.xlu0 %v4695, 64
              %v4707 = vpop.permute.xlu0 %4706
              %4708 = vrot.lane.b32.xlu0 %v4705, 64
              %v4709 = vpop.permute.xlu0 %4708
              %4712 = vst.msk [vmem:[#allocation3] sm:$0xf] %vm3547, %v4707
              %4713 = vst.msk [vmem:[#allocation3 + $0x14] sm:$0xf] %vm3547, %v4709
              %v4714 = vld [vmem:[#allocation4] sm:$0xe]
              %v4715 = vld [vmem:[#allocation4 + $0x4] sm:$0xf]
              %v4716 = vld [vmem:[#allocation4 + $0x8] sm:$0x1]
              %v4720 = vrot.slane %v4714, 5
              %v4721 = vrot.slane %v4720, 4
              %v4722 = vrot.slane %v4715, 5
              %v4723 = vsel %vm3614, %v4721, %v4722
              %v4724 = vrot.slane %v4722, 4
              %v4725 = vrot.slane %v4716, 5
              %v4726 = vsel %vm3614, %v4724, %v4725
              %4729 = vst.msk [vmem:[#allocation3 + $0x4] sm:$0xf] %vm287, %v4723
              %4730 = vst.msk [vmem:[#allocation3 + $0x18] sm:$0xf] %vm287, %v4726
            $region84: #{vdsr_dem_forward.1} parent=77 // pred_fallthru
              _
            %v4731 = vld [vmem:[#allocation3] sm:$0xff]
            %v4732 = vld [vmem:[#allocation3 + $0x8] sm:$0xff]
            %v4733 = vld [vmem:[#allocation3 + $0x10] sm:$0xf]
            %v4734 = vld [vmem:[#allocation3 + $0x14] sm:$0xff]
            %v4735 = vld [vmem:[#allocation3 + $0x1c] sm:$0xff]
            %v4736 = vld [vmem:[#allocation3 + $0x24] sm:$0xf]
            %v4737 = vld [vmem:[#allocation3 + $0x28] sm:$0xff]
            %v4738 = vld [vmem:[#allocation3 + $0x30] sm:$0xff]
            %v4739 = vld [vmem:[#allocation3 + $0x38] sm:$0xf]
            %v4740 = vld [vmem:[#allocation3 + $0x3c] sm:$0xff]
            %v4741 = vld [vmem:[#allocation3 + $0x44] sm:$0xff]
            %v4742 = vld [vmem:[#allocation3 + $0x4c] sm:$0xf]
            %v4743 = vld [vmem:[#allocation3 + $0x50] sm:$0xff]
            %v4744 = vld [vmem:[#allocation3 + $0x58] sm:$0xff]
            %v4745 = vld [vmem:[#allocation3 + $0x60] sm:$0xf]
            %v4746 = vld [vmem:[#allocation3 + $0x64] sm:$0xff]
            %v4747 = vld [vmem:[#allocation3 + $0x6c] sm:$0xff]
            %v4748 = vld [vmem:[#allocation3 + $0x74] sm:$0xf]
            %v4749 = vld [vmem:[#allocation3 + $0x78] sm:$0xff]
            %v4750 = vld [vmem:[#allocation3 + $0x80] sm:$0xff]
            %v4751 = vld [vmem:[#allocation3 + $0x88] sm:$0xf]
            %v4752 = vld [vmem:[#allocation3 + $0x8c] sm:$0xff]
            %v4753 = vld [vmem:[#allocation3 + $0x94] sm:$0xff]
            %v4754 = vld [vmem:[#allocation3 + $0x9c] sm:$0xf]
            %v4755 = vld [vmem:[#allocation3 + $0xa0] sm:$0xff]
            %v4756 = vld [vmem:[#allocation3 + $0xa8] sm:$0xff]
            %v4757 = vld [vmem:[#allocation3 + $0xb0] sm:$0xf]
            %v4758 = vld [vmem:[#allocation3 + $0xb4] sm:$0xff]
            %v4759 = vld [vmem:[#allocation3 + $0xbc] sm:$0xff]
            %v4760 = vld [vmem:[#allocation3 + $0xc4] sm:$0xf]
            %v4761 = vld [vmem:[#allocation3 + $0xc8] sm:$0xff]
            %v4762 = vld [vmem:[#allocation3 + $0xd0] sm:$0xff]
            %v4763 = vld [vmem:[#allocation3 + $0xd8] sm:$0xf]
            %v4764 = vld [vmem:[#allocation3 + $0xdc] sm:$0xff]
            %v4765 = vld [vmem:[#allocation3 + $0xe4] sm:$0xff]
            %v4766 = vld [vmem:[#allocation3 + $0xec] sm:$0xf]
            %v4767 = vld [vmem:[#allocation3 + $0xf0] sm:$0xff]
            %v4768 = vld [vmem:[#allocation3 + $0xf8] sm:$0xff]
            %v4769 = vld [vmem:[#allocation3 + $0x100] sm:$0xf]
            %v4770 = vld [vmem:[#allocation3 + $0x104] sm:$0xff]
            %v4771 = vld [vmem:[#allocation3 + $0x10c] sm:$0xff]
            %v4772 = vld [vmem:[#allocation3 + $0x114] sm:$0xf]
            %v4773 = vld [vmem:[#allocation3 + $0x118] sm:$0xff]
            %v4774 = vld [vmem:[#allocation3 + $0x120] sm:$0xff]
            %v4775 = vld [vmem:[#allocation3 + $0x128] sm:$0xf]
            %v4776 = vld [vmem:[#allocation3 + $0x12c] sm:$0xff]
            %v4777 = vld [vmem:[#allocation3 + $0x134] sm:$0xff]
            %v4778 = vld [vmem:[#allocation3 + $0x13c] sm:$0xf]
            %s4779 = smul.u32 %s3233, 72
            %s4780 = smul.addr %s4779, 4
            %s4781 = scalar_lea.vmem %s4, %s4780
            %v4782 = vld [vmem:[%s4781] sm:$0xf]
            %v4783 = vld [vmem:[%s4781 + $0x4] sm:$0xf]
            %v4784 = vld [vmem:[%s4781 + $0x8] sm:$0xf]
            %v4785 = vld [vmem:[%s4781 + $0xc] sm:$0xf]
            %v4786 = vld [vmem:[%s4781 + $0x10] sm:$0xf]
            %v4787 = vld [vmem:[%s4781 + $0x14] sm:$0xf]
            %v4788 = vld [vmem:[%s4781 + $0x18] sm:$0xf]
            %v4789 = vld [vmem:[%s4781 + $0x1c] sm:$0xf]
            %v4790 = vld [vmem:[%s4781 + $0x20] sm:$0xf]
            %v4791 = vld [vmem:[%s4781 + $0x24] sm:$0xf]
            %v4792 = vld [vmem:[%s4781 + $0x28] sm:$0xf]
            %v4793 = vld [vmem:[%s4781 + $0x2c] sm:$0xf]
            %v4794 = vld [vmem:[%s4781 + $0x30] sm:$0xf]
            %v4795 = vld [vmem:[%s4781 + $0x34] sm:$0xf]
            %v4796 = vld [vmem:[%s4781 + $0x38] sm:$0xf]
            %v4797 = vld [vmem:[%s4781 + $0x3c] sm:$0xf]
            %v4798 = vld [vmem:[%s4781 + $0x40] sm:$0xf]
            %v4799 = vld [vmem:[%s4781 + $0x44] sm:$0xf]
            %v4800 = vld [vmem:[%s4781 + $0x48] sm:$0xf]
            %v4801 = vld [vmem:[%s4781 + $0x4c] sm:$0xf]
            %v4802 = vld [vmem:[%s4781 + $0x50] sm:$0xf]
            %v4803 = vld [vmem:[%s4781 + $0x54] sm:$0xf]
            %v4804 = vld [vmem:[%s4781 + $0x58] sm:$0xf]
            %v4805 = vld [vmem:[%s4781 + $0x5c] sm:$0xf]
            %v4806 = vld [vmem:[%s4781 + $0x60] sm:$0xf]
            %v4807 = vld [vmem:[%s4781 + $0x64] sm:$0xf]
            %v4808 = vld [vmem:[%s4781 + $0x68] sm:$0xf]
            %v4809 = vld [vmem:[%s4781 + $0x6c] sm:$0xf]
            %v4810 = vld [vmem:[%s4781 + $0x70] sm:$0xf]
            %v4811 = vld [vmem:[%s4781 + $0x74] sm:$0xf]
            %v4812 = vld [vmem:[%s4781 + $0x78] sm:$0xf]
            %v4813 = vld [vmem:[%s4781 + $0x7c] sm:$0xf]
            %v4814 = vld [vmem:[%s4781 + $0x80] sm:$0xf]
            %v4815 = vld [vmem:[%s4781 + $0x84] sm:$0xf]
            %v4816 = vld [vmem:[%s4781 + $0x88] sm:$0xf]
            %v4817 = vld [vmem:[%s4781 + $0x8c] sm:$0xf]
            %v4818 = vld [vmem:[%s4781 + $0x90] sm:$0xf]
            %v4819 = vld [vmem:[%s4781 + $0x94] sm:$0xf]
            %v4820 = vld [vmem:[%s4781 + $0x98] sm:$0xf]
            %v4821 = vld [vmem:[%s4781 + $0x9c] sm:$0xf]
            %v4822 = vld [vmem:[%s4781 + $0xa0] sm:$0xf]
            %v4823 = vld [vmem:[%s4781 + $0xa4] sm:$0xf]
            %v4824 = vld [vmem:[%s4781 + $0xa8] sm:$0xf]
            %v4825 = vld [vmem:[%s4781 + $0xac] sm:$0xf]
            %v4826 = vld [vmem:[%s4781 + $0xb0] sm:$0xf]
            %v4827 = vld [vmem:[%s4781 + $0xb4] sm:$0xf]
            %v4828 = vld [vmem:[%s4781 + $0xb8] sm:$0xf]
            %v4829 = vld [vmem:[%s4781 + $0xbc] sm:$0xf]
            %v4830 = vld [vmem:[%s4781 + $0xc0] sm:$0xf]
            %v4831 = vld [vmem:[%s4781 + $0xc4] sm:$0xf]
            %v4832 = vld [vmem:[%s4781 + $0xc8] sm:$0xf]
            %v4833 = vld [vmem:[%s4781 + $0xcc] sm:$0xf]
            %v4834 = vld [vmem:[%s4781 + $0xd0] sm:$0xf]
            %v4835 = vld [vmem:[%s4781 + $0xd4] sm:$0xf]
            %v4836 = vld [vmem:[%s4781 + $0xd8] sm:$0xf]
            %v4837 = vld [vmem:[%s4781 + $0xdc] sm:$0xf]
            %v4838 = vld [vmem:[%s4781 + $0xe0] sm:$0xf]
            %v4839 = vld [vmem:[%s4781 + $0xe4] sm:$0xf]
            %v4840 = vld [vmem:[%s4781 + $0xe8] sm:$0xf]
            %v4841 = vld [vmem:[%s4781 + $0xec] sm:$0xf]
            %v4842 = vld [vmem:[%s4781 + $0xf0] sm:$0xf]
            %v4843 = vld [vmem:[%s4781 + $0xf4] sm:$0xf]
            %v4844 = vld [vmem:[%s4781 + $0xf8] sm:$0xf]
            %v4845 = vld [vmem:[%s4781 + $0xfc] sm:$0xf]
            %v4846 = vld [vmem:[%s4781 + $0x100] sm:$0xf]
            %v4847 = vld [vmem:[%s4781 + $0x104] sm:$0xf]
            %v4848 = vld [vmem:[%s4781 + $0x108] sm:$0xf]
            %v4849 = vld [vmem:[%s4781 + $0x10c] sm:$0xf]
            %v4850 = vld [vmem:[%s4781 + $0x110] sm:$0xf]
            %v4851 = vld [vmem:[%s4781 + $0x114] sm:$0xf]
            %v4852 = vld [vmem:[%s4781 + $0x118] sm:$0xf]
            %v4853 = vld [vmem:[%s4781 + $0x11c] sm:$0xf]
            %v4902 = vunpack.c.l.b16 %v4731
            %v4903 = vunpack.c.h.b16 %v4731
            %v4904 = vunpack.c.l.b16 %v4732
            %v4905 = vunpack.c.h.b16 %v4732
            %v4906 = vunpack.c.l.b16 %v4733
            %v4907 = vunpack.c.l.b16 %v4734
            %v4908 = vunpack.c.h.b16 %v4734
            %v4909 = vunpack.c.l.b16 %v4735
            %v4910 = vunpack.c.h.b16 %v4735
            %v4911 = vunpack.c.l.b16 %v4736
            %v4912 = vunpack.c.l.b16 %v4737
            %v4913 = vunpack.c.h.b16 %v4737
            %v4914 = vunpack.c.l.b16 %v4738
            %v4915 = vunpack.c.h.b16 %v4738
            %v4916 = vunpack.c.l.b16 %v4739
            %v4917 = vunpack.c.l.b16 %v4740
            %v4918 = vunpack.c.h.b16 %v4740
            %v4919 = vunpack.c.l.b16 %v4741
            %v4920 = vunpack.c.h.b16 %v4741
            %v4921 = vunpack.c.l.b16 %v4742
            %v4922 = vunpack.c.l.b16 %v4743
            %v4923 = vunpack.c.h.b16 %v4743
            %v4924 = vunpack.c.l.b16 %v4744
            %v4925 = vunpack.c.h.b16 %v4744
            %v4926 = vunpack.c.l.b16 %v4745
            %v4927 = vunpack.c.l.b16 %v4746
            %v4928 = vunpack.c.h.b16 %v4746
            %v4929 = vunpack.c.l.b16 %v4747
            %v4930 = vunpack.c.h.b16 %v4747
            %v4931 = vunpack.c.l.b16 %v4748
            %v4932 = vunpack.c.l.b16 %v4749
            %v4933 = vunpack.c.h.b16 %v4749
            %v4934 = vunpack.c.l.b16 %v4750
            %v4935 = vunpack.c.h.b16 %v4750
            %v4936 = vunpack.c.l.b16 %v4751
            %v4937 = vunpack.c.l.b16 %v4752
            %v4938 = vunpack.c.h.b16 %v4752
            %v4939 = vunpack.c.l.b16 %v4753
            %v4940 = vunpack.c.h.b16 %v4753
            %v4941 = vunpack.c.l.b16 %v4754
            %v4942 = vunpack.c.l.b16 %v4755
            %v4943 = vunpack.c.h.b16 %v4755
            %v4944 = vunpack.c.l.b16 %v4756
            %v4945 = vunpack.c.h.b16 %v4756
            %v4946 = vunpack.c.l.b16 %v4757
            %v4947 = vunpack.c.l.b16 %v4758
            %v4948 = vunpack.c.h.b16 %v4758
            %v4949 = vunpack.c.l.b16 %v4759
            %v4950 = vunpack.c.h.b16 %v4759
            %v4951 = vunpack.c.l.b16 %v4760
            %v4952 = vunpack.c.l.b16 %v4761
            %v4953 = vunpack.c.h.b16 %v4761
            %v4954 = vunpack.c.l.b16 %v4762
            %v4955 = vunpack.c.h.b16 %v4762
            %v4956 = vunpack.c.l.b16 %v4763
            %v4957 = vunpack.c.l.b16 %v4764
            %v4958 = vunpack.c.h.b16 %v4764
            %v4959 = vunpack.c.l.b16 %v4765
            %v4960 = vunpack.c.h.b16 %v4765
            %v4961 = vunpack.c.l.b16 %v4766
            %v4962 = vunpack.c.l.b16 %v4767
            %v4963 = vunpack.c.h.b16 %v4767
            %v4964 = vunpack.c.l.b16 %v4768
            %v4965 = vunpack.c.h.b16 %v4768
            %v4966 = vunpack.c.l.b16 %v4769
            %v4967 = vunpack.c.l.b16 %v4770
            %v4968 = vunpack.c.h.b16 %v4770
            %v4969 = vunpack.c.l.b16 %v4771
            %v4970 = vunpack.c.h.b16 %v4771
            %v4971 = vunpack.c.l.b16 %v4772
            %v4972 = vunpack.c.l.b16 %v4773
            %v4973 = vunpack.c.h.b16 %v4773
            %v4974 = vunpack.c.l.b16 %v4774
            %v4975 = vunpack.c.h.b16 %v4774
            %v4976 = vunpack.c.l.b16 %v4775
            %v4977 = vunpack.c.l.b16 %v4776
            %v4978 = vunpack.c.h.b16 %v4776
            %v4979 = vunpack.c.l.b16 %v4777
            %v4980 = vunpack.c.h.b16 %v4777
            %v4981 = vunpack.c.l.b16 %v4778
            %v4982 = vpack.c.b16 %v4907, %v4902
            %v4983 = vpack.c.b16 %v4908, %v4903
            %v4984 = vpack.c.b16 %v4909, %v4904
            %v4985 = vpack.c.b16 %v4910, %v4905
            %v4986 = vpack.c.b16 %v4911, %v4906
            %v4987 = vpack.c.b16 %v4917, %v4912
            %v4988 = vpack.c.b16 %v4918, %v4913
            %v4989 = vpack.c.b16 %v4919, %v4914
            %v4990 = vpack.c.b16 %v4920, %v4915
            %v4991 = vpack.c.b16 %v4921, %v4916
            %v4992 = vpack.c.b16 %v4927, %v4922
            %v4993 = vpack.c.b16 %v4928, %v4923
            %v4994 = vpack.c.b16 %v4929, %v4924
            %v4995 = vpack.c.b16 %v4930, %v4925
            %v4996 = vpack.c.b16 %v4931, %v4926
            %v4997 = vpack.c.b16 %v4937, %v4932
            %v4998 = vpack.c.b16 %v4938, %v4933
            %v4999 = vpack.c.b16 %v4939, %v4934
            %v5000 = vpack.c.b16 %v4940, %v4935
            %v5001 = vpack.c.b16 %v4941, %v4936
            %v5002 = vpack.c.b16 %v4947, %v4942
            %v5003 = vpack.c.b16 %v4948, %v4943
            %v5004 = vpack.c.b16 %v4949, %v4944
            %v5005 = vpack.c.b16 %v4950, %v4945
            %v5006 = vpack.c.b16 %v4951, %v4946
            %v5007 = vpack.c.b16 %v4957, %v4952
            %v5008 = vpack.c.b16 %v4958, %v4953
            %v5009 = vpack.c.b16 %v4959, %v4954
            %v5010 = vpack.c.b16 %v4960, %v4955
            %v5011 = vpack.c.b16 %v4961, %v4956
            %v5012 = vpack.c.b16 %v4967, %v4962
            %v5013 = vpack.c.b16 %v4968, %v4963
            %v5014 = vpack.c.b16 %v4969, %v4964
            %v5015 = vpack.c.b16 %v4970, %v4965
            %v5016 = vpack.c.b16 %v4971, %v4966
            %v5017 = vpack.c.b16 %v4977, %v4972
            %v5018 = vpack.c.b16 %v4978, %v4973
            %v5019 = vpack.c.b16 %v4979, %v4974
            %v5020 = vpack.c.b16 %v4980, %v4975
            %v5021 = vpack.c.b16 %v4981, %v4976
            %v5126 = vunpack.c.l.b16 %v4782
            %v5127 = vunpack.c.l.b16 %v4783
            %v5128 = vunpack.c.l.b16 %v4784
            %v5129 = vunpack.c.l.b16 %v4785
            %v5130 = vunpack.c.l.b16 %v4786
            %v5131 = vunpack.c.l.b16 %v4787
            %v5132 = vunpack.c.l.b16 %v4788
            %v5133 = vunpack.c.l.b16 %v4789
            %v5134 = vunpack.c.l.b16 %v4790
            %v5135 = vunpack.c.l.b16 %v4791
            %v5136 = vunpack.c.l.b16 %v4792
            %v5137 = vunpack.c.l.b16 %v4793
            %v5138 = vunpack.c.l.b16 %v4794
            %v5139 = vunpack.c.l.b16 %v4795
            %v5140 = vunpack.c.l.b16 %v4796
            %v5141 = vunpack.c.l.b16 %v4797
            %v5142 = vunpack.c.l.b16 %v4798
            %v5143 = vunpack.c.l.b16 %v4799
            %v5144 = vunpack.c.l.b16 %v4800
            %v5145 = vunpack.c.l.b16 %v4801
            %v5146 = vunpack.c.l.b16 %v4802
            %v5147 = vunpack.c.l.b16 %v4803
            %v5148 = vunpack.c.l.b16 %v4804
            %v5149 = vunpack.c.l.b16 %v4805
            %v5150 = vunpack.c.l.b16 %v4806
            %v5151 = vunpack.c.l.b16 %v4807
            %v5152 = vunpack.c.l.b16 %v4808
            %v5153 = vunpack.c.l.b16 %v4809
            %v5154 = vunpack.c.l.b16 %v4810
            %v5155 = vunpack.c.l.b16 %v4811
            %v5156 = vunpack.c.l.b16 %v4812
            %v5157 = vunpack.c.l.b16 %v4813
            %v5158 = vunpack.c.l.b16 %v4814
            %v5159 = vunpack.c.l.b16 %v4815
            %v5160 = vunpack.c.l.b16 %v4816
            %v5161 = vunpack.c.l.b16 %v4817
            %v5162 = vunpack.c.l.b16 %v4818
            %v5163 = vunpack.c.l.b16 %v4819
            %v5164 = vunpack.c.l.b16 %v4820
            %v5165 = vunpack.c.l.b16 %v4821
            %v5166 = vunpack.c.l.b16 %v4822
            %v5167 = vunpack.c.l.b16 %v4823
            %v5168 = vunpack.c.l.b16 %v4824
            %v5169 = vunpack.c.l.b16 %v4825
            %v5170 = vunpack.c.l.b16 %v4826
            %v5171 = vunpack.c.l.b16 %v4827
            %v5172 = vunpack.c.l.b16 %v4828
            %v5173 = vunpack.c.l.b16 %v4829
            %v5174 = vunpack.c.l.b16 %v4830
            %v5175 = vunpack.c.l.b16 %v4831
            %v5176 = vunpack.c.l.b16 %v4832
            %v5177 = vunpack.c.l.b16 %v4833
            %v5178 = vunpack.c.l.b16 %v4834
            %v5179 = vunpack.c.l.b16 %v4835
            %v5180 = vunpack.c.l.b16 %v4836
            %v5181 = vunpack.c.l.b16 %v4837
            %v5182 = vunpack.c.l.b16 %v4838
            %v5183 = vunpack.c.l.b16 %v4839
            %v5184 = vunpack.c.l.b16 %v4840
            %v5185 = vunpack.c.l.b16 %v4841
            %v5186 = vunpack.c.l.b16 %v4842
            %v5187 = vunpack.c.l.b16 %v4843
            %v5188 = vunpack.c.l.b16 %v4844
            %v5189 = vunpack.c.l.b16 %v4845
            %v5190 = vunpack.c.l.b16 %v4846
            %v5191 = vunpack.c.l.b16 %v4847
            %v5192 = vunpack.c.l.b16 %v4848
            %v5193 = vunpack.c.l.b16 %v4849
            %v5194 = vunpack.c.l.b16 %v4850
            %v5195 = vunpack.c.l.b16 %v4851
            %v5196 = vunpack.c.l.b16 %v4852
            %v5197 = vunpack.c.l.b16 %v4853
            %v5198 = vpack.c.b16 %v5127, %v5126
            %v5199 = vpack.c.b16 %v5129, %v5128
            %v5200 = vpack.c.b16 %v5131, %v5130
            %v5201 = vpack.c.b16 %v5133, %v5132
            %v5202 = vpack.c.b16 %v5135, %v5134
            %v5203 = vpack.c.b16 %v5137, %v5136
            %v5204 = vpack.c.b16 %v5139, %v5138
            %v5205 = vpack.c.b16 %v5141, %v5140
            %v5206 = vpack.c.b16 %v5143, %v5142
            %v5207 = vpack.c.b16 %v5145, %v5144
            %v5208 = vpack.c.b16 %v5147, %v5146
            %v5209 = vpack.c.b16 %v5149, %v5148
            %v5210 = vpack.c.b16 %v5151, %v5150
            %v5211 = vpack.c.b16 %v5153, %v5152
            %v5212 = vpack.c.b16 %v5155, %v5154
            %v5213 = vpack.c.b16 %v5157, %v5156
            %v5214 = vpack.c.b16 %v5159, %v5158
            %v5215 = vpack.c.b16 %v5161, %v5160
            %v5216 = vpack.c.b16 %v5163, %v5162
            %v5217 = vpack.c.b16 %v5165, %v5164
            %v5218 = vpack.c.b16 %v5167, %v5166
            %v5219 = vpack.c.b16 %v5169, %v5168
            %v5220 = vpack.c.b16 %v5171, %v5170
            %v5221 = vpack.c.b16 %v5173, %v5172
            %v5222 = vpack.c.b16 %v5175, %v5174
            %v5223 = vpack.c.b16 %v5177, %v5176
            %v5224 = vpack.c.b16 %v5179, %v5178
            %v5225 = vpack.c.b16 %v5181, %v5180
            %v5226 = vpack.c.b16 %v5183, %v5182
            %v5227 = vpack.c.b16 %v5185, %v5184
            %v5228 = vpack.c.b16 %v5187, %v5186
            %v5229 = vpack.c.b16 %v5189, %v5188
            %v5230 = vpack.c.b16 %v5191, %v5190
            %v5231 = vpack.c.b16 %v5193, %v5192
            %v5232 = vpack.c.b16 %v5195, %v5194
            %v5233 = vpack.c.b16 %v5197, %v5196
            %vm5270 = vcmask 523264
            %v5272 = vsel %vm5270, %v4986, 0
            %v5275 = vsel %vm5270, %v4991, 0
            %v5278 = vsel %vm5270, %v4996, 0
            %v5281 = vsel %vm5270, %v5001, 0
            %v5284 = vsel %vm5270, %v5006, 0
            %v5287 = vsel %vm5270, %v5011, 0
            %v5290 = vsel %vm5270, %v5016, 0
            %v5293 = vsel %vm5270, %v5021, 0
            %5295 = vmatprep.subr.bf16.mxu0 0
            %5296 = vmatpush1.bf16.msra.mxu0 %v5205
            %5297 = vmatprep.subr.bf16.mxu0 0
            %5298 = vmatpush1.bf16.msra.mxu0 %v5204
            %5299 = vmatprep.subr.bf16.mxu0 0
            %5300 = vmatpush1.bf16.msra.mxu0 %v5203
            %5301 = vmatprep.subr.bf16.mxu0 0
            %5302 = vmatpush1.bf16.msra.mxu0 %v5202
            %5303 = vmatprep.subr.bf16.mxu0 0
            %5304 = vmatpush1.bf16.msra.mxu0 %v5201
            %5305 = vmatprep.subr.bf16.mxu0 0
            %5306 = vmatpush1.bf16.msra.mxu0 %v5200
            %5307 = vmatprep.subr.bf16.mxu0 0
            %5308 = vmatpush1.bf16.msra.mxu0 %v5199
            %5309 = vmatprep.subr.bf16.mxu0 0
            %5310 = vmatpush1.bf16.msra.mxu0 %v5198
            %5311 = vmatprep.subr.bf16.mxu0 0
            %5312 = vmatpush2.bf16.msra.mxu0 %v5213
            %5313 = vmatprep.subr.bf16.mxu0 0
            %5314 = vmatpush2.bf16.msra.mxu0 %v5212
            %5315 = vmatprep.subr.bf16.mxu0 0
            %5316 = vmatpush2.bf16.msra.mxu0 %v5211
            %5317 = vmatprep.subr.bf16.mxu0 0
            %5318 = vmatpush2.bf16.msra.mxu0 %v5210
            %5319 = vmatprep.subr.bf16.mxu0 0
            %5320 = vmatpush2.bf16.msra.mxu0 %v5209
            %5321 = vmatprep.subr.bf16.mxu0 0
            %5322 = vmatpush2.bf16.msra.mxu0 %v5208
            %5323 = vmatprep.subr.bf16.mxu0 0
            %5324 = vmatpush2.bf16.msra.mxu0 %v5207
            %5325 = vmatprep.subr.bf16.mxu0 0
            %5326 = vmatpush2.bf16.msra.mxu0 %v5206
            %5327 = vmatprep.mubr.bf16.mxu0 %v4983
            %5328 = vmatmul.mubr.bf16.gmra.mxu0 %v4982
            %v5329 = vpop.f32.mrf.mxu0
            %v5330 = vadd.f32 0.0, %v5329
            %v5331 = vpop.f32.mrf.mxu0
            %v5332 = vpop.f32.mrf.mxu0
            %v5333 = vadd.f32 0.0, %v5332
            %v5334 = vpop.f32.mrf.mxu0
            %5335 = vmatprep.mubr.bf16.mxu0 %v4988
            %5336 = vmatmul.mubr.bf16.gmra.mxu0 %v4987
            %v5337 = vpop.f32.mrf.mxu0
            %v5338 = vadd.f32 0.0, %v5337
            %v5339 = vpop.f32.mrf.mxu0
            %v5340 = vpop.f32.mrf.mxu0
            %v5341 = vadd.f32 0.0, %v5340
            %v5342 = vpop.f32.mrf.mxu0
            %5343 = vmatprep.mubr.bf16.mxu0 %v4993
            %5344 = vmatmul.mubr.bf16.gmra.mxu0 %v4992
            %v5345 = vpop.f32.mrf.mxu0
            %v5346 = vadd.f32 0.0, %v5345
            %v5347 = vpop.f32.mrf.mxu0
            %v5348 = vpop.f32.mrf.mxu0
            %v5349 = vadd.f32 0.0, %v5348
            %v5350 = vpop.f32.mrf.mxu0
            %5351 = vmatprep.mubr.bf16.mxu0 %v4998
            %5352 = vmatmul.mubr.bf16.gmra.mxu0 %v4997
            %v5353 = vpop.f32.mrf.mxu0
            %v5354 = vadd.f32 0.0, %v5353
            %v5355 = vpop.f32.mrf.mxu0
            %v5356 = vpop.f32.mrf.mxu0
            %v5357 = vadd.f32 0.0, %v5356
            %v5358 = vpop.f32.mrf.mxu0
            %5359 = vmatprep.mubr.bf16.mxu0 %v5003
            %5360 = vmatmul.mubr.bf16.gmra.mxu0 %v5002
            %v5361 = vpop.f32.mrf.mxu0
            %v5362 = vadd.f32 0.0, %v5361
            %v5363 = vpop.f32.mrf.mxu0
            %v5364 = vpop.f32.mrf.mxu0
            %v5365 = vadd.f32 0.0, %v5364
            %v5366 = vpop.f32.mrf.mxu0
            %5367 = vmatprep.mubr.bf16.mxu0 %v5008
            %5368 = vmatmul.mubr.bf16.gmra.mxu0 %v5007
            %v5369 = vpop.f32.mrf.mxu0
            %v5370 = vadd.f32 0.0, %v5369
            %v5371 = vpop.f32.mrf.mxu0
            %v5372 = vpop.f32.mrf.mxu0
            %v5373 = vadd.f32 0.0, %v5372
            %v5374 = vpop.f32.mrf.mxu0
            %5375 = vmatprep.mubr.bf16.mxu0 %v5013
            %5376 = vmatmul.mubr.bf16.gmra.mxu0 %v5012
            %v5377 = vpop.f32.mrf.mxu0
            %v5378 = vadd.f32 0.0, %v5377
            %v5379 = vpop.f32.mrf.mxu0
            %v5380 = vpop.f32.mrf.mxu0
            %v5381 = vadd.f32 0.0, %v5380
            %v5382 = vpop.f32.mrf.mxu0
            %5383 = vmatprep.mubr.bf16.mxu0 %v5018
            %5384 = vmatmul.mubr.bf16.gmra.mxu0 %v5017
            %v5385 = vpop.f32.mrf.mxu0
            %v5386 = vadd.f32 0.0, %v5385
            %v5387 = vpop.f32.mrf.mxu0
            %v5388 = vpop.f32.mrf.mxu0
            %v5389 = vadd.f32 0.0, %v5388
            %v5390 = vpop.f32.mrf.mxu0
            %5391 = vdwg.mxu0
            %5392 = vmatprep.subr.bf16.mxu0 0
            %5393 = vmatpush1.bf16.msra.mxu0 %v5221
            %5394 = vmatprep.subr.bf16.mxu0 0
            %5395 = vmatpush1.bf16.msra.mxu0 %v5220
            %5396 = vmatprep.subr.bf16.mxu0 0
            %5397 = vmatpush1.bf16.msra.mxu0 %v5219
            %5398 = vmatprep.subr.bf16.mxu0 0
            %5399 = vmatpush1.bf16.msra.mxu0 %v5218
            %5400 = vmatprep.subr.bf16.mxu0 0
            %5401 = vmatpush1.bf16.msra.mxu0 %v5217
            %5402 = vmatprep.subr.bf16.mxu0 0
            %5403 = vmatpush1.bf16.msra.mxu0 %v5216
            %5404 = vmatprep.subr.bf16.mxu0 0
            %5405 = vmatpush1.bf16.msra.mxu0 %v5215
            %5406 = vmatprep.subr.bf16.mxu0 0
            %5407 = vmatpush1.bf16.msra.mxu0 %v5214
            %5408 = vmatprep.subr.bf16.mxu0 0
            %5409 = vmatpush2.bf16.msra.mxu0 %v5229
            %5410 = vmatprep.subr.bf16.mxu0 0
            %5411 = vmatpush2.bf16.msra.mxu0 %v5228
            %5412 = vmatprep.subr.bf16.mxu0 0
            %5413 = vmatpush2.bf16.msra.mxu0 %v5227
            %5414 = vmatprep.subr.bf16.mxu0 0
            %5415 = vmatpush2.bf16.msra.mxu0 %v5226
            %5416 = vmatprep.subr.bf16.mxu0 0
            %5417 = vmatpush2.bf16.msra.mxu0 %v5225
            %5418 = vmatprep.subr.bf16.mxu0 0
            %5419 = vmatpush2.bf16.msra.mxu0 %v5224
            %5420 = vmatprep.subr.bf16.mxu0 0
            %5421 = vmatpush2.bf16.msra.mxu0 %v5223
            %5422 = vmatprep.subr.bf16.mxu0 0
            %5423 = vmatpush2.bf16.msra.mxu0 %v5222
            %5424 = vmatprep.mubr.bf16.mxu0 %v4985
            %5425 = vmatmul.mubr.bf16.gmra.mxu0 %v4984
            %v5426 = vpop.f32.mrf.mxu0
            %v5427 = vadd.f32 %v5330, %v5426
            %v5428 = vpop.f32.mrf.mxu0
            %v5429 = vpop.f32.mrf.mxu0
            %v5430 = vadd.f32 %v5333, %v5429
            %v5431 = vpop.f32.mrf.mxu0
            %5432 = vmatprep.mubr.bf16.mxu0 %v4990
            %5433 = vmatmul.mubr.bf16.gmra.mxu0 %v4989
            %v5434 = vpop.f32.mrf.mxu0
            %v5435 = vadd.f32 %v5338, %v5434
            %v5436 = vpop.f32.mrf.mxu0
            %v5437 = vpop.f32.mrf.mxu0
            %v5438 = vadd.f32 %v5341, %v5437
            %v5439 = vpop.f32.mrf.mxu0
            %5440 = vmatprep.mubr.bf16.mxu0 %v4995
            %5441 = vmatmul.mubr.bf16.gmra.mxu0 %v4994
            %v5442 = vpop.f32.mrf.mxu0
            %v5443 = vadd.f32 %v5346, %v5442
            %v5444 = vpop.f32.mrf.mxu0
            %v5445 = vpop.f32.mrf.mxu0
            %v5446 = vadd.f32 %v5349, %v5445
            %v5447 = vpop.f32.mrf.mxu0
            %5448 = vmatprep.mubr.bf16.mxu0 %v5000
            %5449 = vmatmul.mubr.bf16.gmra.mxu0 %v4999
            %v5450 = vpop.f32.mrf.mxu0
            %v5451 = vadd.f32 %v5354, %v5450
            %v5452 = vpop.f32.mrf.mxu0
            %v5453 = vpop.f32.mrf.mxu0
            %v5454 = vadd.f32 %v5357, %v5453
            %v5455 = vpop.f32.mrf.mxu0
            %5456 = vmatprep.mubr.bf16.mxu0 %v5005
            %5457 = vmatmul.mubr.bf16.gmra.mxu0 %v5004
            %v5458 = vpop.f32.mrf.mxu0
            %v5459 = vadd.f32 %v5362, %v5458
            %v5460 = vpop.f32.mrf.mxu0
            %v5461 = vpop.f32.mrf.mxu0
            %v5462 = vadd.f32 %v5365, %v5461
            %v5463 = vpop.f32.mrf.mxu0
            %5464 = vmatprep.mubr.bf16.mxu0 %v5010
            %5465 = vmatmul.mubr.bf16.gmra.mxu0 %v5009
            %v5466 = vpop.f32.mrf.mxu0
            %v5467 = vadd.f32 %v5370, %v5466
            %v5468 = vpop.f32.mrf.mxu0
            %v5469 = vpop.f32.mrf.mxu0
            %v5470 = vadd.f32 %v5373, %v5469
            %v5471 = vpop.f32.mrf.mxu0
            %5472 = vmatprep.mubr.bf16.mxu0 %v5015
            %5473 = vmatmul.mubr.bf16.gmra.mxu0 %v5014
            %v5474 = vpop.f32.mrf.mxu0
            %v5475 = vadd.f32 %v5378, %v5474
            %v5476 = vpop.f32.mrf.mxu0
            %v5477 = vpop.f32.mrf.mxu0
            %v5478 = vadd.f32 %v5381, %v5477
            %v5479 = vpop.f32.mrf.mxu0
            %5480 = vmatprep.mubr.bf16.mxu0 %v5020
            %5481 = vmatmul.mubr.bf16.gmra.mxu0 %v5019
            %v5482 = vpop.f32.mrf.mxu0
            %v5483 = vadd.f32 %v5386, %v5482
            %v5484 = vpop.f32.mrf.mxu0
            %v5485 = vpop.f32.mrf.mxu0
            %v5486 = vadd.f32 %v5389, %v5485
            %v5487 = vpop.f32.mrf.mxu0
            %5488 = vdwg.mxu0
            %5489 = vmatprep.subr.bf16.mxu0 0
            %5490 = vmatpush1.bf16.msra.mxu0 0
            %5491 = vmatprep.subr.bf16.mxu0 0
            %5492 = vmatpush1.bf16.msra.mxu0 0
            %5493 = vmatprep.subr.bf16.mxu0 0
            %5494 = vmatpush1.bf16.msra.mxu0 0
            %5495 = vmatprep.subr.bf16.mxu0 0
            %5496 = vmatpush1.bf16.msra.mxu0 0
            %5497 = vmatprep.subr.bf16.mxu0 0
            %5498 = vmatpush1.bf16.msra.mxu0 %v5233
            %5499 = vmatprep.subr.bf16.mxu0 0
            %5500 = vmatpush1.bf16.msra.mxu0 %v5232
            %5501 = vmatprep.subr.bf16.mxu0 0
            %5502 = vmatpush1.bf16.msra.mxu0 %v5231
            %5503 = vmatprep.subr.bf16.mxu0 0
            %5504 = vmatpush1.bf16.msra.mxu0 %v5230
            %5505 = vmatprep.subr.bf16.mxu0 0
            %5506 = vmatpush2.bf16.msra.mxu0 0
            %5507 = vmatprep.subr.bf16.mxu0 0
            %5508 = vmatpush2.bf16.msra.mxu0 0
            %5509 = vmatprep.subr.bf16.mxu0 0
            %5510 = vmatpush2.bf16.msra.mxu0 0
            %5511 = vmatprep.subr.bf16.mxu0 0
            %5512 = vmatpush2.bf16.msra.mxu0 0
            %5513 = vmatprep.subr.bf16.mxu0 0
            %5514 = vmatpush2.bf16.msra.mxu0 0
            %5515 = vmatprep.subr.bf16.mxu0 0
            %5516 = vmatpush2.bf16.msra.mxu0 0
            %5517 = vmatprep.subr.bf16.mxu0 0
            %5518 = vmatpush2.bf16.msra.mxu0 0
            %5519 = vmatprep.subr.bf16.mxu0 0
            %5520 = vmatpush2.bf16.msra.mxu0 0
            %5521 = vmatprep.mubr.bf16.mxu0 0
            %5522 = vmatmul.mubr.bf16.gmra.mxu0 %v5272
            %v5523 = vpop.f32.mrf.mxu0
            %v5524 = vadd.f32 %v5427, %v5523
            %v5525 = vpop.f32.mrf.mxu0
            %v5526 = vpop.f32.mrf.mxu0
            %v5527 = vadd.f32 %v5430, %v5526
            %v5528 = vpop.f32.mrf.mxu0
            %5529 = vmatprep.mubr.bf16.mxu0 0
            %5530 = vmatmul.mubr.bf16.gmra.mxu0 %v5275
            %v5531 = vpop.f32.mrf.mxu0
            %v5532 = vadd.f32 %v5435, %v5531
            %v5533 = vpop.f32.mrf.mxu0
            %v5534 = vpop.f32.mrf.mxu0
            %v5535 = vadd.f32 %v5438, %v5534
            %v5536 = vpop.f32.mrf.mxu0
            %5537 = vmatprep.mubr.bf16.mxu0 0
            %5538 = vmatmul.mubr.bf16.gmra.mxu0 %v5278
            %v5539 = vpop.f32.mrf.mxu0
            %v5540 = vadd.f32 %v5443, %v5539
            %v5541 = vpop.f32.mrf.mxu0
            %v5542 = vpop.f32.mrf.mxu0
            %v5543 = vadd.f32 %v5446, %v5542
            %v5544 = vpop.f32.mrf.mxu0
            %5545 = vmatprep.mubr.bf16.mxu0 0
            %5546 = vmatmul.mubr.bf16.gmra.mxu0 %v5281
            %v5547 = vpop.f32.mrf.mxu0
            %v5548 = vadd.f32 %v5451, %v5547
            %v5549 = vpop.f32.mrf.mxu0
            %v5550 = vpop.f32.mrf.mxu0
            %v5551 = vadd.f32 %v5454, %v5550
            %v5552 = vpop.f32.mrf.mxu0
            %5553 = vmatprep.mubr.bf16.mxu0 0
            %5554 = vmatmul.mubr.bf16.gmra.mxu0 %v5284
            %v5555 = vpop.f32.mrf.mxu0
            %v5556 = vadd.f32 %v5459, %v5555
            %v5557 = vpop.f32.mrf.mxu0
            %v5558 = vpop.f32.mrf.mxu0
            %v5559 = vadd.f32 %v5462, %v5558
            %v5560 = vpop.f32.mrf.mxu0
            %5561 = vmatprep.mubr.bf16.mxu0 0
            %5562 = vmatmul.mubr.bf16.gmra.mxu0 %v5287
            %v5563 = vpop.f32.mrf.mxu0
            %v5564 = vadd.f32 %v5467, %v5563
            %v5565 = vpop.f32.mrf.mxu0
            %v5566 = vpop.f32.mrf.mxu0
            %v5567 = vadd.f32 %v5470, %v5566
            %v5568 = vpop.f32.mrf.mxu0
            %5569 = vmatprep.mubr.bf16.mxu0 0
            %5570 = vmatmul.mubr.bf16.gmra.mxu0 %v5290
            %v5571 = vpop.f32.mrf.mxu0
            %v5572 = vadd.f32 %v5475, %v5571
            %v5573 = vpop.f32.mrf.mxu0
            %v5574 = vpop.f32.mrf.mxu0
            %v5575 = vadd.f32 %v5478, %v5574
            %v5576 = vpop.f32.mrf.mxu0
            %5577 = vmatprep.mubr.bf16.mxu0 0
            %5578 = vmatmul.mubr.bf16.gmra.mxu0 %v5293
            %v5579 = vpop.f32.mrf.mxu0
            %v5580 = vadd.f32 %v5483, %v5579
            %v5581 = vpop.f32.mrf.mxu0
            %v5582 = vpop.f32.mrf.mxu0
            %v5583 = vadd.f32 %v5486, %v5582
            %v5584 = vpop.f32.mrf.mxu0
            %5585 = vdwg.mxu0
            %v5586 = vmax.f32 %v5524, 0.0
            %v5587 = vmax.f32 %v5527, 0.0
            %v5588 = vmax.f32 %v5532, 0.0
            %v5589 = vmax.f32 %v5535, 0.0
            %v5590 = vmax.f32 %v5540, 0.0
            %v5591 = vmax.f32 %v5543, 0.0
            %v5592 = vmax.f32 %v5548, 0.0
            %v5593 = vmax.f32 %v5551, 0.0
            %v5594 = vmax.f32 %v5556, 0.0
            %v5595 = vmax.f32 %v5559, 0.0
            %v5596 = vmax.f32 %v5564, 0.0
            %v5597 = vmax.f32 %v5567, 0.0
            %v5598 = vmax.f32 %v5572, 0.0
            %v5599 = vmax.f32 %v5575, 0.0
            %v5600 = vmax.f32 %v5580, 0.0
            %v5601 = vmax.f32 %v5583, 0.0
            %v5602 = vpack.c.bf16 %v5587, %v5586
            %v5603 = vpack.c.bf16 %v5589, %v5588
            %v5604 = vpack.c.bf16 %v5591, %v5590
            %v5605 = vpack.c.bf16 %v5593, %v5592
            %v5606 = vpack.c.bf16 %v5595, %v5594
            %v5607 = vpack.c.bf16 %v5597, %v5596
            %v5608 = vpack.c.bf16 %v5599, %v5598
            %v5609 = vpack.c.bf16 %v5601, %v5600
            %s5610 = sadd.s32 %s3244, 8
            %s5611 = smul.u32 %s5610, 3
            %s5612 = smul.addr %s5611, 4
            %s5613 = scalar_lea.vmem [#allocation2], %s5612
            %v5614 = vld [vmem:[%s5613] sm:$0xf]
            %v5615 = vld [vmem:[%s5613 + $0x4] sm:$0xf]
            %v5616 = vld [vmem:[%s5613 + $0x8] sm:$0x1]
            %5617 = vst.msk [vmem:[#allocation4] sm:$0xf] %vm287, %v5614
            %5618 = vst.msk [vmem:[#allocation4 + $0x4] sm:$0xf] %vm287, %v5615
            %5619 = vst.msk [vmem:[#allocation4 + $0x8] sm:$0x1] %vm290, %v5616
            %v5628 = vunpack.c.l.b16 %v5602
            %v5629 = vunpack.c.h.b16 %v5602
            %v5630 = vunpack.c.l.b16 %v5603
            %v5631 = vunpack.c.h.b16 %v5603
            %v5632 = vunpack.c.l.b16 %v5604
            %v5633 = vunpack.c.h.b16 %v5604
            %v5634 = vunpack.c.l.b16 %v5605
            %v5635 = vunpack.c.h.b16 %v5605
            %v5636 = vunpack.c.l.b16 %v5606
            %v5637 = vunpack.c.h.b16 %v5606
            %v5638 = vunpack.c.l.b16 %v5607
            %v5639 = vunpack.c.h.b16 %v5607
            %v5640 = vunpack.c.l.b16 %v5608
            %v5641 = vunpack.c.h.b16 %v5608
            %v5642 = vunpack.c.l.b16 %v5609
            %v5643 = vunpack.c.h.b16 %v5609
            %v5644 = vpack.c.b16 %v5628, %v5628
            %v5645 = vpack.c.b16 %v5629, %v5629
            %v5646 = vpack.c.b16 %v5630, %v5630
            %v5647 = vpack.c.b16 %v5631, %v5631
            %v5648 = vpack.c.b16 %v5632, %v5632
            %v5649 = vpack.c.b16 %v5633, %v5633
            %v5650 = vpack.c.b16 %v5634, %v5634
            %v5651 = vpack.c.b16 %v5635, %v5635
            %v5652 = vpack.c.b16 %v5636, %v5636
            %v5653 = vpack.c.b16 %v5637, %v5637
            %v5654 = vpack.c.b16 %v5638, %v5638
            %v5655 = vpack.c.b16 %v5639, %v5639
            %v5656 = vpack.c.b16 %v5640, %v5640
            %v5657 = vpack.c.b16 %v5641, %v5641
            %v5658 = vpack.c.b16 %v5642, %v5642
            %v5659 = vpack.c.b16 %v5643, %v5643
            %vm5660 = vsmask.f32 4368
            %vm5661 = vmor %vm297, %vm5660
            %v5663 = vshrl.u32 %v5644, 16
            %v5665 = vrot.slane %v5663, 7
            %v5666 = vshll.u32 %v5644, 16
            %v5668 = vor.u32 %v5665, %v5666
            %v5669 = vrot.slane %v5665, 4
            %v5671 = vshrl.u32 %v5645, 16
            %v5673 = vrot.slane %v5671, 7
            %v5674 = vshll.u32 %v5645, 16
            %v5676 = vor.u32 %v5673, %v5674
            %v5677 = vsel %vm5661, %v5669, %v5676
            %v5678 = vrot.slane %v5673, 4
            %v5680 = vshrl.u32 %v5646, 16
            %v5682 = vrot.slane %v5680, 7
            %v5683 = vshll.u32 %v5646, 16
            %v5685 = vor.u32 %v5682, %v5683
            %v5686 = vrot.slane %v5682, 4
            %v5688 = vshrl.u32 %v5647, 16
            %v5690 = vrot.slane %v5688, 7
            %v5691 = vshll.u32 %v5647, 16
            %v5693 = vor.u32 %v5690, %v5691
            %v5694 = vsel %vm5661, %v5686, %v5693
            %v5695 = vrot.slane %v5690, 4
            %v5697 = vshrl.u32 %v5648, 16
            %v5699 = vrot.slane %v5697, 7
            %v5700 = vshll.u32 %v5648, 16
            %v5702 = vor.u32 %v5699, %v5700
            %v5703 = vrot.slane %v5699, 4
            %v5705 = vshrl.u32 %v5649, 16
            %v5707 = vrot.slane %v5705, 7
            %v5708 = vshll.u32 %v5649, 16
            %v5710 = vor.u32 %v5707, %v5708
            %v5711 = vsel %vm5661, %v5703, %v5710
            %v5712 = vrot.slane %v5707, 4
            %v5714 = vshrl.u32 %v5650, 16
            %v5716 = vrot.slane %v5714, 7
            %v5717 = vshll.u32 %v5650, 16
            %v5719 = vor.u32 %v5716, %v5717
            %v5720 = vrot.slane %v5716, 4
            %v5722 = vshrl.u32 %v5651, 16
            %v5724 = vrot.slane %v5722, 7
            %v5725 = vshll.u32 %v5651, 16
            %v5727 = vor.u32 %v5724, %v5725
            %v5728 = vsel %vm5661, %v5720, %v5727
            %v5729 = vrot.slane %v5724, 4
            %v5731 = vshrl.u32 %v5652, 16
            %v5733 = vrot.slane %v5731, 7
            %v5734 = vshll.u32 %v5652, 16
            %v5736 = vor.u32 %v5733, %v5734
            %v5737 = vrot.slane %v5733, 4
            %v5739 = vshrl.u32 %v5653, 16
            %v5741 = vrot.slane %v5739, 7
            %v5742 = vshll.u32 %v5653, 16
            %v5744 = vor.u32 %v5741, %v5742
            %v5745 = vsel %vm5661, %v5737, %v5744
            %v5746 = vrot.slane %v5741, 4
            %v5748 = vshrl.u32 %v5654, 16
            %v5750 = vrot.slane %v5748, 7
            %v5751 = vshll.u32 %v5654, 16
            %v5753 = vor.u32 %v5750, %v5751
            %v5754 = vrot.slane %v5750, 4
            %v5756 = vshrl.u32 %v5655, 16
            %v5758 = vrot.slane %v5756, 7
            %v5759 = vshll.u32 %v5655, 16
            %v5761 = vor.u32 %v5758, %v5759
            %v5762 = vsel %vm5661, %v5754, %v5761
            %v5763 = vrot.slane %v5758, 4
            %v5765 = vshrl.u32 %v5656, 16
            %v5767 = vrot.slane %v5765, 7
            %v5768 = vshll.u32 %v5656, 16
            %v5770 = vor.u32 %v5767, %v5768
            %v5771 = vrot.slane %v5767, 4
            %v5773 = vshrl.u32 %v5657, 16
            %v5775 = vrot.slane %v5773, 7
            %v5776 = vshll.u32 %v5657, 16
            %v5778 = vor.u32 %v5775, %v5776
            %v5779 = vsel %vm5661, %v5771, %v5778
            %v5780 = vrot.slane %v5775, 4
            %v5782 = vshrl.u32 %v5658, 16
            %v5784 = vrot.slane %v5782, 7
            %v5785 = vshll.u32 %v5658, 16
            %v5787 = vor.u32 %v5784, %v5785
            %v5788 = vrot.slane %v5784, 4
            %v5790 = vshrl.u32 %v5659, 16
            %v5792 = vrot.slane %v5790, 7
            %v5793 = vshll.u32 %v5659, 16
            %v5795 = vor.u32 %v5792, %v5793
            %v5796 = vsel %vm5661, %v5788, %v5795
            %v5797 = vrot.slane %v5792, 4
            %vm5822 = vcmask 519168
            %vm5823 = vmand %vm5822, %vm353
            %v5824 = vld [vmem:[%s3706] sm:$0xf]
            %v5825 = vsel %vm5823, %v5668, %v5824
            %5826 = vst [vmem:[%s3706] sm:$0xf] %v5825
            %5827 = vst.msk [vmem:[%s3706 + $0x4] sm:$0xf] %vm287, %v5677
            %v5828 = vld [vmem:[%s3706 + $0x8] sm:$0x1]
            %v5829 = vsel %vm298, %v5678, %v5828
            %5830 = vst [vmem:[%s3706 + $0x8] sm:$0x1] %v5829
            %v5831 = vld [vmem:[%s3706 + $0xc] sm:$0xf]
            %v5832 = vsel %vm5823, %v5685, %v5831
            %5833 = vst [vmem:[%s3706 + $0xc] sm:$0xf] %v5832
            %5834 = vst.msk [vmem:[%s3706 + $0x10] sm:$0xf] %vm287, %v5694
            %v5835 = vld [vmem:[%s3706 + $0x14] sm:$0x1]
            %v5836 = vsel %vm298, %v5695, %v5835
            %5837 = vst [vmem:[%s3706 + $0x14] sm:$0x1] %v5836
            %v5838 = vld [vmem:[%s3706 + $0x18] sm:$0xf]
            %v5839 = vsel %vm5823, %v5702, %v5838
            %5840 = vst [vmem:[%s3706 + $0x18] sm:$0xf] %v5839
            %5841 = vst.msk [vmem:[%s3706 + $0x1c] sm:$0xf] %vm287, %v5711
            %v5842 = vld [vmem:[%s3706 + $0x20] sm:$0x1]
            %v5843 = vsel %vm298, %v5712, %v5842
            %5844 = vst [vmem:[%s3706 + $0x20] sm:$0x1] %v5843
            %v5845 = vld [vmem:[%s3706 + $0x24] sm:$0xf]
            %v5846 = vsel %vm5823, %v5719, %v5845
            %5847 = vst [vmem:[%s3706 + $0x24] sm:$0xf] %v5846
            %5848 = vst.msk [vmem:[%s3706 + $0x28] sm:$0xf] %vm287, %v5728
            %v5849 = vld [vmem:[%s3706 + $0x2c] sm:$0x1]
            %v5850 = vsel %vm298, %v5729, %v5849
            %5851 = vst [vmem:[%s3706 + $0x2c] sm:$0x1] %v5850
            %v5852 = vld [vmem:[%s3706 + $0x30] sm:$0xf]
            %v5853 = vsel %vm5823, %v5736, %v5852
            %5854 = vst [vmem:[%s3706 + $0x30] sm:$0xf] %v5853
            %5855 = vst.msk [vmem:[%s3706 + $0x34] sm:$0xf] %vm287, %v5745
            %v5856 = vld [vmem:[%s3706 + $0x38] sm:$0x1]
            %v5857 = vsel %vm298, %v5746, %v5856
            %5858 = vst [vmem:[%s3706 + $0x38] sm:$0x1] %v5857
            %v5859 = vld [vmem:[%s3706 + $0x3c] sm:$0xf]
            %v5860 = vsel %vm5823, %v5753, %v5859
            %5861 = vst [vmem:[%s3706 + $0x3c] sm:$0xf] %v5860
            %5862 = vst.msk [vmem:[%s3706 + $0x40] sm:$0xf] %vm287, %v5762
            %v5863 = vld [vmem:[%s3706 + $0x44] sm:$0x1]
            %v5864 = vsel %vm298, %v5763, %v5863
            %5865 = vst [vmem:[%s3706 + $0x44] sm:$0x1] %v5864
            %v5866 = vld [vmem:[%s3706 + $0x48] sm:$0xf]
            %v5867 = vsel %vm5823, %v5770, %v5866
            %5868 = vst [vmem:[%s3706 + $0x48] sm:$0xf] %v5867
            %5869 = vst.msk [vmem:[%s3706 + $0x4c] sm:$0xf] %vm287, %v5779
            %v5870 = vld [vmem:[%s3706 + $0x50] sm:$0x1]
            %v5871 = vsel %vm298, %v5780, %v5870
            %5872 = vst [vmem:[%s3706 + $0x50] sm:$0x1] %v5871
            %v5873 = vld [vmem:[%s3706 + $0x54] sm:$0xf]
            %v5874 = vsel %vm5823, %v5787, %v5873
            %5875 = vst [vmem:[%s3706 + $0x54] sm:$0xf] %v5874
            %5876 = vst.msk [vmem:[%s3706 + $0x58] sm:$0xf] %vm287, %v5796
            %v5877 = vld [vmem:[%s3706 + $0x5c] sm:$0x1]
            %v5878 = vsel %vm298, %v5797, %v5877
            %5879 = vst [vmem:[%s3706 + $0x5c] sm:$0x1] %v5878
          $region78: #{vdsr_dem_forward.1} parent=70 // loop_footer
            %s3243 = sadd.s32 1, %s3239
          $region79: #{vdsr_dem_forward.1} parent=70 // loop_footer_branch
            %3238 = sbr.rel target = $region75
          $region80: #{vdsr_dem_forward.1} parent=70 // loop_exit
            _
        $region71: #{vdsr_dem_forward.1} parent=43 // loop_footer
          %s3237 = sadd.s32 1, %s3233
        $region72: #{vdsr_dem_forward.1} parent=43 // loop_footer_branch
          %3232 = sbr.rel target = $region68
        $region73: #{vdsr_dem_forward.1} parent=43 // loop_exit
          _
        loop: start=0, step=1, limit=2
        $region85: #{vdsr_dem_forward.1} parent=43 // loop_pre_header
          _
        $region86: #{vdsr_dem_forward.1} parent=43 // loop_header
          %s5881 = sphi 0, %s5885
          %p5882 = scmp.ge.s32.totalorder %s5881, 2
        $region87: #{vdsr_dem_forward.1} parent=43 // loop_header_branch
          %5884 = sbr.rel (%p5882) target = $region91
        $region88: #{vdsr_dem_forward.1} parent=43 // loop_body
          %s5886 = smul.u32 %s5881, 8
          %s5887 = smul.u32 %s5886, 3
          %s5888 = smul.addr %s5887, 4
          %s5889 = scalar_lea.vmem [#allocation2], %s5888
          %v5890 = vld [vmem:[%s5889] sm:$0xf]
          %v5891 = vld [vmem:[%s5889 + $0x4] sm:$0xf]
          %v5892 = vld [vmem:[%s5889 + $0xc] sm:$0xf]
          %v5893 = vld [vmem:[%s5889 + $0x10] sm:$0xf]
          %v5894 = vld [vmem:[%s5889 + $0x18] sm:$0xf]
          %v5895 = vld [vmem:[%s5889 + $0x1c] sm:$0xf]
          %v5896 = vld [vmem:[%s5889 + $0x24] sm:$0xf]
          %v5897 = vld [vmem:[%s5889 + $0x28] sm:$0xf]
          %v5898 = vld [vmem:[%s5889 + $0x30] sm:$0xf]
          %v5899 = vld [vmem:[%s5889 + $0x34] sm:$0xf]
          %v5900 = vld [vmem:[%s5889 + $0x3c] sm:$0xf]
          %v5901 = vld [vmem:[%s5889 + $0x40] sm:$0xf]
          %v5902 = vld [vmem:[%s5889 + $0x48] sm:$0xf]
          %v5903 = vld [vmem:[%s5889 + $0x4c] sm:$0xf]
          %v5904 = vld [vmem:[%s5889 + $0x54] sm:$0xf]
          %v5905 = vld [vmem:[%s5889 + $0x58] sm:$0xf]
          %v5906 = vunpack.c.l.bf16 %v5890
          %v5907 = vunpack.c.l.bf16 %v5891
          %v5908 = vunpack.c.l.bf16 %v5892
          %v5909 = vunpack.c.l.bf16 %v5893
          %v5910 = vunpack.c.l.bf16 %v5894
          %v5911 = vunpack.c.l.bf16 %v5895
          %v5912 = vunpack.c.l.bf16 %v5896
          %v5913 = vunpack.c.l.bf16 %v5897
          %v5914 = vunpack.c.l.bf16 %v5898
          %v5915 = vunpack.c.l.bf16 %v5899
          %v5916 = vunpack.c.l.bf16 %v5900
          %v5917 = vunpack.c.l.bf16 %v5901
          %v5918 = vunpack.c.l.bf16 %v5902
          %v5919 = vunpack.c.l.bf16 %v5903
          %v5920 = vunpack.c.l.bf16 %v5904
          %v5921 = vunpack.c.l.bf16 %v5905
          %v5922 = vld [vmem:[%s5] sm:$0x1]
          %v5923 = vlaneseq
          %v5924 = vshrl.u32 %v5923, 7
          %v5925 = vsub.s32 0, %v5924
          %v5926 = vrot.slane %v5922, %v5925
          %v5927 = vmul.f32 %v5906, %v5926
          %v5928 = vmul.f32 %v5907, %v5926
          %v5929 = vmul.f32 %v5908, %v5926
          %v5930 = vmul.f32 %v5909, %v5926
          %v5931 = vmul.f32 %v5910, %v5926
          %v5932 = vmul.f32 %v5911, %v5926
          %v5933 = vmul.f32 %v5912, %v5926
          %v5934 = vmul.f32 %v5913, %v5926
          %v5935 = vmul.f32 %v5914, %v5926
          %v5936 = vmul.f32 %v5915, %v5926
          %v5937 = vmul.f32 %v5916, %v5926
          %v5938 = vmul.f32 %v5917, %v5926
          %v5939 = vmul.f32 %v5918, %v5926
          %v5940 = vmul.f32 %v5919, %v5926
          %v5941 = vmul.f32 %v5920, %v5926
          %v5942 = vmul.f32 %v5921, %v5926
          %v5943 = vadd.f32 %v5927, 0.0
          %v5944 = vadd.f32 %v5928, 0.0
          %v5945 = vadd.f32 %v5929, 0.0
          %v5946 = vadd.f32 %v5930, 0.0
          %v5947 = vadd.f32 %v5931, 0.0
          %v5948 = vadd.f32 %v5932, 0.0
          %v5949 = vadd.f32 %v5933, 0.0
          %v5950 = vadd.f32 %v5934, 0.0
          %v5951 = vadd.f32 %v5935, 0.0
          %v5952 = vadd.f32 %v5936, 0.0
          %v5953 = vadd.f32 %v5937, 0.0
          %v5954 = vadd.f32 %v5938, 0.0
          %v5955 = vadd.f32 %v5939, 0.0
          %v5956 = vadd.f32 %v5940, 0.0
          %v5957 = vadd.f32 %v5941, 0.0
          %v5958 = vadd.f32 %v5942, 0.0
          %v5959 = vld [vmem:[%s5889 + $0x8] sm:$0x1]
          %v5960 = vld [vmem:[%s5889 + $0x14] sm:$0x1]
          %v5961 = vld [vmem:[%s5889 + $0x20] sm:$0x1]
          %v5962 = vld [vmem:[%s5889 + $0x2c] sm:$0x1]
          %v5963 = vld [vmem:[%s5889 + $0x38] sm:$0x1]
          %v5964 = vld [vmem:[%s5889 + $0x44] sm:$0x1]
          %v5965 = vld [vmem:[%s5889 + $0x50] sm:$0x1]
          %v5966 = vld [vmem:[%s5889 + $0x5c] sm:$0x1]
          %v5967 = vunpack.c.l.bf16 %v5959
          %v5968 = vunpack.c.l.bf16 %v5960
          %v5969 = vunpack.c.l.bf16 %v5961
          %v5970 = vunpack.c.l.bf16 %v5962
          %v5971 = vunpack.c.l.bf16 %v5963
          %v5972 = vunpack.c.l.bf16 %v5964
          %v5973 = vunpack.c.l.bf16 %v5965
          %v5974 = vunpack.c.l.bf16 %v5966
          %v5975 = vld [vmem:[%s5 + $0x1] sm:$0x1]
          %v5976 = vlaneseq
          %v5977 = vshrl.u32 %v5976, 7
          %v5978 = vsub.s32 0, %v5977
          %v5979 = vrot.slane %v5975, %v5978
          %v5980 = vmul.f32 %v5906, %v5979
          %v5981 = vmul.f32 %v5907, %v5979
          %v5982 = vmul.f32 %v5967, %v5979
          %v5983 = vmul.f32 %v5908, %v5979
          %v5984 = vmul.f32 %v5909, %v5979
          %v5985 = vmul.f32 %v5968, %v5979
          %v5986 = vmul.f32 %v5910, %v5979
          %v5987 = vmul.f32 %v5911, %v5979
          %v5988 = vmul.f32 %v5969, %v5979
          %v5989 = vmul.f32 %v5912, %v5979
          %v5990 = vmul.f32 %v5913, %v5979
          %v5991 = vmul.f32 %v5970, %v5979
          %v5992 = vmul.f32 %v5914, %v5979
          %v5993 = vmul.f32 %v5915, %v5979
          %v5994 = vmul.f32 %v5971, %v5979
          %v5995 = vmul.f32 %v5916, %v5979
          %v5996 = vmul.f32 %v5917, %v5979
          %v5997 = vmul.f32 %v5972, %v5979
          %v5998 = vmul.f32 %v5918, %v5979
          %v5999 = vmul.f32 %v5919, %v5979
          %v6000 = vmul.f32 %v5973, %v5979
          %v6001 = vmul.f32 %v5920, %v5979
          %v6002 = vmul.f32 %v5921, %v5979
          %v6003 = vmul.f32 %v5974, %v5979
          %vm6028 = vcmask 1046528
          %v6029 = vrot.slane %v5980, 1
          %v6030 = vrot.slane %v5981, 1
          %v6031 = vsel %vm6028, %v6029, %v6030
          %v6032 = vrot.slane %v5982, 1
          %v6033 = vsel %vm6028, %v6030, %v6032
          %v6034 = vrot.slane %v5983, 1
          %v6035 = vrot.slane %v5984, 1
          %v6036 = vsel %vm6028, %v6034, %v6035
          %v6037 = vrot.slane %v5985, 1
          %v6038 = vsel %vm6028, %v6035, %v6037
          %v6039 = vrot.slane %v5986, 1
          %v6040 = vrot.slane %v5987, 1
          %v6041 = vsel %vm6028, %v6039, %v6040
          %v6042 = vrot.slane %v5988, 1
          %v6043 = vsel %vm6028, %v6040, %v6042
          %v6044 = vrot.slane %v5989, 1
          %v6045 = vrot.slane %v5990, 1
          %v6046 = vsel %vm6028, %v6044, %v6045
          %v6047 = vrot.slane %v5991, 1
          %v6048 = vsel %vm6028, %v6045, %v6047
          %v6049 = vrot.slane %v5992, 1
          %v6050 = vrot.slane %v5993, 1
          %v6051 = vsel %vm6028, %v6049, %v6050
          %v6052 = vrot.slane %v5994, 1
          %v6053 = vsel %vm6028, %v6050, %v6052
          %v6054 = vrot.slane %v5995, 1
          %v6055 = vrot.slane %v5996, 1
          %v6056 = vsel %vm6028, %v6054, %v6055
          %v6057 = vrot.slane %v5997, 1
          %v6058 = vsel %vm6028, %v6055, %v6057
          %v6059 = vrot.slane %v5998, 1
          %v6060 = vrot.slane %v5999, 1
          %v6061 = vsel %vm6028, %v6059, %v6060
          %v6062 = vrot.slane %v6000, 1
          %v6063 = vsel %vm6028, %v6060, %v6062
          %v6064 = vrot.slane %v6001, 1
          %v6065 = vrot.slane %v6002, 1
          %v6066 = vsel %vm6028, %v6064, %v6065
          %v6067 = vrot.slane %v6003, 1
          %v6068 = vsel %vm6028, %v6065, %v6067
          %v6085 = vadd.f32 %v5943, %v6031
          %v6086 = vadd.f32 %v5944, %v6033
          %v6087 = vadd.f32 %v5945, %v6036
          %v6088 = vadd.f32 %v5946, %v6038
          %v6089 = vadd.f32 %v5947, %v6041
          %v6090 = vadd.f32 %v5948, %v6043
          %v6091 = vadd.f32 %v5949, %v6046
          %v6092 = vadd.f32 %v5950, %v6048
          %v6093 = vadd.f32 %v5951, %v6051
          %v6094 = vadd.f32 %v5952, %v6053
          %v6095 = vadd.f32 %v5953, %v6056
          %v6096 = vadd.f32 %v5954, %v6058
          %v6097 = vadd.f32 %v5955, %v6061
          %v6098 = vadd.f32 %v5956, %v6063
          %v6099 = vadd.f32 %v5957, %v6066
          %v6100 = vadd.f32 %v5958, %v6068
          %v6101 = vld [vmem:[%s5889] sm:$0xe]
          %v6102 = vld [vmem:[%s5889 + $0xc] sm:$0xe]
          %v6103 = vld [vmem:[%s5889 + $0x18] sm:$0xe]
          %v6104 = vld [vmem:[%s5889 + $0x24] sm:$0xe]
          %v6105 = vld [vmem:[%s5889 + $0x30] sm:$0xe]
          %v6106 = vld [vmem:[%s5889 + $0x3c] sm:$0xe]
          %v6107 = vld [vmem:[%s5889 + $0x48] sm:$0xe]
          %v6108 = vld [vmem:[%s5889 + $0x54] sm:$0xe]
          %v6109 = vunpack.c.l.bf16 %v6101
          %v6110 = vunpack.c.l.bf16 %v6102
          %v6111 = vunpack.c.l.bf16 %v6103
          %v6112 = vunpack.c.l.bf16 %v6104
          %v6113 = vunpack.c.l.bf16 %v6105
          %v6114 = vunpack.c.l.bf16 %v6106
          %v6115 = vunpack.c.l.bf16 %v6107
          %v6116 = vunpack.c.l.bf16 %v6108
          %v6117 = vld [vmem:[%s5 + $0x2] sm:$0x1]
          %v6118 = vlaneseq
          %v6119 = vshrl.u32 %v6118, 7
          %v6120 = vsub.s32 0, %v6119
          %v6121 = vrot.slane %v6117, %v6120
          %v6122 = vmul.f32 %v6109, %v6121
          %v6123 = vmul.f32 %v5907, %v6121
          %v6124 = vmul.f32 %v5967, %v6121
          %v6125 = vmul.f32 %v6110, %v6121
          %v6126 = vmul.f32 %v5909, %v6121
          %v6127 = vmul.f32 %v5968, %v6121
          %v6128 = vmul.f32 %v6111, %v6121
          %v6129 = vmul.f32 %v5911, %v6121
          %v6130 = vmul.f32 %v5969, %v6121
          %v6131 = vmul.f32 %v6112, %v6121
          %v6132 = vmul.f32 %v5913, %v6121
          %v6133 = vmul.f32 %v5970, %v6121
          %v6134 = vmul.f32 %v6113, %v6121
          %v6135 = vmul.f32 %v5915, %v6121
          %v6136 = vmul.f32 %v5971, %v6121
          %v6137 = vmul.f32 %v6114, %v6121
          %v6138 = vmul.f32 %v5917, %v6121
          %v6139 = vmul.f32 %v5972, %v6121
          %v6140 = vmul.f32 %v6115, %v6121
          %v6141 = vmul.f32 %v5919, %v6121
          %v6142 = vmul.f32 %v5973, %v6121
          %v6143 = vmul.f32 %v6116, %v6121
          %v6144 = vmul.f32 %v5921, %v6121
          %v6145 = vmul.f32 %v5974, %v6121
          %vm6170 = vcmask 1045504
          %v6171 = vrot.slane %v6122, 2
          %v6172 = vrot.slane %v6123, 2
          %v6173 = vsel %vm6170, %v6171, %v6172
          %v6174 = vrot.slane %v6124, 2
          %v6175 = vsel %vm6170, %v6172, %v6174
          %v6176 = vrot.slane %v6125, 2
          %v6177 = vrot.slane %v6126, 2
          %v6178 = vsel %vm6170, %v6176, %v6177
          %v6179 = vrot.slane %v6127, 2
          %v6180 = vsel %vm6170, %v6177, %v6179
          %v6181 = vrot.slane %v6128, 2
          %v6182 = vrot.slane %v6129, 2
          %v6183 = vsel %vm6170, %v6181, %v6182
          %v6184 = vrot.slane %v6130, 2
          %v6185 = vsel %vm6170, %v6182, %v6184
          %v6186 = vrot.slane %v6131, 2
          %v6187 = vrot.slane %v6132, 2
          %v6188 = vsel %vm6170, %v6186, %v6187
          %v6189 = vrot.slane %v6133, 2
          %v6190 = vsel %vm6170, %v6187, %v6189
          %v6191 = vrot.slane %v6134, 2
          %v6192 = vrot.slane %v6135, 2
          %v6193 = vsel %vm6170, %v6191, %v6192
          %v6194 = vrot.slane %v6136, 2
          %v6195 = vsel %vm6170, %v6192, %v6194
          %v6196 = vrot.slane %v6137, 2
          %v6197 = vrot.slane %v6138, 2
          %v6198 = vsel %vm6170, %v6196, %v6197
          %v6199 = vrot.slane %v6139, 2
          %v6200 = vsel %vm6170, %v6197, %v6199
          %v6201 = vrot.slane %v6140, 2
          %v6202 = vrot.slane %v6141, 2
          %v6203 = vsel %vm6170, %v6201, %v6202
          %v6204 = vrot.slane %v6142, 2
          %v6205 = vsel %vm6170, %v6202, %v6204
          %v6206 = vrot.slane %v6143, 2
          %v6207 = vrot.slane %v6144, 2
          %v6208 = vsel %vm6170, %v6206, %v6207
          %v6209 = vrot.slane %v6145, 2
          %v6210 = vsel %vm6170, %v6207, %v6209
          %v6227 = vadd.f32 %v6085, %v6173
          %v6228 = vadd.f32 %v6086, %v6175
          %v6229 = vadd.f32 %v6087, %v6178
          %v6230 = vadd.f32 %v6088, %v6180
          %v6231 = vadd.f32 %v6089, %v6183
          %v6232 = vadd.f32 %v6090, %v6185
          %v6233 = vadd.f32 %v6091, %v6188
          %v6234 = vadd.f32 %v6092, %v6190
          %v6235 = vadd.f32 %v6093, %v6193
          %v6236 = vadd.f32 %v6094, %v6195
          %v6237 = vadd.f32 %v6095, %v6198
          %v6238 = vadd.f32 %v6096, %v6200
          %v6239 = vadd.f32 %v6097, %v6203
          %v6240 = vadd.f32 %v6098, %v6205
          %v6241 = vadd.f32 %v6099, %v6208
          %v6242 = vadd.f32 %v6100, %v6210
          %s6243 = sadd.s32 %s5886, 1
          %s6244 = smul.u32 %s6243, 3
          %s6245 = smul.addr %s6244, 4
          %s6246 = scalar_lea.vmem [#allocation2], %s6245
          %v6247 = vld [vmem:[%s6246] sm:$0xf]
          %v6248 = vld [vmem:[%s6246 + $0x4] sm:$0xf]
          %v6249 = vld [vmem:[%s6246 + $0xc] sm:$0xf]
          %v6250 = vld [vmem:[%s6246 + $0x10] sm:$0xf]
          %v6251 = vld [vmem:[%s6246 + $0x18] sm:$0xf]
          %v6252 = vld [vmem:[%s6246 + $0x1c] sm:$0xf]
          %v6253 = vld [vmem:[%s6246 + $0x24] sm:$0xf]
          %v6254 = vld [vmem:[%s6246 + $0x28] sm:$0xf]
          %v6255 = vld [vmem:[%s6246 + $0x30] sm:$0xf]
          %v6256 = vld [vmem:[%s6246 + $0x34] sm:$0xf]
          %v6257 = vld [vmem:[%s6246 + $0x3c] sm:$0xf]
          %v6258 = vld [vmem:[%s6246 + $0x40] sm:$0xf]
          %v6259 = vld [vmem:[%s6246 + $0x48] sm:$0xf]
          %v6260 = vld [vmem:[%s6246 + $0x4c] sm:$0xf]
          %v6261 = vld [vmem:[%s6246 + $0x54] sm:$0xf]
          %v6262 = vld [vmem:[%s6246 + $0x58] sm:$0xf]
          %v6263 = vunpack.c.l.bf16 %v6247
          %v6264 = vunpack.c.l.bf16 %v6248
          %v6265 = vunpack.c.l.bf16 %v6249
          %v6266 = vunpack.c.l.bf16 %v6250
          %v6267 = vunpack.c.l.bf16 %v6251
          %v6268 = vunpack.c.l.bf16 %v6252
          %v6269 = vunpack.c.l.bf16 %v6253
          %v6270 = vunpack.c.l.bf16 %v6254
          %v6271 = vunpack.c.l.bf16 %v6255
          %v6272 = vunpack.c.l.bf16 %v6256
          %v6273 = vunpack.c.l.bf16 %v6257
          %v6274 = vunpack.c.l.bf16 %v6258
          %v6275 = vunpack.c.l.bf16 %v6259
          %v6276 = vunpack.c.l.bf16 %v6260
          %v6277 = vunpack.c.l.bf16 %v6261
          %v6278 = vunpack.c.l.bf16 %v6262
          %s6279 = scalar_lea.vmem %s5, 4
          %v6280 = vld [vmem:[%s6279] sm:$0x1]
          %v6281 = vlaneseq
          %v6282 = vshrl.u32 %v6281, 7
          %v6283 = vsub.s32 0, %v6282
          %v6284 = vrot.slane %v6280, %v6283
          %v6285 = vmul.f32 %v6263, %v6284
          %v6286 = vmul.f32 %v6264, %v6284
          %v6287 = vmul.f32 %v6265, %v6284
          %v6288 = vmul.f32 %v6266, %v6284
          %v6289 = vmul.f32 %v6267, %v6284
          %v6290 = vmul.f32 %v6268, %v6284
          %v6291 = vmul.f32 %v6269, %v6284
          %v6292 = vmul.f32 %v6270, %v6284
          %v6293 = vmul.f32 %v6271, %v6284
          %v6294 = vmul.f32 %v6272, %v6284
          %v6295 = vmul.f32 %v6273, %v6284
          %v6296 = vmul.f32 %v6274, %v6284
          %v6297 = vmul.f32 %v6275, %v6284
          %v6298 = vmul.f32 %v6276, %v6284
          %v6299 = vmul.f32 %v6277, %v6284
          %v6300 = vmul.f32 %v6278, %v6284
          %v6301 = vadd.f32 %v6227, %v6285
          %v6302 = vadd.f32 %v6228, %v6286
          %v6303 = vadd.f32 %v6229, %v6287
          %v6304 = vadd.f32 %v6230, %v6288
          %v6305 = vadd.f32 %v6231, %v6289
          %v6306 = vadd.f32 %v6232, %v6290
          %v6307 = vadd.f32 %v6233, %v6291
          %v6308 = vadd.f32 %v6234, %v6292
          %v6309 = vadd.f32 %v6235, %v6293
          %v6310 = vadd.f32 %v6236, %v6294
          %v6311 = vadd.f32 %v6237, %v6295
          %v6312 = vadd.f32 %v6238, %v6296
          %v6313 = vadd.f32 %v6239, %v6297
          %v6314 = vadd.f32 %v6240, %v6298
          %v6315 = vadd.f32 %v6241, %v6299
          %v6316 = vadd.f32 %v6242, %v6300
          %v6317 = vld [vmem:[%s6246 + $0x8] sm:$0x1]
          %v6318 = vld [vmem:[%s6246 + $0x14] sm:$0x1]
          %v6319 = vld [vmem:[%s6246 + $0x20] sm:$0x1]
          %v6320 = vld [vmem:[%s6246 + $0x2c] sm:$0x1]
          %v6321 = vld [vmem:[%s6246 + $0x38] sm:$0x1]
          %v6322 = vld [vmem:[%s6246 + $0x44] sm:$0x1]
          %v6323 = vld [vmem:[%s6246 + $0x50] sm:$0x1]
          %v6324 = vld [vmem:[%s6246 + $0x5c] sm:$0x1]
          %v6325 = vunpack.c.l.bf16 %v6317
          %v6326 = vunpack.c.l.bf16 %v6318
          %v6327 = vunpack.c.l.bf16 %v6319
          %v6328 = vunpack.c.l.bf16 %v6320
          %v6329 = vunpack.c.l.bf16 %v6321
          %v6330 = vunpack.c.l.bf16 %v6322
          %v6331 = vunpack.c.l.bf16 %v6323
          %v6332 = vunpack.c.l.bf16 %v6324
          %v6333 = vld [vmem:[%s6279 + $0x1] sm:$0x1]
          %v6334 = vlaneseq
          %v6335 = vshrl.u32 %v6334, 7
          %v6336 = vsub.s32 0, %v6335
          %v6337 = vrot.slane %v6333, %v6336
          %v6338 = vmul.f32 %v6263, %v6337
          %v6339 = vmul.f32 %v6264, %v6337
          %v6340 = vmul.f32 %v6325, %v6337
          %v6341 = vmul.f32 %v6265, %v6337
          %v6342 = vmul.f32 %v6266, %v6337
          %v6343 = vmul.f32 %v6326, %v6337
          %v6344 = vmul.f32 %v6267, %v6337
          %v6345 = vmul.f32 %v6268, %v6337
          %v6346 = vmul.f32 %v6327, %v6337
          %v6347 = vmul.f32 %v6269, %v6337
          %v6348 = vmul.f32 %v6270, %v6337
          %v6349 = vmul.f32 %v6328, %v6337
          %v6350 = vmul.f32 %v6271, %v6337
          %v6351 = vmul.f32 %v6272, %v6337
          %v6352 = vmul.f32 %v6329, %v6337
          %v6353 = vmul.f32 %v6273, %v6337
          %v6354 = vmul.f32 %v6274, %v6337
          %v6355 = vmul.f32 %v6330, %v6337
          %v6356 = vmul.f32 %v6275, %v6337
          %v6357 = vmul.f32 %v6276, %v6337
          %v6358 = vmul.f32 %v6331, %v6337
          %v6359 = vmul.f32 %v6277, %v6337
          %v6360 = vmul.f32 %v6278, %v6337
          %v6361 = vmul.f32 %v6332, %v6337
          %v6386 = vrot.slane %v6338, 1
          %v6387 = vrot.slane %v6339, 1
          %v6388 = vsel %vm6028, %v6386, %v6387
          %v6389 = vrot.slane %v6340, 1
          %v6390 = vsel %vm6028, %v6387, %v6389
          %v6391 = vrot.slane %v6341, 1
          %v6392 = vrot.slane %v6342, 1
          %v6393 = vsel %vm6028, %v6391, %v6392
          %v6394 = vrot.slane %v6343, 1
          %v6395 = vsel %vm6028, %v6392, %v6394
          %v6396 = vrot.slane %v6344, 1
          %v6397 = vrot.slane %v6345, 1
          %v6398 = vsel %vm6028, %v6396, %v6397
          %v6399 = vrot.slane %v6346, 1
          %v6400 = vsel %vm6028, %v6397, %v6399
          %v6401 = vrot.slane %v6347, 1
          %v6402 = vrot.slane %v6348, 1
          %v6403 = vsel %vm6028, %v6401, %v6402
          %v6404 = vrot.slane %v6349, 1
          %v6405 = vsel %vm6028, %v6402, %v6404
          %v6406 = vrot.slane %v6350, 1
          %v6407 = vrot.slane %v6351, 1
          %v6408 = vsel %vm6028, %v6406, %v6407
          %v6409 = vrot.slane %v6352, 1
          %v6410 = vsel %vm6028, %v6407, %v6409
          %v6411 = vrot.slane %v6353, 1
          %v6412 = vrot.slane %v6354, 1
          %v6413 = vsel %vm6028, %v6411, %v6412
          %v6414 = vrot.slane %v6355, 1
          %v6415 = vsel %vm6028, %v6412, %v6414
          %v6416 = vrot.slane %v6356, 1
          %v6417 = vrot.slane %v6357, 1
          %v6418 = vsel %vm6028, %v6416, %v6417
          %v6419 = vrot.slane %v6358, 1
          %v6420 = vsel %vm6028, %v6417, %v6419
          %v6421 = vrot.slane %v6359, 1
          %v6422 = vrot.slane %v6360, 1
          %v6423 = vsel %vm6028, %v6421, %v6422
          %v6424 = vrot.slane %v6361, 1
          %v6425 = vsel %vm6028, %v6422, %v6424
          %v6442 = vadd.f32 %v6301, %v6388
          %v6443 = vadd.f32 %v6302, %v6390
          %v6444 = vadd.f32 %v6303, %v6393
          %v6445 = vadd.f32 %v6304, %v6395
          %v6446 = vadd.f32 %v6305, %v6398
          %v6447 = vadd.f32 %v6306, %v6400
          %v6448 = vadd.f32 %v6307, %v6403
          %v6449 = vadd.f32 %v6308, %v6405
          %v6450 = vadd.f32 %v6309, %v6408
          %v6451 = vadd.f32 %v6310, %v6410
          %v6452 = vadd.f32 %v6311, %v6413
          %v6453 = vadd.f32 %v6312, %v6415
          %v6454 = vadd.f32 %v6313, %v6418
          %v6455 = vadd.f32 %v6314, %v6420
          %v6456 = vadd.f32 %v6315, %v6423
          %v6457 = vadd.f32 %v6316, %v6425
          %v6458 = vld [vmem:[%s6246] sm:$0xe]
          %v6459 = vld [vmem:[%s6246 + $0xc] sm:$0xe]
          %v6460 = vld [vmem:[%s6246 + $0x18] sm:$0xe]
          %v6461 = vld [vmem:[%s6246 + $0x24] sm:$0xe]
          %v6462 = vld [vmem:[%s6246 + $0x30] sm:$0xe]
          %v6463 = vld [vmem:[%s6246 + $0x3c] sm:$0xe]
          %v6464 = vld [vmem:[%s6246 + $0x48] sm:$0xe]
          %v6465 = vld [vmem:[%s6246 + $0x54] sm:$0xe]
          %v6466 = vunpack.c.l.bf16 %v6458
          %v6467 = vunpack.c.l.bf16 %v6459
          %v6468 = vunpack.c.l.bf16 %v6460
          %v6469 = vunpack.c.l.bf16 %v6461
          %v6470 = vunpack.c.l.bf16 %v6462
          %v6471 = vunpack.c.l.bf16 %v6463
          %v6472 = vunpack.c.l.bf16 %v6464
          %v6473 = vunpack.c.l.bf16 %v6465
          %v6474 = vld [vmem:[%s6279 + $0x2] sm:$0x1]
          %v6475 = vlaneseq
          %v6476 = vshrl.u32 %v6475, 7
          %v6477 = vsub.s32 0, %v6476
          %v6478 = vrot.slane %v6474, %v6477
          %v6479 = vmul.f32 %v6466, %v6478
          %v6480 = vmul.f32 %v6264, %v6478
          %v6481 = vmul.f32 %v6325, %v6478
          %v6482 = vmul.f32 %v6467, %v6478
          %v6483 = vmul.f32 %v6266, %v6478
          %v6484 = vmul.f32 %v6326, %v6478
          %v6485 = vmul.f32 %v6468, %v6478
          %v6486 = vmul.f32 %v6268, %v6478
          %v6487 = vmul.f32 %v6327, %v6478
          %v6488 = vmul.f32 %v6469, %v6478
          %v6489 = vmul.f32 %v6270, %v6478
          %v6490 = vmul.f32 %v6328, %v6478
          %v6491 = vmul.f32 %v6470, %v6478
          %v6492 = vmul.f32 %v6272, %v6478
          %v6493 = vmul.f32 %v6329, %v6478
          %v6494 = vmul.f32 %v6471, %v6478
          %v6495 = vmul.f32 %v6274, %v6478
          %v6496 = vmul.f32 %v6330, %v6478
          %v6497 = vmul.f32 %v6472, %v6478
          %v6498 = vmul.f32 %v6276, %v6478
          %v6499 = vmul.f32 %v6331, %v6478
          %v6500 = vmul.f32 %v6473, %v6478
          %v6501 = vmul.f32 %v6278, %v6478
          %v6502 = vmul.f32 %v6332, %v6478
          %v6527 = vrot.slane %v6479, 2
          %v6528 = vrot.slane %v6480, 2
          %v6529 = vsel %vm6170, %v6527, %v6528
          %v6530 = vrot.slane %v6481, 2
          %v6531 = vsel %vm6170, %v6528, %v6530
          %v6532 = vrot.slane %v6482, 2
          %v6533 = vrot.slane %v6483, 2
          %v6534 = vsel %vm6170, %v6532, %v6533
          %v6535 = vrot.slane %v6484, 2
          %v6536 = vsel %vm6170, %v6533, %v6535
          %v6537 = vrot.slane %v6485, 2
          %v6538 = vrot.slane %v6486, 2
          %v6539 = vsel %vm6170, %v6537, %v6538
          %v6540 = vrot.slane %v6487, 2
          %v6541 = vsel %vm6170, %v6538, %v6540
          %v6542 = vrot.slane %v6488, 2
          %v6543 = vrot.slane %v6489, 2
          %v6544 = vsel %vm6170, %v6542, %v6543
          %v6545 = vrot.slane %v6490, 2
          %v6546 = vsel %vm6170, %v6543, %v6545
          %v6547 = vrot.slane %v6491, 2
          %v6548 = vrot.slane %v6492, 2
          %v6549 = vsel %vm6170, %v6547, %v6548
          %v6550 = vrot.slane %v6493, 2
          %v6551 = vsel %vm6170, %v6548, %v6550
          %v6552 = vrot.slane %v6494, 2
          %v6553 = vrot.slane %v6495, 2
          %v6554 = vsel %vm6170, %v6552, %v6553
          %v6555 = vrot.slane %v6496, 2
          %v6556 = vsel %vm6170, %v6553, %v6555
          %v6557 = vrot.slane %v6497, 2
          %v6558 = vrot.slane %v6498, 2
          %v6559 = vsel %vm6170, %v6557, %v6558
          %v6560 = vrot.slane %v6499, 2
          %v6561 = vsel %vm6170, %v6558, %v6560
          %v6562 = vrot.slane %v6500, 2
          %v6563 = vrot.slane %v6501, 2
          %v6564 = vsel %vm6170, %v6562, %v6563
          %v6565 = vrot.slane %v6502, 2
          %v6566 = vsel %vm6170, %v6563, %v6565
          %v6583 = vadd.f32 %v6442, %v6529
          %v6584 = vadd.f32 %v6443, %v6531
          %v6585 = vadd.f32 %v6444, %v6534
          %v6586 = vadd.f32 %v6445, %v6536
          %v6587 = vadd.f32 %v6446, %v6539
          %v6588 = vadd.f32 %v6447, %v6541
          %v6589 = vadd.f32 %v6448, %v6544
          %v6590 = vadd.f32 %v6449, %v6546
          %v6591 = vadd.f32 %v6450, %v6549
          %v6592 = vadd.f32 %v6451, %v6551
          %v6593 = vadd.f32 %v6452, %v6554
          %v6594 = vadd.f32 %v6453, %v6556
          %v6595 = vadd.f32 %v6454, %v6559
          %v6596 = vadd.f32 %v6455, %v6561
          %v6597 = vadd.f32 %v6456, %v6564
          %v6598 = vadd.f32 %v6457, %v6566
          %s6599 = sadd.s32 %s5886, 2
          %s6600 = smul.u32 %s6599, 3
          %s6601 = smul.addr %s6600, 4
          %s6602 = scalar_lea.vmem [#allocation2], %s6601
          %v6603 = vld [vmem:[%s6602] sm:$0xf]
          %v6604 = vld [vmem:[%s6602 + $0x4] sm:$0xf]
          %v6605 = vld [vmem:[%s6602 + $0xc] sm:$0xf]
          %v6606 = vld [vmem:[%s6602 + $0x10] sm:$0xf]
          %v6607 = vld [vmem:[%s6602 + $0x18] sm:$0xf]
          %v6608 = vld [vmem:[%s6602 + $0x1c] sm:$0xf]
          %v6609 = vld [vmem:[%s6602 + $0x24] sm:$0xf]
          %v6610 = vld [vmem:[%s6602 + $0x28] sm:$0xf]
          %v6611 = vld [vmem:[%s6602 + $0x30] sm:$0xf]
          %v6612 = vld [vmem:[%s6602 + $0x34] sm:$0xf]
          %v6613 = vld [vmem:[%s6602 + $0x3c] sm:$0xf]
          %v6614 = vld [vmem:[%s6602 + $0x40] sm:$0xf]
          %v6615 = vld [vmem:[%s6602 + $0x48] sm:$0xf]
          %v6616 = vld [vmem:[%s6602 + $0x4c] sm:$0xf]
          %v6617 = vld [vmem:[%s6602 + $0x54] sm:$0xf]
          %v6618 = vld [vmem:[%s6602 + $0x58] sm:$0xf]
          %v6619 = vunpack.c.l.bf16 %v6603
          %v6620 = vunpack.c.l.bf16 %v6604
          %v6621 = vunpack.c.l.bf16 %v6605
          %v6622 = vunpack.c.l.bf16 %v6606
          %v6623 = vunpack.c.l.bf16 %v6607
          %v6624 = vunpack.c.l.bf16 %v6608
          %v6625 = vunpack.c.l.bf16 %v6609
          %v6626 = vunpack.c.l.bf16 %v6610
          %v6627 = vunpack.c.l.bf16 %v6611
          %v6628 = vunpack.c.l.bf16 %v6612
          %v6629 = vunpack.c.l.bf16 %v6613
          %v6630 = vunpack.c.l.bf16 %v6614
          %v6631 = vunpack.c.l.bf16 %v6615
          %v6632 = vunpack.c.l.bf16 %v6616
          %v6633 = vunpack.c.l.bf16 %v6617
          %v6634 = vunpack.c.l.bf16 %v6618
          %s6635 = scalar_lea.vmem %s5, 8
          %v6636 = vld [vmem:[%s6635] sm:$0x1]
          %v6637 = vlaneseq
          %v6638 = vshrl.u32 %v6637, 7
          %v6639 = vsub.s32 0, %v6638
          %v6640 = vrot.slane %v6636, %v6639
          %v6641 = vmul.f32 %v6619, %v6640
          %v6642 = vmul.f32 %v6620, %v6640
          %v6643 = vmul.f32 %v6621, %v6640
          %v6644 = vmul.f32 %v6622, %v6640
          %v6645 = vmul.f32 %v6623, %v6640
          %v6646 = vmul.f32 %v6624, %v6640
          %v6647 = vmul.f32 %v6625, %v6640
          %v6648 = vmul.f32 %v6626, %v6640
          %v6649 = vmul.f32 %v6627, %v6640
          %v6650 = vmul.f32 %v6628, %v6640
          %v6651 = vmul.f32 %v6629, %v6640
          %v6652 = vmul.f32 %v6630, %v6640
          %v6653 = vmul.f32 %v6631, %v6640
          %v6654 = vmul.f32 %v6632, %v6640
          %v6655 = vmul.f32 %v6633, %v6640
          %v6656 = vmul.f32 %v6634, %v6640
          %v6657 = vadd.f32 %v6583, %v6641
          %v6658 = vadd.f32 %v6584, %v6642
          %v6659 = vadd.f32 %v6585, %v6643
          %v6660 = vadd.f32 %v6586, %v6644
          %v6661 = vadd.f32 %v6587, %v6645
          %v6662 = vadd.f32 %v6588, %v6646
          %v6663 = vadd.f32 %v6589, %v6647
          %v6664 = vadd.f32 %v6590, %v6648
          %v6665 = vadd.f32 %v6591, %v6649
          %v6666 = vadd.f32 %v6592, %v6650
          %v6667 = vadd.f32 %v6593, %v6651
          %v6668 = vadd.f32 %v6594, %v6652
          %v6669 = vadd.f32 %v6595, %v6653
          %v6670 = vadd.f32 %v6596, %v6654
          %v6671 = vadd.f32 %v6597, %v6655
          %v6672 = vadd.f32 %v6598, %v6656
          %v6673 = vld [vmem:[%s6602 + $0x8] sm:$0x1]
          %v6674 = vld [vmem:[%s6602 + $0x14] sm:$0x1]
          %v6675 = vld [vmem:[%s6602 + $0x20] sm:$0x1]
          %v6676 = vld [vmem:[%s6602 + $0x2c] sm:$0x1]
          %v6677 = vld [vmem:[%s6602 + $0x38] sm:$0x1]
          %v6678 = vld [vmem:[%s6602 + $0x44] sm:$0x1]
          %v6679 = vld [vmem:[%s6602 + $0x50] sm:$0x1]
          %v6680 = vld [vmem:[%s6602 + $0x5c] sm:$0x1]
          %v6681 = vunpack.c.l.bf16 %v6673
          %v6682 = vunpack.c.l.bf16 %v6674
          %v6683 = vunpack.c.l.bf16 %v6675
          %v6684 = vunpack.c.l.bf16 %v6676
          %v6685 = vunpack.c.l.bf16 %v6677
          %v6686 = vunpack.c.l.bf16 %v6678
          %v6687 = vunpack.c.l.bf16 %v6679
          %v6688 = vunpack.c.l.bf16 %v6680
          %v6689 = vld [vmem:[%s6635 + $0x1] sm:$0x1]
          %v6690 = vlaneseq
          %v6691 = vshrl.u32 %v6690, 7
          %v6692 = vsub.s32 0, %v6691
          %v6693 = vrot.slane %v6689, %v6692
          %v6694 = vmul.f32 %v6619, %v6693
          %v6695 = vmul.f32 %v6620, %v6693
          %v6696 = vmul.f32 %v6681, %v6693
          %v6697 = vmul.f32 %v6621, %v6693
          %v6698 = vmul.f32 %v6622, %v6693
          %v6699 = vmul.f32 %v6682, %v6693
          %v6700 = vmul.f32 %v6623, %v6693
          %v6701 = vmul.f32 %v6624, %v6693
          %v6702 = vmul.f32 %v6683, %v6693
          %v6703 = vmul.f32 %v6625, %v6693
          %v6704 = vmul.f32 %v6626, %v6693
          %v6705 = vmul.f32 %v6684, %v6693
          %v6706 = vmul.f32 %v6627, %v6693
          %v6707 = vmul.f32 %v6628, %v6693
          %v6708 = vmul.f32 %v6685, %v6693
          %v6709 = vmul.f32 %v6629, %v6693
          %v6710 = vmul.f32 %v6630, %v6693
          %v6711 = vmul.f32 %v6686, %v6693
          %v6712 = vmul.f32 %v6631, %v6693
          %v6713 = vmul.f32 %v6632, %v6693
          %v6714 = vmul.f32 %v6687, %v6693
          %v6715 = vmul.f32 %v6633, %v6693
          %v6716 = vmul.f32 %v6634, %v6693
          %v6717 = vmul.f32 %v6688, %v6693
          %v6742 = vrot.slane %v6694, 1
          %v6743 = vrot.slane %v6695, 1
          %v6744 = vsel %vm6028, %v6742, %v6743
          %v6745 = vrot.slane %v6696, 1
          %v6746 = vsel %vm6028, %v6743, %v6745
          %v6747 = vrot.slane %v6697, 1
          %v6748 = vrot.slane %v6698, 1
          %v6749 = vsel %vm6028, %v6747, %v6748
          %v6750 = vrot.slane %v6699, 1
          %v6751 = vsel %vm6028, %v6748, %v6750
          %v6752 = vrot.slane %v6700, 1
          %v6753 = vrot.slane %v6701, 1
          %v6754 = vsel %vm6028, %v6752, %v6753
          %v6755 = vrot.slane %v6702, 1
          %v6756 = vsel %vm6028, %v6753, %v6755
          %v6757 = vrot.slane %v6703, 1
          %v6758 = vrot.slane %v6704, 1
          %v6759 = vsel %vm6028, %v6757, %v6758
          %v6760 = vrot.slane %v6705, 1
          %v6761 = vsel %vm6028, %v6758, %v6760
          %v6762 = vrot.slane %v6706, 1
          %v6763 = vrot.slane %v6707, 1
          %v6764 = vsel %vm6028, %v6762, %v6763
          %v6765 = vrot.slane %v6708, 1
          %v6766 = vsel %vm6028, %v6763, %v6765
          %v6767 = vrot.slane %v6709, 1
          %v6768 = vrot.slane %v6710, 1
          %v6769 = vsel %vm6028, %v6767, %v6768
          %v6770 = vrot.slane %v6711, 1
          %v6771 = vsel %vm6028, %v6768, %v6770
          %v6772 = vrot.slane %v6712, 1
          %v6773 = vrot.slane %v6713, 1
          %v6774 = vsel %vm6028, %v6772, %v6773
          %v6775 = vrot.slane %v6714, 1
          %v6776 = vsel %vm6028, %v6773, %v6775
          %v6777 = vrot.slane %v6715, 1
          %v6778 = vrot.slane %v6716, 1
          %v6779 = vsel %vm6028, %v6777, %v6778
          %v6780 = vrot.slane %v6717, 1
          %v6781 = vsel %vm6028, %v6778, %v6780
          %v6798 = vadd.f32 %v6657, %v6744
          %v6799 = vadd.f32 %v6658, %v6746
          %v6800 = vadd.f32 %v6659, %v6749
          %v6801 = vadd.f32 %v6660, %v6751
          %v6802 = vadd.f32 %v6661, %v6754
          %v6803 = vadd.f32 %v6662, %v6756
          %v6804 = vadd.f32 %v6663, %v6759
          %v6805 = vadd.f32 %v6664, %v6761
          %v6806 = vadd.f32 %v6665, %v6764
          %v6807 = vadd.f32 %v6666, %v6766
          %v6808 = vadd.f32 %v6667, %v6769
          %v6809 = vadd.f32 %v6668, %v6771
          %v6810 = vadd.f32 %v6669, %v6774
          %v6811 = vadd.f32 %v6670, %v6776
          %v6812 = vadd.f32 %v6671, %v6779
          %v6813 = vadd.f32 %v6672, %v6781
          %v6814 = vld [vmem:[%s6602] sm:$0xe]
          %v6815 = vld [vmem:[%s6602 + $0xc] sm:$0xe]
          %v6816 = vld [vmem:[%s6602 + $0x18] sm:$0xe]
          %v6817 = vld [vmem:[%s6602 + $0x24] sm:$0xe]
          %v6818 = vld [vmem:[%s6602 + $0x30] sm:$0xe]
          %v6819 = vld [vmem:[%s6602 + $0x3c] sm:$0xe]
          %v6820 = vld [vmem:[%s6602 + $0x48] sm:$0xe]
          %v6821 = vld [vmem:[%s6602 + $0x54] sm:$0xe]
          %v6822 = vunpack.c.l.bf16 %v6814
          %v6823 = vunpack.c.l.bf16 %v6815
          %v6824 = vunpack.c.l.bf16 %v6816
          %v6825 = vunpack.c.l.bf16 %v6817
          %v6826 = vunpack.c.l.bf16 %v6818
          %v6827 = vunpack.c.l.bf16 %v6819
          %v6828 = vunpack.c.l.bf16 %v6820
          %v6829 = vunpack.c.l.bf16 %v6821
          %v6830 = vld [vmem:[%s6635 + $0x2] sm:$0x1]
          %v6831 = vlaneseq
          %v6832 = vshrl.u32 %v6831, 7
          %v6833 = vsub.s32 0, %v6832
          %v6834 = vrot.slane %v6830, %v6833
          %v6835 = vmul.f32 %v6822, %v6834
          %v6836 = vmul.f32 %v6620, %v6834
          %v6837 = vmul.f32 %v6681, %v6834
          %v6838 = vmul.f32 %v6823, %v6834
          %v6839 = vmul.f32 %v6622, %v6834
          %v6840 = vmul.f32 %v6682, %v6834
          %v6841 = vmul.f32 %v6824, %v6834
          %v6842 = vmul.f32 %v6624, %v6834
          %v6843 = vmul.f32 %v6683, %v6834
          %v6844 = vmul.f32 %v6825, %v6834
          %v6845 = vmul.f32 %v6626, %v6834
          %v6846 = vmul.f32 %v6684, %v6834
          %v6847 = vmul.f32 %v6826, %v6834
          %v6848 = vmul.f32 %v6628, %v6834
          %v6849 = vmul.f32 %v6685, %v6834
          %v6850 = vmul.f32 %v6827, %v6834
          %v6851 = vmul.f32 %v6630, %v6834
          %v6852 = vmul.f32 %v6686, %v6834
          %v6853 = vmul.f32 %v6828, %v6834
          %v6854 = vmul.f32 %v6632, %v6834
          %v6855 = vmul.f32 %v6687, %v6834
          %v6856 = vmul.f32 %v6829, %v6834
          %v6857 = vmul.f32 %v6634, %v6834
          %v6858 = vmul.f32 %v6688, %v6834
          %v6883 = vrot.slane %v6835, 2
          %v6884 = vrot.slane %v6836, 2
          %v6885 = vsel %vm6170, %v6883, %v6884
          %v6886 = vrot.slane %v6837, 2
          %v6887 = vsel %vm6170, %v6884, %v6886
          %v6888 = vrot.slane %v6838, 2
          %v6889 = vrot.slane %v6839, 2
          %v6890 = vsel %vm6170, %v6888, %v6889
          %v6891 = vrot.slane %v6840, 2
          %v6892 = vsel %vm6170, %v6889, %v6891
          %v6893 = vrot.slane %v6841, 2
          %v6894 = vrot.slane %v6842, 2
          %v6895 = vsel %vm6170, %v6893, %v6894
          %v6896 = vrot.slane %v6843, 2
          %v6897 = vsel %vm6170, %v6894, %v6896
          %v6898 = vrot.slane %v6844, 2
          %v6899 = vrot.slane %v6845, 2
          %v6900 = vsel %vm6170, %v6898, %v6899
          %v6901 = vrot.slane %v6846, 2
          %v6902 = vsel %vm6170, %v6899, %v6901
          %v6903 = vrot.slane %v6847, 2
          %v6904 = vrot.slane %v6848, 2
          %v6905 = vsel %vm6170, %v6903, %v6904
          %v6906 = vrot.slane %v6849, 2
          %v6907 = vsel %vm6170, %v6904, %v6906
          %v6908 = vrot.slane %v6850, 2
          %v6909 = vrot.slane %v6851, 2
          %v6910 = vsel %vm6170, %v6908, %v6909
          %v6911 = vrot.slane %v6852, 2
          %v6912 = vsel %vm6170, %v6909, %v6911
          %v6913 = vrot.slane %v6853, 2
          %v6914 = vrot.slane %v6854, 2
          %v6915 = vsel %vm6170, %v6913, %v6914
          %v6916 = vrot.slane %v6855, 2
          %v6917 = vsel %vm6170, %v6914, %v6916
          %v6918 = vrot.slane %v6856, 2
          %v6919 = vrot.slane %v6857, 2
          %v6920 = vsel %vm6170, %v6918, %v6919
          %v6921 = vrot.slane %v6858, 2
          %v6922 = vsel %vm6170, %v6919, %v6921
          %v6939 = vadd.f32 %v6798, %v6885
          %v6940 = vadd.f32 %v6799, %v6887
          %v6941 = vadd.f32 %v6800, %v6890
          %v6942 = vadd.f32 %v6801, %v6892
          %v6943 = vadd.f32 %v6802, %v6895
          %v6944 = vadd.f32 %v6803, %v6897
          %v6945 = vadd.f32 %v6804, %v6900
          %v6946 = vadd.f32 %v6805, %v6902
          %v6947 = vadd.f32 %v6806, %v6905
          %v6948 = vadd.f32 %v6807, %v6907
          %v6949 = vadd.f32 %v6808, %v6910
          %v6950 = vadd.f32 %v6809, %v6912
          %v6951 = vadd.f32 %v6810, %v6915
          %v6952 = vadd.f32 %v6811, %v6917
          %v6953 = vadd.f32 %v6812, %v6920
          %v6954 = vadd.f32 %v6813, %v6922
          %vm6955 = vcmask 523264
          %v6956 = vsel %vm6955, %v6939, 0.0
          %6957 = vadd.xlane.f32.xlu0 %v6956
          %v6958 = vpop.xlane.xlu0 %6957
          %v6959 = vsel %vm6955, %v6940, 0.0
          %6960 = vadd.xlane.f32.xlu0 %v6959
          %v6961 = vpop.xlane.xlu0 %6960
          %v6962 = vsel %vm6955, %v6941, 0.0
          %6963 = vadd.xlane.f32.xlu0 %v6962
          %v6964 = vpop.xlane.xlu0 %6963
          %v6965 = vsel %vm6955, %v6942, 0.0
          %6966 = vadd.xlane.f32.xlu0 %v6965
          %v6967 = vpop.xlane.xlu0 %6966
          %v6968 = vsel %vm6955, %v6943, 0.0
          %6969 = vadd.xlane.f32.xlu0 %v6968
          %v6970 = vpop.xlane.xlu0 %6969
          %v6971 = vsel %vm6955, %v6944, 0.0
          %6972 = vadd.xlane.f32.xlu0 %v6971
          %v6973 = vpop.xlane.xlu0 %6972
          %v6974 = vsel %vm6955, %v6945, 0.0
          %6975 = vadd.xlane.f32.xlu0 %v6974
          %v6976 = vpop.xlane.xlu0 %6975
          %v6977 = vsel %vm6955, %v6946, 0.0
          %6978 = vadd.xlane.f32.xlu0 %v6977
          %v6979 = vpop.xlane.xlu0 %6978
          %v6980 = vsel %vm6955, %v6947, 0.0
          %6981 = vadd.xlane.f32.xlu0 %v6980
          %v6982 = vpop.xlane.xlu0 %6981
          %v6983 = vsel %vm6955, %v6948, 0.0
          %6984 = vadd.xlane.f32.xlu0 %v6983
          %v6985 = vpop.xlane.xlu0 %6984
          %v6986 = vsel %vm6955, %v6949, 0.0
          %6987 = vadd.xlane.f32.xlu0 %v6986
          %v6988 = vpop.xlane.xlu0 %6987
          %v6989 = vsel %vm6955, %v6950, 0.0
          %6990 = vadd.xlane.f32.xlu0 %v6989
          %v6991 = vpop.xlane.xlu0 %6990
          %v6992 = vsel %vm6955, %v6951, 0.0
          %6993 = vadd.xlane.f32.xlu0 %v6992
          %v6994 = vpop.xlane.xlu0 %6993
          %v6995 = vsel %vm6955, %v6952, 0.0
          %6996 = vadd.xlane.f32.xlu0 %v6995
          %v6997 = vpop.xlane.xlu0 %6996
          %v6998 = vsel %vm6955, %v6953, 0.0
          %6999 = vadd.xlane.f32.xlu0 %v6998
          %v7000 = vpop.xlane.xlu0 %6999
          %v7001 = vsel %vm6955, %v6954, 0.0
          %7002 = vadd.xlane.f32.xlu0 %v7001
          %v7003 = vpop.xlane.xlu0 %7002
          %s7004 = smul.u32 %s5886, 16
          %s7005 = scalar_lea.vmem %s275, %s7004
          %v7006 = vld [vmem:[%s7005] sm:$0xff]
          %v7007 = vld [vmem:[%s7005 + $0x8] sm:$0xff]
          %v7008 = vld [vmem:[%s7005 + $0x10] sm:$0xff]
          %v7009 = vld [vmem:[%s7005 + $0x18] sm:$0xff]
          %v7010 = vld [vmem:[%s7005 + $0x20] sm:$0xff]
          %v7011 = vld [vmem:[%s7005 + $0x28] sm:$0xff]
          %v7012 = vld [vmem:[%s7005 + $0x30] sm:$0xff]
          %v7013 = vld [vmem:[%s7005 + $0x38] sm:$0xff]
          %v7014 = vld [vmem:[%s7005 + $0x40] sm:$0xff]
          %v7015 = vld [vmem:[%s7005 + $0x48] sm:$0xff]
          %v7016 = vld [vmem:[%s7005 + $0x50] sm:$0xff]
          %v7017 = vld [vmem:[%s7005 + $0x58] sm:$0xff]
          %v7018 = vld [vmem:[%s7005 + $0x60] sm:$0xff]
          %v7019 = vld [vmem:[%s7005 + $0x68] sm:$0xff]
          %v7020 = vld [vmem:[%s7005 + $0x70] sm:$0xff]
          %v7021 = vld [vmem:[%s7005 + $0x78] sm:$0xff]
          %s7022 = sld [smem:[#allocation5 + $0x2]]
          %v7023 = vstv %s7022
          %v7024 = vmul.f32 %v7006, %v7023
          %v7025 = vmul.f32 %v7007, %v7023
          %v7026 = vmul.f32 %v7008, %v7023
          %v7027 = vmul.f32 %v7009, %v7023
          %v7028 = vmul.f32 %v7010, %v7023
          %v7029 = vmul.f32 %v7011, %v7023
          %v7030 = vmul.f32 %v7012, %v7023
          %v7031 = vmul.f32 %v7013, %v7023
          %v7032 = vmul.f32 %v7014, %v7023
          %v7033 = vmul.f32 %v7015, %v7023
          %v7034 = vmul.f32 %v7016, %v7023
          %v7035 = vmul.f32 %v7017, %v7023
          %v7036 = vmul.f32 %v7018, %v7023
          %v7037 = vmul.f32 %v7019, %v7023
          %v7038 = vmul.f32 %v7020, %v7023
          %v7039 = vmul.f32 %v7021, %v7023
          %s7040 = sld [smem:[#allocation5 + $0x3]]
          %v7041 = vstv %s7040
          %v7042 = vadd.f32 %v7024, %v7041
          %v7043 = vadd.f32 %v7025, %v7041
          %v7044 = vadd.f32 %v7026, %v7041
          %v7045 = vadd.f32 %v7027, %v7041
          %v7046 = vadd.f32 %v7028, %v7041
          %v7047 = vadd.f32 %v7029, %v7041
          %v7048 = vadd.f32 %v7030, %v7041
          %v7049 = vadd.f32 %v7031, %v7041
          %v7050 = vadd.f32 %v7032, %v7041
          %v7051 = vadd.f32 %v7033, %v7041
          %v7052 = vadd.f32 %v7034, %v7041
          %v7053 = vadd.f32 %v7035, %v7041
          %v7054 = vadd.f32 %v7036, %v7041
          %v7055 = vadd.f32 %v7037, %v7041
          %v7056 = vadd.f32 %v7038, %v7041
          %v7057 = vadd.f32 %v7039, %v7041
          %v7058 = vadd.f32 %v6958, %v7042
          %v7059 = vadd.f32 %v6961, %v7043
          %v7060 = vadd.f32 %v6964, %v7044
          %v7061 = vadd.f32 %v6967, %v7045
          %v7062 = vadd.f32 %v6970, %v7046
          %v7063 = vadd.f32 %v6973, %v7047
          %v7064 = vadd.f32 %v6976, %v7048
          %v7065 = vadd.f32 %v6979, %v7049
          %v7066 = vadd.f32 %v6982, %v7050
          %v7067 = vadd.f32 %v6985, %v7051
          %v7068 = vadd.f32 %v6988, %v7052
          %v7069 = vadd.f32 %v6991, %v7053
          %v7070 = vadd.f32 %v6994, %v7054
          %v7071 = vadd.f32 %v6997, %v7055
          %v7072 = vadd.f32 %v7000, %v7056
          %v7073 = vadd.f32 %v7003, %v7057
          %s7074 = sld [smem:[#allocation5 + $0x4]]
          %v7075 = vstv %s7074
          %v7076 = vmul.f32 %v7058, %v7075
          %v7077 = vmul.f32 %v7059, %v7075
          %v7078 = vmul.f32 %v7060, %v7075
          %v7079 = vmul.f32 %v7061, %v7075
          %v7080 = vmul.f32 %v7062, %v7075
          %v7081 = vmul.f32 %v7063, %v7075
          %v7082 = vmul.f32 %v7064, %v7075
          %v7083 = vmul.f32 %v7065, %v7075
          %v7084 = vmul.f32 %v7066, %v7075
          %v7085 = vmul.f32 %v7067, %v7075
          %v7086 = vmul.f32 %v7068, %v7075
          %v7087 = vmul.f32 %v7069, %v7075
          %v7088 = vmul.f32 %v7070, %v7075
          %v7089 = vmul.f32 %v7071, %v7075
          %v7090 = vmul.f32 %v7072, %v7075
          %v7091 = vmul.f32 %v7073, %v7075
          %s7092 = sld [smem:[#allocation5 + $0x5]]
          %v7093 = vstv %s7092
          %v7094 = vadd.f32 %v7076, %v7093
          %v7095 = vadd.f32 %v7077, %v7093
          %v7096 = vadd.f32 %v7078, %v7093
          %v7097 = vadd.f32 %v7079, %v7093
          %v7098 = vadd.f32 %v7080, %v7093
          %v7099 = vadd.f32 %v7081, %v7093
          %v7100 = vadd.f32 %v7082, %v7093
          %v7101 = vadd.f32 %v7083, %v7093
          %v7102 = vadd.f32 %v7084, %v7093
          %v7103 = vadd.f32 %v7085, %v7093
          %v7104 = vadd.f32 %v7086, %v7093
          %v7105 = vadd.f32 %v7087, %v7093
          %v7106 = vadd.f32 %v7088, %v7093
          %v7107 = vadd.f32 %v7089, %v7093
          %v7108 = vadd.f32 %v7090, %v7093
          %v7109 = vadd.f32 %v7091, %v7093
          %s7110 = scalar_lea.vmem %s285, %s7004
          %vm7111 = vcmask 7168
          %7112 = vst.msk [vmem:[%s7110] sm:$0xff] %vm7111, %v7094
          %7113 = vst.msk [vmem:[%s7110 + $0x8] sm:$0xff] %vm7111, %v7095
          %7114 = vst.msk [vmem:[%s7110 + $0x10] sm:$0xff] %vm7111, %v7096
          %7115 = vst.msk [vmem:[%s7110 + $0x18] sm:$0xff] %vm7111, %v7097
          %7116 = vst.msk [vmem:[%s7110 + $0x20] sm:$0xff] %vm7111, %v7098
          %7117 = vst.msk [vmem:[%s7110 + $0x28] sm:$0xff] %vm7111, %v7099
          %7118 = vst.msk [vmem:[%s7110 + $0x30] sm:$0xff] %vm7111, %v7100
          %7119 = vst.msk [vmem:[%s7110 + $0x38] sm:$0xff] %vm7111, %v7101
          %7120 = vst.msk [vmem:[%s7110 + $0x40] sm:$0xff] %vm7111, %v7102
          %7121 = vst.msk [vmem:[%s7110 + $0x48] sm:$0xff] %vm7111, %v7103
          %7122 = vst.msk [vmem:[%s7110 + $0x50] sm:$0xff] %vm7111, %v7104
          %7123 = vst.msk [vmem:[%s7110 + $0x58] sm:$0xff] %vm7111, %v7105
          %7124 = vst.msk [vmem:[%s7110 + $0x60] sm:$0xff] %vm7111, %v7106
          %7125 = vst.msk [vmem:[%s7110 + $0x68] sm:$0xff] %vm7111, %v7107
          %7126 = vst.msk [vmem:[%s7110 + $0x70] sm:$0xff] %vm7111, %v7108
          %7127 = vst.msk [vmem:[%s7110 + $0x78] sm:$0xff] %vm7111, %v7109
        $region89: #{vdsr_dem_forward.1} parent=43 // loop_footer
          %s5885 = sadd.s32 1, %s5881
        $region90: #{vdsr_dem_forward.1} parent=43 // loop_footer_branch
          %5880 = sbr.rel target = $region86
        $region91: #{vdsr_dem_forward.1} parent=43 // loop_exit
          _
        %p7128 = scmp.lt.s32.totalorder %s18, 1
        %s7129 = scalar_select %p7128, %s18, 1
        %s7130 = smul.addr %s7129, 32
        %s7131 = smul.addr %s7130, 8
        %s7132 = scalar_lea.vmem %s6, %s7131
        // Predicated region
        $region92: #{vdsr_dem_forward.1} parent=43 // pred_check
          %p7133 = pneg %p172
        $region93: #{vdsr_dem_forward.1} parent=43 // pred_check_branch
          %7135 = sbr.rel (%p7133) target = $region95
        $region94: #{vdsr_dem_forward.1} parent=43 // pred_region
          _
        $region95: #{vdsr_dem_forward.1} parent=43 // pred_fallthru
          _
      $region44: #{vdsr_dem_forward.1} parent=5 // pred_fallthru
        _
      %p7136 = scmp.le.s32.totalorder 2, %s13
      // Predicated region
      $region96: #{vdsr_dem_forward.1} parent=5 // pred_check
        %p7137 = pneg %p7136
      $region97: #{vdsr_dem_forward.1} parent=5 // pred_check_branch
        %7139 = sbr.rel (%p7137) target = $region99
      $region98: #{vdsr_dem_forward.1} parent=5 // pred_region
        %s7140 = ssub.s32 %s13, 2
        // Predicated region
        $region100: #{vdsr_dem_forward.1} parent=98 // pred_check
          %p7141 = pneg %p178
        $region101: #{vdsr_dem_forward.1} parent=98 // pred_check_branch
          %7143 = sbr.rel (%p7141) target = $region103
        $region102: #{vdsr_dem_forward.1} parent=98 // pred_region
          %p7144 = scmp.lt.s32.totalorder %s19, 1
          %s7145 = scalar_select %p7144, %s19, 1
          %s7146 = smul.addr %s7145, 32
          %s7147 = smul.addr %s7146, 8
          %s7148 = scalar_lea.vmem %s6, %s7147
        $region103: #{vdsr_dem_forward.1} parent=98 // pred_fallthru
          _
      $region99: #{vdsr_dem_forward.1} parent=5 // pred_fallthru
        _
    $region6: #{vdsr_dem_forward.1} parent=1 // loop_footer
      %s17 = sadd.s32 1, %s13
    $region7: #{vdsr_dem_forward.1} parent=1 // loop_footer_branch
      %12 = sbr.rel target = $region3
    $region8: #{vdsr_dem_forward.1} parent=1 // loop_exit
      _
    %7149 = vsyncpa [#allocation6], 1
    %s7150 = scalar_lea.sflag [#allocation6], 1
    %7151 = vsyncpa %s7150, 1

</llo_original>
